<compile_context>
chip_gen: v5e
topology: v5e:2x2
jax: 0.10.0
libtpu: 0.0.40
codegen_flags: <defaults>
</compile_context>

<pallas_src>
import jax
import jax.numpy as jnp
from jax.experimental import pallas as pl
from jax.experimental.pallas import tpu as pltpu


def _round_up(x, m):
    return -(-x // m) * m


# ---------------------------------------------------------------------------
# Pallas kernel 1: fused conv-as-matmul + bias + ReLU + 2x2 max-pool
#   a_ref : (4, K, tn)  bf16   quadrant-grouped im2col patches (transposed)
#   w_ref : (Cout, K)   bf16   conv weights, (kh, kw, Cin) flattened into K
#   b_ref : (Cout, 1)   f32    bias
#   o_ref : (Cout, tn)  f32    pooled output pixels (lane-dense)
# ---------------------------------------------------------------------------
def _conv_relu_pool_kernel(a_ref, w_ref, b_ref, o_ref):
    w = w_ref[...]
    acc = jnp.dot(w, a_ref[0], preferred_element_type=jnp.float32)
    for q in range(1, 4):  # max over the 4 pool quadrants
        acc = jnp.maximum(
            acc, jnp.dot(w, a_ref[q], preferred_element_type=jnp.float32))
    o_ref[...] = jnp.maximum(acc + b_ref[...], 0.0).astype(o_ref.dtype)


def conv3x3_relu_pool2(x_cnhw, w_oihw, bias):
    """Conv2d(3x3, stride 1, pad 1) + ReLU + MaxPool2d(2), channels-first layout.

    x_cnhw : (Cin, N, H, W)
    w_oihw : (Cout, Cin, 3, 3)  (torch layout)
    bias   : (Cout,)
    returns: (Cout, N, H//2, W//2) float32
    """
    Cin, N, H, W = x_cnhw.shape
    Cout = w_oihw.shape[0]
    PH, PW = H // 2, W // 2          # floor-mode pooling (PyTorch default)
    M = N * PH * PW                  # number of pooled output pixels
    K = 9 * Cin

    xp = jnp.pad(x_cnhw.astype(jnp.bfloat16), ((0, 0), (0, 0), (1, 1), (1, 1)))

    # Quadrant-grouped, transposed im2col. Quadrant q=(qy,qx) holds the patches
    # of conv-output pixel (2*ph+qy, 2*pw+qx); feature order is (kh, kw, Cin).
    quads = []
    for qy in range(2):
        for qx in range(2):
            taps = []
            for dy in range(3):
                for dx in range(3):
                    hs, ws = qy + dy, qx + dx
                    sl = xp[:, :, hs:hs + 2 * PH - 1:2, ws:ws + 2 * PW - 1:2]
                    taps.append(sl.reshape(Cin, M))          # (Cin, M)
            quads.append(jnp.concatenate(taps, axis=0))      # (K, M)
    a = jnp.stack(quads, axis=0)                              # (4, K, M)

    # 1 grid step for small layers, 2 lane tiles (v7x megacore) for the big one.
    n_tiles = 2 if M > 1024 else 1
    Mp = _round_up(M, 128 * n_tiles)       # lane padding only (few columns)
    tn = Mp // n_tiles
    a = jnp.pad(a, ((0, 0), (0, 0), (0, Mp - M)))

    # torch weight (Cout, Cin, kh, kw) -> (Cout, kh, kw, Cin) -> (Cout, 9*Cin)
    wt = jnp.transpose(w_oihw, (0, 2, 3, 1)).reshape(Cout, K).astype(jnp.bfloat16)
    b2 = bias.reshape(Cout, 1).astype(jnp.float32)

    out = pl.pallas_call(
        _conv_relu_pool_kernel,
        out_shape=jax.ShapeDtypeStruct((Cout, Mp), jnp.float32),
        grid=(n_tiles,),
        in_specs=[
            pl.BlockSpec((4, K, tn), lambda i: (0, 0, i)),
            pl.BlockSpec((Cout, K), lambda i: (0, 0)),
            pl.BlockSpec((Cout, 1), lambda i: (0, 0)),
        ],
        out_specs=pl.BlockSpec((Cout, tn), lambda i: (0, i)),
        compiler_params=pltpu.CompilerParams(
            dimension_semantics=("parallel",),
            vmem_limit_bytes=32 * 1024 * 1024,
        ),
    )(a, wt, b2)
    return out[:, :M].reshape(Cout, N, PH, PW)


# ---------------------------------------------------------------------------
# Pallas kernel 2: fused MLP (enc_fc + 2 double linear blocks + head)
# All six weight matrices stay resident in VMEM; one launch for the whole MLP.
# ---------------------------------------------------------------------------
def _mlp_kernel(*refs):
    x_ref, o_ref = refs[0], refs[-1]
    wb = refs[1:-1]                     # alternating (weight, bias) refs
    n_layers = len(wb) // 2
    h = x_ref[...]                      # (batch, d_in) bf16
    for li in range(n_layers):
        w = wb[2 * li][...]
        b = wb[2 * li + 1][...]
        y = jnp.dot(h, w, preferred_element_type=jnp.float32) + b
        if li < n_layers - 1:           # ReLU on every layer except the head
            h = jnp.maximum(y, 0.0).astype(jnp.bfloat16)
        else:
            h = y
    o_ref[...] = h.astype(o_ref.dtype)


def mlp_forward(x_bf16, layers, n_out):
    """x_bf16: (batch, d_in); layers: list of (w (din, dout), b (dout,))."""
    batch = x_bf16.shape[0]
    inputs = [x_bf16]
    in_specs = [pl.BlockSpec(x_bf16.shape, lambda i: (0, 0))]
    for w, b in layers:
        wb = w.astype(jnp.bfloat16)
        bb = b.reshape(1, -1).astype(jnp.float32)
        inputs += [wb, bb]
        in_specs += [
            pl.BlockSpec(wb.shape, lambda i: (0, 0)),
            pl.BlockSpec(bb.shape, lambda i: (0, 0)),
        ]
    return pl.pallas_call(
        _mlp_kernel,
        out_shape=jax.ShapeDtypeStruct((batch, n_out), jnp.float32),
        grid=(1,),
        in_specs=in_specs,
        out_specs=pl.BlockSpec((batch, n_out), lambda i: (0, 0)),
        compiler_params=pltpu.CompilerParams(
            dimension_semantics=("arbitrary",),
            vmem_limit_bytes=32 * 1024 * 1024,
        ),
    )(*inputs)


# ---------------------------------------------------------------------------
# Parameter construction (deterministic, synthetic)
# ---------------------------------------------------------------------------
def _init_linear(key, fan_in, fan_out):
    kw, kb = jax.random.split(key)
    scale = 1.0 / jnp.sqrt(jnp.float32(fan_in))
    w = jax.random.uniform(kw, (fan_in, fan_out), jnp.float32, -scale, scale)
    b = jax.random.uniform(kb, (fan_out,), jnp.float32, -scale, scale)
    return w, b


def _init_conv(key, cin, cout, k=3):
    kw, kb = jax.random.split(key)
    fan_in = cin * k * k
    scale = 1.0 / jnp.sqrt(jnp.float32(fan_in))
    w = jax.random.uniform(kw, (cout, cin, k, k), jnp.float32, -scale, scale)
    b = jax.random.uniform(kb, (cout,), jnp.float32, -scale, scale)
    return w, b


def init_cnn90_params(key, n_channels, encoded_size, n_classes):
    keys = jax.random.split(key, 9)
    params = {}
    params["conv1"] = _init_conv(keys[0], n_channels, 8)
    params["conv2"] = _init_conv(keys[1], 8, 16)
    params["conv3"] = _init_conv(keys[2], 16, 32)
    flat = 32 * 11 * 11                  # 90 -> 45 -> 22 -> 11
    params["enc_fc"] = _init_linear(keys[3], flat, encoded_size)
    params["cls_b1_l1"] = _init_linear(keys[4], encoded_size, encoded_size)
    params["cls_b1_l2"] = _init_linear(keys[5], encoded_size, encoded_size)
    params["cls_b2_l1"] = _init_linear(keys[6], encoded_size, encoded_size)
    params["cls_b2_l2"] = _init_linear(keys[7], encoded_size, encoded_size)
    params["cls_head"] = _init_linear(keys[8], encoded_size, n_classes)
    return params


# ---------------------------------------------------------------------------
# Forward pass
# ---------------------------------------------------------------------------
def cnn90_forward(params, x_nchw):
    # NCHW (PyTorch) -> CNHW: channels on sublanes, pixels on lanes (lane-dense)
    x = jnp.transpose(x_nchw.astype(jnp.float32), (1, 0, 2, 3))

    # Encoder90 conv stack (each call: conv + ReLU + pool fused in one kernel)
    x = conv3x3_relu_pool2(x, *params["conv1"])   # (8,  N, 45, 45)
    x = conv3x3_relu_pool2(x, *params["conv2"])   # (16, N, 22, 22)
    x = conv3x3_relu_pool2(x, *params["conv3"])   # (32, N, 11, 11)

    # flatten in torch NCHW order: (C, N, H, W) -> (N, C, H, W) -> (N, C*H*W)
    n = x.shape[1]
    flat = jnp.transpose(x, (1, 0, 2, 3)).reshape(n, -1).astype(jnp.bfloat16)

    # Encoder FC + Classifier (2 double blocks + head) in a single kernel
    layers = [params["enc_fc"],
              params["cls_b1_l1"], params["cls_b1_l2"],
              params["cls_b2_l1"], params["cls_b2_l2"],
              params["cls_head"]]
    n_classes = params["cls_head"][0].shape[1]
    return mlp_forward(flat, layers, n_classes)


if __name__ == "__main__":
    batch, n_channels, hw = 2, 3, 90
    encoded_size, n_classes = 64, 10

    key = jax.random.PRNGKey(0)
    k_x, k_p = jax.random.split(key)
    x = jax.random.normal(k_x, (batch, n_channels, hw, hw), dtype=jnp.float32)
    params = init_cnn90_params(k_p, n_channels, encoded_size, n_classes)

    fwd = jax.jit(cnn90_forward)
    logits = fwd(params, x)
    jax.block_until_ready(logits)
    assert logits.shape == (batch, n_classes)
    print("KERNEL_OK")
</pallas_src>

<mosaic_0001>
module attributes {stable_mosaic.version = 11 : i64} {
  func.func @_conv_relu_pool_kernel(%arg0: i32, %arg1: memref<4x27x2048xbf16, #tpu.memory_space<vmem>>, %arg2: memref<8x27xbf16, #tpu.memory_space<vmem>>, %arg3: memref<8x1xf32, #tpu.memory_space<vmem>>, %arg4: memref<8x2048xf32, #tpu.memory_space<vmem>>) attributes {dimension_semantics = [#tpu.dimension_semantics<parallel>], iteration_bounds = array<i64: 2>, scalar_prefetch = 0 : i64, scratch_operands = 0 : i64, tpu.core_type = #tpu.core_type<tc>, window_params = [{transform_indices = @transform_0, window_bounds = array<i64: 4, 27, 2048>}, {pipeline_mode = #tpu.pipeline_mode<synchronous>, transform_indices = @transform_1, window_bounds = array<i64: 8, 27>}, {pipeline_mode = #tpu.pipeline_mode<synchronous>, transform_indices = @transform_2, window_bounds = array<i64: 8, 1>}, {transform_indices = @transform_3, window_bounds = array<i64: 8, 2048>}]} {
    %c0 = arith.constant 0 : index
    %c0_0 = arith.constant 0 : index
    %0 = vector.load %arg2[%c0, %c0_0] : memref<8x27xbf16, #tpu.memory_space<vmem>>, vector<8x27xbf16>
    %c0_1 = arith.constant 0 : index
    %c0_2 = arith.constant 0 : index
    %c0_3 = arith.constant 0 : index
    %1 = vector.load %arg1[%c0_1, %c0_2, %c0_3] : memref<4x27x2048xbf16, #tpu.memory_space<vmem>>, vector<1x27x2048xbf16>
    %2 = vector.shape_cast %1 : vector<1x27x2048xbf16> to vector<27x2048xbf16>
    %cst = arith.constant dense<0.000000e+00> : vector<8x2048xf32>
    %3 = tpu.matmul %0, %2, %cst {dimension_numbers = #tpu.dot_dimension_numbers<[1], [0], [0], [1], [0, 0, 1, 1], [], []>} : vector<8x27xbf16>, vector<27x2048xbf16>, vector<8x2048xf32> -> vector<8x2048xf32>
    %c1 = arith.constant 1 : index
    %c0_4 = arith.constant 0 : index
    %c0_5 = arith.constant 0 : index
    %4 = vector.load %arg1[%c1, %c0_4, %c0_5] : memref<4x27x2048xbf16, #tpu.memory_space<vmem>>, vector<1x27x2048xbf16>
    %5 = vector.shape_cast %4 : vector<1x27x2048xbf16> to vector<27x2048xbf16>
    %cst_6 = arith.constant dense<0.000000e+00> : vector<8x2048xf32>
    %6 = tpu.matmul %0, %5, %cst_6 {dimension_numbers = #tpu.dot_dimension_numbers<[1], [0], [0], [1], [0, 0, 1, 1], [], []>} : vector<8x27xbf16>, vector<27x2048xbf16>, vector<8x2048xf32> -> vector<8x2048xf32>
    %7 = arith.maximumf %3, %6 : vector<8x2048xf32>
    %c2 = arith.constant 2 : index
    %c0_7 = arith.constant 0 : index
    %c0_8 = arith.constant 0 : index
    %8 = vector.load %arg1[%c2, %c0_7, %c0_8] : memref<4x27x2048xbf16, #tpu.memory_space<vmem>>, vector<1x27x2048xbf16>
    %9 = vector.shape_cast %8 : vector<1x27x2048xbf16> to vector<27x2048xbf16>
    %cst_9 = arith.constant dense<0.000000e+00> : vector<8x2048xf32>
    %10 = tpu.matmul %0, %9, %cst_9 {dimension_numbers = #tpu.dot_dimension_numbers<[1], [0], [0], [1], [0, 0, 1, 1], [], []>} : vector<8x27xbf16>, vector<27x2048xbf16>, vector<8x2048xf32> -> vector<8x2048xf32>
    %11 = arith.maximumf %7, %10 : vector<8x2048xf32>
    %c3 = arith.constant 3 : index
    %c0_10 = arith.constant 0 : index
    %c0_11 = arith.constant 0 : index
    %12 = vector.load %arg1[%c3, %c0_10, %c0_11] : memref<4x27x2048xbf16, #tpu.memory_space<vmem>>, vector<1x27x2048xbf16>
    %13 = vector.shape_cast %12 : vector<1x27x2048xbf16> to vector<27x2048xbf16>
    %cst_12 = arith.constant dense<0.000000e+00> : vector<8x2048xf32>
    %14 = tpu.matmul %0, %13, %cst_12 {dimension_numbers = #tpu.dot_dimension_numbers<[1], [0], [0], [1], [0, 0, 1, 1], [], []>} : vector<8x27xbf16>, vector<27x2048xbf16>, vector<8x2048xf32> -> vector<8x2048xf32>
    %15 = arith.maximumf %11, %14 : vector<8x2048xf32>
    %c0_13 = arith.constant 0 : index
    %c0_14 = arith.constant 0 : index
    %16 = vector.load %arg3[%c0_13, %c0_14] : memref<8x1xf32, #tpu.memory_space<vmem>>, vector<8x1xf32>
    %17 = vector.broadcast %16 : vector<8x1xf32> to vector<8x2048xf32>
    %18 = arith.addf %15, %17 : vector<8x2048xf32>
    %cst_15 = arith.constant 0.000000e+00 : f32
    %19 = vector.broadcast %cst_15 : f32 to vector<8x2048xf32>
    %20 = arith.maximumf %18, %19 : vector<8x2048xf32>
    %c0_16 = arith.constant 0 : index
    %c0_17 = arith.constant 0 : index
    %21 = vector.load %arg4[%c0_16, %c0_17] : memref<8x2048xf32, #tpu.memory_space<vmem>>, vector<8x2048xf32>
    tpu.vector_store %arg4[%c0_16, %c0_17], %20 {strides = array<i32>} : memref<8x2048xf32, #tpu.memory_space<vmem>>, vector<8x2048xf32>,
    return
  }
  func.func @transform_0(%arg0: i32) -> (i32, i32, i32) {
    %c0_i32 = arith.constant 0 : i32
    %c0_i32_0 = arith.constant 0 : i32
    %c0_i32_1 = arith.constant 0 : i32
    return %c0_i32, %c0_i32_0, %arg0 : i32, i32, i32
  }
  func.func @transform_1(%arg0: i32) -> (i32, i32) {
    %c0_i32 = arith.constant 0 : i32
    %c0_i32_0 = arith.constant 0 : i32
    %c0_i32_1 = arith.constant 0 : i32
    return %c0_i32, %c0_i32_0 : i32, i32
  }
  func.func @transform_2(%arg0: i32) -> (i32, i32) {
    %c0_i32 = arith.constant 0 : i32
    %c0_i32_0 = arith.constant 0 : i32
    %c0_i32_1 = arith.constant 0 : i32
    return %c0_i32, %c0_i32_0 : i32, i32
  }
  func.func @transform_3(%arg0: i32) -> (i32, i32) {
    %c0_i32 = arith.constant 0 : i32
    %c0_i32_0 = arith.constant 0 : i32
    return %c0_i32, %arg0 : i32, i32
  }
}

module attributes {stable_mosaic.version = 11 : i64} {
  func.func @_conv_relu_pool_kernel(%arg0: i32, %arg1: memref<4x72x1024xbf16, #tpu.memory_space<vmem>>, %arg2: memref<16x72xbf16, #tpu.memory_space<vmem>>, %arg3: memref<16x1xf32, #tpu.memory_space<vmem>>, %arg4: memref<16x1024xf32, #tpu.memory_space<vmem>>) attributes {dimension_semantics = [#tpu.dimension_semantics<parallel>], iteration_bounds = array<i64: 1>, scalar_prefetch = 0 : i64, scratch_operands = 0 : i64, tpu.core_type = #tpu.core_type<tc>, window_params = [{transform_indices = @transform_0, window_bounds = array<i64: 4, 72, 1024>}, {pipeline_mode = #tpu.pipeline_mode<synchronous>, transform_indices = @transform_1, window_bounds = array<i64: 16, 72>}, {pipeline_mode = #tpu.pipeline_mode<synchronous>, transform_indices = @transform_2, window_bounds = array<i64: 16, 1>}, {transform_indices = @transform_3, window_bounds = array<i64: 16, 1024>}]} {
    %c0 = arith.constant 0 : index
    %c0_0 = arith.constant 0 : index
    %0 = vector.load %arg2[%c0, %c0_0] : memref<16x72xbf16, #tpu.memory_space<vmem>>, vector<16x72xbf16>
    %c0_1 = arith.constant 0 : index
    %c0_2 = arith.constant 0 : index
    %c0_3 = arith.constant 0 : index
    %1 = vector.load %arg1[%c0_1, %c0_2, %c0_3] : memref<4x72x1024xbf16, #tpu.memory_space<vmem>>, vector<1x72x1024xbf16>
    %2 = vector.shape_cast %1 : vector<1x72x1024xbf16> to vector<72x1024xbf16>
    %cst = arith.constant dense<0.000000e+00> : vector<16x1024xf32>
    %3 = tpu.matmul %0, %2, %cst {dimension_numbers = #tpu.dot_dimension_numbers<[1], [0], [0], [1], [0, 0, 1, 1], [], []>} : vector<16x72xbf16>, vector<72x1024xbf16>, vector<16x1024xf32> -> vector<16x1024xf32>
    %c1 = arith.constant 1 : index
    %c0_4 = arith.constant 0 : index
    %c0_5 = arith.constant 0 : index
    %4 = vector.load %arg1[%c1, %c0_4, %c0_5] : memref<4x72x1024xbf16, #tpu.memory_space<vmem>>, vector<1x72x1024xbf16>
    %5 = vector.shape_cast %4 : vector<1x72x1024xbf16> to vector<72x1024xbf16>
    %cst_6 = arith.constant dense<0.000000e+00> : vector<16x1024xf32>
    %6 = tpu.matmul %0, %5, %cst_6 {dimension_numbers = #tpu.dot_dimension_numbers<[1], [0], [0], [1], [0, 0, 1, 1], [], []>} : vector<16x72xbf16>, vector<72x1024xbf16>, vector<16x1024xf32> -> vector<16x1024xf32>
    %7 = arith.maximumf %3, %6 : vector<16x1024xf32>
    %c2 = arith.constant 2 : index
    %c0_7 = arith.constant 0 : index
    %c0_8 = arith.constant 0 : index
    %8 = vector.load %arg1[%c2, %c0_7, %c0_8] : memref<4x72x1024xbf16, #tpu.memory_space<vmem>>, vector<1x72x1024xbf16>
    %9 = vector.shape_cast %8 : vector<1x72x1024xbf16> to vector<72x1024xbf16>
    %cst_9 = arith.constant dense<0.000000e+00> : vector<16x1024xf32>
    %10 = tpu.matmul %0, %9, %cst_9 {dimension_numbers = #tpu.dot_dimension_numbers<[1], [0], [0], [1], [0, 0, 1, 1], [], []>} : vector<16x72xbf16>, vector<72x1024xbf16>, vector<16x1024xf32> -> vector<16x1024xf32>
    %11 = arith.maximumf %7, %10 : vector<16x1024xf32>
    %c3 = arith.constant 3 : index
    %c0_10 = arith.constant 0 : index
    %c0_11 = arith.constant 0 : index
    %12 = vector.load %arg1[%c3, %c0_10, %c0_11] : memref<4x72x1024xbf16, #tpu.memory_space<vmem>>, vector<1x72x1024xbf16>
    %13 = vector.shape_cast %12 : vector<1x72x1024xbf16> to vector<72x1024xbf16>
    %cst_12 = arith.constant dense<0.000000e+00> : vector<16x1024xf32>
    %14 = tpu.matmul %0, %13, %cst_12 {dimension_numbers = #tpu.dot_dimension_numbers<[1], [0], [0], [1], [0, 0, 1, 1], [], []>} : vector<16x72xbf16>, vector<72x1024xbf16>, vector<16x1024xf32> -> vector<16x1024xf32>
    %15 = arith.maximumf %11, %14 : vector<16x1024xf32>
    %c0_13 = arith.constant 0 : index
    %c0_14 = arith.constant 0 : index
    %16 = vector.load %arg3[%c0_13, %c0_14] : memref<16x1xf32, #tpu.memory_space<vmem>>, vector<16x1xf32>
    %17 = vector.broadcast %16 : vector<16x1xf32> to vector<16x1024xf32>
    %18 = arith.addf %15, %17 : vector<16x1024xf32>
    %cst_15 = arith.constant 0.000000e+00 : f32
    %19 = vector.broadcast %cst_15 : f32 to vector<16x1024xf32>
    %20 = arith.maximumf %18, %19 : vector<16x1024xf32>
    %c0_16 = arith.constant 0 : index
    %c0_17 = arith.constant 0 : index
    %21 = vector.load %arg4[%c0_16, %c0_17] : memref<16x1024xf32, #tpu.memory_space<vmem>>, vector<16x1024xf32>
    tpu.vector_store %arg4[%c0_16, %c0_17], %20 {strides = array<i32>} : memref<16x1024xf32, #tpu.memory_space<vmem>>, vector<16x1024xf32>,
    return
  }
  func.func @transform_0(%arg0: i32) -> (i32, i32, i32) {
    %c0_i32 = arith.constant 0 : i32
    %c0_i32_0 = arith.constant 0 : i32
    %c0_i32_1 = arith.constant 0 : i32
    return %c0_i32, %c0_i32_0, %arg0 : i32, i32, i32
  }
  func.func @transform_1(%arg0: i32) -> (i32, i32) {
    %c0_i32 = arith.constant 0 : i32
    %c0_i32_0 = arith.constant 0 : i32
    %c0_i32_1 = arith.constant 0 : i32
    return %c0_i32, %c0_i32_0 : i32, i32
  }
  func.func @transform_2(%arg0: i32) -> (i32, i32) {
    %c0_i32 = arith.constant 0 : i32
    %c0_i32_0 = arith.constant 0 : i32
    %c0_i32_1 = arith.constant 0 : i32
    return %c0_i32, %c0_i32_0 : i32, i32
  }
  func.func @transform_3(%arg0: i32) -> (i32, i32) {
    %c0_i32 = arith.constant 0 : i32
    %c0_i32_0 = arith.constant 0 : i32
    return %c0_i32, %arg0 : i32, i32
  }
}

module attributes {stable_mosaic.version = 11 : i64} {
  func.func @_conv_relu_pool_kernel(%arg0: i32, %arg1: memref<4x144x256xbf16, #tpu.memory_space<vmem>>, %arg2: memref<32x144xbf16, #tpu.memory_space<vmem>>, %arg3: memref<32x1xf32, #tpu.memory_space<vmem>>, %arg4: memref<32x256xf32, #tpu.memory_space<vmem>>) attributes {dimension_semantics = [#tpu.dimension_semantics<parallel>], iteration_bounds = array<i64: 1>, scalar_prefetch = 0 : i64, scratch_operands = 0 : i64, tpu.core_type = #tpu.core_type<tc>, window_params = [{transform_indices = @transform_0, window_bounds = array<i64: 4, 144, 256>}, {pipeline_mode = #tpu.pipeline_mode<synchronous>, transform_indices = @transform_1, window_bounds = array<i64: 32, 144>}, {pipeline_mode = #tpu.pipeline_mode<synchronous>, transform_indices = @transform_2, window_bounds = array<i64: 32, 1>}, {transform_indices = @transform_3, window_bounds = array<i64: 32, 256>}]} {
    %c0 = arith.constant 0 : index
    %c0_0 = arith.constant 0 : index
    %0 = vector.load %arg2[%c0, %c0_0] : memref<32x144xbf16, #tpu.memory_space<vmem>>, vector<32x144xbf16>
    %c0_1 = arith.constant 0 : index
    %c0_2 = arith.constant 0 : index
    %c0_3 = arith.constant 0 : index
    %1 = vector.load %arg1[%c0_1, %c0_2, %c0_3] : memref<4x144x256xbf16, #tpu.memory_space<vmem>>, vector<1x144x256xbf16>
    %2 = vector.shape_cast %1 : vector<1x144x256xbf16> to vector<144x256xbf16>
    %cst = arith.constant dense<0.000000e+00> : vector<32x256xf32>
    %3 = tpu.matmul %0, %2, %cst {dimension_numbers = #tpu.dot_dimension_numbers<[1], [0], [0], [1], [0, 0, 1, 1], [], []>} : vector<32x144xbf16>, vector<144x256xbf16>, vector<32x256xf32> -> vector<32x256xf32>
    %c1 = arith.constant 1 : index
    %c0_4 = arith.constant 0 : index
    %c0_5 = arith.constant 0 : index
    %4 = vector.load %arg1[%c1, %c0_4, %c0_5] : memref<4x144x256xbf16, #tpu.memory_space<vmem>>, vector<1x144x256xbf16>
    %5 = vector.shape_cast %4 : vector<1x144x256xbf16> to vector<144x256xbf16>
    %cst_6 = arith.constant dense<0.000000e+00> : vector<32x256xf32>
    %6 = tpu.matmul %0, %5, %cst_6 {dimension_numbers = #tpu.dot_dimension_numbers<[1], [0], [0], [1], [0, 0, 1, 1], [], []>} : vector<32x144xbf16>, vector<144x256xbf16>, vector<32x256xf32> -> vector<32x256xf32>
    %7 = arith.maximumf %3, %6 : vector<32x256xf32>
    %c2 = arith.constant 2 : index
    %c0_7 = arith.constant 0 : index
    %c0_8 = arith.constant 0 : index
    %8 = vector.load %arg1[%c2, %c0_7, %c0_8] : memref<4x144x256xbf16, #tpu.memory_space<vmem>>, vector<1x144x256xbf16>
    %9 = vector.shape_cast %8 : vector<1x144x256xbf16> to vector<144x256xbf16>
    %cst_9 = arith.constant dense<0.000000e+00> : vector<32x256xf32>
    %10 = tpu.matmul %0, %9, %cst_9 {dimension_numbers = #tpu.dot_dimension_numbers<[1], [0], [0], [1], [0, 0, 1, 1], [], []>} : vector<32x144xbf16>, vector<144x256xbf16>, vector<32x256xf32> -> vector<32x256xf32>
    %11 = arith.maximumf %7, %10 : vector<32x256xf32>
    %c3 = arith.constant 3 : index
    %c0_10 = arith.constant 0 : index
    %c0_11 = arith.constant 0 : index
    %12 = vector.load %arg1[%c3, %c0_10, %c0_11] : memref<4x144x256xbf16, #tpu.memory_space<vmem>>, vector<1x144x256xbf16>
    %13 = vector.shape_cast %12 : vector<1x144x256xbf16> to vector<144x256xbf16>
    %cst_12 = arith.constant dense<0.000000e+00> : vector<32x256xf32>
    %14 = tpu.matmul %0, %13, %cst_12 {dimension_numbers = #tpu.dot_dimension_numbers<[1], [0], [0], [1], [0, 0, 1, 1], [], []>} : vector<32x144xbf16>, vector<144x256xbf16>, vector<32x256xf32> -> vector<32x256xf32>
    %15 = arith.maximumf %11, %14 : vector<32x256xf32>
    %c0_13 = arith.constant 0 : index
    %c0_14 = arith.constant 0 : index
    %16 = vector.load %arg3[%c0_13, %c0_14] : memref<32x1xf32, #tpu.memory_space<vmem>>, vector<32x1xf32>
    %17 = vector.broadcast %16 : vector<32x1xf32> to vector<32x256xf32>
    %18 = arith.addf %15, %17 : vector<32x256xf32>
    %cst_15 = arith.constant 0.000000e+00 : f32
    %19 = vector.broadcast %cst_15 : f32 to vector<32x256xf32>
    %20 = arith.maximumf %18, %19 : vector<32x256xf32>
    %c0_16 = arith.constant 0 : index
    %c0_17 = arith.constant 0 : index
    %21 = vector.load %arg4[%c0_16, %c0_17] : memref<32x256xf32, #tpu.memory_space<vmem>>, vector<32x256xf32>
    tpu.vector_store %arg4[%c0_16, %c0_17], %20 {strides = array<i32>} : memref<32x256xf32, #tpu.memory_space<vmem>>, vector<32x256xf32>,
    return
  }
  func.func @transform_0(%arg0: i32) -> (i32, i32, i32) {
    %c0_i32 = arith.constant 0 : i32
    %c0_i32_0 = arith.constant 0 : i32
    %c0_i32_1 = arith.constant 0 : i32
    return %c0_i32, %c0_i32_0, %arg0 : i32, i32, i32
  }
  func.func @transform_1(%arg0: i32) -> (i32, i32) {
    %c0_i32 = arith.constant 0 : i32
    %c0_i32_0 = arith.constant 0 : i32
    %c0_i32_1 = arith.constant 0 : i32
    return %c0_i32, %c0_i32_0 : i32, i32
  }
  func.func @transform_2(%arg0: i32) -> (i32, i32) {
    %c0_i32 = arith.constant 0 : i32
    %c0_i32_0 = arith.constant 0 : i32
    %c0_i32_1 = arith.constant 0 : i32
    return %c0_i32, %c0_i32_0 : i32, i32
  }
  func.func @transform_3(%arg0: i32) -> (i32, i32) {
    %c0_i32 = arith.constant 0 : i32
    %c0_i32_0 = arith.constant 0 : i32
    return %c0_i32, %arg0 : i32, i32
  }
}

module attributes {stable_mosaic.version = 11 : i64} {
  func.func @_mlp_kernel(%arg0: i32, %arg1: memref<2x3872xbf16, #tpu.memory_space<vmem>>, %arg2: memref<3872x64xbf16, #tpu.memory_space<vmem>>, %arg3: memref<1x64xf32, #tpu.memory_space<vmem>>, %arg4: memref<64x64xbf16, #tpu.memory_space<vmem>>, %arg5: memref<1x64xf32, #tpu.memory_space<vmem>>, %arg6: memref<64x64xbf16, #tpu.memory_space<vmem>>, %arg7: memref<1x64xf32, #tpu.memory_space<vmem>>, %arg8: memref<64x64xbf16, #tpu.memory_space<vmem>>, %arg9: memref<1x64xf32, #tpu.memory_space<vmem>>, %arg10: memref<64x64xbf16, #tpu.memory_space<vmem>>, %arg11: memref<1x64xf32, #tpu.memory_space<vmem>>, %arg12: memref<64x10xbf16, #tpu.memory_space<vmem>>, %arg13: memref<1x10xf32, #tpu.memory_space<vmem>>, %arg14: memref<2x10xf32, #tpu.memory_space<vmem>>) attributes {dimension_semantics = [#tpu.dimension_semantics<arbitrary>], iteration_bounds = array<i64: 1>, scalar_prefetch = 0 : i64, scratch_operands = 0 : i64, tpu.core_type = #tpu.core_type<tc>, window_params = [{pipeline_mode = #tpu.pipeline_mode<synchronous>, transform_indices = @transform_0, window_bounds = array<i64: 2, 3872>}, {pipeline_mode = #tpu.pipeline_mode<synchronous>, transform_indices = @transform_1, window_bounds = array<i64: 3872, 64>}, {pipeline_mode = #tpu.pipeline_mode<synchronous>, transform_indices = @transform_2, window_bounds = array<i64: 1, 64>}, {pipeline_mode = #tpu.pipeline_mode<synchronous>, transform_indices = @transform_3, window_bounds = array<i64: 64, 64>}, {pipeline_mode = #tpu.pipeline_mode<synchronous>, transform_indices = @transform_4, window_bounds = array<i64: 1, 64>}, {pipeline_mode = #tpu.pipeline_mode<synchronous>, transform_indices = @transform_5, window_bounds = array<i64: 64, 64>}, {pipeline_mode = #tpu.pipeline_mode<synchronous>, transform_indices = @transform_6, window_bounds = array<i64: 1, 64>}, {pipeline_mode = #tpu.pipeline_mode<synchronous>, transform_indices = @transform_7, window_bounds = array<i64: 64, 64>}, {pipeline_mode = #tpu.pipeline_mode<synchronous>, transform_indices = @transform_8, window_bounds = array<i64: 1, 64>}, {pipeline_mode = #tpu.pipeline_mode<synchronous>, transform_indices = @transform_9, window_bounds = array<i64: 64, 64>}, {pipeline_mode = #tpu.pipeline_mode<synchronous>, transform_indices = @transform_10, window_bounds = array<i64: 1, 64>}, {pipeline_mode = #tpu.pipeline_mode<synchronous>, transform_indices = @transform_11, window_bounds = array<i64: 64, 10>}, {pipeline_mode = #tpu.pipeline_mode<synchronous>, transform_indices = @transform_12, window_bounds = array<i64: 1, 10>}, {pipeline_mode = #tpu.pipeline_mode<synchronous>, transform_indices = @transform_13, window_bounds = array<i64: 2, 10>}]} {
    %c0 = arith.constant 0 : index
    %c0_0 = arith.constant 0 : index
    %0 = vector.load %arg1[%c0, %c0_0] : memref<2x3872xbf16, #tpu.memory_space<vmem>>, vector<2x3872xbf16>
    %c0_1 = arith.constant 0 : index
    %c0_2 = arith.constant 0 : index
    %1 = vector.load %arg2[%c0_1, %c0_2] : memref<3872x64xbf16, #tpu.memory_space<vmem>>, vector<3872x64xbf16>
    %c0_3 = arith.constant 0 : index
    %c0_4 = arith.constant 0 : index
    %2 = vector.load %arg3[%c0_3, %c0_4] : memref<1x64xf32, #tpu.memory_space<vmem>>, vector<1x64xf32>
    %cst = arith.constant dense<0.000000e+00> : vector<2x64xf32>
    %3 = tpu.matmul %0, %1, %cst {dimension_numbers = #tpu.dot_dimension_numbers<[1], [0], [0], [1], [0, 0, 1, 1], [], []>} : vector<2x3872xbf16>, vector<3872x64xbf16>, vector<2x64xf32> -> vector<2x64xf32>
    %4 = vector.broadcast %2 : vector<1x64xf32> to vector<2x64xf32>
    %5 = arith.addf %3, %4 : vector<2x64xf32>
    %cst_5 = arith.constant 0.000000e+00 : f32
    %6 = vector.broadcast %cst_5 : f32 to vector<2x64xf32>
    %7 = arith.maximumf %5, %6 : vector<2x64xf32>
    %8 = arith.truncf %7 : vector<2x64xf32> to vector<2x64xbf16>
    %c0_6 = arith.constant 0 : index
    %c0_7 = arith.constant 0 : index
    %9 = vector.load %arg4[%c0_6, %c0_7] : memref<64x64xbf16, #tpu.memory_space<vmem>>, vector<64x64xbf16>
    %c0_8 = arith.constant 0 : index
    %c0_9 = arith.constant 0 : index
    %10 = vector.load %arg5[%c0_8, %c0_9] : memref<1x64xf32, #tpu.memory_space<vmem>>, vector<1x64xf32>
    %cst_10 = arith.constant dense<0.000000e+00> : vector<2x64xf32>
    %11 = tpu.matmul %8, %9, %cst_10 {dimension_numbers = #tpu.dot_dimension_numbers<[1], [0], [0], [1], [0, 0, 1, 1], [], []>} : vector<2x64xbf16>, vector<64x64xbf16>, vector<2x64xf32> -> vector<2x64xf32>
    %12 = vector.broadcast %10 : vector<1x64xf32> to vector<2x64xf32>
    %13 = arith.addf %11, %12 : vector<2x64xf32>
    %cst_11 = arith.constant 0.000000e+00 : f32
    %14 = vector.broadcast %cst_11 : f32 to vector<2x64xf32>
    %15 = arith.maximumf %13, %14 : vector<2x64xf32>
    %16 = arith.truncf %15 : vector<2x64xf32> to vector<2x64xbf16>
    %c0_12 = arith.constant 0 : index
    %c0_13 = arith.constant 0 : index
    %17 = vector.load %arg6[%c0_12, %c0_13] : memref<64x64xbf16, #tpu.memory_space<vmem>>, vector<64x64xbf16>
    %c0_14 = arith.constant 0 : index
    %c0_15 = arith.constant 0 : index
    %18 = vector.load %arg7[%c0_14, %c0_15] : memref<1x64xf32, #tpu.memory_space<vmem>>, vector<1x64xf32>
    %cst_16 = arith.constant dense<0.000000e+00> : vector<2x64xf32>
    %19 = tpu.matmul %16, %17, %cst_16 {dimension_numbers = #tpu.dot_dimension_numbers<[1], [0], [0], [1], [0, 0, 1, 1], [], []>} : vector<2x64xbf16>, vector<64x64xbf16>, vector<2x64xf32> -> vector<2x64xf32>
    %20 = vector.broadcast %18 : vector<1x64xf32> to vector<2x64xf32>
    %21 = arith.addf %19, %20 : vector<2x64xf32>
    %cst_17 = arith.constant 0.000000e+00 : f32
    %22 = vector.broadcast %cst_17 : f32 to vector<2x64xf32>
    %23 = arith.maximumf %21, %22 : vector<2x64xf32>
    %24 = arith.truncf %23 : vector<2x64xf32> to vector<2x64xbf16>
    %c0_18 = arith.constant 0 : index
    %c0_19 = arith.constant 0 : index
    %25 = vector.load %arg8[%c0_18, %c0_19] : memref<64x64xbf16, #tpu.memory_space<vmem>>, vector<64x64xbf16>
    %c0_20 = arith.constant 0 : index
    %c0_21 = arith.constant 0 : index
    %26 = vector.load %arg9[%c0_20, %c0_21] : memref<1x64xf32, #tpu.memory_space<vmem>>, vector<1x64xf32>
    %cst_22 = arith.constant dense<0.000000e+00> : vector<2x64xf32>
    %27 = tpu.matmul %24, %25, %cst_22 {dimension_numbers = #tpu.dot_dimension_numbers<[1], [0], [0], [1], [0, 0, 1, 1], [], []>} : vector<2x64xbf16>, vector<64x64xbf16>, vector<2x64xf32> -> vector<2x64xf32>
    %28 = vector.broadcast %26 : vector<1x64xf32> to vector<2x64xf32>
    %29 = arith.addf %27, %28 : vector<2x64xf32>
    %cst_23 = arith.constant 0.000000e+00 : f32
    %30 = vector.broadcast %cst_23 : f32 to vector<2x64xf32>
    %31 = arith.maximumf %29, %30 : vector<2x64xf32>
    %32 = arith.truncf %31 : vector<2x64xf32> to vector<2x64xbf16>
    %c0_24 = arith.constant 0 : index
    %c0_25 = arith.constant 0 : index
    %33 = vector.load %arg10[%c0_24, %c0_25] : memref<64x64xbf16, #tpu.memory_space<vmem>>, vector<64x64xbf16>
    %c0_26 = arith.constant 0 : index
    %c0_27 = arith.constant 0 : index
    %34 = vector.load %arg11[%c0_26, %c0_27] : memref<1x64xf32, #tpu.memory_space<vmem>>, vector<1x64xf32>
    %cst_28 = arith.constant dense<0.000000e+00> : vector<2x64xf32>
    %35 = tpu.matmul %32, %33, %cst_28 {dimension_numbers = #tpu.dot_dimension_numbers<[1], [0], [0], [1], [0, 0, 1, 1], [], []>} : vector<2x64xbf16>, vector<64x64xbf16>, vector<2x64xf32> -> vector<2x64xf32>
    %36 = vector.broadcast %34 : vector<1x64xf32> to vector<2x64xf32>
    %37 = arith.addf %35, %36 : vector<2x64xf32>
    %cst_29 = arith.constant 0.000000e+00 : f32
    %38 = vector.broadcast %cst_29 : f32 to vector<2x64xf32>
    %39 = arith.maximumf %37, %38 : vector<2x64xf32>
    %40 = arith.truncf %39 : vector<2x64xf32> to vector<2x64xbf16>
    %c0_30 = arith.constant 0 : index
    %c0_31 = arith.constant 0 : index
    %41 = vector.load %arg12[%c0_30, %c0_31] : memref<64x10xbf16, #tpu.memory_space<vmem>>, vector<64x10xbf16>
    %c0_32 = arith.constant 0 : index
    %c0_33 = arith.constant 0 : index
    %42 = vector.load %arg13[%c0_32, %c0_33] : memref<1x10xf32, #tpu.memory_space<vmem>>, vector<1x10xf32>
    %cst_34 = arith.constant dense<0.000000e+00> : vector<2x10xf32>
    %43 = tpu.matmul %40, %41, %cst_34 {dimension_numbers = #tpu.dot_dimension_numbers<[1], [0], [0], [1], [0, 0, 1, 1], [], []>} : vector<2x64xbf16>, vector<64x10xbf16>, vector<2x10xf32> -> vector<2x10xf32>
    %44 = vector.broadcast %42 : vector<1x10xf32> to vector<2x10xf32>
    %45 = arith.addf %43, %44 : vector<2x10xf32>
    %c0_35 = arith.constant 0 : index
    %c0_36 = arith.constant 0 : index
    %46 = vector.load %arg14[%c0_35, %c0_36] : memref<2x10xf32, #tpu.memory_space<vmem>>, vector<2x10xf32>
    tpu.vector_store %arg14[%c0_35, %c0_36], %45 {strides = array<i32>} : memref<2x10xf32, #tpu.memory_space<vmem>>, vector<2x10xf32>,
    return
  }
  func.func @transform_0(%arg0: i32) -> (i32, i32) {
    %c0_i32 = arith.constant 0 : i32
    %c0_i32_0 = arith.constant 0 : i32
    %c0_i32_1 = arith.constant 0 : i32
    return %c0_i32, %c0_i32_0 : i32, i32
  }
  func.func @transform_1(%arg0: i32) -> (i32, i32) {
    %c0_i32 = arith.constant 0 : i32
    %c0_i32_0 = arith.constant 0 : i32
    %c0_i32_1 = arith.constant 0 : i32
    return %c0_i32, %c0_i32_0 : i32, i32
  }
  func.func @transform_2(%arg0: i32) -> (i32, i32) {
    %c0_i32 = arith.constant 0 : i32
    %c0_i32_0 = arith.constant 0 : i32
    %c0_i32_1 = arith.constant 0 : i32
    return %c0_i32, %c0_i32_0 : i32, i32
  }
  func.func @transform_3(%arg0: i32) -> (i32, i32) {
    %c0_i32 = arith.constant 0 : i32
    %c0_i32_0 = arith.constant 0 : i32
    %c0_i32_1 = arith.constant 0 : i32
    return %c0_i32, %c0_i32_0 : i32, i32
  }
  func.func @transform_4(%arg0: i32) -> (i32, i32) {
    %c0_i32 = arith.constant 0 : i32
    %c0_i32_0 = arith.constant 0 : i32
    %c0_i32_1 = arith.constant 0 : i32
    return %c0_i32, %c0_i32_0 : i32, i32
  }
  func.func @transform_5(%arg0: i32) -> (i32, i32) {
    %c0_i32 = arith.constant 0 : i32
    %c0_i32_0 = arith.constant 0 : i32
    %c0_i32_1 = arith.constant 0 : i32
    return %c0_i32, %c0_i32_0 : i32, i32
  }
  func.func @transform_6(%arg0: i32) -> (i32, i32) {
    %c0_i32 = arith.constant 0 : i32
    %c0_i32_0 = arith.constant 0 : i32
    %c0_i32_1 = arith.constant 0 : i32
    return %c0_i32, %c0_i32_0 : i32, i32
  }
  func.func @transform_7(%arg0: i32) -> (i32, i32) {
    %c0_i32 = arith.constant 0 : i32
    %c0_i32_0 = arith.constant 0 : i32
    %c0_i32_1 = arith.constant 0 : i32
    return %c0_i32, %c0_i32_0 : i32, i32
  }
  func.func @transform_8(%arg0: i32) -> (i32, i32) {
    %c0_i32 = arith.constant 0 : i32
    %c0_i32_0 = arith.constant 0 : i32
    %c0_i32_1 = arith.constant 0 : i32
    return %c0_i32, %c0_i32_0 : i32, i32
  }
  func.func @transform_9(%arg0: i32) -> (i32, i32) {
    %c0_i32 = arith.constant 0 : i32
    %c0_i32_0 = arith.constant 0 : i32
    %c0_i32_1 = arith.constant 0 : i32
    return %c0_i32, %c0_i32_0 : i32, i32
  }
  func.func @transform_10(%arg0: i32) -> (i32, i32) {
    %c0_i32 = arith.constant 0 : i32
    %c0_i32_0 = arith.constant 0 : i32
    %c0_i32_1 = arith.constant 0 : i32
    return %c0_i32, %c0_i32_0 : i32, i32
  }
  func.func @transform_11(%arg0: i32) -> (i32, i32) {
    %c0_i32 = arith.constant 0 : i32
    %c0_i32_0 = arith.constant 0 : i32
    %c0_i32_1 = arith.constant 0 : i32
    return %c0_i32, %c0_i32_0 : i32, i32
  }
  func.func @transform_12(%arg0: i32) -> (i32, i32) {
    %c0_i32 = arith.constant 0 : i32
    %c0_i32_0 = arith.constant 0 : i32
    %c0_i32_1 = arith.constant 0 : i32
    return %c0_i32, %c0_i32_0 : i32, i32
  }
  func.func @transform_13(%arg0: i32) -> (i32, i32) {
    %c0_i32 = arith.constant 0 : i32
    %c0_i32_0 = arith.constant 0 : i32
    %c0_i32_1 = arith.constant 0 : i32
    return %c0_i32, %c0_i32_0 : i32, i32
  }
}

</mosaic_0001>

<llo_original>
// kernel: cnn90_forward.4
$region0: #{cnn90_forward.4}
  #allocation0 [shape = 'u32[]', space=smem, size = 0x4, offset = 0x4, fixed_abs, tag = 'smem constant byte address 0x4 - core index']
  #allocation1 [shape = 'u32[72,128]{1,0:T(1,128)}', space=vmem, size = 0x9000, scoped, tag = 'internal scratch']
  %s0 = inlined_call_operand.vmem [shape: bf16[4,27,4096], index: 0, kind: input, shape index: {}]
  %s1 = inlined_call_operand.vmem [shape: bf16[8,27], index: 1, kind: input, shape index: {}]
  %s2 = inlined_call_operand.vmem [shape: f32[8,1], index: 2, kind: input, shape index: {}]
  %s3 = inlined_call_operand.vmem [shape: f32[8,4096], index: 3, kind: output, shape index: {}]
  %s4 = sld [smem:[#allocation0]]
  $region68: #{cnn90_forward.4} parent=0
    _
  %s6 = ssub.s32 1, %s4
  %s7 = scalar_select 0, %s6, %s4
  $region1: #{cnn90_forward.4} parent=0
    #allocation2 [shape = 'u8[1048576]{0}', space=vmem, size = 0x100000, scoped, tag = 'input window, operand 0']
    loop: start=0, step=1, limit=4
    $region2: #{cnn90_forward.4} parent=1 // loop_pre_header
      _
    $region3: #{cnn90_forward.4} parent=1 // loop_header
      %s9 = sphi 0, %s13
      %p10 = scmp.ge.s32.totalorder %s9, 4
      %s19 = sphi 0, %s21
      %s22 = sphi 0, %s19
      %s23 = sphi 0, %s22
      %s39 = sphi 0, %s23
      %s43 = sphi 0, %s43
      %s45 = sphi 0, %s43
      %s46 = sphi 0, %s45
      %s60 = sphi 0, %s46
      %s64 = sphi 0, %s64
      %s66 = sphi 0, %s64
      %s67 = sphi 0, %s66
      %s81 = sphi 0, %s67
      %s87 = sphi 0, %s89
      %s90 = sphi 0, %s87
      %s91 = sphi 0, %s90
      %s107 = sphi 0, %s91
    $region4: #{cnn90_forward.4} parent=1 // loop_header_branch
      %12 = sbr.rel (%p10) target = $region8
    $region5: #{cnn90_forward.4} parent=1 // loop_body
      %s14 = ssub.s32 %s9, 1
      %s15 = ssub.s32 %s9, 2
      %s16 = sadd.s32 %s9, 1
      %s17 = ssub.s32 %s9, %s16
      %p18 = scmp.eq.s32.totalorder %s17, 0
      %s20 = sadd.s32 %s19, 1
      %s21 = scalar_select %p18, %s19, %s20
      %p24 = pneg %p18
      %p25 = scmp.eq.s32.totalorder %s9, 1
      %p26 = por %p24, %p25
      %p27 = scmp.ne.s32.totalorder %s19, %s22
      %p28 = scmp.eq.s32.totalorder %s9, 0
      %p29 = por %p27, %p28
      %p30 = scmp.ne.s32.totalorder %s19, %s22
      %p31 = scmp.eq.s32.totalorder %s14, 1
      %p32 = por %p30, %p31
      %p33 = scmp.ne.s32.totalorder %s22, %s23
      %p34 = scmp.eq.s32.totalorder %s14, 0
      %p35 = por %p33, %p34
      %p36 = scmp.ne.s32.totalorder %s22, %s23
      %p37 = scmp.eq.s32.totalorder %s15, 1
      %p38 = por %p36, %p37
      %p40 = scmp.ne.s32.totalorder %s23, %s39
      %p41 = scmp.eq.s32.totalorder %s15, 0
      %p42 = por %p40, %p41
      %s44 = sadd.s32 %s43, 1
      %p47 = scmp.eq.s32.totalorder %s9, 1
      %p48 = scmp.ne.s32.totalorder %s43, %s45
      %p49 = scmp.eq.s32.totalorder %s9, 0
      %p50 = por %p48, %p49
      %p51 = scmp.ne.s32.totalorder %s43, %s45
      %p52 = scmp.eq.s32.totalorder %s14, 1
      %p53 = por %p51, %p52
      %p54 = scmp.ne.s32.totalorder %s45, %s46
      %p55 = scmp.eq.s32.totalorder %s14, 0
      %p56 = por %p54, %p55
      %p57 = scmp.ne.s32.totalorder %s45, %s46
      %p58 = scmp.eq.s32.totalorder %s15, 1
      %p59 = por %p57, %p58
      %p61 = scmp.ne.s32.totalorder %s46, %s60
      %p62 = scmp.eq.s32.totalorder %s15, 0
      %p63 = por %p61, %p62
      %s65 = sadd.s32 %s64, 1
      %p68 = scmp.eq.s32.totalorder %s9, 1
      %p69 = scmp.ne.s32.totalorder %s64, %s66
      %p70 = scmp.eq.s32.totalorder %s9, 0
      %p71 = por %p69, %p70
      %p72 = scmp.ne.s32.totalorder %s64, %s66
      %p73 = scmp.eq.s32.totalorder %s14, 1
      %p74 = por %p72, %p73
      %p75 = scmp.ne.s32.totalorder %s66, %s67
      %p76 = scmp.eq.s32.totalorder %s14, 0
      %p77 = por %p75, %p76
      %p78 = scmp.ne.s32.totalorder %s66, %s67
      %p79 = scmp.eq.s32.totalorder %s15, 1
      %p80 = por %p78, %p79
      %p82 = scmp.ne.s32.totalorder %s67, %s81
      %p83 = scmp.eq.s32.totalorder %s15, 0
      %p84 = por %p82, %p83
      %s85 = ssub.s32 %s9, %s16
      %p86 = scmp.eq.s32.totalorder %s85, 0
      %s88 = sadd.s32 %s87, 1
      %s89 = scalar_select %p86, %s87, %s88
      %p92 = pneg %p86
      %p93 = scmp.eq.s32.totalorder %s9, 1
      %p94 = por %p92, %p93
      %p95 = scmp.ne.s32.totalorder %s87, %s90
      %p96 = scmp.eq.s32.totalorder %s9, 0
      %p97 = por %p95, %p96
      %p98 = scmp.ne.s32.totalorder %s87, %s90
      %p99 = scmp.eq.s32.totalorder %s14, 1
      %p100 = por %p98, %p99
      %p101 = scmp.ne.s32.totalorder %s90, %s91
      %p102 = scmp.eq.s32.totalorder %s14, 0
      %p103 = por %p101, %p102
      %p104 = scmp.ne.s32.totalorder %s90, %s91
      %p105 = scmp.eq.s32.totalorder %s15, 1
      %p106 = por %p104, %p105
      %p108 = scmp.ne.s32.totalorder %s91, %s107
      %p109 = scmp.eq.s32.totalorder %s15, 0
      %p110 = por %p108, %p109
      %p111 = scmp.le.s32.totalorder 1, %s9
      %p112 = scmp.lt.s32.totalorder %s9, 3
      %p113 = pnand %p111, %p112
      %p114 = pneg %p113
      // Predicated region
      $region9: #{cnn90_forward.4} parent=5 // pred_check
        _
      $region10: #{cnn90_forward.4} parent=5 // pred_check_branch
        %116 = sbr.rel (%p113) target = $region12
      $region11: #{cnn90_forward.4} parent=5 // pred_region
        %s117 = ssub.s32 %s9, 1
        // Predicated region
        $region13: #{cnn90_forward.4} parent=11 // pred_check
          %p118 = pneg %p56
        $region14: #{cnn90_forward.4} parent=11 // pred_check_branch
          %120 = sbr.rel (%p118) target = $region16
        $region15: #{cnn90_forward.4} parent=11 // pred_region
          _
        $region16: #{cnn90_forward.4} parent=11 // pred_fallthru
          _
        // Predicated region
        $region17: #{cnn90_forward.4} parent=11 // pred_check
          %p121 = pneg %p77
        $region18: #{cnn90_forward.4} parent=11 // pred_check_branch
          %123 = sbr.rel (%p121) target = $region20
        $region19: #{cnn90_forward.4} parent=11 // pred_region
          _
        $region20: #{cnn90_forward.4} parent=11 // pred_fallthru
          _
      $region12: #{cnn90_forward.4} parent=5 // pred_fallthru
        _
      %p124 = scmp.lt.s32.totalorder %s9, 2
      // Predicated region
      $region21: #{cnn90_forward.4} parent=5 // pred_check
        %p125 = pneg %p124
      $region22: #{cnn90_forward.4} parent=5 // pred_check_branch
        %127 = sbr.rel (%p125) target = $region24
      $region23: #{cnn90_forward.4} parent=5 // pred_region
        // Predicated region
        $region25: #{cnn90_forward.4} parent=23 // pred_check
          %p128 = pneg %p29
        $region26: #{cnn90_forward.4} parent=23 // pred_check_branch
          %130 = sbr.rel (%p128) target = $region28
        $region27: #{cnn90_forward.4} parent=23 // pred_region
          %s131 = sand.u32 %s19, 1
          %s132 = sand.u32 %s19, 1
          %s133 = smul.addr %s132, 1024
          %s134 = scalar_lea.vmem [#allocation2], %s133
          %s135 = smul.u32 16, %s9
          %s136 = smul.addr %s135, 4
          %s137 = scalar_lea.vmem %s0, %s136
          // Predicated region
          $region29: #{cnn90_forward.4} parent=27 // pred_check
            _
          $region30: #{cnn90_forward.4} parent=27 // pred_check_branch
            %139 = sbr.rel (0) target = $region32
          $region31: #{cnn90_forward.4} parent=27 // pred_region
            // Predicated region
            $region33: #{cnn90_forward.4} parent=31 // pred_check
              _
            $region34: #{cnn90_forward.4} parent=31 // pred_check_branch
              %141 = sbr.rel (0) target = $region36
            $region35: #{cnn90_forward.4} parent=31 // pred_region
              loop: start=0, step=1, limit=1
              $region37: #{cnn90_forward.4} parent=35 // loop_pre_header
                _
              $region38: #{cnn90_forward.4} parent=35 // loop_header
                %s143 = sphi 0, %s147
                %p144 = scmp.ge.s32.totalorder %s143, 1
                %s148 = sphi %s137, %s137
                %s149 = sphi %s134, %s134
              $region39: #{cnn90_forward.4} parent=35 // loop_header_branch
                %146 = sbr.rel (%p144) target = $region43
              $region40: #{cnn90_forward.4} parent=35 // loop_body
                %v150 = vld [vmem:[%s148] sm:$0xff]
                %151 = vst [vmem:[%s149] sm:$0xff] %v150
                %v152 = vld [vmem:[%s148 + $0x8] sm:$0xff]
                %153 = vst [vmem:[%s149 + $0x8] sm:$0xff] %v152
                %v154 = vld [vmem:[%s148 + $0x10] sm:$0xff]
                %155 = vst [vmem:[%s149 + $0x10] sm:$0xff] %v154
                %v156 = vld [vmem:[%s148 + $0x18] sm:$0xff]
                %157 = vst [vmem:[%s149 + $0x18] sm:$0xff] %v156
                %v158 = vld [vmem:[%s148 + $0x20] sm:$0xff]
                %159 = vst [vmem:[%s149 + $0x20] sm:$0xff] %v158
                %v160 = vld [vmem:[%s148 + $0x28] sm:$0xff]
                %161 = vst [vmem:[%s149 + $0x28] sm:$0xff] %v160
                %v162 = vld [vmem:[%s148 + $0x30] sm:$0xff]
                %163 = vst [vmem:[%s149 + $0x30] sm:$0xff] %v162
                %v164 = vld [vmem:[%s148 + $0x38] sm:$0xff]
                %165 = vst [vmem:[%s149 + $0x38] sm:$0xff] %v164
                %v166 = vld [vmem:[%s148 + $0x80] sm:$0xff]
                %167 = vst [vmem:[%s149 + $0x40] sm:$0xff] %v166
                %v168 = vld [vmem:[%s148 + $0x88] sm:$0xff]
                %169 = vst [vmem:[%s149 + $0x48] sm:$0xff] %v168
                %v170 = vld [vmem:[%s148 + $0x90] sm:$0xff]
                %171 = vst [vmem:[%s149 + $0x50] sm:$0xff] %v170
                %v172 = vld [vmem:[%s148 + $0x98] sm:$0xff]
                %173 = vst [vmem:[%s149 + $0x58] sm:$0xff] %v172
                %v174 = vld [vmem:[%s148 + $0xa0] sm:$0xff]
                %175 = vst [vmem:[%s149 + $0x60] sm:$0xff] %v174
                %v176 = vld [vmem:[%s148 + $0xa8] sm:$0xff]
                %177 = vst [vmem:[%s149 + $0x68] sm:$0xff] %v176
                %v178 = vld [vmem:[%s148 + $0xb0] sm:$0xff]
                %179 = vst [vmem:[%s149 + $0x70] sm:$0xff] %v178
                %v180 = vld [vmem:[%s148 + $0xb8] sm:$0xff]
                %181 = vst [vmem:[%s149 + $0x78] sm:$0xff] %v180
                %v182 = vld [vmem:[%s148 + $0x100] sm:$0xff]
                %183 = vst [vmem:[%s149 + $0x80] sm:$0xff] %v182
                %v184 = vld [vmem:[%s148 + $0x108] sm:$0xff]
                %185 = vst [vmem:[%s149 + $0x88] sm:$0xff] %v184
                %v186 = vld [vmem:[%s148 + $0x110] sm:$0xff]
                %187 = vst [vmem:[%s149 + $0x90] sm:$0xff] %v186
                %v188 = vld [vmem:[%s148 + $0x118] sm:$0xff]
                %189 = vst [vmem:[%s149 + $0x98] sm:$0xff] %v188
                %v190 = vld [vmem:[%s148 + $0x120] sm:$0xff]
                %191 = vst [vmem:[%s149 + $0xa0] sm:$0xff] %v190
                %v192 = vld [vmem:[%s148 + $0x128] sm:$0xff]
                %193 = vst [vmem:[%s149 + $0xa8] sm:$0xff] %v192
                %v194 = vld [vmem:[%s148 + $0x130] sm:$0xff]
                %195 = vst [vmem:[%s149 + $0xb0] sm:$0xff] %v194
                %v196 = vld [vmem:[%s148 + $0x138] sm:$0xff]
                %197 = vst [vmem:[%s149 + $0xb8] sm:$0xff] %v196
                %v198 = vld [vmem:[%s148 + $0x180] sm:$0xff]
                %199 = vst [vmem:[%s149 + $0xc0] sm:$0xff] %v198
                %v200 = vld [vmem:[%s148 + $0x188] sm:$0xff]
                %201 = vst [vmem:[%s149 + $0xc8] sm:$0xff] %v200
                %v202 = vld [vmem:[%s148 + $0x190] sm:$0xff]
                %203 = vst [vmem:[%s149 + $0xd0] sm:$0xff] %v202
                %v204 = vld [vmem:[%s148 + $0x198] sm:$0xff]
                %205 = vst [vmem:[%s149 + $0xd8] sm:$0xff] %v204
                %v206 = vld [vmem:[%s148 + $0x1a0] sm:$0xff]
                %207 = vst [vmem:[%s149 + $0xe0] sm:$0xff] %v206
                %v208 = vld [vmem:[%s148 + $0x1a8] sm:$0xff]
                %209 = vst [vmem:[%s149 + $0xe8] sm:$0xff] %v208
                %v210 = vld [vmem:[%s148 + $0x1b0] sm:$0xff]
                %211 = vst [vmem:[%s149 + $0xf0] sm:$0xff] %v210
                %v212 = vld [vmem:[%s148 + $0x1b8] sm:$0xff]
                %213 = vst [vmem:[%s149 + $0xf8] sm:$0xff] %v212
                %v214 = vld [vmem:[%s148 + $0x200] sm:$0xff]
                %215 = vst [vmem:[%s149 + $0x100] sm:$0xff] %v214
                %v216 = vld [vmem:[%s148 + $0x208] sm:$0xff]
                %217 = vst [vmem:[%s149 + $0x108] sm:$0xff] %v216
                %v218 = vld [vmem:[%s148 + $0x210] sm:$0xff]
                %219 = vst [vmem:[%s149 + $0x110] sm:$0xff] %v218
                %v220 = vld [vmem:[%s148 + $0x218] sm:$0xff]
                %221 = vst [vmem:[%s149 + $0x118] sm:$0xff] %v220
                %v222 = vld [vmem:[%s148 + $0x220] sm:$0xff]
                %223 = vst [vmem:[%s149 + $0x120] sm:$0xff] %v222
                %v224 = vld [vmem:[%s148 + $0x228] sm:$0xff]
                %225 = vst [vmem:[%s149 + $0x128] sm:$0xff] %v224
                %v226 = vld [vmem:[%s148 + $0x230] sm:$0xff]
                %227 = vst [vmem:[%s149 + $0x130] sm:$0xff] %v226
                %v228 = vld [vmem:[%s148 + $0x238] sm:$0xff]
                %229 = vst [vmem:[%s149 + $0x138] sm:$0xff] %v228
                %v230 = vld [vmem:[%s148 + $0x280] sm:$0xff]
                %231 = vst [vmem:[%s149 + $0x140] sm:$0xff] %v230
                %v232 = vld [vmem:[%s148 + $0x288] sm:$0xff]
                %233 = vst [vmem:[%s149 + $0x148] sm:$0xff] %v232
                %v234 = vld [vmem:[%s148 + $0x290] sm:$0xff]
                %235 = vst [vmem:[%s149 + $0x150] sm:$0xff] %v234
                %v236 = vld [vmem:[%s148 + $0x298] sm:$0xff]
                %237 = vst [vmem:[%s149 + $0x158] sm:$0xff] %v236
                %v238 = vld [vmem:[%s148 + $0x2a0] sm:$0xff]
                %239 = vst [vmem:[%s149 + $0x160] sm:$0xff] %v238
                %v240 = vld [vmem:[%s148 + $0x2a8] sm:$0xff]
                %241 = vst [vmem:[%s149 + $0x168] sm:$0xff] %v240
                %v242 = vld [vmem:[%s148 + $0x2b0] sm:$0xff]
                %243 = vst [vmem:[%s149 + $0x170] sm:$0xff] %v242
                %v244 = vld [vmem:[%s148 + $0x2b8] sm:$0xff]
                %245 = vst [vmem:[%s149 + $0x178] sm:$0xff] %v244
                %v246 = vld [vmem:[%s148 + $0x300] sm:$0xff]
                %247 = vst [vmem:[%s149 + $0x180] sm:$0xff] %v246
                %v248 = vld [vmem:[%s148 + $0x308] sm:$0xff]
                %249 = vst [vmem:[%s149 + $0x188] sm:$0xff] %v248
                %v250 = vld [vmem:[%s148 + $0x310] sm:$0xff]
                %251 = vst [vmem:[%s149 + $0x190] sm:$0xff] %v250
                %v252 = vld [vmem:[%s148 + $0x318] sm:$0xff]
                %253 = vst [vmem:[%s149 + $0x198] sm:$0xff] %v252
                %v254 = vld [vmem:[%s148 + $0x320] sm:$0xff]
                %255 = vst [vmem:[%s149 + $0x1a0] sm:$0xff] %v254
                %v256 = vld [vmem:[%s148 + $0x328] sm:$0xff]
                %257 = vst [vmem:[%s149 + $0x1a8] sm:$0xff] %v256
                %v258 = vld [vmem:[%s148 + $0x330] sm:$0xff]
                %259 = vst [vmem:[%s149 + $0x1b0] sm:$0xff] %v258
                %v260 = vld [vmem:[%s148 + $0x338] sm:$0xff]
                %261 = vst [vmem:[%s149 + $0x1b8] sm:$0xff] %v260
                %v262 = vld [vmem:[%s148 + $0x380] sm:$0xff]
                %263 = vst [vmem:[%s149 + $0x1c0] sm:$0xff] %v262
                %v264 = vld [vmem:[%s148 + $0x388] sm:$0xff]
                %265 = vst [vmem:[%s149 + $0x1c8] sm:$0xff] %v264
                %v266 = vld [vmem:[%s148 + $0x390] sm:$0xff]
                %267 = vst [vmem:[%s149 + $0x1d0] sm:$0xff] %v266
                %v268 = vld [vmem:[%s148 + $0x398] sm:$0xff]
                %269 = vst [vmem:[%s149 + $0x1d8] sm:$0xff] %v268
                %v270 = vld [vmem:[%s148 + $0x3a0] sm:$0xff]
                %271 = vst [vmem:[%s149 + $0x1e0] sm:$0xff] %v270
                %v272 = vld [vmem:[%s148 + $0x3a8] sm:$0xff]
                %273 = vst [vmem:[%s149 + $0x1e8] sm:$0xff] %v272
                %v274 = vld [vmem:[%s148 + $0x3b0] sm:$0xff]
                %275 = vst [vmem:[%s149 + $0x1f0] sm:$0xff] %v274
                %v276 = vld [vmem:[%s148 + $0x3b8] sm:$0xff]
                %277 = vst [vmem:[%s149 + $0x1f8] sm:$0xff] %v276
                %v278 = vld [vmem:[%s148 + $0x400] sm:$0xff]
                %279 = vst [vmem:[%s149 + $0x200] sm:$0xff] %v278
                %v280 = vld [vmem:[%s148 + $0x408] sm:$0xff]
                %281 = vst [vmem:[%s149 + $0x208] sm:$0xff] %v280
                %v282 = vld [vmem:[%s148 + $0x410] sm:$0xff]
                %283 = vst [vmem:[%s149 + $0x210] sm:$0xff] %v282
                %v284 = vld [vmem:[%s148 + $0x418] sm:$0xff]
                %285 = vst [vmem:[%s149 + $0x218] sm:$0xff] %v284
                %v286 = vld [vmem:[%s148 + $0x420] sm:$0xff]
                %287 = vst [vmem:[%s149 + $0x220] sm:$0xff] %v286
                %v288 = vld [vmem:[%s148 + $0x428] sm:$0xff]
                %289 = vst [vmem:[%s149 + $0x228] sm:$0xff] %v288
                %v290 = vld [vmem:[%s148 + $0x430] sm:$0xff]
                %291 = vst [vmem:[%s149 + $0x230] sm:$0xff] %v290
                %v292 = vld [vmem:[%s148 + $0x438] sm:$0xff]
                %293 = vst [vmem:[%s149 + $0x238] sm:$0xff] %v292
                %v294 = vld [vmem:[%s148 + $0x480] sm:$0xff]
                %295 = vst [vmem:[%s149 + $0x240] sm:$0xff] %v294
                %v296 = vld [vmem:[%s148 + $0x488] sm:$0xff]
                %297 = vst [vmem:[%s149 + $0x248] sm:$0xff] %v296
                %v298 = vld [vmem:[%s148 + $0x490] sm:$0xff]
                %299 = vst [vmem:[%s149 + $0x250] sm:$0xff] %v298
                %v300 = vld [vmem:[%s148 + $0x498] sm:$0xff]
                %301 = vst [vmem:[%s149 + $0x258] sm:$0xff] %v300
                %v302 = vld [vmem:[%s148 + $0x4a0] sm:$0xff]
                %303 = vst [vmem:[%s149 + $0x260] sm:$0xff] %v302
                %v304 = vld [vmem:[%s148 + $0x4a8] sm:$0xff]
                %305 = vst [vmem:[%s149 + $0x268] sm:$0xff] %v304
                %v306 = vld [vmem:[%s148 + $0x4b0] sm:$0xff]
                %307 = vst [vmem:[%s149 + $0x270] sm:$0xff] %v306
                %v308 = vld [vmem:[%s148 + $0x4b8] sm:$0xff]
                %309 = vst [vmem:[%s149 + $0x278] sm:$0xff] %v308
                %v310 = vld [vmem:[%s148 + $0x500] sm:$0xff]
                %311 = vst [vmem:[%s149 + $0x280] sm:$0xff] %v310
                %v312 = vld [vmem:[%s148 + $0x508] sm:$0xff]
                %313 = vst [vmem:[%s149 + $0x288] sm:$0xff] %v312
                %v314 = vld [vmem:[%s148 + $0x510] sm:$0xff]
                %315 = vst [vmem:[%s149 + $0x290] sm:$0xff] %v314
                %v316 = vld [vmem:[%s148 + $0x518] sm:$0xff]
                %317 = vst [vmem:[%s149 + $0x298] sm:$0xff] %v316
                %v318 = vld [vmem:[%s148 + $0x520] sm:$0xff]
                %319 = vst [vmem:[%s149 + $0x2a0] sm:$0xff] %v318
                %v320 = vld [vmem:[%s148 + $0x528] sm:$0xff]
                %321 = vst [vmem:[%s149 + $0x2a8] sm:$0xff] %v320
                %v322 = vld [vmem:[%s148 + $0x530] sm:$0xff]
                %323 = vst [vmem:[%s149 + $0x2b0] sm:$0xff] %v322
                %v324 = vld [vmem:[%s148 + $0x538] sm:$0xff]
                %325 = vst [vmem:[%s149 + $0x2b8] sm:$0xff] %v324
                %v326 = vld [vmem:[%s148 + $0x580] sm:$0xff]
                %327 = vst [vmem:[%s149 + $0x2c0] sm:$0xff] %v326
                %v328 = vld [vmem:[%s148 + $0x588] sm:$0xff]
                %329 = vst [vmem:[%s149 + $0x2c8] sm:$0xff] %v328
                %v330 = vld [vmem:[%s148 + $0x590] sm:$0xff]
                %331 = vst [vmem:[%s149 + $0x2d0] sm:$0xff] %v330
                %v332 = vld [vmem:[%s148 + $0x598] sm:$0xff]
                %333 = vst [vmem:[%s149 + $0x2d8] sm:$0xff] %v332
                %v334 = vld [vmem:[%s148 + $0x5a0] sm:$0xff]
                %335 = vst [vmem:[%s149 + $0x2e0] sm:$0xff] %v334
                %v336 = vld [vmem:[%s148 + $0x5a8] sm:$0xff]
                %337 = vst [vmem:[%s149 + $0x2e8] sm:$0xff] %v336
                %v338 = vld [vmem:[%s148 + $0x5b0] sm:$0xff]
                %339 = vst [vmem:[%s149 + $0x2f0] sm:$0xff] %v338
                %v340 = vld [vmem:[%s148 + $0x5b8] sm:$0xff]
                %341 = vst [vmem:[%s149 + $0x2f8] sm:$0xff] %v340
                %v342 = vld [vmem:[%s148 + $0x600] sm:$0xff]
                %343 = vst [vmem:[%s149 + $0x300] sm:$0xff] %v342
                %v344 = vld [vmem:[%s148 + $0x608] sm:$0xff]
                %345 = vst [vmem:[%s149 + $0x308] sm:$0xff] %v344
                %v346 = vld [vmem:[%s148 + $0x610] sm:$0xff]
                %347 = vst [vmem:[%s149 + $0x310] sm:$0xff] %v346
                %v348 = vld [vmem:[%s148 + $0x618] sm:$0xff]
                %349 = vst [vmem:[%s149 + $0x318] sm:$0xff] %v348
                %v350 = vld [vmem:[%s148 + $0x620] sm:$0xff]
                %351 = vst [vmem:[%s149 + $0x320] sm:$0xff] %v350
                %v352 = vld [vmem:[%s148 + $0x628] sm:$0xff]
                %353 = vst [vmem:[%s149 + $0x328] sm:$0xff] %v352
                %v354 = vld [vmem:[%s148 + $0x630] sm:$0xff]
                %355 = vst [vmem:[%s149 + $0x330] sm:$0xff] %v354
                %v356 = vld [vmem:[%s148 + $0x638] sm:$0xff]
                %357 = vst [vmem:[%s149 + $0x338] sm:$0xff] %v356
                %v358 = vld [vmem:[%s148 + $0x680] sm:$0xff]
                %359 = vst [vmem:[%s149 + $0x340] sm:$0xff] %v358
                %v360 = vld [vmem:[%s148 + $0x688] sm:$0xff]
                %361 = vst [vmem:[%s149 + $0x348] sm:$0xff] %v360
                %v362 = vld [vmem:[%s148 + $0x690] sm:$0xff]
                %363 = vst [vmem:[%s149 + $0x350] sm:$0xff] %v362
                %v364 = vld [vmem:[%s148 + $0x698] sm:$0xff]
                %365 = vst [vmem:[%s149 + $0x358] sm:$0xff] %v364
                %v366 = vld [vmem:[%s148 + $0x6a0] sm:$0xff]
                %367 = vst [vmem:[%s149 + $0x360] sm:$0xff] %v366
                %v368 = vld [vmem:[%s148 + $0x6a8] sm:$0xff]
                %369 = vst [vmem:[%s149 + $0x368] sm:$0xff] %v368
                %v370 = vld [vmem:[%s148 + $0x6b0] sm:$0xff]
                %371 = vst [vmem:[%s149 + $0x370] sm:$0xff] %v370
                %v372 = vld [vmem:[%s148 + $0x6b8] sm:$0xff]
                %373 = vst [vmem:[%s149 + $0x378] sm:$0xff] %v372
                %v374 = vld [vmem:[%s148 + $0x700] sm:$0xff]
                %375 = vst [vmem:[%s149 + $0x380] sm:$0xff] %v374
                %v376 = vld [vmem:[%s148 + $0x708] sm:$0xff]
                %377 = vst [vmem:[%s149 + $0x388] sm:$0xff] %v376
                %v378 = vld [vmem:[%s148 + $0x710] sm:$0xff]
                %379 = vst [vmem:[%s149 + $0x390] sm:$0xff] %v378
                %v380 = vld [vmem:[%s148 + $0x718] sm:$0xff]
                %381 = vst [vmem:[%s149 + $0x398] sm:$0xff] %v380
                %v382 = vld [vmem:[%s148 + $0x720] sm:$0xff]
                %383 = vst [vmem:[%s149 + $0x3a0] sm:$0xff] %v382
                %v384 = vld [vmem:[%s148 + $0x728] sm:$0xff]
                %385 = vst [vmem:[%s149 + $0x3a8] sm:$0xff] %v384
                %v386 = vld [vmem:[%s148 + $0x730] sm:$0xff]
                %387 = vst [vmem:[%s149 + $0x3b0] sm:$0xff] %v386
                %v388 = vld [vmem:[%s148 + $0x738] sm:$0xff]
                %389 = vst [vmem:[%s149 + $0x3b8] sm:$0xff] %v388
                %v390 = vld [vmem:[%s148 + $0x780] sm:$0xff]
                %391 = vst [vmem:[%s149 + $0x3c0] sm:$0xff] %v390
                %v392 = vld [vmem:[%s148 + $0x788] sm:$0xff]
                %393 = vst [vmem:[%s149 + $0x3c8] sm:$0xff] %v392
                %v394 = vld [vmem:[%s148 + $0x790] sm:$0xff]
                %395 = vst [vmem:[%s149 + $0x3d0] sm:$0xff] %v394
                %v396 = vld [vmem:[%s148 + $0x798] sm:$0xff]
                %397 = vst [vmem:[%s149 + $0x3d8] sm:$0xff] %v396
                %v398 = vld [vmem:[%s148 + $0x7a0] sm:$0xff]
                %399 = vst [vmem:[%s149 + $0x3e0] sm:$0xff] %v398
                %v400 = vld [vmem:[%s148 + $0x7a8] sm:$0xff]
                %401 = vst [vmem:[%s149 + $0x3e8] sm:$0xff] %v400
                %v402 = vld [vmem:[%s148 + $0x7b0] sm:$0xff]
                %403 = vst [vmem:[%s149 + $0x3f0] sm:$0xff] %v402
                %v404 = vld [vmem:[%s148 + $0x7b8] sm:$0xff]
                %405 = vst [vmem:[%s149 + $0x3f8] sm:$0xff] %v404
              $region41: #{cnn90_forward.4} parent=35 // loop_footer
                %s147 = sadd.s32 1, %s143
              $region42: #{cnn90_forward.4} parent=35 // loop_footer_branch
                %142 = sbr.rel target = $region38
              $region43: #{cnn90_forward.4} parent=35 // loop_exit
                _
            $region36: #{cnn90_forward.4} parent=31 // pred_fallthru
              _
            // Predicated region
            $region44: #{cnn90_forward.4} parent=31 // pred_check
              _
            $region45: #{cnn90_forward.4} parent=31 // pred_check_branch
              %407 = sbr.rel target = $region47
            $region46: #{cnn90_forward.4} parent=31 // pred_region
              _
            $region47: #{cnn90_forward.4} parent=31 // pred_fallthru
              _
          $region32: #{cnn90_forward.4} parent=27 // pred_fallthru
            _
          %408 = vnop
        $region28: #{cnn90_forward.4} parent=23 // pred_fallthru
          _
      $region24: #{cnn90_forward.4} parent=5 // pred_fallthru
        _
      %p409 = scmp.le.s32.totalorder 1, %s9
      %p410 = scmp.lt.s32.totalorder %s9, 3
      %p411 = pnand %p409, %p410
      %p412 = pneg %p411
      // Predicated region
      $region48: #{cnn90_forward.4} parent=5 // pred_check
        _
      $region49: #{cnn90_forward.4} parent=5 // pred_check_branch
        %414 = sbr.rel (%p411) target = $region51
      $region50: #{cnn90_forward.4} parent=5 // pred_region
        %s415 = ssub.s32 %s9, 1
        %s416 = sand.u32 %s22, 1
        %s417 = sand.u32 %s22, 1
        %s418 = smul.addr %s417, 1024
        %s419 = scalar_lea.vmem [#allocation2], %s418
        // Predicated region
        $region52: #{cnn90_forward.4} parent=50 // pred_check
          %p420 = pneg %p35
        $region53: #{cnn90_forward.4} parent=50 // pred_check_branch
          %422 = sbr.rel (%p420) target = $region55
        $region54: #{cnn90_forward.4} parent=50 // pred_region
          _
        $region55: #{cnn90_forward.4} parent=50 // pred_fallthru
          _
        %s423 = sand.u32 %s22, 1
        %s424 = sand.u32 %s22, 1
        %s425 = smul.addr %s424, 1024
        %s426 = scalar_lea.vmem [#allocation2], %s425
        %p427 = pneg %p35
        %p428 = pneg %p32
        %p429 = pneg %p56
        %p430 = pneg %p53
        %p431 = pneg %p77
        %p432 = pneg %p74
        %p433 = pneg %p103
        %p434 = pneg %p100
        %s435 = smul.u32 16, %s14
        %p436 = scmp.lt.s32.totalorder %s435, 31
        %s437 = scalar_select %p436, %s435, 31
        %s438 = smul.addr %s437, 8
        %s439 = scalar_lea.vmem %s3, %s438
        %s440 = smul.u32 16, %s14
        %s441 = smul.u32 16, %s14
        %p442 = scmp.lt.s32.totalorder %s441, 31
        %s443 = scalar_select %p442, %s441, 31
        %s444 = smul.addr %s443, 8
        %s445 = scalar_lea.vmem %s3, %s444
        %s446 = smul.u32 16, %s14
        %v448 = vld [vmem:[%s1] sm:$0xf]
        %v449 = vld [vmem:[%s419] sm:$0xff]
        %v450 = vld [vmem:[%s419 + $0x8] sm:$0xff]
        %v451 = vld [vmem:[%s419 + $0x10] sm:$0xff]
        %v452 = vld [vmem:[%s419 + $0x18] sm:$0xff]
        %v453 = vld [vmem:[%s419 + $0x20] sm:$0xff]
        %v454 = vld [vmem:[%s419 + $0x28] sm:$0xff]
        %v455 = vld [vmem:[%s419 + $0x30] sm:$0xff]
        %v456 = vld [vmem:[%s419 + $0x38] sm:$0xff]
        %v457 = vld [vmem:[%s419 + $0x40] sm:$0xff]
        %v458 = vld [vmem:[%s419 + $0x48] sm:$0xff]
        %v459 = vld [vmem:[%s419 + $0x50] sm:$0xff]
        %v460 = vld [vmem:[%s419 + $0x58] sm:$0xff]
        %v461 = vld [vmem:[%s419 + $0x60] sm:$0xff]
        %v462 = vld [vmem:[%s419 + $0x68] sm:$0xff]
        %v463 = vld [vmem:[%s419 + $0x70] sm:$0xff]
        %v464 = vld [vmem:[%s419 + $0x78] sm:$0xff]
        %v465 = vld [vmem:[%s419 + $0x80] sm:$0xff]
        %v466 = vld [vmem:[%s419 + $0x88] sm:$0xff]
        %v467 = vld [vmem:[%s419 + $0x90] sm:$0xff]
        %v468 = vld [vmem:[%s419 + $0x98] sm:$0xff]
        %v469 = vld [vmem:[%s419 + $0xa0] sm:$0xff]
        %v470 = vld [vmem:[%s419 + $0xa8] sm:$0xff]
        %v471 = vld [vmem:[%s419 + $0xb0] sm:$0xff]
        %v472 = vld [vmem:[%s419 + $0xb8] sm:$0xff]
        %v473 = vld [vmem:[%s419 + $0xc0] sm:$0x33]
        %v474 = vld [vmem:[%s419 + $0xc8] sm:$0x33]
        %v475 = vld [vmem:[%s419 + $0xd0] sm:$0x33]
        %v476 = vld [vmem:[%s419 + $0xd8] sm:$0x33]
        %v477 = vld [vmem:[%s419 + $0xe0] sm:$0x33]
        %v478 = vld [vmem:[%s419 + $0xe8] sm:$0x33]
        %v479 = vld [vmem:[%s419 + $0xf0] sm:$0x33]
        %v480 = vld [vmem:[%s419 + $0xf8] sm:$0x33]
        %v513 = vunpack.c.l.b16 %v449
        %v514 = vunpack.c.h.b16 %v449
        %v515 = vunpack.c.l.b16 %v450
        %v516 = vunpack.c.h.b16 %v450
        %v517 = vunpack.c.l.b16 %v451
        %v518 = vunpack.c.h.b16 %v451
        %v519 = vunpack.c.l.b16 %v452
        %v520 = vunpack.c.h.b16 %v452
        %v521 = vunpack.c.l.b16 %v453
        %v522 = vunpack.c.h.b16 %v453
        %v523 = vunpack.c.l.b16 %v454
        %v524 = vunpack.c.h.b16 %v454
        %v525 = vunpack.c.l.b16 %v455
        %v526 = vunpack.c.h.b16 %v455
        %v527 = vunpack.c.l.b16 %v456
        %v528 = vunpack.c.h.b16 %v456
        %v529 = vunpack.c.l.b16 %v457
        %v530 = vunpack.c.h.b16 %v457
        %v531 = vunpack.c.l.b16 %v458
        %v532 = vunpack.c.h.b16 %v458
        %v533 = vunpack.c.l.b16 %v459
        %v534 = vunpack.c.h.b16 %v459
        %v535 = vunpack.c.l.b16 %v460
        %v536 = vunpack.c.h.b16 %v460
        %v537 = vunpack.c.l.b16 %v461
        %v538 = vunpack.c.h.b16 %v461
        %v539 = vunpack.c.l.b16 %v462
        %v540 = vunpack.c.h.b16 %v462
        %v541 = vunpack.c.l.b16 %v463
        %v542 = vunpack.c.h.b16 %v463
        %v543 = vunpack.c.l.b16 %v464
        %v544 = vunpack.c.h.b16 %v464
        %v545 = vunpack.c.l.b16 %v465
        %v546 = vunpack.c.h.b16 %v465
        %v547 = vunpack.c.l.b16 %v466
        %v548 = vunpack.c.h.b16 %v466
        %v549 = vunpack.c.l.b16 %v467
        %v550 = vunpack.c.h.b16 %v467
        %v551 = vunpack.c.l.b16 %v468
        %v552 = vunpack.c.h.b16 %v468
        %v553 = vunpack.c.l.b16 %v469
        %v554 = vunpack.c.h.b16 %v469
        %v555 = vunpack.c.l.b16 %v470
        %v556 = vunpack.c.h.b16 %v470
        %v557 = vunpack.c.l.b16 %v471
        %v558 = vunpack.c.h.b16 %v471
        %v559 = vunpack.c.l.b16 %v472
        %v560 = vunpack.c.h.b16 %v472
        %v561 = vunpack.c.l.b16 %v473
        %v562 = vunpack.c.h.b16 %v473
        %v563 = vunpack.c.l.b16 %v474
        %v564 = vunpack.c.h.b16 %v474
        %v565 = vunpack.c.l.b16 %v475
        %v566 = vunpack.c.h.b16 %v475
        %v567 = vunpack.c.l.b16 %v476
        %v568 = vunpack.c.h.b16 %v476
        %v569 = vunpack.c.l.b16 %v477
        %v570 = vunpack.c.h.b16 %v477
        %v571 = vunpack.c.l.b16 %v478
        %v572 = vunpack.c.h.b16 %v478
        %v573 = vunpack.c.l.b16 %v479
        %v574 = vunpack.c.h.b16 %v479
        %v575 = vunpack.c.l.b16 %v480
        %v576 = vunpack.c.h.b16 %v480
        %v577 = vpack.c.b16 %v529, %v513
        %v578 = vpack.c.b16 %v530, %v514
        %v579 = vpack.c.b16 %v531, %v515
        %v580 = vpack.c.b16 %v532, %v516
        %v581 = vpack.c.b16 %v533, %v517
        %v582 = vpack.c.b16 %v534, %v518
        %v583 = vpack.c.b16 %v535, %v519
        %v584 = vpack.c.b16 %v536, %v520
        %v585 = vpack.c.b16 %v537, %v521
        %v586 = vpack.c.b16 %v538, %v522
        %v587 = vpack.c.b16 %v539, %v523
        %v588 = vpack.c.b16 %v540, %v524
        %v589 = vpack.c.b16 %v541, %v525
        %v590 = vpack.c.b16 %v542, %v526
        %v591 = vpack.c.b16 %v543, %v527
        %v592 = vpack.c.b16 %v544, %v528
        %v593 = vpack.c.b16 %v561, %v545
        %v594 = vpack.c.b16 %v562, %v546
        %v595 = vpack.c.b16 %v563, %v547
        %v596 = vpack.c.b16 %v564, %v548
        %v597 = vpack.c.b16 %v565, %v549
        %v598 = vpack.c.b16 %v566, %v550
        %v599 = vpack.c.b16 %v567, %v551
        %v600 = vpack.c.b16 %v568, %v552
        %v601 = vpack.c.b16 %v569, %v553
        %v602 = vpack.c.b16 %v570, %v554
        %v603 = vpack.c.b16 %v571, %v555
        %v604 = vpack.c.b16 %v572, %v556
        %v605 = vpack.c.b16 %v573, %v557
        %v606 = vpack.c.b16 %v574, %v558
        %v607 = vpack.c.b16 %v575, %v559
        %v608 = vpack.c.b16 %v576, %v560
        %vm625 = vcmask 220160
        %v627 = vsel %vm625, %v448, 0
        %vm629 = vcmask 1044480
        %vm630 = vcmask 1045504
        %v631 = vsel %vm629, 4294967295, 65535
        %v632 = vsel %vm630, %v631, 0
        %v634 = vand.u32 %v593, %v632
        %v637 = vand.u32 %v594, %v632
        %v640 = vand.u32 %v595, %v632
        %v643 = vand.u32 %v596, %v632
        %v646 = vand.u32 %v597, %v632
        %v649 = vand.u32 %v598, %v632
        %v652 = vand.u32 %v599, %v632
        %v655 = vand.u32 %v600, %v632
        %v658 = vand.u32 %v601, %v632
        %v661 = vand.u32 %v602, %v632
        %v664 = vand.u32 %v603, %v632
        %v667 = vand.u32 %v604, %v632
        %v670 = vand.u32 %v605, %v632
        %v673 = vand.u32 %v606, %v632
        %v676 = vand.u32 %v607, %v632
        %v679 = vand.u32 %v608, %v632
        %681 = vmatpush.bf16.msra.mxu0 0
        %682 = vmatpush.bf16.msra.mxu0 0
        %683 = vmatpush.bf16.msra.mxu0 0
        %684 = vmatpush.bf16.msra.mxu0 0
        %685 = vmatpush.bf16.msra.mxu0 0
        %686 = vmatpush.bf16.msra.mxu0 0
        %687 = vmatpush.bf16.msra.mxu0 %v634
        %688 = vmatpush.bf16.msra.mxu0 %v577
        %689 = vmatmul.bf16.gmra.mxu0 %v627
        %v690 = vpop.f32.mrf.mxu0
        %v691 = vadd.f32 0.0, %v690
        %v692 = vpop.f32.mrf.mxu0
        %693 = vdwg.mxu0
        %694 = vmatpush.bf16.msra.mxu0 0
        %695 = vmatpush.bf16.msra.mxu0 0
        %696 = vmatpush.bf16.msra.mxu0 0
        %697 = vmatpush.bf16.msra.mxu0 0
        %698 = vmatpush.bf16.msra.mxu0 0
        %699 = vmatpush.bf16.msra.mxu0 0
        %700 = vmatpush.bf16.msra.mxu0 %v637
        %701 = vmatpush.bf16.msra.mxu0 %v578
        %702 = vmatmul.bf16.gmra.mxu0 %v627
        %v703 = vpop.f32.mrf.mxu0
        %v704 = vadd.f32 0.0, %v703
        %v705 = vpop.f32.mrf.mxu0
        %706 = vdwg.mxu0
        %707 = vmatpush.bf16.msra.mxu0 0
        %708 = vmatpush.bf16.msra.mxu0 0
        %709 = vmatpush.bf16.msra.mxu0 0
        %710 = vmatpush.bf16.msra.mxu0 0
        %711 = vmatpush.bf16.msra.mxu0 0
        %712 = vmatpush.bf16.msra.mxu0 0
        %713 = vmatpush.bf16.msra.mxu0 %v640
        %714 = vmatpush.bf16.msra.mxu0 %v579
        %715 = vmatmul.bf16.gmra.mxu0 %v627
        %v716 = vpop.f32.mrf.mxu0
        %v717 = vadd.f32 0.0, %v716
        %v718 = vpop.f32.mrf.mxu0
        %719 = vdwg.mxu0
        %720 = vmatpush.bf16.msra.mxu0 0
        %721 = vmatpush.bf16.msra.mxu0 0
        %722 = vmatpush.bf16.msra.mxu0 0
        %723 = vmatpush.bf16.msra.mxu0 0
        %724 = vmatpush.bf16.msra.mxu0 0
        %725 = vmatpush.bf16.msra.mxu0 0
        %726 = vmatpush.bf16.msra.mxu0 %v643
        %727 = vmatpush.bf16.msra.mxu0 %v580
        %728 = vmatmul.bf16.gmra.mxu0 %v627
        %v729 = vpop.f32.mrf.mxu0
        %v730 = vadd.f32 0.0, %v729
        %v731 = vpop.f32.mrf.mxu0
        %732 = vdwg.mxu0
        %733 = vmatpush.bf16.msra.mxu0 0
        %734 = vmatpush.bf16.msra.mxu0 0
        %735 = vmatpush.bf16.msra.mxu0 0
        %736 = vmatpush.bf16.msra.mxu0 0
        %737 = vmatpush.bf16.msra.mxu0 0
        %738 = vmatpush.bf16.msra.mxu0 0
        %739 = vmatpush.bf16.msra.mxu0 %v646
        %740 = vmatpush.bf16.msra.mxu0 %v581
        %741 = vmatmul.bf16.gmra.mxu0 %v627
        %v742 = vpop.f32.mrf.mxu0
        %v743 = vadd.f32 0.0, %v742
        %v744 = vpop.f32.mrf.mxu0
        %745 = vdwg.mxu0
        %746 = vmatpush.bf16.msra.mxu0 0
        %747 = vmatpush.bf16.msra.mxu0 0
        %748 = vmatpush.bf16.msra.mxu0 0
        %749 = vmatpush.bf16.msra.mxu0 0
        %750 = vmatpush.bf16.msra.mxu0 0
        %751 = vmatpush.bf16.msra.mxu0 0
        %752 = vmatpush.bf16.msra.mxu0 %v649
        %753 = vmatpush.bf16.msra.mxu0 %v582
        %754 = vmatmul.bf16.gmra.mxu0 %v627
        %v755 = vpop.f32.mrf.mxu0
        %v756 = vadd.f32 0.0, %v755
        %v757 = vpop.f32.mrf.mxu0
        %758 = vdwg.mxu0
        %759 = vmatpush.bf16.msra.mxu0 0
        %760 = vmatpush.bf16.msra.mxu0 0
        %761 = vmatpush.bf16.msra.mxu0 0
        %762 = vmatpush.bf16.msra.mxu0 0
        %763 = vmatpush.bf16.msra.mxu0 0
        %764 = vmatpush.bf16.msra.mxu0 0
        %765 = vmatpush.bf16.msra.mxu0 %v652
        %766 = vmatpush.bf16.msra.mxu0 %v583
        %767 = vmatmul.bf16.gmra.mxu0 %v627
        %v768 = vpop.f32.mrf.mxu0
        %v769 = vadd.f32 0.0, %v768
        %v770 = vpop.f32.mrf.mxu0
        %771 = vdwg.mxu0
        %772 = vmatpush.bf16.msra.mxu0 0
        %773 = vmatpush.bf16.msra.mxu0 0
        %774 = vmatpush.bf16.msra.mxu0 0
        %775 = vmatpush.bf16.msra.mxu0 0
        %776 = vmatpush.bf16.msra.mxu0 0
        %777 = vmatpush.bf16.msra.mxu0 0
        %778 = vmatpush.bf16.msra.mxu0 %v655
        %779 = vmatpush.bf16.msra.mxu0 %v584
        %780 = vmatmul.bf16.gmra.mxu0 %v627
        %v781 = vpop.f32.mrf.mxu0
        %v782 = vadd.f32 0.0, %v781
        %v783 = vpop.f32.mrf.mxu0
        %784 = vdwg.mxu0
        %785 = vmatpush.bf16.msra.mxu0 0
        %786 = vmatpush.bf16.msra.mxu0 0
        %787 = vmatpush.bf16.msra.mxu0 0
        %788 = vmatpush.bf16.msra.mxu0 0
        %789 = vmatpush.bf16.msra.mxu0 0
        %790 = vmatpush.bf16.msra.mxu0 0
        %791 = vmatpush.bf16.msra.mxu0 %v658
        %792 = vmatpush.bf16.msra.mxu0 %v585
        %793 = vmatmul.bf16.gmra.mxu0 %v627
        %v794 = vpop.f32.mrf.mxu0
        %v795 = vadd.f32 0.0, %v794
        %v796 = vpop.f32.mrf.mxu0
        %797 = vdwg.mxu0
        %798 = vmatpush.bf16.msra.mxu0 0
        %799 = vmatpush.bf16.msra.mxu0 0
        %800 = vmatpush.bf16.msra.mxu0 0
        %801 = vmatpush.bf16.msra.mxu0 0
        %802 = vmatpush.bf16.msra.mxu0 0
        %803 = vmatpush.bf16.msra.mxu0 0
        %804 = vmatpush.bf16.msra.mxu0 %v661
        %805 = vmatpush.bf16.msra.mxu0 %v586
        %806 = vmatmul.bf16.gmra.mxu0 %v627
        %v807 = vpop.f32.mrf.mxu0
        %v808 = vadd.f32 0.0, %v807
        %v809 = vpop.f32.mrf.mxu0
        %810 = vdwg.mxu0
        %811 = vmatpush.bf16.msra.mxu0 0
        %812 = vmatpush.bf16.msra.mxu0 0
        %813 = vmatpush.bf16.msra.mxu0 0
        %814 = vmatpush.bf16.msra.mxu0 0
        %815 = vmatpush.bf16.msra.mxu0 0
        %816 = vmatpush.bf16.msra.mxu0 0
        %817 = vmatpush.bf16.msra.mxu0 %v664
        %818 = vmatpush.bf16.msra.mxu0 %v587
        %819 = vmatmul.bf16.gmra.mxu0 %v627
        %v820 = vpop.f32.mrf.mxu0
        %v821 = vadd.f32 0.0, %v820
        %v822 = vpop.f32.mrf.mxu0
        %823 = vdwg.mxu0
        %824 = vmatpush.bf16.msra.mxu0 0
        %825 = vmatpush.bf16.msra.mxu0 0
        %826 = vmatpush.bf16.msra.mxu0 0
        %827 = vmatpush.bf16.msra.mxu0 0
        %828 = vmatpush.bf16.msra.mxu0 0
        %829 = vmatpush.bf16.msra.mxu0 0
        %830 = vmatpush.bf16.msra.mxu0 %v667
        %831 = vmatpush.bf16.msra.mxu0 %v588
        %832 = vmatmul.bf16.gmra.mxu0 %v627
        %v833 = vpop.f32.mrf.mxu0
        %v834 = vadd.f32 0.0, %v833
        %v835 = vpop.f32.mrf.mxu0
        %836 = vdwg.mxu0
        %837 = vmatpush.bf16.msra.mxu0 0
        %838 = vmatpush.bf16.msra.mxu0 0
        %839 = vmatpush.bf16.msra.mxu0 0
        %840 = vmatpush.bf16.msra.mxu0 0
        %841 = vmatpush.bf16.msra.mxu0 0
        %842 = vmatpush.bf16.msra.mxu0 0
        %843 = vmatpush.bf16.msra.mxu0 %v670
        %844 = vmatpush.bf16.msra.mxu0 %v589
        %845 = vmatmul.bf16.gmra.mxu0 %v627
        %v846 = vpop.f32.mrf.mxu0
        %v847 = vadd.f32 0.0, %v846
        %v848 = vpop.f32.mrf.mxu0
        %849 = vdwg.mxu0
        %850 = vmatpush.bf16.msra.mxu0 0
        %851 = vmatpush.bf16.msra.mxu0 0
        %852 = vmatpush.bf16.msra.mxu0 0
        %853 = vmatpush.bf16.msra.mxu0 0
        %854 = vmatpush.bf16.msra.mxu0 0
        %855 = vmatpush.bf16.msra.mxu0 0
        %856 = vmatpush.bf16.msra.mxu0 %v673
        %857 = vmatpush.bf16.msra.mxu0 %v590
        %858 = vmatmul.bf16.gmra.mxu0 %v627
        %v859 = vpop.f32.mrf.mxu0
        %v860 = vadd.f32 0.0, %v859
        %v861 = vpop.f32.mrf.mxu0
        %862 = vdwg.mxu0
        %863 = vmatpush.bf16.msra.mxu0 0
        %864 = vmatpush.bf16.msra.mxu0 0
        %865 = vmatpush.bf16.msra.mxu0 0
        %866 = vmatpush.bf16.msra.mxu0 0
        %867 = vmatpush.bf16.msra.mxu0 0
        %868 = vmatpush.bf16.msra.mxu0 0
        %869 = vmatpush.bf16.msra.mxu0 %v676
        %870 = vmatpush.bf16.msra.mxu0 %v591
        %871 = vmatmul.bf16.gmra.mxu0 %v627
        %v872 = vpop.f32.mrf.mxu0
        %v873 = vadd.f32 0.0, %v872
        %v874 = vpop.f32.mrf.mxu0
        %875 = vdwg.mxu0
        %876 = vmatpush.bf16.msra.mxu0 0
        %877 = vmatpush.bf16.msra.mxu0 0
        %878 = vmatpush.bf16.msra.mxu0 0
        %879 = vmatpush.bf16.msra.mxu0 0
        %880 = vmatpush.bf16.msra.mxu0 0
        %881 = vmatpush.bf16.msra.mxu0 0
        %882 = vmatpush.bf16.msra.mxu0 %v679
        %883 = vmatpush.bf16.msra.mxu0 %v592
        %884 = vmatmul.bf16.gmra.mxu0 %v627
        %v885 = vpop.f32.mrf.mxu0
        %v886 = vadd.f32 0.0, %v885
        %v887 = vpop.f32.mrf.mxu0
        %888 = vdwg.mxu0
        %s889 = scalar_lea.vmem %s419, 256 [#allocation2]
        %v890 = vld [vmem:[%s889] sm:$0xff]
        %v891 = vld [vmem:[%s889 + $0x8] sm:$0xff]
        %v892 = vld [vmem:[%s889 + $0x10] sm:$0xff]
        %v893 = vld [vmem:[%s889 + $0x18] sm:$0xff]
        %v894 = vld [vmem:[%s889 + $0x20] sm:$0xff]
        %v895 = vld [vmem:[%s889 + $0x28] sm:$0xff]
        %v896 = vld [vmem:[%s889 + $0x30] sm:$0xff]
        %v897 = vld [vmem:[%s889 + $0x38] sm:$0xff]
        %v898 = vld [vmem:[%s889 + $0x40] sm:$0xff]
        %v899 = vld [vmem:[%s889 + $0x48] sm:$0xff]
        %v900 = vld [vmem:[%s889 + $0x50] sm:$0xff]
        %v901 = vld [vmem:[%s889 + $0x58] sm:$0xff]
        %v902 = vld [vmem:[%s889 + $0x60] sm:$0xff]
        %v903 = vld [vmem:[%s889 + $0x68] sm:$0xff]
        %v904 = vld [vmem:[%s889 + $0x70] sm:$0xff]
        %v905 = vld [vmem:[%s889 + $0x78] sm:$0xff]
        %v906 = vld [vmem:[%s889 + $0x80] sm:$0xff]
        %v907 = vld [vmem:[%s889 + $0x88] sm:$0xff]
        %v908 = vld [vmem:[%s889 + $0x90] sm:$0xff]
        %v909 = vld [vmem:[%s889 + $0x98] sm:$0xff]
        %v910 = vld [vmem:[%s889 + $0xa0] sm:$0xff]
        %v911 = vld [vmem:[%s889 + $0xa8] sm:$0xff]
        %v912 = vld [vmem:[%s889 + $0xb0] sm:$0xff]
        %v913 = vld [vmem:[%s889 + $0xb8] sm:$0xff]
        %v914 = vld [vmem:[%s889 + $0xc0] sm:$0x33]
        %v915 = vld [vmem:[%s889 + $0xc8] sm:$0x33]
        %v916 = vld [vmem:[%s889 + $0xd0] sm:$0x33]
        %v917 = vld [vmem:[%s889 + $0xd8] sm:$0x33]
        %v918 = vld [vmem:[%s889 + $0xe0] sm:$0x33]
        %v919 = vld [vmem:[%s889 + $0xe8] sm:$0x33]
        %v920 = vld [vmem:[%s889 + $0xf0] sm:$0x33]
        %v921 = vld [vmem:[%s889 + $0xf8] sm:$0x33]
        %v954 = vunpack.c.l.b16 %v890
        %v955 = vunpack.c.h.b16 %v890
        %v956 = vunpack.c.l.b16 %v891
        %v957 = vunpack.c.h.b16 %v891
        %v958 = vunpack.c.l.b16 %v892
        %v959 = vunpack.c.h.b16 %v892
        %v960 = vunpack.c.l.b16 %v893
        %v961 = vunpack.c.h.b16 %v893
        %v962 = vunpack.c.l.b16 %v894
        %v963 = vunpack.c.h.b16 %v894
        %v964 = vunpack.c.l.b16 %v895
        %v965 = vunpack.c.h.b16 %v895
        %v966 = vunpack.c.l.b16 %v896
        %v967 = vunpack.c.h.b16 %v896
        %v968 = vunpack.c.l.b16 %v897
        %v969 = vunpack.c.h.b16 %v897
        %v970 = vunpack.c.l.b16 %v898
        %v971 = vunpack.c.h.b16 %v898
        %v972 = vunpack.c.l.b16 %v899
        %v973 = vunpack.c.h.b16 %v899
        %v974 = vunpack.c.l.b16 %v900
        %v975 = vunpack.c.h.b16 %v900
        %v976 = vunpack.c.l.b16 %v901
        %v977 = vunpack.c.h.b16 %v901
        %v978 = vunpack.c.l.b16 %v902
        %v979 = vunpack.c.h.b16 %v902
        %v980 = vunpack.c.l.b16 %v903
        %v981 = vunpack.c.h.b16 %v903
        %v982 = vunpack.c.l.b16 %v904
        %v983 = vunpack.c.h.b16 %v904
        %v984 = vunpack.c.l.b16 %v905
        %v985 = vunpack.c.h.b16 %v905
        %v986 = vunpack.c.l.b16 %v906
        %v987 = vunpack.c.h.b16 %v906
        %v988 = vunpack.c.l.b16 %v907
        %v989 = vunpack.c.h.b16 %v907
        %v990 = vunpack.c.l.b16 %v908
        %v991 = vunpack.c.h.b16 %v908
        %v992 = vunpack.c.l.b16 %v909
        %v993 = vunpack.c.h.b16 %v909
        %v994 = vunpack.c.l.b16 %v910
        %v995 = vunpack.c.h.b16 %v910
        %v996 = vunpack.c.l.b16 %v911
        %v997 = vunpack.c.h.b16 %v911
        %v998 = vunpack.c.l.b16 %v912
        %v999 = vunpack.c.h.b16 %v912
        %v1000 = vunpack.c.l.b16 %v913
        %v1001 = vunpack.c.h.b16 %v913
        %v1002 = vunpack.c.l.b16 %v914
        %v1003 = vunpack.c.h.b16 %v914
        %v1004 = vunpack.c.l.b16 %v915
        %v1005 = vunpack.c.h.b16 %v915
        %v1006 = vunpack.c.l.b16 %v916
        %v1007 = vunpack.c.h.b16 %v916
        %v1008 = vunpack.c.l.b16 %v917
        %v1009 = vunpack.c.h.b16 %v917
        %v1010 = vunpack.c.l.b16 %v918
        %v1011 = vunpack.c.h.b16 %v918
        %v1012 = vunpack.c.l.b16 %v919
        %v1013 = vunpack.c.h.b16 %v919
        %v1014 = vunpack.c.l.b16 %v920
        %v1015 = vunpack.c.h.b16 %v920
        %v1016 = vunpack.c.l.b16 %v921
        %v1017 = vunpack.c.h.b16 %v921
        %v1018 = vpack.c.b16 %v970, %v954
        %v1019 = vpack.c.b16 %v971, %v955
        %v1020 = vpack.c.b16 %v972, %v956
        %v1021 = vpack.c.b16 %v973, %v957
        %v1022 = vpack.c.b16 %v974, %v958
        %v1023 = vpack.c.b16 %v975, %v959
        %v1024 = vpack.c.b16 %v976, %v960
        %v1025 = vpack.c.b16 %v977, %v961
        %v1026 = vpack.c.b16 %v978, %v962
        %v1027 = vpack.c.b16 %v979, %v963
        %v1028 = vpack.c.b16 %v980, %v964
        %v1029 = vpack.c.b16 %v981, %v965
        %v1030 = vpack.c.b16 %v982, %v966
        %v1031 = vpack.c.b16 %v983, %v967
        %v1032 = vpack.c.b16 %v984, %v968
        %v1033 = vpack.c.b16 %v985, %v969
        %v1034 = vpack.c.b16 %v1002, %v986
        %v1035 = vpack.c.b16 %v1003, %v987
        %v1036 = vpack.c.b16 %v1004, %v988
        %v1037 = vpack.c.b16 %v1005, %v989
        %v1038 = vpack.c.b16 %v1006, %v990
        %v1039 = vpack.c.b16 %v1007, %v991
        %v1040 = vpack.c.b16 %v1008, %v992
        %v1041 = vpack.c.b16 %v1009, %v993
        %v1042 = vpack.c.b16 %v1010, %v994
        %v1043 = vpack.c.b16 %v1011, %v995
        %v1044 = vpack.c.b16 %v1012, %v996
        %v1045 = vpack.c.b16 %v1013, %v997
        %v1046 = vpack.c.b16 %v1014, %v998
        %v1047 = vpack.c.b16 %v1015, %v999
        %v1048 = vpack.c.b16 %v1016, %v1000
        %v1049 = vpack.c.b16 %v1017, %v1001
        %v1067 = vand.u32 %v1034, %v632
        %v1070 = vand.u32 %v1035, %v632
        %v1073 = vand.u32 %v1036, %v632
        %v1076 = vand.u32 %v1037, %v632
        %v1079 = vand.u32 %v1038, %v632
        %v1082 = vand.u32 %v1039, %v632
        %v1085 = vand.u32 %v1040, %v632
        %v1088 = vand.u32 %v1041, %v632
        %v1091 = vand.u32 %v1042, %v632
        %v1094 = vand.u32 %v1043, %v632
        %v1097 = vand.u32 %v1044, %v632
        %v1100 = vand.u32 %v1045, %v632
        %v1103 = vand.u32 %v1046, %v632
        %v1106 = vand.u32 %v1047, %v632
        %v1109 = vand.u32 %v1048, %v632
        %v1112 = vand.u32 %v1049, %v632
        %1114 = vmatpush.bf16.msra.mxu0 0
        %1115 = vmatpush.bf16.msra.mxu0 0
        %1116 = vmatpush.bf16.msra.mxu0 0
        %1117 = vmatpush.bf16.msra.mxu0 0
        %1118 = vmatpush.bf16.msra.mxu0 0
        %1119 = vmatpush.bf16.msra.mxu0 0
        %1120 = vmatpush.bf16.msra.mxu0 %v1067
        %1121 = vmatpush.bf16.msra.mxu0 %v1018
        %1122 = vmatmul.bf16.gmra.mxu0 %v627
        %v1123 = vpop.f32.mrf.mxu0
        %v1124 = vadd.f32 0.0, %v1123
        %v1125 = vpop.f32.mrf.mxu0
        %1126 = vdwg.mxu0
        %1127 = vmatpush.bf16.msra.mxu0 0
        %1128 = vmatpush.bf16.msra.mxu0 0
        %1129 = vmatpush.bf16.msra.mxu0 0
        %1130 = vmatpush.bf16.msra.mxu0 0
        %1131 = vmatpush.bf16.msra.mxu0 0
        %1132 = vmatpush.bf16.msra.mxu0 0
        %1133 = vmatpush.bf16.msra.mxu0 %v1070
        %1134 = vmatpush.bf16.msra.mxu0 %v1019
        %1135 = vmatmul.bf16.gmra.mxu0 %v627
        %v1136 = vpop.f32.mrf.mxu0
        %v1137 = vadd.f32 0.0, %v1136
        %v1138 = vpop.f32.mrf.mxu0
        %1139 = vdwg.mxu0
        %1140 = vmatpush.bf16.msra.mxu0 0
        %1141 = vmatpush.bf16.msra.mxu0 0
        %1142 = vmatpush.bf16.msra.mxu0 0
        %1143 = vmatpush.bf16.msra.mxu0 0
        %1144 = vmatpush.bf16.msra.mxu0 0
        %1145 = vmatpush.bf16.msra.mxu0 0
        %1146 = vmatpush.bf16.msra.mxu0 %v1073
        %1147 = vmatpush.bf16.msra.mxu0 %v1020
        %1148 = vmatmul.bf16.gmra.mxu0 %v627
        %v1149 = vpop.f32.mrf.mxu0
        %v1150 = vadd.f32 0.0, %v1149
        %v1151 = vpop.f32.mrf.mxu0
        %1152 = vdwg.mxu0
        %1153 = vmatpush.bf16.msra.mxu0 0
        %1154 = vmatpush.bf16.msra.mxu0 0
        %1155 = vmatpush.bf16.msra.mxu0 0
        %1156 = vmatpush.bf16.msra.mxu0 0
        %1157 = vmatpush.bf16.msra.mxu0 0
        %1158 = vmatpush.bf16.msra.mxu0 0
        %1159 = vmatpush.bf16.msra.mxu0 %v1076
        %1160 = vmatpush.bf16.msra.mxu0 %v1021
        %1161 = vmatmul.bf16.gmra.mxu0 %v627
        %v1162 = vpop.f32.mrf.mxu0
        %v1163 = vadd.f32 0.0, %v1162
        %v1164 = vpop.f32.mrf.mxu0
        %1165 = vdwg.mxu0
        %1166 = vmatpush.bf16.msra.mxu0 0
        %1167 = vmatpush.bf16.msra.mxu0 0
        %1168 = vmatpush.bf16.msra.mxu0 0
        %1169 = vmatpush.bf16.msra.mxu0 0
        %1170 = vmatpush.bf16.msra.mxu0 0
        %1171 = vmatpush.bf16.msra.mxu0 0
        %1172 = vmatpush.bf16.msra.mxu0 %v1079
        %1173 = vmatpush.bf16.msra.mxu0 %v1022
        %1174 = vmatmul.bf16.gmra.mxu0 %v627
        %v1175 = vpop.f32.mrf.mxu0
        %v1176 = vadd.f32 0.0, %v1175
        %v1177 = vpop.f32.mrf.mxu0
        %1178 = vdwg.mxu0
        %1179 = vmatpush.bf16.msra.mxu0 0
        %1180 = vmatpush.bf16.msra.mxu0 0
        %1181 = vmatpush.bf16.msra.mxu0 0
        %1182 = vmatpush.bf16.msra.mxu0 0
        %1183 = vmatpush.bf16.msra.mxu0 0
        %1184 = vmatpush.bf16.msra.mxu0 0
        %1185 = vmatpush.bf16.msra.mxu0 %v1082
        %1186 = vmatpush.bf16.msra.mxu0 %v1023
        %1187 = vmatmul.bf16.gmra.mxu0 %v627
        %v1188 = vpop.f32.mrf.mxu0
        %v1189 = vadd.f32 0.0, %v1188
        %v1190 = vpop.f32.mrf.mxu0
        %1191 = vdwg.mxu0
        %1192 = vmatpush.bf16.msra.mxu0 0
        %1193 = vmatpush.bf16.msra.mxu0 0
        %1194 = vmatpush.bf16.msra.mxu0 0
        %1195 = vmatpush.bf16.msra.mxu0 0
        %1196 = vmatpush.bf16.msra.mxu0 0
        %1197 = vmatpush.bf16.msra.mxu0 0
        %1198 = vmatpush.bf16.msra.mxu0 %v1085
        %1199 = vmatpush.bf16.msra.mxu0 %v1024
        %1200 = vmatmul.bf16.gmra.mxu0 %v627
        %v1201 = vpop.f32.mrf.mxu0
        %v1202 = vadd.f32 0.0, %v1201
        %v1203 = vpop.f32.mrf.mxu0
        %1204 = vdwg.mxu0
        %1205 = vmatpush.bf16.msra.mxu0 0
        %1206 = vmatpush.bf16.msra.mxu0 0
        %1207 = vmatpush.bf16.msra.mxu0 0
        %1208 = vmatpush.bf16.msra.mxu0 0
        %1209 = vmatpush.bf16.msra.mxu0 0
        %1210 = vmatpush.bf16.msra.mxu0 0
        %1211 = vmatpush.bf16.msra.mxu0 %v1088
        %1212 = vmatpush.bf16.msra.mxu0 %v1025
        %1213 = vmatmul.bf16.gmra.mxu0 %v627
        %v1214 = vpop.f32.mrf.mxu0
        %v1215 = vadd.f32 0.0, %v1214
        %v1216 = vpop.f32.mrf.mxu0
        %1217 = vdwg.mxu0
        %1218 = vmatpush.bf16.msra.mxu0 0
        %1219 = vmatpush.bf16.msra.mxu0 0
        %1220 = vmatpush.bf16.msra.mxu0 0
        %1221 = vmatpush.bf16.msra.mxu0 0
        %1222 = vmatpush.bf16.msra.mxu0 0
        %1223 = vmatpush.bf16.msra.mxu0 0
        %1224 = vmatpush.bf16.msra.mxu0 %v1091
        %1225 = vmatpush.bf16.msra.mxu0 %v1026
        %1226 = vmatmul.bf16.gmra.mxu0 %v627
        %v1227 = vpop.f32.mrf.mxu0
        %v1228 = vadd.f32 0.0, %v1227
        %v1229 = vpop.f32.mrf.mxu0
        %1230 = vdwg.mxu0
        %1231 = vmatpush.bf16.msra.mxu0 0
        %1232 = vmatpush.bf16.msra.mxu0 0
        %1233 = vmatpush.bf16.msra.mxu0 0
        %1234 = vmatpush.bf16.msra.mxu0 0
        %1235 = vmatpush.bf16.msra.mxu0 0
        %1236 = vmatpush.bf16.msra.mxu0 0
        %1237 = vmatpush.bf16.msra.mxu0 %v1094
        %1238 = vmatpush.bf16.msra.mxu0 %v1027
        %1239 = vmatmul.bf16.gmra.mxu0 %v627
        %v1240 = vpop.f32.mrf.mxu0
        %v1241 = vadd.f32 0.0, %v1240
        %v1242 = vpop.f32.mrf.mxu0
        %1243 = vdwg.mxu0
        %1244 = vmatpush.bf16.msra.mxu0 0
        %1245 = vmatpush.bf16.msra.mxu0 0
        %1246 = vmatpush.bf16.msra.mxu0 0
        %1247 = vmatpush.bf16.msra.mxu0 0
        %1248 = vmatpush.bf16.msra.mxu0 0
        %1249 = vmatpush.bf16.msra.mxu0 0
        %1250 = vmatpush.bf16.msra.mxu0 %v1097
        %1251 = vmatpush.bf16.msra.mxu0 %v1028
        %1252 = vmatmul.bf16.gmra.mxu0 %v627
        %v1253 = vpop.f32.mrf.mxu0
        %v1254 = vadd.f32 0.0, %v1253
        %v1255 = vpop.f32.mrf.mxu0
        %1256 = vdwg.mxu0
        %1257 = vmatpush.bf16.msra.mxu0 0
        %1258 = vmatpush.bf16.msra.mxu0 0
        %1259 = vmatpush.bf16.msra.mxu0 0
        %1260 = vmatpush.bf16.msra.mxu0 0
        %1261 = vmatpush.bf16.msra.mxu0 0
        %1262 = vmatpush.bf16.msra.mxu0 0
        %1263 = vmatpush.bf16.msra.mxu0 %v1100
        %1264 = vmatpush.bf16.msra.mxu0 %v1029
        %1265 = vmatmul.bf16.gmra.mxu0 %v627
        %v1266 = vpop.f32.mrf.mxu0
        %v1267 = vadd.f32 0.0, %v1266
        %v1268 = vpop.f32.mrf.mxu0
        %1269 = vdwg.mxu0
        %1270 = vmatpush.bf16.msra.mxu0 0
        %1271 = vmatpush.bf16.msra.mxu0 0
        %1272 = vmatpush.bf16.msra.mxu0 0
        %1273 = vmatpush.bf16.msra.mxu0 0
        %1274 = vmatpush.bf16.msra.mxu0 0
        %1275 = vmatpush.bf16.msra.mxu0 0
        %1276 = vmatpush.bf16.msra.mxu0 %v1103
        %1277 = vmatpush.bf16.msra.mxu0 %v1030
        %1278 = vmatmul.bf16.gmra.mxu0 %v627
        %v1279 = vpop.f32.mrf.mxu0
        %v1280 = vadd.f32 0.0, %v1279
        %v1281 = vpop.f32.mrf.mxu0
        %1282 = vdwg.mxu0
        %1283 = vmatpush.bf16.msra.mxu0 0
        %1284 = vmatpush.bf16.msra.mxu0 0
        %1285 = vmatpush.bf16.msra.mxu0 0
        %1286 = vmatpush.bf16.msra.mxu0 0
        %1287 = vmatpush.bf16.msra.mxu0 0
        %1288 = vmatpush.bf16.msra.mxu0 0
        %1289 = vmatpush.bf16.msra.mxu0 %v1106
        %1290 = vmatpush.bf16.msra.mxu0 %v1031
        %1291 = vmatmul.bf16.gmra.mxu0 %v627
        %v1292 = vpop.f32.mrf.mxu0
        %v1293 = vadd.f32 0.0, %v1292
        %v1294 = vpop.f32.mrf.mxu0
        %1295 = vdwg.mxu0
        %1296 = vmatpush.bf16.msra.mxu0 0
        %1297 = vmatpush.bf16.msra.mxu0 0
        %1298 = vmatpush.bf16.msra.mxu0 0
        %1299 = vmatpush.bf16.msra.mxu0 0
        %1300 = vmatpush.bf16.msra.mxu0 0
        %1301 = vmatpush.bf16.msra.mxu0 0
        %1302 = vmatpush.bf16.msra.mxu0 %v1109
        %1303 = vmatpush.bf16.msra.mxu0 %v1032
        %1304 = vmatmul.bf16.gmra.mxu0 %v627
        %v1305 = vpop.f32.mrf.mxu0
        %v1306 = vadd.f32 0.0, %v1305
        %v1307 = vpop.f32.mrf.mxu0
        %1308 = vdwg.mxu0
        %1309 = vmatpush.bf16.msra.mxu0 0
        %1310 = vmatpush.bf16.msra.mxu0 0
        %1311 = vmatpush.bf16.msra.mxu0 0
        %1312 = vmatpush.bf16.msra.mxu0 0
        %1313 = vmatpush.bf16.msra.mxu0 0
        %1314 = vmatpush.bf16.msra.mxu0 0
        %1315 = vmatpush.bf16.msra.mxu0 %v1112
        %1316 = vmatpush.bf16.msra.mxu0 %v1033
        %1317 = vmatmul.bf16.gmra.mxu0 %v627
        %v1318 = vpop.f32.mrf.mxu0
        %v1319 = vadd.f32 0.0, %v1318
        %v1320 = vpop.f32.mrf.mxu0
        %1321 = vdwg.mxu0
        %v1322 = vmax.f32 %v691, %v1124
        %v1323 = vmax.f32 %v704, %v1137
        %v1324 = vmax.f32 %v717, %v1150
        %v1325 = vmax.f32 %v730, %v1163
        %v1326 = vmax.f32 %v743, %v1176
        %v1327 = vmax.f32 %v756, %v1189
        %v1328 = vmax.f32 %v769, %v1202
        %v1329 = vmax.f32 %v782, %v1215
        %v1330 = vmax.f32 %v795, %v1228
        %v1331 = vmax.f32 %v808, %v1241
        %v1332 = vmax.f32 %v821, %v1254
        %v1333 = vmax.f32 %v834, %v1267
        %v1334 = vmax.f32 %v847, %v1280
        %v1335 = vmax.f32 %v860, %v1293
        %v1336 = vmax.f32 %v873, %v1306
        %v1337 = vmax.f32 %v886, %v1319
        %s1338 = scalar_lea.vmem %s419, 512 [#allocation2]
        %v1339 = vld [vmem:[%s1338] sm:$0xff]
        %v1340 = vld [vmem:[%s1338 + $0x8] sm:$0xff]
        %v1341 = vld [vmem:[%s1338 + $0x10] sm:$0xff]
        %v1342 = vld [vmem:[%s1338 + $0x18] sm:$0xff]
        %v1343 = vld [vmem:[%s1338 + $0x20] sm:$0xff]
        %v1344 = vld [vmem:[%s1338 + $0x28] sm:$0xff]
        %v1345 = vld [vmem:[%s1338 + $0x30] sm:$0xff]
        %v1346 = vld [vmem:[%s1338 + $0x38] sm:$0xff]
        %v1347 = vld [vmem:[%s1338 + $0x40] sm:$0xff]
        %v1348 = vld [vmem:[%s1338 + $0x48] sm:$0xff]
        %v1349 = vld [vmem:[%s1338 + $0x50] sm:$0xff]
        %v1350 = vld [vmem:[%s1338 + $0x58] sm:$0xff]
        %v1351 = vld [vmem:[%s1338 + $0x60] sm:$0xff]
        %v1352 = vld [vmem:[%s1338 + $0x68] sm:$0xff]
        %v1353 = vld [vmem:[%s1338 + $0x70] sm:$0xff]
        %v1354 = vld [vmem:[%s1338 + $0x78] sm:$0xff]
        %v1355 = vld [vmem:[%s1338 + $0x80] sm:$0xff]
        %v1356 = vld [vmem:[%s1338 + $0x88] sm:$0xff]
        %v1357 = vld [vmem:[%s1338 + $0x90] sm:$0xff]
        %v1358 = vld [vmem:[%s1338 + $0x98] sm:$0xff]
        %v1359 = vld [vmem:[%s1338 + $0xa0] sm:$0xff]
        %v1360 = vld [vmem:[%s1338 + $0xa8] sm:$0xff]
        %v1361 = vld [vmem:[%s1338 + $0xb0] sm:$0xff]
        %v1362 = vld [vmem:[%s1338 + $0xb8] sm:$0xff]
        %v1363 = vld [vmem:[%s1338 + $0xc0] sm:$0x33]
        %v1364 = vld [vmem:[%s1338 + $0xc8] sm:$0x33]
        %v1365 = vld [vmem:[%s1338 + $0xd0] sm:$0x33]
        %v1366 = vld [vmem:[%s1338 + $0xd8] sm:$0x33]
        %v1367 = vld [vmem:[%s1338 + $0xe0] sm:$0x33]
        %v1368 = vld [vmem:[%s1338 + $0xe8] sm:$0x33]
        %v1369 = vld [vmem:[%s1338 + $0xf0] sm:$0x33]
        %v1370 = vld [vmem:[%s1338 + $0xf8] sm:$0x33]
        %v1403 = vunpack.c.l.b16 %v1339
        %v1404 = vunpack.c.h.b16 %v1339
        %v1405 = vunpack.c.l.b16 %v1340
        %v1406 = vunpack.c.h.b16 %v1340
        %v1407 = vunpack.c.l.b16 %v1341
        %v1408 = vunpack.c.h.b16 %v1341
        %v1409 = vunpack.c.l.b16 %v1342
        %v1410 = vunpack.c.h.b16 %v1342
        %v1411 = vunpack.c.l.b16 %v1343
        %v1412 = vunpack.c.h.b16 %v1343
        %v1413 = vunpack.c.l.b16 %v1344
        %v1414 = vunpack.c.h.b16 %v1344
        %v1415 = vunpack.c.l.b16 %v1345
        %v1416 = vunpack.c.h.b16 %v1345
        %v1417 = vunpack.c.l.b16 %v1346
        %v1418 = vunpack.c.h.b16 %v1346
        %v1419 = vunpack.c.l.b16 %v1347
        %v1420 = vunpack.c.h.b16 %v1347
        %v1421 = vunpack.c.l.b16 %v1348
        %v1422 = vunpack.c.h.b16 %v1348
        %v1423 = vunpack.c.l.b16 %v1349
        %v1424 = vunpack.c.h.b16 %v1349
        %v1425 = vunpack.c.l.b16 %v1350
        %v1426 = vunpack.c.h.b16 %v1350
        %v1427 = vunpack.c.l.b16 %v1351
        %v1428 = vunpack.c.h.b16 %v1351
        %v1429 = vunpack.c.l.b16 %v1352
        %v1430 = vunpack.c.h.b16 %v1352
        %v1431 = vunpack.c.l.b16 %v1353
        %v1432 = vunpack.c.h.b16 %v1353
        %v1433 = vunpack.c.l.b16 %v1354
        %v1434 = vunpack.c.h.b16 %v1354
        %v1435 = vunpack.c.l.b16 %v1355
        %v1436 = vunpack.c.h.b16 %v1355
        %v1437 = vunpack.c.l.b16 %v1356
        %v1438 = vunpack.c.h.b16 %v1356
        %v1439 = vunpack.c.l.b16 %v1357
        %v1440 = vunpack.c.h.b16 %v1357
        %v1441 = vunpack.c.l.b16 %v1358
        %v1442 = vunpack.c.h.b16 %v1358
        %v1443 = vunpack.c.l.b16 %v1359
        %v1444 = vunpack.c.h.b16 %v1359
        %v1445 = vunpack.c.l.b16 %v1360
        %v1446 = vunpack.c.h.b16 %v1360
        %v1447 = vunpack.c.l.b16 %v1361
        %v1448 = vunpack.c.h.b16 %v1361
        %v1449 = vunpack.c.l.b16 %v1362
        %v1450 = vunpack.c.h.b16 %v1362
        %v1451 = vunpack.c.l.b16 %v1363
        %v1452 = vunpack.c.h.b16 %v1363
        %v1453 = vunpack.c.l.b16 %v1364
        %v1454 = vunpack.c.h.b16 %v1364
        %v1455 = vunpack.c.l.b16 %v1365
        %v1456 = vunpack.c.h.b16 %v1365
        %v1457 = vunpack.c.l.b16 %v1366
        %v1458 = vunpack.c.h.b16 %v1366
        %v1459 = vunpack.c.l.b16 %v1367
        %v1460 = vunpack.c.h.b16 %v1367
        %v1461 = vunpack.c.l.b16 %v1368
        %v1462 = vunpack.c.h.b16 %v1368
        %v1463 = vunpack.c.l.b16 %v1369
        %v1464 = vunpack.c.h.b16 %v1369
        %v1465 = vunpack.c.l.b16 %v1370
        %v1466 = vunpack.c.h.b16 %v1370
        %v1467 = vpack.c.b16 %v1419, %v1403
        %v1468 = vpack.c.b16 %v1420, %v1404
        %v1469 = vpack.c.b16 %v1421, %v1405
        %v1470 = vpack.c.b16 %v1422, %v1406
        %v1471 = vpack.c.b16 %v1423, %v1407
        %v1472 = vpack.c.b16 %v1424, %v1408
        %v1473 = vpack.c.b16 %v1425, %v1409
        %v1474 = vpack.c.b16 %v1426, %v1410
        %v1475 = vpack.c.b16 %v1427, %v1411
        %v1476 = vpack.c.b16 %v1428, %v1412
        %v1477 = vpack.c.b16 %v1429, %v1413
        %v1478 = vpack.c.b16 %v1430, %v1414
        %v1479 = vpack.c.b16 %v1431, %v1415
        %v1480 = vpack.c.b16 %v1432, %v1416
        %v1481 = vpack.c.b16 %v1433, %v1417
        %v1482 = vpack.c.b16 %v1434, %v1418
        %v1483 = vpack.c.b16 %v1451, %v1435
        %v1484 = vpack.c.b16 %v1452, %v1436
        %v1485 = vpack.c.b16 %v1453, %v1437
        %v1486 = vpack.c.b16 %v1454, %v1438
        %v1487 = vpack.c.b16 %v1455, %v1439
        %v1488 = vpack.c.b16 %v1456, %v1440
        %v1489 = vpack.c.b16 %v1457, %v1441
        %v1490 = vpack.c.b16 %v1458, %v1442
        %v1491 = vpack.c.b16 %v1459, %v1443
        %v1492 = vpack.c.b16 %v1460, %v1444
        %v1493 = vpack.c.b16 %v1461, %v1445
        %v1494 = vpack.c.b16 %v1462, %v1446
        %v1495 = vpack.c.b16 %v1463, %v1447
        %v1496 = vpack.c.b16 %v1464, %v1448
        %v1497 = vpack.c.b16 %v1465, %v1449
        %v1498 = vpack.c.b16 %v1466, %v1450
        %v1516 = vand.u32 %v1483, %v632
        %v1519 = vand.u32 %v1484, %v632
        %v1522 = vand.u32 %v1485, %v632
        %v1525 = vand.u32 %v1486, %v632
        %v1528 = vand.u32 %v1487, %v632
        %v1531 = vand.u32 %v1488, %v632
        %v1534 = vand.u32 %v1489, %v632
        %v1537 = vand.u32 %v1490, %v632
        %v1540 = vand.u32 %v1491, %v632
        %v1543 = vand.u32 %v1492, %v632
        %v1546 = vand.u32 %v1493, %v632
        %v1549 = vand.u32 %v1494, %v632
        %v1552 = vand.u32 %v1495, %v632
        %v1555 = vand.u32 %v1496, %v632
        %v1558 = vand.u32 %v1497, %v632
        %v1561 = vand.u32 %v1498, %v632
        %1563 = vmatpush.bf16.msra.mxu0 0
        %1564 = vmatpush.bf16.msra.mxu0 0
        %1565 = vmatpush.bf16.msra.mxu0 0
        %1566 = vmatpush.bf16.msra.mxu0 0
        %1567 = vmatpush.bf16.msra.mxu0 0
        %1568 = vmatpush.bf16.msra.mxu0 0
        %1569 = vmatpush.bf16.msra.mxu0 %v1516
        %1570 = vmatpush.bf16.msra.mxu0 %v1467
        %1571 = vmatmul.bf16.gmra.mxu0 %v627
        %v1572 = vpop.f32.mrf.mxu0
        %v1573 = vadd.f32 0.0, %v1572
        %v1574 = vpop.f32.mrf.mxu0
        %1575 = vdwg.mxu0
        %1576 = vmatpush.bf16.msra.mxu0 0
        %1577 = vmatpush.bf16.msra.mxu0 0
        %1578 = vmatpush.bf16.msra.mxu0 0
        %1579 = vmatpush.bf16.msra.mxu0 0
        %1580 = vmatpush.bf16.msra.mxu0 0
        %1581 = vmatpush.bf16.msra.mxu0 0
        %1582 = vmatpush.bf16.msra.mxu0 %v1519
        %1583 = vmatpush.bf16.msra.mxu0 %v1468
        %1584 = vmatmul.bf16.gmra.mxu0 %v627
        %v1585 = vpop.f32.mrf.mxu0
        %v1586 = vadd.f32 0.0, %v1585
        %v1587 = vpop.f32.mrf.mxu0
        %1588 = vdwg.mxu0
        %1589 = vmatpush.bf16.msra.mxu0 0
        %1590 = vmatpush.bf16.msra.mxu0 0
        %1591 = vmatpush.bf16.msra.mxu0 0
        %1592 = vmatpush.bf16.msra.mxu0 0
        %1593 = vmatpush.bf16.msra.mxu0 0
        %1594 = vmatpush.bf16.msra.mxu0 0
        %1595 = vmatpush.bf16.msra.mxu0 %v1522
        %1596 = vmatpush.bf16.msra.mxu0 %v1469
        %1597 = vmatmul.bf16.gmra.mxu0 %v627
        %v1598 = vpop.f32.mrf.mxu0
        %v1599 = vadd.f32 0.0, %v1598
        %v1600 = vpop.f32.mrf.mxu0
        %1601 = vdwg.mxu0
        %1602 = vmatpush.bf16.msra.mxu0 0
        %1603 = vmatpush.bf16.msra.mxu0 0
        %1604 = vmatpush.bf16.msra.mxu0 0
        %1605 = vmatpush.bf16.msra.mxu0 0
        %1606 = vmatpush.bf16.msra.mxu0 0
        %1607 = vmatpush.bf16.msra.mxu0 0
        %1608 = vmatpush.bf16.msra.mxu0 %v1525
        %1609 = vmatpush.bf16.msra.mxu0 %v1470
        %1610 = vmatmul.bf16.gmra.mxu0 %v627
        %v1611 = vpop.f32.mrf.mxu0
        %v1612 = vadd.f32 0.0, %v1611
        %v1613 = vpop.f32.mrf.mxu0
        %1614 = vdwg.mxu0
        %1615 = vmatpush.bf16.msra.mxu0 0
        %1616 = vmatpush.bf16.msra.mxu0 0
        %1617 = vmatpush.bf16.msra.mxu0 0
        %1618 = vmatpush.bf16.msra.mxu0 0
        %1619 = vmatpush.bf16.msra.mxu0 0
        %1620 = vmatpush.bf16.msra.mxu0 0
        %1621 = vmatpush.bf16.msra.mxu0 %v1528
        %1622 = vmatpush.bf16.msra.mxu0 %v1471
        %1623 = vmatmul.bf16.gmra.mxu0 %v627
        %v1624 = vpop.f32.mrf.mxu0
        %v1625 = vadd.f32 0.0, %v1624
        %v1626 = vpop.f32.mrf.mxu0
        %1627 = vdwg.mxu0
        %1628 = vmatpush.bf16.msra.mxu0 0
        %1629 = vmatpush.bf16.msra.mxu0 0
        %1630 = vmatpush.bf16.msra.mxu0 0
        %1631 = vmatpush.bf16.msra.mxu0 0
        %1632 = vmatpush.bf16.msra.mxu0 0
        %1633 = vmatpush.bf16.msra.mxu0 0
        %1634 = vmatpush.bf16.msra.mxu0 %v1531
        %1635 = vmatpush.bf16.msra.mxu0 %v1472
        %1636 = vmatmul.bf16.gmra.mxu0 %v627
        %v1637 = vpop.f32.mrf.mxu0
        %v1638 = vadd.f32 0.0, %v1637
        %v1639 = vpop.f32.mrf.mxu0
        %1640 = vdwg.mxu0
        %1641 = vmatpush.bf16.msra.mxu0 0
        %1642 = vmatpush.bf16.msra.mxu0 0
        %1643 = vmatpush.bf16.msra.mxu0 0
        %1644 = vmatpush.bf16.msra.mxu0 0
        %1645 = vmatpush.bf16.msra.mxu0 0
        %1646 = vmatpush.bf16.msra.mxu0 0
        %1647 = vmatpush.bf16.msra.mxu0 %v1534
        %1648 = vmatpush.bf16.msra.mxu0 %v1473
        %1649 = vmatmul.bf16.gmra.mxu0 %v627
        %v1650 = vpop.f32.mrf.mxu0
        %v1651 = vadd.f32 0.0, %v1650
        %v1652 = vpop.f32.mrf.mxu0
        %1653 = vdwg.mxu0
        %1654 = vmatpush.bf16.msra.mxu0 0
        %1655 = vmatpush.bf16.msra.mxu0 0
        %1656 = vmatpush.bf16.msra.mxu0 0
        %1657 = vmatpush.bf16.msra.mxu0 0
        %1658 = vmatpush.bf16.msra.mxu0 0
        %1659 = vmatpush.bf16.msra.mxu0 0
        %1660 = vmatpush.bf16.msra.mxu0 %v1537
        %1661 = vmatpush.bf16.msra.mxu0 %v1474
        %1662 = vmatmul.bf16.gmra.mxu0 %v627
        %v1663 = vpop.f32.mrf.mxu0
        %v1664 = vadd.f32 0.0, %v1663
        %v1665 = vpop.f32.mrf.mxu0
        %1666 = vdwg.mxu0
        %1667 = vmatpush.bf16.msra.mxu0 0
        %1668 = vmatpush.bf16.msra.mxu0 0
        %1669 = vmatpush.bf16.msra.mxu0 0
        %1670 = vmatpush.bf16.msra.mxu0 0
        %1671 = vmatpush.bf16.msra.mxu0 0
        %1672 = vmatpush.bf16.msra.mxu0 0
        %1673 = vmatpush.bf16.msra.mxu0 %v1540
        %1674 = vmatpush.bf16.msra.mxu0 %v1475
        %1675 = vmatmul.bf16.gmra.mxu0 %v627
        %v1676 = vpop.f32.mrf.mxu0
        %v1677 = vadd.f32 0.0, %v1676
        %v1678 = vpop.f32.mrf.mxu0
        %1679 = vdwg.mxu0
        %1680 = vmatpush.bf16.msra.mxu0 0
        %1681 = vmatpush.bf16.msra.mxu0 0
        %1682 = vmatpush.bf16.msra.mxu0 0
        %1683 = vmatpush.bf16.msra.mxu0 0
        %1684 = vmatpush.bf16.msra.mxu0 0
        %1685 = vmatpush.bf16.msra.mxu0 0
        %1686 = vmatpush.bf16.msra.mxu0 %v1543
        %1687 = vmatpush.bf16.msra.mxu0 %v1476
        %1688 = vmatmul.bf16.gmra.mxu0 %v627
        %v1689 = vpop.f32.mrf.mxu0
        %v1690 = vadd.f32 0.0, %v1689
        %v1691 = vpop.f32.mrf.mxu0
        %1692 = vdwg.mxu0
        %1693 = vmatpush.bf16.msra.mxu0 0
        %1694 = vmatpush.bf16.msra.mxu0 0
        %1695 = vmatpush.bf16.msra.mxu0 0
        %1696 = vmatpush.bf16.msra.mxu0 0
        %1697 = vmatpush.bf16.msra.mxu0 0
        %1698 = vmatpush.bf16.msra.mxu0 0
        %1699 = vmatpush.bf16.msra.mxu0 %v1546
        %1700 = vmatpush.bf16.msra.mxu0 %v1477
        %1701 = vmatmul.bf16.gmra.mxu0 %v627
        %v1702 = vpop.f32.mrf.mxu0
        %v1703 = vadd.f32 0.0, %v1702
        %v1704 = vpop.f32.mrf.mxu0
        %1705 = vdwg.mxu0
        %1706 = vmatpush.bf16.msra.mxu0 0
        %1707 = vmatpush.bf16.msra.mxu0 0
        %1708 = vmatpush.bf16.msra.mxu0 0
        %1709 = vmatpush.bf16.msra.mxu0 0
        %1710 = vmatpush.bf16.msra.mxu0 0
        %1711 = vmatpush.bf16.msra.mxu0 0
        %1712 = vmatpush.bf16.msra.mxu0 %v1549
        %1713 = vmatpush.bf16.msra.mxu0 %v1478
        %1714 = vmatmul.bf16.gmra.mxu0 %v627
        %v1715 = vpop.f32.mrf.mxu0
        %v1716 = vadd.f32 0.0, %v1715
        %v1717 = vpop.f32.mrf.mxu0
        %1718 = vdwg.mxu0
        %1719 = vmatpush.bf16.msra.mxu0 0
        %1720 = vmatpush.bf16.msra.mxu0 0
        %1721 = vmatpush.bf16.msra.mxu0 0
        %1722 = vmatpush.bf16.msra.mxu0 0
        %1723 = vmatpush.bf16.msra.mxu0 0
        %1724 = vmatpush.bf16.msra.mxu0 0
        %1725 = vmatpush.bf16.msra.mxu0 %v1552
        %1726 = vmatpush.bf16.msra.mxu0 %v1479
        %1727 = vmatmul.bf16.gmra.mxu0 %v627
        %v1728 = vpop.f32.mrf.mxu0
        %v1729 = vadd.f32 0.0, %v1728
        %v1730 = vpop.f32.mrf.mxu0
        %1731 = vdwg.mxu0
        %1732 = vmatpush.bf16.msra.mxu0 0
        %1733 = vmatpush.bf16.msra.mxu0 0
        %1734 = vmatpush.bf16.msra.mxu0 0
        %1735 = vmatpush.bf16.msra.mxu0 0
        %1736 = vmatpush.bf16.msra.mxu0 0
        %1737 = vmatpush.bf16.msra.mxu0 0
        %1738 = vmatpush.bf16.msra.mxu0 %v1555
        %1739 = vmatpush.bf16.msra.mxu0 %v1480
        %1740 = vmatmul.bf16.gmra.mxu0 %v627
        %v1741 = vpop.f32.mrf.mxu0
        %v1742 = vadd.f32 0.0, %v1741
        %v1743 = vpop.f32.mrf.mxu0
        %1744 = vdwg.mxu0
        %1745 = vmatpush.bf16.msra.mxu0 0
        %1746 = vmatpush.bf16.msra.mxu0 0
        %1747 = vmatpush.bf16.msra.mxu0 0
        %1748 = vmatpush.bf16.msra.mxu0 0
        %1749 = vmatpush.bf16.msra.mxu0 0
        %1750 = vmatpush.bf16.msra.mxu0 0
        %1751 = vmatpush.bf16.msra.mxu0 %v1558
        %1752 = vmatpush.bf16.msra.mxu0 %v1481
        %1753 = vmatmul.bf16.gmra.mxu0 %v627
        %v1754 = vpop.f32.mrf.mxu0
        %v1755 = vadd.f32 0.0, %v1754
        %v1756 = vpop.f32.mrf.mxu0
        %1757 = vdwg.mxu0
        %1758 = vmatpush.bf16.msra.mxu0 0
        %1759 = vmatpush.bf16.msra.mxu0 0
        %1760 = vmatpush.bf16.msra.mxu0 0
        %1761 = vmatpush.bf16.msra.mxu0 0
        %1762 = vmatpush.bf16.msra.mxu0 0
        %1763 = vmatpush.bf16.msra.mxu0 0
        %1764 = vmatpush.bf16.msra.mxu0 %v1561
        %1765 = vmatpush.bf16.msra.mxu0 %v1482
        %1766 = vmatmul.bf16.gmra.mxu0 %v627
        %v1767 = vpop.f32.mrf.mxu0
        %v1768 = vadd.f32 0.0, %v1767
        %v1769 = vpop.f32.mrf.mxu0
        %1770 = vdwg.mxu0
        %v1771 = vmax.f32 %v1322, %v1573
        %v1772 = vmax.f32 %v1323, %v1586
        %v1773 = vmax.f32 %v1324, %v1599
        %v1774 = vmax.f32 %v1325, %v1612
        %v1775 = vmax.f32 %v1326, %v1625
        %v1776 = vmax.f32 %v1327, %v1638
        %v1777 = vmax.f32 %v1328, %v1651
        %v1778 = vmax.f32 %v1329, %v1664
        %v1779 = vmax.f32 %v1330, %v1677
        %v1780 = vmax.f32 %v1331, %v1690
        %v1781 = vmax.f32 %v1332, %v1703
        %v1782 = vmax.f32 %v1333, %v1716
        %v1783 = vmax.f32 %v1334, %v1729
        %v1784 = vmax.f32 %v1335, %v1742
        %v1785 = vmax.f32 %v1336, %v1755
        %v1786 = vmax.f32 %v1337, %v1768
        %s1787 = scalar_lea.vmem %s419, 768 [#allocation2]
        %v1788 = vld [vmem:[%s1787] sm:$0xff]
        %v1789 = vld [vmem:[%s1787 + $0x8] sm:$0xff]
        %v1790 = vld [vmem:[%s1787 + $0x10] sm:$0xff]
        %v1791 = vld [vmem:[%s1787 + $0x18] sm:$0xff]
        %v1792 = vld [vmem:[%s1787 + $0x20] sm:$0xff]
        %v1793 = vld [vmem:[%s1787 + $0x28] sm:$0xff]
        %v1794 = vld [vmem:[%s1787 + $0x30] sm:$0xff]
        %v1795 = vld [vmem:[%s1787 + $0x38] sm:$0xff]
        %v1796 = vld [vmem:[%s1787 + $0x40] sm:$0xff]
        %v1797 = vld [vmem:[%s1787 + $0x48] sm:$0xff]
        %v1798 = vld [vmem:[%s1787 + $0x50] sm:$0xff]
        %v1799 = vld [vmem:[%s1787 + $0x58] sm:$0xff]
        %v1800 = vld [vmem:[%s1787 + $0x60] sm:$0xff]
        %v1801 = vld [vmem:[%s1787 + $0x68] sm:$0xff]
        %v1802 = vld [vmem:[%s1787 + $0x70] sm:$0xff]
        %v1803 = vld [vmem:[%s1787 + $0x78] sm:$0xff]
        %v1804 = vld [vmem:[%s1787 + $0x80] sm:$0xff]
        %v1805 = vld [vmem:[%s1787 + $0x88] sm:$0xff]
        %v1806 = vld [vmem:[%s1787 + $0x90] sm:$0xff]
        %v1807 = vld [vmem:[%s1787 + $0x98] sm:$0xff]
        %v1808 = vld [vmem:[%s1787 + $0xa0] sm:$0xff]
        %v1809 = vld [vmem:[%s1787 + $0xa8] sm:$0xff]
        %v1810 = vld [vmem:[%s1787 + $0xb0] sm:$0xff]
        %v1811 = vld [vmem:[%s1787 + $0xb8] sm:$0xff]
        %v1812 = vld [vmem:[%s1787 + $0xc0] sm:$0x33]
        %v1813 = vld [vmem:[%s1787 + $0xc8] sm:$0x33]
        %v1814 = vld [vmem:[%s1787 + $0xd0] sm:$0x33]
        %v1815 = vld [vmem:[%s1787 + $0xd8] sm:$0x33]
        %v1816 = vld [vmem:[%s1787 + $0xe0] sm:$0x33]
        %v1817 = vld [vmem:[%s1787 + $0xe8] sm:$0x33]
        %v1818 = vld [vmem:[%s1787 + $0xf0] sm:$0x33]
        %v1819 = vld [vmem:[%s1787 + $0xf8] sm:$0x33]
        %v1852 = vunpack.c.l.b16 %v1788
        %v1853 = vunpack.c.h.b16 %v1788
        %v1854 = vunpack.c.l.b16 %v1789
        %v1855 = vunpack.c.h.b16 %v1789
        %v1856 = vunpack.c.l.b16 %v1790
        %v1857 = vunpack.c.h.b16 %v1790
        %v1858 = vunpack.c.l.b16 %v1791
        %v1859 = vunpack.c.h.b16 %v1791
        %v1860 = vunpack.c.l.b16 %v1792
        %v1861 = vunpack.c.h.b16 %v1792
        %v1862 = vunpack.c.l.b16 %v1793
        %v1863 = vunpack.c.h.b16 %v1793
        %v1864 = vunpack.c.l.b16 %v1794
        %v1865 = vunpack.c.h.b16 %v1794
        %v1866 = vunpack.c.l.b16 %v1795
        %v1867 = vunpack.c.h.b16 %v1795
        %v1868 = vunpack.c.l.b16 %v1796
        %v1869 = vunpack.c.h.b16 %v1796
        %v1870 = vunpack.c.l.b16 %v1797
        %v1871 = vunpack.c.h.b16 %v1797
        %v1872 = vunpack.c.l.b16 %v1798
        %v1873 = vunpack.c.h.b16 %v1798
        %v1874 = vunpack.c.l.b16 %v1799
        %v1875 = vunpack.c.h.b16 %v1799
        %v1876 = vunpack.c.l.b16 %v1800
        %v1877 = vunpack.c.h.b16 %v1800
        %v1878 = vunpack.c.l.b16 %v1801
        %v1879 = vunpack.c.h.b16 %v1801
        %v1880 = vunpack.c.l.b16 %v1802
        %v1881 = vunpack.c.h.b16 %v1802
        %v1882 = vunpack.c.l.b16 %v1803
        %v1883 = vunpack.c.h.b16 %v1803
        %v1884 = vunpack.c.l.b16 %v1804
        %v1885 = vunpack.c.h.b16 %v1804
        %v1886 = vunpack.c.l.b16 %v1805
        %v1887 = vunpack.c.h.b16 %v1805
        %v1888 = vunpack.c.l.b16 %v1806
        %v1889 = vunpack.c.h.b16 %v1806
        %v1890 = vunpack.c.l.b16 %v1807
        %v1891 = vunpack.c.h.b16 %v1807
        %v1892 = vunpack.c.l.b16 %v1808
        %v1893 = vunpack.c.h.b16 %v1808
        %v1894 = vunpack.c.l.b16 %v1809
        %v1895 = vunpack.c.h.b16 %v1809
        %v1896 = vunpack.c.l.b16 %v1810
        %v1897 = vunpack.c.h.b16 %v1810
        %v1898 = vunpack.c.l.b16 %v1811
        %v1899 = vunpack.c.h.b16 %v1811
        %v1900 = vunpack.c.l.b16 %v1812
        %v1901 = vunpack.c.h.b16 %v1812
        %v1902 = vunpack.c.l.b16 %v1813
        %v1903 = vunpack.c.h.b16 %v1813
        %v1904 = vunpack.c.l.b16 %v1814
        %v1905 = vunpack.c.h.b16 %v1814
        %v1906 = vunpack.c.l.b16 %v1815
        %v1907 = vunpack.c.h.b16 %v1815
        %v1908 = vunpack.c.l.b16 %v1816
        %v1909 = vunpack.c.h.b16 %v1816
        %v1910 = vunpack.c.l.b16 %v1817
        %v1911 = vunpack.c.h.b16 %v1817
        %v1912 = vunpack.c.l.b16 %v1818
        %v1913 = vunpack.c.h.b16 %v1818
        %v1914 = vunpack.c.l.b16 %v1819
        %v1915 = vunpack.c.h.b16 %v1819
        %v1916 = vpack.c.b16 %v1868, %v1852
        %v1917 = vpack.c.b16 %v1869, %v1853
        %v1918 = vpack.c.b16 %v1870, %v1854
        %v1919 = vpack.c.b16 %v1871, %v1855
        %v1920 = vpack.c.b16 %v1872, %v1856
        %v1921 = vpack.c.b16 %v1873, %v1857
        %v1922 = vpack.c.b16 %v1874, %v1858
        %v1923 = vpack.c.b16 %v1875, %v1859
        %v1924 = vpack.c.b16 %v1876, %v1860
        %v1925 = vpack.c.b16 %v1877, %v1861
        %v1926 = vpack.c.b16 %v1878, %v1862
        %v1927 = vpack.c.b16 %v1879, %v1863
        %v1928 = vpack.c.b16 %v1880, %v1864
        %v1929 = vpack.c.b16 %v1881, %v1865
        %v1930 = vpack.c.b16 %v1882, %v1866
        %v1931 = vpack.c.b16 %v1883, %v1867
        %v1932 = vpack.c.b16 %v1900, %v1884
        %v1933 = vpack.c.b16 %v1901, %v1885
        %v1934 = vpack.c.b16 %v1902, %v1886
        %v1935 = vpack.c.b16 %v1903, %v1887
        %v1936 = vpack.c.b16 %v1904, %v1888
        %v1937 = vpack.c.b16 %v1905, %v1889
        %v1938 = vpack.c.b16 %v1906, %v1890
        %v1939 = vpack.c.b16 %v1907, %v1891
        %v1940 = vpack.c.b16 %v1908, %v1892
        %v1941 = vpack.c.b16 %v1909, %v1893
        %v1942 = vpack.c.b16 %v1910, %v1894
        %v1943 = vpack.c.b16 %v1911, %v1895
        %v1944 = vpack.c.b16 %v1912, %v1896
        %v1945 = vpack.c.b16 %v1913, %v1897
        %v1946 = vpack.c.b16 %v1914, %v1898
        %v1947 = vpack.c.b16 %v1915, %v1899
        %v1965 = vand.u32 %v1932, %v632
        %v1968 = vand.u32 %v1933, %v632
        %v1971 = vand.u32 %v1934, %v632
        %v1974 = vand.u32 %v1935, %v632
        %v1977 = vand.u32 %v1936, %v632
        %v1980 = vand.u32 %v1937, %v632
        %v1983 = vand.u32 %v1938, %v632
        %v1986 = vand.u32 %v1939, %v632
        %v1989 = vand.u32 %v1940, %v632
        %v1992 = vand.u32 %v1941, %v632
        %v1995 = vand.u32 %v1942, %v632
        %v1998 = vand.u32 %v1943, %v632
        %v2001 = vand.u32 %v1944, %v632
        %v2004 = vand.u32 %v1945, %v632
        %v2007 = vand.u32 %v1946, %v632
        %v2010 = vand.u32 %v1947, %v632
        %2012 = vmatpush.bf16.msra.mxu0 0
        %2013 = vmatpush.bf16.msra.mxu0 0
        %2014 = vmatpush.bf16.msra.mxu0 0
        %2015 = vmatpush.bf16.msra.mxu0 0
        %2016 = vmatpush.bf16.msra.mxu0 0
        %2017 = vmatpush.bf16.msra.mxu0 0
        %2018 = vmatpush.bf16.msra.mxu0 %v1965
        %2019 = vmatpush.bf16.msra.mxu0 %v1916
        %2020 = vmatmul.bf16.gmra.mxu0 %v627
        %v2021 = vpop.f32.mrf.mxu0
        %v2022 = vadd.f32 0.0, %v2021
        %v2023 = vpop.f32.mrf.mxu0
        %2024 = vdwg.mxu0
        %2025 = vmatpush.bf16.msra.mxu0 0
        %2026 = vmatpush.bf16.msra.mxu0 0
        %2027 = vmatpush.bf16.msra.mxu0 0
        %2028 = vmatpush.bf16.msra.mxu0 0
        %2029 = vmatpush.bf16.msra.mxu0 0
        %2030 = vmatpush.bf16.msra.mxu0 0
        %2031 = vmatpush.bf16.msra.mxu0 %v1968
        %2032 = vmatpush.bf16.msra.mxu0 %v1917
        %2033 = vmatmul.bf16.gmra.mxu0 %v627
        %v2034 = vpop.f32.mrf.mxu0
        %v2035 = vadd.f32 0.0, %v2034
        %v2036 = vpop.f32.mrf.mxu0
        %2037 = vdwg.mxu0
        %2038 = vmatpush.bf16.msra.mxu0 0
        %2039 = vmatpush.bf16.msra.mxu0 0
        %2040 = vmatpush.bf16.msra.mxu0 0
        %2041 = vmatpush.bf16.msra.mxu0 0
        %2042 = vmatpush.bf16.msra.mxu0 0
        %2043 = vmatpush.bf16.msra.mxu0 0
        %2044 = vmatpush.bf16.msra.mxu0 %v1971
        %2045 = vmatpush.bf16.msra.mxu0 %v1918
        %2046 = vmatmul.bf16.gmra.mxu0 %v627
        %v2047 = vpop.f32.mrf.mxu0
        %v2048 = vadd.f32 0.0, %v2047
        %v2049 = vpop.f32.mrf.mxu0
        %2050 = vdwg.mxu0
        %2051 = vmatpush.bf16.msra.mxu0 0
        %2052 = vmatpush.bf16.msra.mxu0 0
        %2053 = vmatpush.bf16.msra.mxu0 0
        %2054 = vmatpush.bf16.msra.mxu0 0
        %2055 = vmatpush.bf16.msra.mxu0 0
        %2056 = vmatpush.bf16.msra.mxu0 0
        %2057 = vmatpush.bf16.msra.mxu0 %v1974
        %2058 = vmatpush.bf16.msra.mxu0 %v1919
        %2059 = vmatmul.bf16.gmra.mxu0 %v627
        %v2060 = vpop.f32.mrf.mxu0
        %v2061 = vadd.f32 0.0, %v2060
        %v2062 = vpop.f32.mrf.mxu0
        %2063 = vdwg.mxu0
        %2064 = vmatpush.bf16.msra.mxu0 0
        %2065 = vmatpush.bf16.msra.mxu0 0
        %2066 = vmatpush.bf16.msra.mxu0 0
        %2067 = vmatpush.bf16.msra.mxu0 0
        %2068 = vmatpush.bf16.msra.mxu0 0
        %2069 = vmatpush.bf16.msra.mxu0 0
        %2070 = vmatpush.bf16.msra.mxu0 %v1977
        %2071 = vmatpush.bf16.msra.mxu0 %v1920
        %2072 = vmatmul.bf16.gmra.mxu0 %v627
        %v2073 = vpop.f32.mrf.mxu0
        %v2074 = vadd.f32 0.0, %v2073
        %v2075 = vpop.f32.mrf.mxu0
        %2076 = vdwg.mxu0
        %2077 = vmatpush.bf16.msra.mxu0 0
        %2078 = vmatpush.bf16.msra.mxu0 0
        %2079 = vmatpush.bf16.msra.mxu0 0
        %2080 = vmatpush.bf16.msra.mxu0 0
        %2081 = vmatpush.bf16.msra.mxu0 0
        %2082 = vmatpush.bf16.msra.mxu0 0
        %2083 = vmatpush.bf16.msra.mxu0 %v1980
        %2084 = vmatpush.bf16.msra.mxu0 %v1921
        %2085 = vmatmul.bf16.gmra.mxu0 %v627
        %v2086 = vpop.f32.mrf.mxu0
        %v2087 = vadd.f32 0.0, %v2086
        %v2088 = vpop.f32.mrf.mxu0
        %2089 = vdwg.mxu0
        %2090 = vmatpush.bf16.msra.mxu0 0
        %2091 = vmatpush.bf16.msra.mxu0 0
        %2092 = vmatpush.bf16.msra.mxu0 0
        %2093 = vmatpush.bf16.msra.mxu0 0
        %2094 = vmatpush.bf16.msra.mxu0 0
        %2095 = vmatpush.bf16.msra.mxu0 0
        %2096 = vmatpush.bf16.msra.mxu0 %v1983
        %2097 = vmatpush.bf16.msra.mxu0 %v1922
        %2098 = vmatmul.bf16.gmra.mxu0 %v627
        %v2099 = vpop.f32.mrf.mxu0
        %v2100 = vadd.f32 0.0, %v2099
        %v2101 = vpop.f32.mrf.mxu0
        %2102 = vdwg.mxu0
        %2103 = vmatpush.bf16.msra.mxu0 0
        %2104 = vmatpush.bf16.msra.mxu0 0
        %2105 = vmatpush.bf16.msra.mxu0 0
        %2106 = vmatpush.bf16.msra.mxu0 0
        %2107 = vmatpush.bf16.msra.mxu0 0
        %2108 = vmatpush.bf16.msra.mxu0 0
        %2109 = vmatpush.bf16.msra.mxu0 %v1986
        %2110 = vmatpush.bf16.msra.mxu0 %v1923
        %2111 = vmatmul.bf16.gmra.mxu0 %v627
        %v2112 = vpop.f32.mrf.mxu0
        %v2113 = vadd.f32 0.0, %v2112
        %v2114 = vpop.f32.mrf.mxu0
        %2115 = vdwg.mxu0
        %2116 = vmatpush.bf16.msra.mxu0 0
        %2117 = vmatpush.bf16.msra.mxu0 0
        %2118 = vmatpush.bf16.msra.mxu0 0
        %2119 = vmatpush.bf16.msra.mxu0 0
        %2120 = vmatpush.bf16.msra.mxu0 0
        %2121 = vmatpush.bf16.msra.mxu0 0
        %2122 = vmatpush.bf16.msra.mxu0 %v1989
        %2123 = vmatpush.bf16.msra.mxu0 %v1924
        %2124 = vmatmul.bf16.gmra.mxu0 %v627
        %v2125 = vpop.f32.mrf.mxu0
        %v2126 = vadd.f32 0.0, %v2125
        %v2127 = vpop.f32.mrf.mxu0
        %2128 = vdwg.mxu0
        %2129 = vmatpush.bf16.msra.mxu0 0
        %2130 = vmatpush.bf16.msra.mxu0 0
        %2131 = vmatpush.bf16.msra.mxu0 0
        %2132 = vmatpush.bf16.msra.mxu0 0
        %2133 = vmatpush.bf16.msra.mxu0 0
        %2134 = vmatpush.bf16.msra.mxu0 0
        %2135 = vmatpush.bf16.msra.mxu0 %v1992
        %2136 = vmatpush.bf16.msra.mxu0 %v1925
        %2137 = vmatmul.bf16.gmra.mxu0 %v627
        %v2138 = vpop.f32.mrf.mxu0
        %v2139 = vadd.f32 0.0, %v2138
        %v2140 = vpop.f32.mrf.mxu0
        %2141 = vdwg.mxu0
        %2142 = vmatpush.bf16.msra.mxu0 0
        %2143 = vmatpush.bf16.msra.mxu0 0
        %2144 = vmatpush.bf16.msra.mxu0 0
        %2145 = vmatpush.bf16.msra.mxu0 0
        %2146 = vmatpush.bf16.msra.mxu0 0
        %2147 = vmatpush.bf16.msra.mxu0 0
        %2148 = vmatpush.bf16.msra.mxu0 %v1995
        %2149 = vmatpush.bf16.msra.mxu0 %v1926
        %2150 = vmatmul.bf16.gmra.mxu0 %v627
        %v2151 = vpop.f32.mrf.mxu0
        %v2152 = vadd.f32 0.0, %v2151
        %v2153 = vpop.f32.mrf.mxu0
        %2154 = vdwg.mxu0
        %2155 = vmatpush.bf16.msra.mxu0 0
        %2156 = vmatpush.bf16.msra.mxu0 0
        %2157 = vmatpush.bf16.msra.mxu0 0
        %2158 = vmatpush.bf16.msra.mxu0 0
        %2159 = vmatpush.bf16.msra.mxu0 0
        %2160 = vmatpush.bf16.msra.mxu0 0
        %2161 = vmatpush.bf16.msra.mxu0 %v1998
        %2162 = vmatpush.bf16.msra.mxu0 %v1927
        %2163 = vmatmul.bf16.gmra.mxu0 %v627
        %v2164 = vpop.f32.mrf.mxu0
        %v2165 = vadd.f32 0.0, %v2164
        %v2166 = vpop.f32.mrf.mxu0
        %2167 = vdwg.mxu0
        %2168 = vmatpush.bf16.msra.mxu0 0
        %2169 = vmatpush.bf16.msra.mxu0 0
        %2170 = vmatpush.bf16.msra.mxu0 0
        %2171 = vmatpush.bf16.msra.mxu0 0
        %2172 = vmatpush.bf16.msra.mxu0 0
        %2173 = vmatpush.bf16.msra.mxu0 0
        %2174 = vmatpush.bf16.msra.mxu0 %v2001
        %2175 = vmatpush.bf16.msra.mxu0 %v1928
        %2176 = vmatmul.bf16.gmra.mxu0 %v627
        %v2177 = vpop.f32.mrf.mxu0
        %v2178 = vadd.f32 0.0, %v2177
        %v2179 = vpop.f32.mrf.mxu0
        %2180 = vdwg.mxu0
        %2181 = vmatpush.bf16.msra.mxu0 0
        %2182 = vmatpush.bf16.msra.mxu0 0
        %2183 = vmatpush.bf16.msra.mxu0 0
        %2184 = vmatpush.bf16.msra.mxu0 0
        %2185 = vmatpush.bf16.msra.mxu0 0
        %2186 = vmatpush.bf16.msra.mxu0 0
        %2187 = vmatpush.bf16.msra.mxu0 %v2004
        %2188 = vmatpush.bf16.msra.mxu0 %v1929
        %2189 = vmatmul.bf16.gmra.mxu0 %v627
        %v2190 = vpop.f32.mrf.mxu0
        %v2191 = vadd.f32 0.0, %v2190
        %v2192 = vpop.f32.mrf.mxu0
        %2193 = vdwg.mxu0
        %2194 = vmatpush.bf16.msra.mxu0 0
        %2195 = vmatpush.bf16.msra.mxu0 0
        %2196 = vmatpush.bf16.msra.mxu0 0
        %2197 = vmatpush.bf16.msra.mxu0 0
        %2198 = vmatpush.bf16.msra.mxu0 0
        %2199 = vmatpush.bf16.msra.mxu0 0
        %2200 = vmatpush.bf16.msra.mxu0 %v2007
        %2201 = vmatpush.bf16.msra.mxu0 %v1930
        %2202 = vmatmul.bf16.gmra.mxu0 %v627
        %v2203 = vpop.f32.mrf.mxu0
        %v2204 = vadd.f32 0.0, %v2203
        %v2205 = vpop.f32.mrf.mxu0
        %2206 = vdwg.mxu0
        %2207 = vmatpush.bf16.msra.mxu0 0
        %2208 = vmatpush.bf16.msra.mxu0 0
        %2209 = vmatpush.bf16.msra.mxu0 0
        %2210 = vmatpush.bf16.msra.mxu0 0
        %2211 = vmatpush.bf16.msra.mxu0 0
        %2212 = vmatpush.bf16.msra.mxu0 0
        %2213 = vmatpush.bf16.msra.mxu0 %v2010
        %2214 = vmatpush.bf16.msra.mxu0 %v1931
        %2215 = vmatmul.bf16.gmra.mxu0 %v627
        %v2216 = vpop.f32.mrf.mxu0
        %v2217 = vadd.f32 0.0, %v2216
        %v2218 = vpop.f32.mrf.mxu0
        %2219 = vdwg.mxu0
        %v2220 = vmax.f32 %v1771, %v2022
        %v2221 = vmax.f32 %v1772, %v2035
        %v2222 = vmax.f32 %v1773, %v2048
        %v2223 = vmax.f32 %v1774, %v2061
        %v2224 = vmax.f32 %v1775, %v2074
        %v2225 = vmax.f32 %v1776, %v2087
        %v2226 = vmax.f32 %v1777, %v2100
        %v2227 = vmax.f32 %v1778, %v2113
        %v2228 = vmax.f32 %v1779, %v2126
        %v2229 = vmax.f32 %v1780, %v2139
        %v2230 = vmax.f32 %v1781, %v2152
        %v2231 = vmax.f32 %v1782, %v2165
        %v2232 = vmax.f32 %v1783, %v2178
        %v2233 = vmax.f32 %v1784, %v2191
        %v2234 = vmax.f32 %v1785, %v2204
        %v2235 = vmax.f32 %v1786, %v2217
        %v2236 = vld [vmem:[%s2] sm:$0xff]
        %2238 = vset.pattern.permute.xlu0 0
        %2239 = vperm.xlu0 %2238, %v2236
        %v2240 = vpop.permute.xlu0 %2239
        %v2242 = vadd.f32 %v2220, %v2240
        %v2243 = vadd.f32 %v2221, %v2240
        %v2244 = vadd.f32 %v2222, %v2240
        %v2245 = vadd.f32 %v2223, %v2240
        %v2246 = vadd.f32 %v2224, %v2240
        %v2247 = vadd.f32 %v2225, %v2240
        %v2248 = vadd.f32 %v2226, %v2240
        %v2249 = vadd.f32 %v2227, %v2240
        %v2250 = vadd.f32 %v2228, %v2240
        %v2251 = vadd.f32 %v2229, %v2240
        %v2252 = vadd.f32 %v2230, %v2240
        %v2253 = vadd.f32 %v2231, %v2240
        %v2254 = vadd.f32 %v2232, %v2240
        %v2255 = vadd.f32 %v2233, %v2240
        %v2256 = vadd.f32 %v2234, %v2240
        %v2257 = vadd.f32 %v2235, %v2240
        %v2258 = vmax.f32 %v2242, 0.0
        %v2259 = vmax.f32 %v2243, 0.0
        %v2260 = vmax.f32 %v2244, 0.0
        %v2261 = vmax.f32 %v2245, 0.0
        %v2262 = vmax.f32 %v2246, 0.0
        %v2263 = vmax.f32 %v2247, 0.0
        %v2264 = vmax.f32 %v2248, 0.0
        %v2265 = vmax.f32 %v2249, 0.0
        %v2266 = vmax.f32 %v2250, 0.0
        %v2267 = vmax.f32 %v2251, 0.0
        %v2268 = vmax.f32 %v2252, 0.0
        %v2269 = vmax.f32 %v2253, 0.0
        %v2270 = vmax.f32 %v2254, 0.0
        %v2271 = vmax.f32 %v2255, 0.0
        %v2272 = vmax.f32 %v2256, 0.0
        %v2273 = vmax.f32 %v2257, 0.0
        %2274 = vst [vmem:[%s445] sm:$0xff] %v2258
        %2275 = vst [vmem:[%s445 + $0x8] sm:$0xff] %v2259
        %2276 = vst [vmem:[%s445 + $0x10] sm:$0xff] %v2260
        %2277 = vst [vmem:[%s445 + $0x18] sm:$0xff] %v2261
        %2278 = vst [vmem:[%s445 + $0x20] sm:$0xff] %v2262
        %2279 = vst [vmem:[%s445 + $0x28] sm:$0xff] %v2263
        %2280 = vst [vmem:[%s445 + $0x30] sm:$0xff] %v2264
        %2281 = vst [vmem:[%s445 + $0x38] sm:$0xff] %v2265
        %2282 = vst [vmem:[%s445 + $0x40] sm:$0xff] %v2266
        %2283 = vst [vmem:[%s445 + $0x48] sm:$0xff] %v2267
        %2284 = vst [vmem:[%s445 + $0x50] sm:$0xff] %v2268
        %2285 = vst [vmem:[%s445 + $0x58] sm:$0xff] %v2269
        %2286 = vst [vmem:[%s445 + $0x60] sm:$0xff] %v2270
        %2287 = vst [vmem:[%s445 + $0x68] sm:$0xff] %v2271
        %2288 = vst [vmem:[%s445 + $0x70] sm:$0xff] %v2272
        %2289 = vst [vmem:[%s445 + $0x78] sm:$0xff] %v2273
        %s2290 = smul.u32 16, %s14
        %p2291 = scmp.lt.s32.totalorder %s2290, 31
        %s2292 = scalar_select %p2291, %s2290, 31
        %s2293 = smul.addr %s2292, 8
        %s2294 = scalar_lea.vmem %s3, %s2293
        // Predicated region
        $region56: #{cnn90_forward.4} parent=50 // pred_check
          %p2295 = pneg %p100
        $region57: #{cnn90_forward.4} parent=50 // pred_check_branch
          %2297 = sbr.rel (%p2295) target = $region59
        $region58: #{cnn90_forward.4} parent=50 // pred_region
          %s2298 = smul.u32 16, %s14
        $region59: #{cnn90_forward.4} parent=50 // pred_fallthru
          _
      $region51: #{cnn90_forward.4} parent=5 // pred_fallthru
        _
      %p2299 = scmp.le.s32.totalorder 2, %s9
      // Predicated region
      $region60: #{cnn90_forward.4} parent=5 // pred_check
        %p2300 = pneg %p2299
      $region61: #{cnn90_forward.4} parent=5 // pred_check_branch
        %2302 = sbr.rel (%p2300) target = $region63
      $region62: #{cnn90_forward.4} parent=5 // pred_region
        %s2303 = ssub.s32 %s9, 2
        // Predicated region
        $region64: #{cnn90_forward.4} parent=62 // pred_check
          %p2304 = pneg %p106
        $region65: #{cnn90_forward.4} parent=62 // pred_check_branch
          %2306 = sbr.rel (%p2304) target = $region67
        $region66: #{cnn90_forward.4} parent=62 // pred_region
          %s2307 = smul.u32 16, %s15
          %p2308 = scmp.lt.s32.totalorder %s2307, 31
          %s2309 = scalar_select %p2308, %s2307, 31
          %s2310 = smul.addr %s2309, 8
          %s2311 = scalar_lea.vmem %s3, %s2310
        $region67: #{cnn90_forward.4} parent=62 // pred_fallthru
          _
      $region63: #{cnn90_forward.4} parent=5 // pred_fallthru
        _
    $region6: #{cnn90_forward.4} parent=1 // loop_footer
      %s13 = sadd.s32 1, %s9
    $region7: #{cnn90_forward.4} parent=1 // loop_footer_branch
      %8 = sbr.rel target = $region3
    $region8: #{cnn90_forward.4} parent=1 // loop_exit
      _

// kernel: cnn90_forward.5
$region0: #{cnn90_forward.5}
  #allocation0 [shape = 'u32[]', space=smem, size = 0x4, offset = 0x4, fixed_abs, tag = 'smem constant byte address 0x4 - core index']
  #allocation1 [shape = 'u32[72,128]{1,0:T(1,128)}', space=vmem, size = 0x9000, scoped, tag = 'internal scratch']
  %s0 = inlined_call_operand.vmem [shape: bf16[4,72,1024], index: 0, kind: input, shape index: {}]
  %s1 = inlined_call_operand.vmem [shape: bf16[16,72], index: 1, kind: input, shape index: {}]
  %s2 = inlined_call_operand.vmem [shape: f32[16,1], index: 2, kind: input, shape index: {}]
  %s3 = inlined_call_operand.vmem [shape: f32[16,1024], index: 3, kind: output, shape index: {}]
  %s4 = sld [smem:[#allocation0]]
  $region22: #{cnn90_forward.5} parent=0
    _
  %s6 = ssub.s32 1, %s4
  %s7 = scalar_select 0, %s6, %s4
  // Predicated region
  $region2: #{cnn90_forward.5} parent=0 // pred_check
    _
  $region3: #{cnn90_forward.5} parent=0 // pred_check_branch
    %9 = sbr.rel (0) target = $region5
  $region4: #{cnn90_forward.5} parent=0 // pred_region
    _
  $region5: #{cnn90_forward.5} parent=0 // pred_fallthru
    _
  // Predicated region
  $region6: #{cnn90_forward.5} parent=0 // pred_check
    _
  $region7: #{cnn90_forward.5} parent=0 // pred_check_branch
    %11 = sbr.rel (0) target = $region9
  $region8: #{cnn90_forward.5} parent=0 // pred_region
    _
  $region9: #{cnn90_forward.5} parent=0 // pred_fallthru
    _
  // Predicated region
  $region10: #{cnn90_forward.5} parent=0 // pred_check
    _
  $region11: #{cnn90_forward.5} parent=0 // pred_check_branch
    %13 = sbr.rel (0) target = $region13
  $region12: #{cnn90_forward.5} parent=0 // pred_region
    _
  $region13: #{cnn90_forward.5} parent=0 // pred_fallthru
    _
  %v15 = vld [vmem:[%s1] sm:$0xf]
  %v16 = vld [vmem:[%s1 + $0x4] sm:$0xf]
  %v17 = vld [vmem:[%s0] sm:$0xff]
  %v18 = vld [vmem:[%s0 + $0x8] sm:$0xff]
  %v19 = vld [vmem:[%s0 + $0x10] sm:$0xff]
  %v20 = vld [vmem:[%s0 + $0x18] sm:$0xff]
  %v21 = vld [vmem:[%s0 + $0x20] sm:$0xff]
  %v22 = vld [vmem:[%s0 + $0x28] sm:$0xff]
  %v23 = vld [vmem:[%s0 + $0x30] sm:$0xff]
  %v24 = vld [vmem:[%s0 + $0x38] sm:$0xff]
  %v25 = vld [vmem:[%s0 + $0x40] sm:$0xff]
  %v26 = vld [vmem:[%s0 + $0x48] sm:$0xff]
  %v27 = vld [vmem:[%s0 + $0x50] sm:$0xff]
  %v28 = vld [vmem:[%s0 + $0x58] sm:$0xff]
  %v29 = vld [vmem:[%s0 + $0x60] sm:$0xff]
  %v30 = vld [vmem:[%s0 + $0x68] sm:$0xff]
  %v31 = vld [vmem:[%s0 + $0x70] sm:$0xff]
  %v32 = vld [vmem:[%s0 + $0x78] sm:$0xff]
  %v33 = vld [vmem:[%s0 + $0x80] sm:$0xff]
  %v34 = vld [vmem:[%s0 + $0x88] sm:$0xff]
  %v35 = vld [vmem:[%s0 + $0x90] sm:$0xff]
  %v36 = vld [vmem:[%s0 + $0x98] sm:$0xff]
  %v37 = vld [vmem:[%s0 + $0xa0] sm:$0xff]
  %v38 = vld [vmem:[%s0 + $0xa8] sm:$0xff]
  %v39 = vld [vmem:[%s0 + $0xb0] sm:$0xff]
  %v40 = vld [vmem:[%s0 + $0xb8] sm:$0xff]
  %v41 = vld [vmem:[%s0 + $0xc0] sm:$0xff]
  %v42 = vld [vmem:[%s0 + $0xc8] sm:$0xff]
  %v43 = vld [vmem:[%s0 + $0xd0] sm:$0xff]
  %v44 = vld [vmem:[%s0 + $0xd8] sm:$0xff]
  %v45 = vld [vmem:[%s0 + $0xe0] sm:$0xff]
  %v46 = vld [vmem:[%s0 + $0xe8] sm:$0xff]
  %v47 = vld [vmem:[%s0 + $0xf0] sm:$0xff]
  %v48 = vld [vmem:[%s0 + $0xf8] sm:$0xff]
  %v49 = vld [vmem:[%s0 + $0x100] sm:$0xff]
  %v50 = vld [vmem:[%s0 + $0x108] sm:$0xff]
  %v51 = vld [vmem:[%s0 + $0x110] sm:$0xff]
  %v52 = vld [vmem:[%s0 + $0x118] sm:$0xff]
  %v55 = vunpack.c.l.b16 %v15
  %v56 = vunpack.c.l.b16 %v16
  %v57 = vpack.c.b16 %v56, %v55
  %v94 = vunpack.c.l.b16 %v17
  %v95 = vunpack.c.h.b16 %v17
  %v96 = vunpack.c.l.b16 %v18
  %v97 = vunpack.c.h.b16 %v18
  %v98 = vunpack.c.l.b16 %v19
  %v99 = vunpack.c.h.b16 %v19
  %v100 = vunpack.c.l.b16 %v20
  %v101 = vunpack.c.h.b16 %v20
  %v102 = vunpack.c.l.b16 %v21
  %v103 = vunpack.c.h.b16 %v21
  %v104 = vunpack.c.l.b16 %v22
  %v105 = vunpack.c.h.b16 %v22
  %v106 = vunpack.c.l.b16 %v23
  %v107 = vunpack.c.h.b16 %v23
  %v108 = vunpack.c.l.b16 %v24
  %v109 = vunpack.c.h.b16 %v24
  %v110 = vunpack.c.l.b16 %v25
  %v111 = vunpack.c.h.b16 %v25
  %v112 = vunpack.c.l.b16 %v26
  %v113 = vunpack.c.h.b16 %v26
  %v114 = vunpack.c.l.b16 %v27
  %v115 = vunpack.c.h.b16 %v27
  %v116 = vunpack.c.l.b16 %v28
  %v117 = vunpack.c.h.b16 %v28
  %v118 = vunpack.c.l.b16 %v29
  %v119 = vunpack.c.h.b16 %v29
  %v120 = vunpack.c.l.b16 %v30
  %v121 = vunpack.c.h.b16 %v30
  %v122 = vunpack.c.l.b16 %v31
  %v123 = vunpack.c.h.b16 %v31
  %v124 = vunpack.c.l.b16 %v32
  %v125 = vunpack.c.h.b16 %v32
  %v126 = vunpack.c.l.b16 %v33
  %v127 = vunpack.c.h.b16 %v33
  %v128 = vunpack.c.l.b16 %v34
  %v129 = vunpack.c.h.b16 %v34
  %v130 = vunpack.c.l.b16 %v35
  %v131 = vunpack.c.h.b16 %v35
  %v132 = vunpack.c.l.b16 %v36
  %v133 = vunpack.c.h.b16 %v36
  %v134 = vunpack.c.l.b16 %v37
  %v135 = vunpack.c.h.b16 %v37
  %v136 = vunpack.c.l.b16 %v38
  %v137 = vunpack.c.h.b16 %v38
  %v138 = vunpack.c.l.b16 %v39
  %v139 = vunpack.c.h.b16 %v39
  %v140 = vunpack.c.l.b16 %v40
  %v141 = vunpack.c.h.b16 %v40
  %v142 = vunpack.c.l.b16 %v41
  %v143 = vunpack.c.h.b16 %v41
  %v144 = vunpack.c.l.b16 %v42
  %v145 = vunpack.c.h.b16 %v42
  %v146 = vunpack.c.l.b16 %v43
  %v147 = vunpack.c.h.b16 %v43
  %v148 = vunpack.c.l.b16 %v44
  %v149 = vunpack.c.h.b16 %v44
  %v150 = vunpack.c.l.b16 %v45
  %v151 = vunpack.c.h.b16 %v45
  %v152 = vunpack.c.l.b16 %v46
  %v153 = vunpack.c.h.b16 %v46
  %v154 = vunpack.c.l.b16 %v47
  %v155 = vunpack.c.h.b16 %v47
  %v156 = vunpack.c.l.b16 %v48
  %v157 = vunpack.c.h.b16 %v48
  %v158 = vunpack.c.l.b16 %v49
  %v159 = vunpack.c.h.b16 %v49
  %v160 = vunpack.c.l.b16 %v50
  %v161 = vunpack.c.h.b16 %v50
  %v162 = vunpack.c.l.b16 %v51
  %v163 = vunpack.c.h.b16 %v51
  %v164 = vunpack.c.l.b16 %v52
  %v165 = vunpack.c.h.b16 %v52
  %v166 = vpack.c.b16 %v102, %v94
  %v167 = vpack.c.b16 %v103, %v95
  %v168 = vpack.c.b16 %v104, %v96
  %v169 = vpack.c.b16 %v105, %v97
  %v170 = vpack.c.b16 %v106, %v98
  %v171 = vpack.c.b16 %v107, %v99
  %v172 = vpack.c.b16 %v108, %v100
  %v173 = vpack.c.b16 %v109, %v101
  %v174 = vpack.c.b16 %v118, %v110
  %v175 = vpack.c.b16 %v119, %v111
  %v176 = vpack.c.b16 %v120, %v112
  %v177 = vpack.c.b16 %v121, %v113
  %v178 = vpack.c.b16 %v122, %v114
  %v179 = vpack.c.b16 %v123, %v115
  %v180 = vpack.c.b16 %v124, %v116
  %v181 = vpack.c.b16 %v125, %v117
  %v182 = vpack.c.b16 %v134, %v126
  %v183 = vpack.c.b16 %v135, %v127
  %v184 = vpack.c.b16 %v136, %v128
  %v185 = vpack.c.b16 %v137, %v129
  %v186 = vpack.c.b16 %v138, %v130
  %v187 = vpack.c.b16 %v139, %v131
  %v188 = vpack.c.b16 %v140, %v132
  %v189 = vpack.c.b16 %v141, %v133
  %v190 = vpack.c.b16 %v150, %v142
  %v191 = vpack.c.b16 %v151, %v143
  %v192 = vpack.c.b16 %v152, %v144
  %v193 = vpack.c.b16 %v153, %v145
  %v194 = vpack.c.b16 %v154, %v146
  %v195 = vpack.c.b16 %v155, %v147
  %v196 = vpack.c.b16 %v156, %v148
  %v197 = vpack.c.b16 %v157, %v149
  %v198 = vpack.c.b16 %v158, %v158
  %v199 = vpack.c.b16 %v159, %v159
  %v200 = vpack.c.b16 %v160, %v160
  %v201 = vpack.c.b16 %v161, %v161
  %v202 = vpack.c.b16 %v162, %v162
  %v203 = vpack.c.b16 %v163, %v163
  %v204 = vpack.c.b16 %v164, %v164
  %v205 = vpack.c.b16 %v165, %v165
  %vm238 = vcmask 588800
  %v240 = vsel %vm238, %v57, 0
  %vm242 = vcmask 1043456
  %v244 = vsel %vm242, %v198, 0
  %v247 = vsel %vm242, %v199, 0
  %v250 = vsel %vm242, %v200, 0
  %v253 = vsel %vm242, %v201, 0
  %v256 = vsel %vm242, %v202, 0
  %v259 = vsel %vm242, %v203, 0
  %v262 = vsel %vm242, %v204, 0
  %v265 = vsel %vm242, %v205, 0
  %267 = vmatpush.bf16.msra.mxu0 0
  %268 = vmatpush.bf16.msra.mxu0 0
  %269 = vmatpush.bf16.msra.mxu0 0
  %270 = vmatpush.bf16.msra.mxu0 %v244
  %271 = vmatpush.bf16.msra.mxu0 %v190
  %272 = vmatpush.bf16.msra.mxu0 %v182
  %273 = vmatpush.bf16.msra.mxu0 %v174
  %274 = vmatpush.bf16.msra.mxu0 %v166
  %275 = vmatmul.bf16.gmra.mxu0 %v240
  %v276 = vpop.f32.mrf.mxu0
  %v277 = vadd.f32 0.0, %v276
  %v278 = vpop.f32.mrf.mxu0
  %v279 = vadd.f32 0.0, %v278
  %280 = vdwg.mxu0
  %281 = vmatpush.bf16.msra.mxu0 0
  %282 = vmatpush.bf16.msra.mxu0 0
  %283 = vmatpush.bf16.msra.mxu0 0
  %284 = vmatpush.bf16.msra.mxu0 %v247
  %285 = vmatpush.bf16.msra.mxu0 %v191
  %286 = vmatpush.bf16.msra.mxu0 %v183
  %287 = vmatpush.bf16.msra.mxu0 %v175
  %288 = vmatpush.bf16.msra.mxu0 %v167
  %289 = vmatmul.bf16.gmra.mxu0 %v240
  %v290 = vpop.f32.mrf.mxu0
  %v291 = vadd.f32 0.0, %v290
  %v292 = vpop.f32.mrf.mxu0
  %v293 = vadd.f32 0.0, %v292
  %294 = vdwg.mxu0
  %295 = vmatpush.bf16.msra.mxu0 0
  %296 = vmatpush.bf16.msra.mxu0 0
  %297 = vmatpush.bf16.msra.mxu0 0
  %298 = vmatpush.bf16.msra.mxu0 %v250
  %299 = vmatpush.bf16.msra.mxu0 %v192
  %300 = vmatpush.bf16.msra.mxu0 %v184
  %301 = vmatpush.bf16.msra.mxu0 %v176
  %302 = vmatpush.bf16.msra.mxu0 %v168
  %303 = vmatmul.bf16.gmra.mxu0 %v240
  %v304 = vpop.f32.mrf.mxu0
  %v305 = vadd.f32 0.0, %v304
  %v306 = vpop.f32.mrf.mxu0
  %v307 = vadd.f32 0.0, %v306
  %308 = vdwg.mxu0
  %309 = vmatpush.bf16.msra.mxu0 0
  %310 = vmatpush.bf16.msra.mxu0 0
  %311 = vmatpush.bf16.msra.mxu0 0
  %312 = vmatpush.bf16.msra.mxu0 %v253
  %313 = vmatpush.bf16.msra.mxu0 %v193
  %314 = vmatpush.bf16.msra.mxu0 %v185
  %315 = vmatpush.bf16.msra.mxu0 %v177
  %316 = vmatpush.bf16.msra.mxu0 %v169
  %317 = vmatmul.bf16.gmra.mxu0 %v240
  %v318 = vpop.f32.mrf.mxu0
  %v319 = vadd.f32 0.0, %v318
  %v320 = vpop.f32.mrf.mxu0
  %v321 = vadd.f32 0.0, %v320
  %322 = vdwg.mxu0
  %323 = vmatpush.bf16.msra.mxu0 0
  %324 = vmatpush.bf16.msra.mxu0 0
  %325 = vmatpush.bf16.msra.mxu0 0
  %326 = vmatpush.bf16.msra.mxu0 %v256
  %327 = vmatpush.bf16.msra.mxu0 %v194
  %328 = vmatpush.bf16.msra.mxu0 %v186
  %329 = vmatpush.bf16.msra.mxu0 %v178
  %330 = vmatpush.bf16.msra.mxu0 %v170
  %331 = vmatmul.bf16.gmra.mxu0 %v240
  %v332 = vpop.f32.mrf.mxu0
  %v333 = vadd.f32 0.0, %v332
  %v334 = vpop.f32.mrf.mxu0
  %v335 = vadd.f32 0.0, %v334
  %336 = vdwg.mxu0
  %337 = vmatpush.bf16.msra.mxu0 0
  %338 = vmatpush.bf16.msra.mxu0 0
  %339 = vmatpush.bf16.msra.mxu0 0
  %340 = vmatpush.bf16.msra.mxu0 %v259
  %341 = vmatpush.bf16.msra.mxu0 %v195
  %342 = vmatpush.bf16.msra.mxu0 %v187
  %343 = vmatpush.bf16.msra.mxu0 %v179
  %344 = vmatpush.bf16.msra.mxu0 %v171
  %345 = vmatmul.bf16.gmra.mxu0 %v240
  %v346 = vpop.f32.mrf.mxu0
  %v347 = vadd.f32 0.0, %v346
  %v348 = vpop.f32.mrf.mxu0
  %v349 = vadd.f32 0.0, %v348
  %350 = vdwg.mxu0
  %351 = vmatpush.bf16.msra.mxu0 0
  %352 = vmatpush.bf16.msra.mxu0 0
  %353 = vmatpush.bf16.msra.mxu0 0
  %354 = vmatpush.bf16.msra.mxu0 %v262
  %355 = vmatpush.bf16.msra.mxu0 %v196
  %356 = vmatpush.bf16.msra.mxu0 %v188
  %357 = vmatpush.bf16.msra.mxu0 %v180
  %358 = vmatpush.bf16.msra.mxu0 %v172
  %359 = vmatmul.bf16.gmra.mxu0 %v240
  %v360 = vpop.f32.mrf.mxu0
  %v361 = vadd.f32 0.0, %v360
  %v362 = vpop.f32.mrf.mxu0
  %v363 = vadd.f32 0.0, %v362
  %364 = vdwg.mxu0
  %365 = vmatpush.bf16.msra.mxu0 0
  %366 = vmatpush.bf16.msra.mxu0 0
  %367 = vmatpush.bf16.msra.mxu0 0
  %368 = vmatpush.bf16.msra.mxu0 %v265
  %369 = vmatpush.bf16.msra.mxu0 %v197
  %370 = vmatpush.bf16.msra.mxu0 %v189
  %371 = vmatpush.bf16.msra.mxu0 %v181
  %372 = vmatpush.bf16.msra.mxu0 %v173
  %373 = vmatmul.bf16.gmra.mxu0 %v240
  %v374 = vpop.f32.mrf.mxu0
  %v375 = vadd.f32 0.0, %v374
  %v376 = vpop.f32.mrf.mxu0
  %v377 = vadd.f32 0.0, %v376
  %378 = vdwg.mxu0
  %s379 = scalar_lea.vmem %s0, 288
  %v380 = vld [vmem:[%s379] sm:$0xff]
  %v381 = vld [vmem:[%s379 + $0x8] sm:$0xff]
  %v382 = vld [vmem:[%s379 + $0x10] sm:$0xff]
  %v383 = vld [vmem:[%s379 + $0x18] sm:$0xff]
  %v384 = vld [vmem:[%s379 + $0x20] sm:$0xff]
  %v385 = vld [vmem:[%s379 + $0x28] sm:$0xff]
  %v386 = vld [vmem:[%s379 + $0x30] sm:$0xff]
  %v387 = vld [vmem:[%s379 + $0x38] sm:$0xff]
  %v388 = vld [vmem:[%s379 + $0x40] sm:$0xff]
  %v389 = vld [vmem:[%s379 + $0x48] sm:$0xff]
  %v390 = vld [vmem:[%s379 + $0x50] sm:$0xff]
  %v391 = vld [vmem:[%s379 + $0x58] sm:$0xff]
  %v392 = vld [vmem:[%s379 + $0x60] sm:$0xff]
  %v393 = vld [vmem:[%s379 + $0x68] sm:$0xff]
  %v394 = vld [vmem:[%s379 + $0x70] sm:$0xff]
  %v395 = vld [vmem:[%s379 + $0x78] sm:$0xff]
  %v396 = vld [vmem:[%s379 + $0x80] sm:$0xff]
  %v397 = vld [vmem:[%s379 + $0x88] sm:$0xff]
  %v398 = vld [vmem:[%s379 + $0x90] sm:$0xff]
  %v399 = vld [vmem:[%s379 + $0x98] sm:$0xff]
  %v400 = vld [vmem:[%s379 + $0xa0] sm:$0xff]
  %v401 = vld [vmem:[%s379 + $0xa8] sm:$0xff]
  %v402 = vld [vmem:[%s379 + $0xb0] sm:$0xff]
  %v403 = vld [vmem:[%s379 + $0xb8] sm:$0xff]
  %v404 = vld [vmem:[%s379 + $0xc0] sm:$0xff]
  %v405 = vld [vmem:[%s379 + $0xc8] sm:$0xff]
  %v406 = vld [vmem:[%s379 + $0xd0] sm:$0xff]
  %v407 = vld [vmem:[%s379 + $0xd8] sm:$0xff]
  %v408 = vld [vmem:[%s379 + $0xe0] sm:$0xff]
  %v409 = vld [vmem:[%s379 + $0xe8] sm:$0xff]
  %v410 = vld [vmem:[%s379 + $0xf0] sm:$0xff]
  %v411 = vld [vmem:[%s379 + $0xf8] sm:$0xff]
  %v412 = vld [vmem:[%s379 + $0x100] sm:$0xff]
  %v413 = vld [vmem:[%s379 + $0x108] sm:$0xff]
  %v414 = vld [vmem:[%s379 + $0x110] sm:$0xff]
  %v415 = vld [vmem:[%s379 + $0x118] sm:$0xff]
  %v452 = vunpack.c.l.b16 %v380
  %v453 = vunpack.c.h.b16 %v380
  %v454 = vunpack.c.l.b16 %v381
  %v455 = vunpack.c.h.b16 %v381
  %v456 = vunpack.c.l.b16 %v382
  %v457 = vunpack.c.h.b16 %v382
  %v458 = vunpack.c.l.b16 %v383
  %v459 = vunpack.c.h.b16 %v383
  %v460 = vunpack.c.l.b16 %v384
  %v461 = vunpack.c.h.b16 %v384
  %v462 = vunpack.c.l.b16 %v385
  %v463 = vunpack.c.h.b16 %v385
  %v464 = vunpack.c.l.b16 %v386
  %v465 = vunpack.c.h.b16 %v386
  %v466 = vunpack.c.l.b16 %v387
  %v467 = vunpack.c.h.b16 %v387
  %v468 = vunpack.c.l.b16 %v388
  %v469 = vunpack.c.h.b16 %v388
  %v470 = vunpack.c.l.b16 %v389
  %v471 = vunpack.c.h.b16 %v389
  %v472 = vunpack.c.l.b16 %v390
  %v473 = vunpack.c.h.b16 %v390
  %v474 = vunpack.c.l.b16 %v391
  %v475 = vunpack.c.h.b16 %v391
  %v476 = vunpack.c.l.b16 %v392
  %v477 = vunpack.c.h.b16 %v392
  %v478 = vunpack.c.l.b16 %v393
  %v479 = vunpack.c.h.b16 %v393
  %v480 = vunpack.c.l.b16 %v394
  %v481 = vunpack.c.h.b16 %v394
  %v482 = vunpack.c.l.b16 %v395
  %v483 = vunpack.c.h.b16 %v395
  %v484 = vunpack.c.l.b16 %v396
  %v485 = vunpack.c.h.b16 %v396
  %v486 = vunpack.c.l.b16 %v397
  %v487 = vunpack.c.h.b16 %v397
  %v488 = vunpack.c.l.b16 %v398
  %v489 = vunpack.c.h.b16 %v398
  %v490 = vunpack.c.l.b16 %v399
  %v491 = vunpack.c.h.b16 %v399
  %v492 = vunpack.c.l.b16 %v400
  %v493 = vunpack.c.h.b16 %v400
  %v494 = vunpack.c.l.b16 %v401
  %v495 = vunpack.c.h.b16 %v401
  %v496 = vunpack.c.l.b16 %v402
  %v497 = vunpack.c.h.b16 %v402
  %v498 = vunpack.c.l.b16 %v403
  %v499 = vunpack.c.h.b16 %v403
  %v500 = vunpack.c.l.b16 %v404
  %v501 = vunpack.c.h.b16 %v404
  %v502 = vunpack.c.l.b16 %v405
  %v503 = vunpack.c.h.b16 %v405
  %v504 = vunpack.c.l.b16 %v406
  %v505 = vunpack.c.h.b16 %v406
  %v506 = vunpack.c.l.b16 %v407
  %v507 = vunpack.c.h.b16 %v407
  %v508 = vunpack.c.l.b16 %v408
  %v509 = vunpack.c.h.b16 %v408
  %v510 = vunpack.c.l.b16 %v409
  %v511 = vunpack.c.h.b16 %v409
  %v512 = vunpack.c.l.b16 %v410
  %v513 = vunpack.c.h.b16 %v410
  %v514 = vunpack.c.l.b16 %v411
  %v515 = vunpack.c.h.b16 %v411
  %v516 = vunpack.c.l.b16 %v412
  %v517 = vunpack.c.h.b16 %v412
  %v518 = vunpack.c.l.b16 %v413
  %v519 = vunpack.c.h.b16 %v413
  %v520 = vunpack.c.l.b16 %v414
  %v521 = vunpack.c.h.b16 %v414
  %v522 = vunpack.c.l.b16 %v415
  %v523 = vunpack.c.h.b16 %v415
  %v524 = vpack.c.b16 %v460, %v452
  %v525 = vpack.c.b16 %v461, %v453
  %v526 = vpack.c.b16 %v462, %v454
  %v527 = vpack.c.b16 %v463, %v455
  %v528 = vpack.c.b16 %v464, %v456
  %v529 = vpack.c.b16 %v465, %v457
  %v530 = vpack.c.b16 %v466, %v458
  %v531 = vpack.c.b16 %v467, %v459
  %v532 = vpack.c.b16 %v476, %v468
  %v533 = vpack.c.b16 %v477, %v469
  %v534 = vpack.c.b16 %v478, %v470
  %v535 = vpack.c.b16 %v479, %v471
  %v536 = vpack.c.b16 %v480, %v472
  %v537 = vpack.c.b16 %v481, %v473
  %v538 = vpack.c.b16 %v482, %v474
  %v539 = vpack.c.b16 %v483, %v475
  %v540 = vpack.c.b16 %v492, %v484
  %v541 = vpack.c.b16 %v493, %v485
  %v542 = vpack.c.b16 %v494, %v486
  %v543 = vpack.c.b16 %v495, %v487
  %v544 = vpack.c.b16 %v496, %v488
  %v545 = vpack.c.b16 %v497, %v489
  %v546 = vpack.c.b16 %v498, %v490
  %v547 = vpack.c.b16 %v499, %v491
  %v548 = vpack.c.b16 %v508, %v500
  %v549 = vpack.c.b16 %v509, %v501
  %v550 = vpack.c.b16 %v510, %v502
  %v551 = vpack.c.b16 %v511, %v503
  %v552 = vpack.c.b16 %v512, %v504
  %v553 = vpack.c.b16 %v513, %v505
  %v554 = vpack.c.b16 %v514, %v506
  %v555 = vpack.c.b16 %v515, %v507
  %v556 = vpack.c.b16 %v516, %v516
  %v557 = vpack.c.b16 %v517, %v517
  %v558 = vpack.c.b16 %v518, %v518
  %v559 = vpack.c.b16 %v519, %v519
  %v560 = vpack.c.b16 %v520, %v520
  %v561 = vpack.c.b16 %v521, %v521
  %v562 = vpack.c.b16 %v522, %v522
  %v563 = vpack.c.b16 %v523, %v523
  %v597 = vsel %vm242, %v556, 0
  %v600 = vsel %vm242, %v557, 0
  %v603 = vsel %vm242, %v558, 0
  %v606 = vsel %vm242, %v559, 0
  %v609 = vsel %vm242, %v560, 0
  %v612 = vsel %vm242, %v561, 0
  %v615 = vsel %vm242, %v562, 0
  %v618 = vsel %vm242, %v563, 0
  %620 = vmatpush.bf16.msra.mxu0 0
  %621 = vmatpush.bf16.msra.mxu0 0
  %622 = vmatpush.bf16.msra.mxu0 0
  %623 = vmatpush.bf16.msra.mxu0 %v597
  %624 = vmatpush.bf16.msra.mxu0 %v548
  %625 = vmatpush.bf16.msra.mxu0 %v540
  %626 = vmatpush.bf16.msra.mxu0 %v532
  %627 = vmatpush.bf16.msra.mxu0 %v524
  %628 = vmatmul.bf16.gmra.mxu0 %v240
  %v629 = vpop.f32.mrf.mxu0
  %v630 = vadd.f32 0.0, %v629
  %v631 = vpop.f32.mrf.mxu0
  %v632 = vadd.f32 0.0, %v631
  %633 = vdwg.mxu0
  %634 = vmatpush.bf16.msra.mxu0 0
  %635 = vmatpush.bf16.msra.mxu0 0
  %636 = vmatpush.bf16.msra.mxu0 0
  %637 = vmatpush.bf16.msra.mxu0 %v600
  %638 = vmatpush.bf16.msra.mxu0 %v549
  %639 = vmatpush.bf16.msra.mxu0 %v541
  %640 = vmatpush.bf16.msra.mxu0 %v533
  %641 = vmatpush.bf16.msra.mxu0 %v525
  %642 = vmatmul.bf16.gmra.mxu0 %v240
  %v643 = vpop.f32.mrf.mxu0
  %v644 = vadd.f32 0.0, %v643
  %v645 = vpop.f32.mrf.mxu0
  %v646 = vadd.f32 0.0, %v645
  %647 = vdwg.mxu0
  %648 = vmatpush.bf16.msra.mxu0 0
  %649 = vmatpush.bf16.msra.mxu0 0
  %650 = vmatpush.bf16.msra.mxu0 0
  %651 = vmatpush.bf16.msra.mxu0 %v603
  %652 = vmatpush.bf16.msra.mxu0 %v550
  %653 = vmatpush.bf16.msra.mxu0 %v542
  %654 = vmatpush.bf16.msra.mxu0 %v534
  %655 = vmatpush.bf16.msra.mxu0 %v526
  %656 = vmatmul.bf16.gmra.mxu0 %v240
  %v657 = vpop.f32.mrf.mxu0
  %v658 = vadd.f32 0.0, %v657
  %v659 = vpop.f32.mrf.mxu0
  %v660 = vadd.f32 0.0, %v659
  %661 = vdwg.mxu0
  %662 = vmatpush.bf16.msra.mxu0 0
  %663 = vmatpush.bf16.msra.mxu0 0
  %664 = vmatpush.bf16.msra.mxu0 0
  %665 = vmatpush.bf16.msra.mxu0 %v606
  %666 = vmatpush.bf16.msra.mxu0 %v551
  %667 = vmatpush.bf16.msra.mxu0 %v543
  %668 = vmatpush.bf16.msra.mxu0 %v535
  %669 = vmatpush.bf16.msra.mxu0 %v527
  %670 = vmatmul.bf16.gmra.mxu0 %v240
  %v671 = vpop.f32.mrf.mxu0
  %v672 = vadd.f32 0.0, %v671
  %v673 = vpop.f32.mrf.mxu0
  %v674 = vadd.f32 0.0, %v673
  %675 = vdwg.mxu0
  %676 = vmatpush.bf16.msra.mxu0 0
  %677 = vmatpush.bf16.msra.mxu0 0
  %678 = vmatpush.bf16.msra.mxu0 0
  %679 = vmatpush.bf16.msra.mxu0 %v609
  %680 = vmatpush.bf16.msra.mxu0 %v552
  %681 = vmatpush.bf16.msra.mxu0 %v544
  %682 = vmatpush.bf16.msra.mxu0 %v536
  %683 = vmatpush.bf16.msra.mxu0 %v528
  %684 = vmatmul.bf16.gmra.mxu0 %v240
  %v685 = vpop.f32.mrf.mxu0
  %v686 = vadd.f32 0.0, %v685
  %v687 = vpop.f32.mrf.mxu0
  %v688 = vadd.f32 0.0, %v687
  %689 = vdwg.mxu0
  %690 = vmatpush.bf16.msra.mxu0 0
  %691 = vmatpush.bf16.msra.mxu0 0
  %692 = vmatpush.bf16.msra.mxu0 0
  %693 = vmatpush.bf16.msra.mxu0 %v612
  %694 = vmatpush.bf16.msra.mxu0 %v553
  %695 = vmatpush.bf16.msra.mxu0 %v545
  %696 = vmatpush.bf16.msra.mxu0 %v537
  %697 = vmatpush.bf16.msra.mxu0 %v529
  %698 = vmatmul.bf16.gmra.mxu0 %v240
  %v699 = vpop.f32.mrf.mxu0
  %v700 = vadd.f32 0.0, %v699
  %v701 = vpop.f32.mrf.mxu0
  %v702 = vadd.f32 0.0, %v701
  %703 = vdwg.mxu0
  %704 = vmatpush.bf16.msra.mxu0 0
  %705 = vmatpush.bf16.msra.mxu0 0
  %706 = vmatpush.bf16.msra.mxu0 0
  %707 = vmatpush.bf16.msra.mxu0 %v615
  %708 = vmatpush.bf16.msra.mxu0 %v554
  %709 = vmatpush.bf16.msra.mxu0 %v546
  %710 = vmatpush.bf16.msra.mxu0 %v538
  %711 = vmatpush.bf16.msra.mxu0 %v530
  %712 = vmatmul.bf16.gmra.mxu0 %v240
  %v713 = vpop.f32.mrf.mxu0
  %v714 = vadd.f32 0.0, %v713
  %v715 = vpop.f32.mrf.mxu0
  %v716 = vadd.f32 0.0, %v715
  %717 = vdwg.mxu0
  %718 = vmatpush.bf16.msra.mxu0 0
  %719 = vmatpush.bf16.msra.mxu0 0
  %720 = vmatpush.bf16.msra.mxu0 0
  %721 = vmatpush.bf16.msra.mxu0 %v618
  %722 = vmatpush.bf16.msra.mxu0 %v555
  %723 = vmatpush.bf16.msra.mxu0 %v547
  %724 = vmatpush.bf16.msra.mxu0 %v539
  %725 = vmatpush.bf16.msra.mxu0 %v531
  %726 = vmatmul.bf16.gmra.mxu0 %v240
  %v727 = vpop.f32.mrf.mxu0
  %v728 = vadd.f32 0.0, %v727
  %v729 = vpop.f32.mrf.mxu0
  %v730 = vadd.f32 0.0, %v729
  %731 = vdwg.mxu0
  %v732 = vmax.f32 %v277, %v630
  %v733 = vmax.f32 %v291, %v644
  %v734 = vmax.f32 %v305, %v658
  %v735 = vmax.f32 %v319, %v672
  %v736 = vmax.f32 %v333, %v686
  %v737 = vmax.f32 %v347, %v700
  %v738 = vmax.f32 %v361, %v714
  %v739 = vmax.f32 %v375, %v728
  %v740 = vmax.f32 %v279, %v632
  %v741 = vmax.f32 %v293, %v646
  %v742 = vmax.f32 %v307, %v660
  %v743 = vmax.f32 %v321, %v674
  %v744 = vmax.f32 %v335, %v688
  %v745 = vmax.f32 %v349, %v702
  %v746 = vmax.f32 %v363, %v716
  %v747 = vmax.f32 %v377, %v730
  %s748 = scalar_lea.vmem %s0, 576
  %v749 = vld [vmem:[%s748] sm:$0xff]
  %v750 = vld [vmem:[%s748 + $0x8] sm:$0xff]
  %v751 = vld [vmem:[%s748 + $0x10] sm:$0xff]
  %v752 = vld [vmem:[%s748 + $0x18] sm:$0xff]
  %v753 = vld [vmem:[%s748 + $0x20] sm:$0xff]
  %v754 = vld [vmem:[%s748 + $0x28] sm:$0xff]
  %v755 = vld [vmem:[%s748 + $0x30] sm:$0xff]
  %v756 = vld [vmem:[%s748 + $0x38] sm:$0xff]
  %v757 = vld [vmem:[%s748 + $0x40] sm:$0xff]
  %v758 = vld [vmem:[%s748 + $0x48] sm:$0xff]
  %v759 = vld [vmem:[%s748 + $0x50] sm:$0xff]
  %v760 = vld [vmem:[%s748 + $0x58] sm:$0xff]
  %v761 = vld [vmem:[%s748 + $0x60] sm:$0xff]
  %v762 = vld [vmem:[%s748 + $0x68] sm:$0xff]
  %v763 = vld [vmem:[%s748 + $0x70] sm:$0xff]
  %v764 = vld [vmem:[%s748 + $0x78] sm:$0xff]
  %v765 = vld [vmem:[%s748 + $0x80] sm:$0xff]
  %v766 = vld [vmem:[%s748 + $0x88] sm:$0xff]
  %v767 = vld [vmem:[%s748 + $0x90] sm:$0xff]
  %v768 = vld [vmem:[%s748 + $0x98] sm:$0xff]
  %v769 = vld [vmem:[%s748 + $0xa0] sm:$0xff]
  %v770 = vld [vmem:[%s748 + $0xa8] sm:$0xff]
  %v771 = vld [vmem:[%s748 + $0xb0] sm:$0xff]
  %v772 = vld [vmem:[%s748 + $0xb8] sm:$0xff]
  %v773 = vld [vmem:[%s748 + $0xc0] sm:$0xff]
  %v774 = vld [vmem:[%s748 + $0xc8] sm:$0xff]
  %v775 = vld [vmem:[%s748 + $0xd0] sm:$0xff]
  %v776 = vld [vmem:[%s748 + $0xd8] sm:$0xff]
  %v777 = vld [vmem:[%s748 + $0xe0] sm:$0xff]
  %v778 = vld [vmem:[%s748 + $0xe8] sm:$0xff]
  %v779 = vld [vmem:[%s748 + $0xf0] sm:$0xff]
  %v780 = vld [vmem:[%s748 + $0xf8] sm:$0xff]
  %v781 = vld [vmem:[%s748 + $0x100] sm:$0xff]
  %v782 = vld [vmem:[%s748 + $0x108] sm:$0xff]
  %v783 = vld [vmem:[%s748 + $0x110] sm:$0xff]
  %v784 = vld [vmem:[%s748 + $0x118] sm:$0xff]
  %v821 = vunpack.c.l.b16 %v749
  %v822 = vunpack.c.h.b16 %v749
  %v823 = vunpack.c.l.b16 %v750
  %v824 = vunpack.c.h.b16 %v750
  %v825 = vunpack.c.l.b16 %v751
  %v826 = vunpack.c.h.b16 %v751
  %v827 = vunpack.c.l.b16 %v752
  %v828 = vunpack.c.h.b16 %v752
  %v829 = vunpack.c.l.b16 %v753
  %v830 = vunpack.c.h.b16 %v753
  %v831 = vunpack.c.l.b16 %v754
  %v832 = vunpack.c.h.b16 %v754
  %v833 = vunpack.c.l.b16 %v755
  %v834 = vunpack.c.h.b16 %v755
  %v835 = vunpack.c.l.b16 %v756
  %v836 = vunpack.c.h.b16 %v756
  %v837 = vunpack.c.l.b16 %v757
  %v838 = vunpack.c.h.b16 %v757
  %v839 = vunpack.c.l.b16 %v758
  %v840 = vunpack.c.h.b16 %v758
  %v841 = vunpack.c.l.b16 %v759
  %v842 = vunpack.c.h.b16 %v759
  %v843 = vunpack.c.l.b16 %v760
  %v844 = vunpack.c.h.b16 %v760
  %v845 = vunpack.c.l.b16 %v761
  %v846 = vunpack.c.h.b16 %v761
  %v847 = vunpack.c.l.b16 %v762
  %v848 = vunpack.c.h.b16 %v762
  %v849 = vunpack.c.l.b16 %v763
  %v850 = vunpack.c.h.b16 %v763
  %v851 = vunpack.c.l.b16 %v764
  %v852 = vunpack.c.h.b16 %v764
  %v853 = vunpack.c.l.b16 %v765
  %v854 = vunpack.c.h.b16 %v765
  %v855 = vunpack.c.l.b16 %v766
  %v856 = vunpack.c.h.b16 %v766
  %v857 = vunpack.c.l.b16 %v767
  %v858 = vunpack.c.h.b16 %v767
  %v859 = vunpack.c.l.b16 %v768
  %v860 = vunpack.c.h.b16 %v768
  %v861 = vunpack.c.l.b16 %v769
  %v862 = vunpack.c.h.b16 %v769
  %v863 = vunpack.c.l.b16 %v770
  %v864 = vunpack.c.h.b16 %v770
  %v865 = vunpack.c.l.b16 %v771
  %v866 = vunpack.c.h.b16 %v771
  %v867 = vunpack.c.l.b16 %v772
  %v868 = vunpack.c.h.b16 %v772
  %v869 = vunpack.c.l.b16 %v773
  %v870 = vunpack.c.h.b16 %v773
  %v871 = vunpack.c.l.b16 %v774
  %v872 = vunpack.c.h.b16 %v774
  %v873 = vunpack.c.l.b16 %v775
  %v874 = vunpack.c.h.b16 %v775
  %v875 = vunpack.c.l.b16 %v776
  %v876 = vunpack.c.h.b16 %v776
  %v877 = vunpack.c.l.b16 %v777
  %v878 = vunpack.c.h.b16 %v777
  %v879 = vunpack.c.l.b16 %v778
  %v880 = vunpack.c.h.b16 %v778
  %v881 = vunpack.c.l.b16 %v779
  %v882 = vunpack.c.h.b16 %v779
  %v883 = vunpack.c.l.b16 %v780
  %v884 = vunpack.c.h.b16 %v780
  %v885 = vunpack.c.l.b16 %v781
  %v886 = vunpack.c.h.b16 %v781
  %v887 = vunpack.c.l.b16 %v782
  %v888 = vunpack.c.h.b16 %v782
  %v889 = vunpack.c.l.b16 %v783
  %v890 = vunpack.c.h.b16 %v783
  %v891 = vunpack.c.l.b16 %v784
  %v892 = vunpack.c.h.b16 %v784
  %v893 = vpack.c.b16 %v829, %v821
  %v894 = vpack.c.b16 %v830, %v822
  %v895 = vpack.c.b16 %v831, %v823
  %v896 = vpack.c.b16 %v832, %v824
  %v897 = vpack.c.b16 %v833, %v825
  %v898 = vpack.c.b16 %v834, %v826
  %v899 = vpack.c.b16 %v835, %v827
  %v900 = vpack.c.b16 %v836, %v828
  %v901 = vpack.c.b16 %v845, %v837
  %v902 = vpack.c.b16 %v846, %v838
  %v903 = vpack.c.b16 %v847, %v839
  %v904 = vpack.c.b16 %v848, %v840
  %v905 = vpack.c.b16 %v849, %v841
  %v906 = vpack.c.b16 %v850, %v842
  %v907 = vpack.c.b16 %v851, %v843
  %v908 = vpack.c.b16 %v852, %v844
  %v909 = vpack.c.b16 %v861, %v853
  %v910 = vpack.c.b16 %v862, %v854
  %v911 = vpack.c.b16 %v863, %v855
  %v912 = vpack.c.b16 %v864, %v856
  %v913 = vpack.c.b16 %v865, %v857
  %v914 = vpack.c.b16 %v866, %v858
  %v915 = vpack.c.b16 %v867, %v859
  %v916 = vpack.c.b16 %v868, %v860
  %v917 = vpack.c.b16 %v877, %v869
  %v918 = vpack.c.b16 %v878, %v870
  %v919 = vpack.c.b16 %v879, %v871
  %v920 = vpack.c.b16 %v880, %v872
  %v921 = vpack.c.b16 %v881, %v873
  %v922 = vpack.c.b16 %v882, %v874
  %v923 = vpack.c.b16 %v883, %v875
  %v924 = vpack.c.b16 %v884, %v876
  %v925 = vpack.c.b16 %v885, %v885
  %v926 = vpack.c.b16 %v886, %v886
  %v927 = vpack.c.b16 %v887, %v887
  %v928 = vpack.c.b16 %v888, %v888
  %v929 = vpack.c.b16 %v889, %v889
  %v930 = vpack.c.b16 %v890, %v890
  %v931 = vpack.c.b16 %v891, %v891
  %v932 = vpack.c.b16 %v892, %v892
  %v966 = vsel %vm242, %v925, 0
  %v969 = vsel %vm242, %v926, 0
  %v972 = vsel %vm242, %v927, 0
  %v975 = vsel %vm242, %v928, 0
  %v978 = vsel %vm242, %v929, 0
  %v981 = vsel %vm242, %v930, 0
  %v984 = vsel %vm242, %v931, 0
  %v987 = vsel %vm242, %v932, 0
  %989 = vmatpush.bf16.msra.mxu0 0
  %990 = vmatpush.bf16.msra.mxu0 0
  %991 = vmatpush.bf16.msra.mxu0 0
  %992 = vmatpush.bf16.msra.mxu0 %v966
  %993 = vmatpush.bf16.msra.mxu0 %v917
  %994 = vmatpush.bf16.msra.mxu0 %v909
  %995 = vmatpush.bf16.msra.mxu0 %v901
  %996 = vmatpush.bf16.msra.mxu0 %v893
  %997 = vmatmul.bf16.gmra.mxu0 %v240
  %v998 = vpop.f32.mrf.mxu0
  %v999 = vadd.f32 0.0, %v998
  %v1000 = vpop.f32.mrf.mxu0
  %v1001 = vadd.f32 0.0, %v1000
  %1002 = vdwg.mxu0
  %1003 = vmatpush.bf16.msra.mxu0 0
  %1004 = vmatpush.bf16.msra.mxu0 0
  %1005 = vmatpush.bf16.msra.mxu0 0
  %1006 = vmatpush.bf16.msra.mxu0 %v969
  %1007 = vmatpush.bf16.msra.mxu0 %v918
  %1008 = vmatpush.bf16.msra.mxu0 %v910
  %1009 = vmatpush.bf16.msra.mxu0 %v902
  %1010 = vmatpush.bf16.msra.mxu0 %v894
  %1011 = vmatmul.bf16.gmra.mxu0 %v240
  %v1012 = vpop.f32.mrf.mxu0
  %v1013 = vadd.f32 0.0, %v1012
  %v1014 = vpop.f32.mrf.mxu0
  %v1015 = vadd.f32 0.0, %v1014
  %1016 = vdwg.mxu0
  %1017 = vmatpush.bf16.msra.mxu0 0
  %1018 = vmatpush.bf16.msra.mxu0 0
  %1019 = vmatpush.bf16.msra.mxu0 0
  %1020 = vmatpush.bf16.msra.mxu0 %v972
  %1021 = vmatpush.bf16.msra.mxu0 %v919
  %1022 = vmatpush.bf16.msra.mxu0 %v911
  %1023 = vmatpush.bf16.msra.mxu0 %v903
  %1024 = vmatpush.bf16.msra.mxu0 %v895
  %1025 = vmatmul.bf16.gmra.mxu0 %v240
  %v1026 = vpop.f32.mrf.mxu0
  %v1027 = vadd.f32 0.0, %v1026
  %v1028 = vpop.f32.mrf.mxu0
  %v1029 = vadd.f32 0.0, %v1028
  %1030 = vdwg.mxu0
  %1031 = vmatpush.bf16.msra.mxu0 0
  %1032 = vmatpush.bf16.msra.mxu0 0
  %1033 = vmatpush.bf16.msra.mxu0 0
  %1034 = vmatpush.bf16.msra.mxu0 %v975
  %1035 = vmatpush.bf16.msra.mxu0 %v920
  %1036 = vmatpush.bf16.msra.mxu0 %v912
  %1037 = vmatpush.bf16.msra.mxu0 %v904
  %1038 = vmatpush.bf16.msra.mxu0 %v896
  %1039 = vmatmul.bf16.gmra.mxu0 %v240
  %v1040 = vpop.f32.mrf.mxu0
  %v1041 = vadd.f32 0.0, %v1040
  %v1042 = vpop.f32.mrf.mxu0
  %v1043 = vadd.f32 0.0, %v1042
  %1044 = vdwg.mxu0
  %1045 = vmatpush.bf16.msra.mxu0 0
  %1046 = vmatpush.bf16.msra.mxu0 0
  %1047 = vmatpush.bf16.msra.mxu0 0
  %1048 = vmatpush.bf16.msra.mxu0 %v978
  %1049 = vmatpush.bf16.msra.mxu0 %v921
  %1050 = vmatpush.bf16.msra.mxu0 %v913
  %1051 = vmatpush.bf16.msra.mxu0 %v905
  %1052 = vmatpush.bf16.msra.mxu0 %v897
  %1053 = vmatmul.bf16.gmra.mxu0 %v240
  %v1054 = vpop.f32.mrf.mxu0
  %v1055 = vadd.f32 0.0, %v1054
  %v1056 = vpop.f32.mrf.mxu0
  %v1057 = vadd.f32 0.0, %v1056
  %1058 = vdwg.mxu0
  %1059 = vmatpush.bf16.msra.mxu0 0
  %1060 = vmatpush.bf16.msra.mxu0 0
  %1061 = vmatpush.bf16.msra.mxu0 0
  %1062 = vmatpush.bf16.msra.mxu0 %v981
  %1063 = vmatpush.bf16.msra.mxu0 %v922
  %1064 = vmatpush.bf16.msra.mxu0 %v914
  %1065 = vmatpush.bf16.msra.mxu0 %v906
  %1066 = vmatpush.bf16.msra.mxu0 %v898
  %1067 = vmatmul.bf16.gmra.mxu0 %v240
  %v1068 = vpop.f32.mrf.mxu0
  %v1069 = vadd.f32 0.0, %v1068
  %v1070 = vpop.f32.mrf.mxu0
  %v1071 = vadd.f32 0.0, %v1070
  %1072 = vdwg.mxu0
  %1073 = vmatpush.bf16.msra.mxu0 0
  %1074 = vmatpush.bf16.msra.mxu0 0
  %1075 = vmatpush.bf16.msra.mxu0 0
  %1076 = vmatpush.bf16.msra.mxu0 %v984
  %1077 = vmatpush.bf16.msra.mxu0 %v923
  %1078 = vmatpush.bf16.msra.mxu0 %v915
  %1079 = vmatpush.bf16.msra.mxu0 %v907
  %1080 = vmatpush.bf16.msra.mxu0 %v899
  %1081 = vmatmul.bf16.gmra.mxu0 %v240
  %v1082 = vpop.f32.mrf.mxu0
  %v1083 = vadd.f32 0.0, %v1082
  %v1084 = vpop.f32.mrf.mxu0
  %v1085 = vadd.f32 0.0, %v1084
  %1086 = vdwg.mxu0
  %1087 = vmatpush.bf16.msra.mxu0 0
  %1088 = vmatpush.bf16.msra.mxu0 0
  %1089 = vmatpush.bf16.msra.mxu0 0
  %1090 = vmatpush.bf16.msra.mxu0 %v987
  %1091 = vmatpush.bf16.msra.mxu0 %v924
  %1092 = vmatpush.bf16.msra.mxu0 %v916
  %1093 = vmatpush.bf16.msra.mxu0 %v908
  %1094 = vmatpush.bf16.msra.mxu0 %v900
  %1095 = vmatmul.bf16.gmra.mxu0 %v240
  %v1096 = vpop.f32.mrf.mxu0
  %v1097 = vadd.f32 0.0, %v1096
  %v1098 = vpop.f32.mrf.mxu0
  %v1099 = vadd.f32 0.0, %v1098
  %1100 = vdwg.mxu0
  %v1101 = vmax.f32 %v732, %v999
  %v1102 = vmax.f32 %v733, %v1013
  %v1103 = vmax.f32 %v734, %v1027
  %v1104 = vmax.f32 %v735, %v1041
  %v1105 = vmax.f32 %v736, %v1055
  %v1106 = vmax.f32 %v737, %v1069
  %v1107 = vmax.f32 %v738, %v1083
  %v1108 = vmax.f32 %v739, %v1097
  %v1109 = vmax.f32 %v740, %v1001
  %v1110 = vmax.f32 %v741, %v1015
  %v1111 = vmax.f32 %v742, %v1029
  %v1112 = vmax.f32 %v743, %v1043
  %v1113 = vmax.f32 %v744, %v1057
  %v1114 = vmax.f32 %v745, %v1071
  %v1115 = vmax.f32 %v746, %v1085
  %v1116 = vmax.f32 %v747, %v1099
  %s1117 = scalar_lea.vmem %s0, 864
  %v1118 = vld [vmem:[%s1117] sm:$0xff]
  %v1119 = vld [vmem:[%s1117 + $0x8] sm:$0xff]
  %v1120 = vld [vmem:[%s1117 + $0x10] sm:$0xff]
  %v1121 = vld [vmem:[%s1117 + $0x18] sm:$0xff]
  %v1122 = vld [vmem:[%s1117 + $0x20] sm:$0xff]
  %v1123 = vld [vmem:[%s1117 + $0x28] sm:$0xff]
  %v1124 = vld [vmem:[%s1117 + $0x30] sm:$0xff]
  %v1125 = vld [vmem:[%s1117 + $0x38] sm:$0xff]
  %v1126 = vld [vmem:[%s1117 + $0x40] sm:$0xff]
  %v1127 = vld [vmem:[%s1117 + $0x48] sm:$0xff]
  %v1128 = vld [vmem:[%s1117 + $0x50] sm:$0xff]
  %v1129 = vld [vmem:[%s1117 + $0x58] sm:$0xff]
  %v1130 = vld [vmem:[%s1117 + $0x60] sm:$0xff]
  %v1131 = vld [vmem:[%s1117 + $0x68] sm:$0xff]
  %v1132 = vld [vmem:[%s1117 + $0x70] sm:$0xff]
  %v1133 = vld [vmem:[%s1117 + $0x78] sm:$0xff]
  %v1134 = vld [vmem:[%s1117 + $0x80] sm:$0xff]
  %v1135 = vld [vmem:[%s1117 + $0x88] sm:$0xff]
  %v1136 = vld [vmem:[%s1117 + $0x90] sm:$0xff]
  %v1137 = vld [vmem:[%s1117 + $0x98] sm:$0xff]
  %v1138 = vld [vmem:[%s1117 + $0xa0] sm:$0xff]
  %v1139 = vld [vmem:[%s1117 + $0xa8] sm:$0xff]
  %v1140 = vld [vmem:[%s1117 + $0xb0] sm:$0xff]
  %v1141 = vld [vmem:[%s1117 + $0xb8] sm:$0xff]
  %v1142 = vld [vmem:[%s1117 + $0xc0] sm:$0xff]
  %v1143 = vld [vmem:[%s1117 + $0xc8] sm:$0xff]
  %v1144 = vld [vmem:[%s1117 + $0xd0] sm:$0xff]
  %v1145 = vld [vmem:[%s1117 + $0xd8] sm:$0xff]
  %v1146 = vld [vmem:[%s1117 + $0xe0] sm:$0xff]
  %v1147 = vld [vmem:[%s1117 + $0xe8] sm:$0xff]
  %v1148 = vld [vmem:[%s1117 + $0xf0] sm:$0xff]
  %v1149 = vld [vmem:[%s1117 + $0xf8] sm:$0xff]
  %v1150 = vld [vmem:[%s1117 + $0x100] sm:$0xff]
  %v1151 = vld [vmem:[%s1117 + $0x108] sm:$0xff]
  %v1152 = vld [vmem:[%s1117 + $0x110] sm:$0xff]
  %v1153 = vld [vmem:[%s1117 + $0x118] sm:$0xff]
  %v1190 = vunpack.c.l.b16 %v1118
  %v1191 = vunpack.c.h.b16 %v1118
  %v1192 = vunpack.c.l.b16 %v1119
  %v1193 = vunpack.c.h.b16 %v1119
  %v1194 = vunpack.c.l.b16 %v1120
  %v1195 = vunpack.c.h.b16 %v1120
  %v1196 = vunpack.c.l.b16 %v1121
  %v1197 = vunpack.c.h.b16 %v1121
  %v1198 = vunpack.c.l.b16 %v1122
  %v1199 = vunpack.c.h.b16 %v1122
  %v1200 = vunpack.c.l.b16 %v1123
  %v1201 = vunpack.c.h.b16 %v1123
  %v1202 = vunpack.c.l.b16 %v1124
  %v1203 = vunpack.c.h.b16 %v1124
  %v1204 = vunpack.c.l.b16 %v1125
  %v1205 = vunpack.c.h.b16 %v1125
  %v1206 = vunpack.c.l.b16 %v1126
  %v1207 = vunpack.c.h.b16 %v1126
  %v1208 = vunpack.c.l.b16 %v1127
  %v1209 = vunpack.c.h.b16 %v1127
  %v1210 = vunpack.c.l.b16 %v1128
  %v1211 = vunpack.c.h.b16 %v1128
  %v1212 = vunpack.c.l.b16 %v1129
  %v1213 = vunpack.c.h.b16 %v1129
  %v1214 = vunpack.c.l.b16 %v1130
  %v1215 = vunpack.c.h.b16 %v1130
  %v1216 = vunpack.c.l.b16 %v1131
  %v1217 = vunpack.c.h.b16 %v1131
  %v1218 = vunpack.c.l.b16 %v1132
  %v1219 = vunpack.c.h.b16 %v1132
  %v1220 = vunpack.c.l.b16 %v1133
  %v1221 = vunpack.c.h.b16 %v1133
  %v1222 = vunpack.c.l.b16 %v1134
  %v1223 = vunpack.c.h.b16 %v1134
  %v1224 = vunpack.c.l.b16 %v1135
  %v1225 = vunpack.c.h.b16 %v1135
  %v1226 = vunpack.c.l.b16 %v1136
  %v1227 = vunpack.c.h.b16 %v1136
  %v1228 = vunpack.c.l.b16 %v1137
  %v1229 = vunpack.c.h.b16 %v1137
  %v1230 = vunpack.c.l.b16 %v1138
  %v1231 = vunpack.c.h.b16 %v1138
  %v1232 = vunpack.c.l.b16 %v1139
  %v1233 = vunpack.c.h.b16 %v1139
  %v1234 = vunpack.c.l.b16 %v1140
  %v1235 = vunpack.c.h.b16 %v1140
  %v1236 = vunpack.c.l.b16 %v1141
  %v1237 = vunpack.c.h.b16 %v1141
  %v1238 = vunpack.c.l.b16 %v1142
  %v1239 = vunpack.c.h.b16 %v1142
  %v1240 = vunpack.c.l.b16 %v1143
  %v1241 = vunpack.c.h.b16 %v1143
  %v1242 = vunpack.c.l.b16 %v1144
  %v1243 = vunpack.c.h.b16 %v1144
  %v1244 = vunpack.c.l.b16 %v1145
  %v1245 = vunpack.c.h.b16 %v1145
  %v1246 = vunpack.c.l.b16 %v1146
  %v1247 = vunpack.c.h.b16 %v1146
  %v1248 = vunpack.c.l.b16 %v1147
  %v1249 = vunpack.c.h.b16 %v1147
  %v1250 = vunpack.c.l.b16 %v1148
  %v1251 = vunpack.c.h.b16 %v1148
  %v1252 = vunpack.c.l.b16 %v1149
  %v1253 = vunpack.c.h.b16 %v1149
  %v1254 = vunpack.c.l.b16 %v1150
  %v1255 = vunpack.c.h.b16 %v1150
  %v1256 = vunpack.c.l.b16 %v1151
  %v1257 = vunpack.c.h.b16 %v1151
  %v1258 = vunpack.c.l.b16 %v1152
  %v1259 = vunpack.c.h.b16 %v1152
  %v1260 = vunpack.c.l.b16 %v1153
  %v1261 = vunpack.c.h.b16 %v1153
  %v1262 = vpack.c.b16 %v1198, %v1190
  %v1263 = vpack.c.b16 %v1199, %v1191
  %v1264 = vpack.c.b16 %v1200, %v1192
  %v1265 = vpack.c.b16 %v1201, %v1193
  %v1266 = vpack.c.b16 %v1202, %v1194
  %v1267 = vpack.c.b16 %v1203, %v1195
  %v1268 = vpack.c.b16 %v1204, %v1196
  %v1269 = vpack.c.b16 %v1205, %v1197
  %v1270 = vpack.c.b16 %v1214, %v1206
  %v1271 = vpack.c.b16 %v1215, %v1207
  %v1272 = vpack.c.b16 %v1216, %v1208
  %v1273 = vpack.c.b16 %v1217, %v1209
  %v1274 = vpack.c.b16 %v1218, %v1210
  %v1275 = vpack.c.b16 %v1219, %v1211
  %v1276 = vpack.c.b16 %v1220, %v1212
  %v1277 = vpack.c.b16 %v1221, %v1213
  %v1278 = vpack.c.b16 %v1230, %v1222
  %v1279 = vpack.c.b16 %v1231, %v1223
  %v1280 = vpack.c.b16 %v1232, %v1224
  %v1281 = vpack.c.b16 %v1233, %v1225
  %v1282 = vpack.c.b16 %v1234, %v1226
  %v1283 = vpack.c.b16 %v1235, %v1227
  %v1284 = vpack.c.b16 %v1236, %v1228
  %v1285 = vpack.c.b16 %v1237, %v1229
  %v1286 = vpack.c.b16 %v1246, %v1238
  %v1287 = vpack.c.b16 %v1247, %v1239
  %v1288 = vpack.c.b16 %v1248, %v1240
  %v1289 = vpack.c.b16 %v1249, %v1241
  %v1290 = vpack.c.b16 %v1250, %v1242
  %v1291 = vpack.c.b16 %v1251, %v1243
  %v1292 = vpack.c.b16 %v1252, %v1244
  %v1293 = vpack.c.b16 %v1253, %v1245
  %v1294 = vpack.c.b16 %v1254, %v1254
  %v1295 = vpack.c.b16 %v1255, %v1255
  %v1296 = vpack.c.b16 %v1256, %v1256
  %v1297 = vpack.c.b16 %v1257, %v1257
  %v1298 = vpack.c.b16 %v1258, %v1258
  %v1299 = vpack.c.b16 %v1259, %v1259
  %v1300 = vpack.c.b16 %v1260, %v1260
  %v1301 = vpack.c.b16 %v1261, %v1261
  %v1335 = vsel %vm242, %v1294, 0
  %v1338 = vsel %vm242, %v1295, 0
  %v1341 = vsel %vm242, %v1296, 0
  %v1344 = vsel %vm242, %v1297, 0
  %v1347 = vsel %vm242, %v1298, 0
  %v1350 = vsel %vm242, %v1299, 0
  %v1353 = vsel %vm242, %v1300, 0
  %v1356 = vsel %vm242, %v1301, 0
  %1358 = vmatpush.bf16.msra.mxu0 0
  %1359 = vmatpush.bf16.msra.mxu0 0
  %1360 = vmatpush.bf16.msra.mxu0 0
  %1361 = vmatpush.bf16.msra.mxu0 %v1335
  %1362 = vmatpush.bf16.msra.mxu0 %v1286
  %1363 = vmatpush.bf16.msra.mxu0 %v1278
  %1364 = vmatpush.bf16.msra.mxu0 %v1270
  %1365 = vmatpush.bf16.msra.mxu0 %v1262
  %1366 = vmatmul.bf16.gmra.mxu0 %v240
  %v1367 = vpop.f32.mrf.mxu0
  %v1368 = vadd.f32 0.0, %v1367
  %v1369 = vpop.f32.mrf.mxu0
  %v1370 = vadd.f32 0.0, %v1369
  %1371 = vdwg.mxu0
  %1372 = vmatpush.bf16.msra.mxu0 0
  %1373 = vmatpush.bf16.msra.mxu0 0
  %1374 = vmatpush.bf16.msra.mxu0 0
  %1375 = vmatpush.bf16.msra.mxu0 %v1338
  %1376 = vmatpush.bf16.msra.mxu0 %v1287
  %1377 = vmatpush.bf16.msra.mxu0 %v1279
  %1378 = vmatpush.bf16.msra.mxu0 %v1271
  %1379 = vmatpush.bf16.msra.mxu0 %v1263
  %1380 = vmatmul.bf16.gmra.mxu0 %v240
  %v1381 = vpop.f32.mrf.mxu0
  %v1382 = vadd.f32 0.0, %v1381
  %v1383 = vpop.f32.mrf.mxu0
  %v1384 = vadd.f32 0.0, %v1383
  %1385 = vdwg.mxu0
  %1386 = vmatpush.bf16.msra.mxu0 0
  %1387 = vmatpush.bf16.msra.mxu0 0
  %1388 = vmatpush.bf16.msra.mxu0 0
  %1389 = vmatpush.bf16.msra.mxu0 %v1341
  %1390 = vmatpush.bf16.msra.mxu0 %v1288
  %1391 = vmatpush.bf16.msra.mxu0 %v1280
  %1392 = vmatpush.bf16.msra.mxu0 %v1272
  %1393 = vmatpush.bf16.msra.mxu0 %v1264
  %1394 = vmatmul.bf16.gmra.mxu0 %v240
  %v1395 = vpop.f32.mrf.mxu0
  %v1396 = vadd.f32 0.0, %v1395
  %v1397 = vpop.f32.mrf.mxu0
  %v1398 = vadd.f32 0.0, %v1397
  %1399 = vdwg.mxu0
  %1400 = vmatpush.bf16.msra.mxu0 0
  %1401 = vmatpush.bf16.msra.mxu0 0
  %1402 = vmatpush.bf16.msra.mxu0 0
  %1403 = vmatpush.bf16.msra.mxu0 %v1344
  %1404 = vmatpush.bf16.msra.mxu0 %v1289
  %1405 = vmatpush.bf16.msra.mxu0 %v1281
  %1406 = vmatpush.bf16.msra.mxu0 %v1273
  %1407 = vmatpush.bf16.msra.mxu0 %v1265
  %1408 = vmatmul.bf16.gmra.mxu0 %v240
  %v1409 = vpop.f32.mrf.mxu0
  %v1410 = vadd.f32 0.0, %v1409
  %v1411 = vpop.f32.mrf.mxu0
  %v1412 = vadd.f32 0.0, %v1411
  %1413 = vdwg.mxu0
  %1414 = vmatpush.bf16.msra.mxu0 0
  %1415 = vmatpush.bf16.msra.mxu0 0
  %1416 = vmatpush.bf16.msra.mxu0 0
  %1417 = vmatpush.bf16.msra.mxu0 %v1347
  %1418 = vmatpush.bf16.msra.mxu0 %v1290
  %1419 = vmatpush.bf16.msra.mxu0 %v1282
  %1420 = vmatpush.bf16.msra.mxu0 %v1274
  %1421 = vmatpush.bf16.msra.mxu0 %v1266
  %1422 = vmatmul.bf16.gmra.mxu0 %v240
  %v1423 = vpop.f32.mrf.mxu0
  %v1424 = vadd.f32 0.0, %v1423
  %v1425 = vpop.f32.mrf.mxu0
  %v1426 = vadd.f32 0.0, %v1425
  %1427 = vdwg.mxu0
  %1428 = vmatpush.bf16.msra.mxu0 0
  %1429 = vmatpush.bf16.msra.mxu0 0
  %1430 = vmatpush.bf16.msra.mxu0 0
  %1431 = vmatpush.bf16.msra.mxu0 %v1350
  %1432 = vmatpush.bf16.msra.mxu0 %v1291
  %1433 = vmatpush.bf16.msra.mxu0 %v1283
  %1434 = vmatpush.bf16.msra.mxu0 %v1275
  %1435 = vmatpush.bf16.msra.mxu0 %v1267
  %1436 = vmatmul.bf16.gmra.mxu0 %v240
  %v1437 = vpop.f32.mrf.mxu0
  %v1438 = vadd.f32 0.0, %v1437
  %v1439 = vpop.f32.mrf.mxu0
  %v1440 = vadd.f32 0.0, %v1439
  %1441 = vdwg.mxu0
  %1442 = vmatpush.bf16.msra.mxu0 0
  %1443 = vmatpush.bf16.msra.mxu0 0
  %1444 = vmatpush.bf16.msra.mxu0 0
  %1445 = vmatpush.bf16.msra.mxu0 %v1353
  %1446 = vmatpush.bf16.msra.mxu0 %v1292
  %1447 = vmatpush.bf16.msra.mxu0 %v1284
  %1448 = vmatpush.bf16.msra.mxu0 %v1276
  %1449 = vmatpush.bf16.msra.mxu0 %v1268
  %1450 = vmatmul.bf16.gmra.mxu0 %v240
  %v1451 = vpop.f32.mrf.mxu0
  %v1452 = vadd.f32 0.0, %v1451
  %v1453 = vpop.f32.mrf.mxu0
  %v1454 = vadd.f32 0.0, %v1453
  %1455 = vdwg.mxu0
  %1456 = vmatpush.bf16.msra.mxu0 0
  %1457 = vmatpush.bf16.msra.mxu0 0
  %1458 = vmatpush.bf16.msra.mxu0 0
  %1459 = vmatpush.bf16.msra.mxu0 %v1356
  %1460 = vmatpush.bf16.msra.mxu0 %v1293
  %1461 = vmatpush.bf16.msra.mxu0 %v1285
  %1462 = vmatpush.bf16.msra.mxu0 %v1277
  %1463 = vmatpush.bf16.msra.mxu0 %v1269
  %1464 = vmatmul.bf16.gmra.mxu0 %v240
  %v1465 = vpop.f32.mrf.mxu0
  %v1466 = vadd.f32 0.0, %v1465
  %v1467 = vpop.f32.mrf.mxu0
  %v1468 = vadd.f32 0.0, %v1467
  %1469 = vdwg.mxu0
  %v1470 = vmax.f32 %v1101, %v1368
  %v1471 = vmax.f32 %v1102, %v1382
  %v1472 = vmax.f32 %v1103, %v1396
  %v1473 = vmax.f32 %v1104, %v1410
  %v1474 = vmax.f32 %v1105, %v1424
  %v1475 = vmax.f32 %v1106, %v1438
  %v1476 = vmax.f32 %v1107, %v1452
  %v1477 = vmax.f32 %v1108, %v1466
  %v1478 = vmax.f32 %v1109, %v1370
  %v1479 = vmax.f32 %v1110, %v1384
  %v1480 = vmax.f32 %v1111, %v1398
  %v1481 = vmax.f32 %v1112, %v1412
  %v1482 = vmax.f32 %v1113, %v1426
  %v1483 = vmax.f32 %v1114, %v1440
  %v1484 = vmax.f32 %v1115, %v1454
  %v1485 = vmax.f32 %v1116, %v1468
  %v1486 = vld [vmem:[%s2] sm:$0xff]
  %v1487 = vld [vmem:[%s2 + $0x8] sm:$0xff]
  %1489 = vset.pattern.permute.xlu0 0
  %1490 = vperm.xlu0 %1489, %v1486
  %v1491 = vpop.permute.xlu0 %1490
  %1494 = vset.pattern.permute.xlu0 0
  %1495 = vperm.xlu0 %1494, %v1487
  %v1496 = vpop.permute.xlu0 %1495
  %v1498 = vadd.f32 %v1470, %v1491
  %v1499 = vadd.f32 %v1471, %v1491
  %v1500 = vadd.f32 %v1472, %v1491
  %v1501 = vadd.f32 %v1473, %v1491
  %v1502 = vadd.f32 %v1474, %v1491
  %v1503 = vadd.f32 %v1475, %v1491
  %v1504 = vadd.f32 %v1476, %v1491
  %v1505 = vadd.f32 %v1477, %v1491
  %v1506 = vadd.f32 %v1478, %v1496
  %v1507 = vadd.f32 %v1479, %v1496
  %v1508 = vadd.f32 %v1480, %v1496
  %v1509 = vadd.f32 %v1481, %v1496
  %v1510 = vadd.f32 %v1482, %v1496
  %v1511 = vadd.f32 %v1483, %v1496
  %v1512 = vadd.f32 %v1484, %v1496
  %v1513 = vadd.f32 %v1485, %v1496
  %v1514 = vmax.f32 %v1498, 0.0
  %v1515 = vmax.f32 %v1499, 0.0
  %v1516 = vmax.f32 %v1500, 0.0
  %v1517 = vmax.f32 %v1501, 0.0
  %v1518 = vmax.f32 %v1502, 0.0
  %v1519 = vmax.f32 %v1503, 0.0
  %v1520 = vmax.f32 %v1504, 0.0
  %v1521 = vmax.f32 %v1505, 0.0
  %v1522 = vmax.f32 %v1506, 0.0
  %v1523 = vmax.f32 %v1507, 0.0
  %v1524 = vmax.f32 %v1508, 0.0
  %v1525 = vmax.f32 %v1509, 0.0
  %v1526 = vmax.f32 %v1510, 0.0
  %v1527 = vmax.f32 %v1511, 0.0
  %v1528 = vmax.f32 %v1512, 0.0
  %v1529 = vmax.f32 %v1513, 0.0
  %1530 = vst [vmem:[%s3] sm:$0xff] %v1514
  %1531 = vst [vmem:[%s3 + $0x8] sm:$0xff] %v1515
  %1532 = vst [vmem:[%s3 + $0x10] sm:$0xff] %v1516
  %1533 = vst [vmem:[%s3 + $0x18] sm:$0xff] %v1517
  %1534 = vst [vmem:[%s3 + $0x20] sm:$0xff] %v1518
  %1535 = vst [vmem:[%s3 + $0x28] sm:$0xff] %v1519
  %1536 = vst [vmem:[%s3 + $0x30] sm:$0xff] %v1520
  %1537 = vst [vmem:[%s3 + $0x38] sm:$0xff] %v1521
  %1538 = vst [vmem:[%s3 + $0x40] sm:$0xff] %v1522
  %1539 = vst [vmem:[%s3 + $0x48] sm:$0xff] %v1523
  %1540 = vst [vmem:[%s3 + $0x50] sm:$0xff] %v1524
  %1541 = vst [vmem:[%s3 + $0x58] sm:$0xff] %v1525
  %1542 = vst [vmem:[%s3 + $0x60] sm:$0xff] %v1526
  %1543 = vst [vmem:[%s3 + $0x68] sm:$0xff] %v1527
  %1544 = vst [vmem:[%s3 + $0x70] sm:$0xff] %v1528
  %1545 = vst [vmem:[%s3 + $0x78] sm:$0xff] %v1529
  // Predicated region
  $region14: #{cnn90_forward.5} parent=0 // pred_check
    _
  $region15: #{cnn90_forward.5} parent=0 // pred_check_branch
    %1547 = sbr.rel (0) target = $region17
  $region16: #{cnn90_forward.5} parent=0 // pred_region
    _
  $region17: #{cnn90_forward.5} parent=0 // pred_fallthru
    _
  // Predicated region
  $region18: #{cnn90_forward.5} parent=0 // pred_check
    _
  $region19: #{cnn90_forward.5} parent=0 // pred_check_branch
    %1549 = sbr.rel (0) target = $region21
  $region20: #{cnn90_forward.5} parent=0 // pred_region
    _
  $region21: #{cnn90_forward.5} parent=0 // pred_fallthru
    _

// kernel: cnn90_forward.6
$region0: #{cnn90_forward.6}
  #allocation0 [shape = 'u32[]', space=smem, size = 0x4, offset = 0x4, fixed_abs, tag = 'smem constant byte address 0x4 - core index']
  #allocation1 [shape = 'u32[72,128]{1,0:T(1,128)}', space=vmem, size = 0x9000, scoped, tag = 'internal scratch']
  %s0 = inlined_call_operand.vmem [shape: bf16[4,144,256], index: 0, kind: input, shape index: {}]
  %s1 = inlined_call_operand.vmem [shape: bf16[32,144], index: 1, kind: input, shape index: {}]
  %s2 = inlined_call_operand.vmem [shape: f32[32,1], index: 2, kind: input, shape index: {}]
  %s3 = inlined_call_operand.vmem [shape: f32[32,256], index: 3, kind: output, shape index: {}]
  %s4 = sld [smem:[#allocation0]]
  $region22: #{cnn90_forward.6} parent=0
    _
  %s6 = ssub.s32 1, %s4
  %s7 = scalar_select 0, %s6, %s4
  // Predicated region
  $region2: #{cnn90_forward.6} parent=0 // pred_check
    _
  $region3: #{cnn90_forward.6} parent=0 // pred_check_branch
    %9 = sbr.rel (0) target = $region5
  $region4: #{cnn90_forward.6} parent=0 // pred_region
    _
  $region5: #{cnn90_forward.6} parent=0 // pred_fallthru
    _
  // Predicated region
  $region6: #{cnn90_forward.6} parent=0 // pred_check
    _
  $region7: #{cnn90_forward.6} parent=0 // pred_check_branch
    %11 = sbr.rel (0) target = $region9
  $region8: #{cnn90_forward.6} parent=0 // pred_region
    _
  $region9: #{cnn90_forward.6} parent=0 // pred_fallthru
    _
  // Predicated region
  $region10: #{cnn90_forward.6} parent=0 // pred_check
    _
  $region11: #{cnn90_forward.6} parent=0 // pred_check_branch
    %13 = sbr.rel (0) target = $region13
  $region12: #{cnn90_forward.6} parent=0 // pred_region
    _
  $region13: #{cnn90_forward.6} parent=0 // pred_fallthru
    _
  %v15 = vld [vmem:[%s1] sm:$0xff]
  %v16 = vld [vmem:[%s1 + $0x8] sm:$0xff]
  %v17 = vld [vmem:[%s1 + $0x10] sm:$0xff]
  %v18 = vld [vmem:[%s1 + $0x18] sm:$0xff]
  %v19 = vld [vmem:[%s0] sm:$0xff]
  %v20 = vld [vmem:[%s0 + $0x8] sm:$0xff]
  %v21 = vld [vmem:[%s0 + $0x10] sm:$0xff]
  %v22 = vld [vmem:[%s0 + $0x18] sm:$0xff]
  %v23 = vld [vmem:[%s0 + $0x20] sm:$0xff]
  %v24 = vld [vmem:[%s0 + $0x28] sm:$0xff]
  %v25 = vld [vmem:[%s0 + $0x30] sm:$0xff]
  %v26 = vld [vmem:[%s0 + $0x38] sm:$0xff]
  %v27 = vld [vmem:[%s0 + $0x40] sm:$0xff]
  %v28 = vld [vmem:[%s0 + $0x48] sm:$0xff]
  %v29 = vld [vmem:[%s0 + $0x50] sm:$0xff]
  %v30 = vld [vmem:[%s0 + $0x58] sm:$0xff]
  %v31 = vld [vmem:[%s0 + $0x60] sm:$0xff]
  %v32 = vld [vmem:[%s0 + $0x68] sm:$0xff]
  %v33 = vld [vmem:[%s0 + $0x70] sm:$0xff]
  %v34 = vld [vmem:[%s0 + $0x78] sm:$0xff]
  %v35 = vld [vmem:[%s0 + $0x80] sm:$0xff]
  %v36 = vld [vmem:[%s0 + $0x88] sm:$0xff]
  %v41 = vunpack.c.l.b16 %v15
  %v42 = vunpack.c.h.b16 %v15
  %v43 = vunpack.c.l.b16 %v16
  %v44 = vunpack.c.h.b16 %v16
  %v45 = vunpack.c.l.b16 %v17
  %v46 = vunpack.c.h.b16 %v17
  %v47 = vunpack.c.l.b16 %v18
  %v48 = vunpack.c.h.b16 %v18
  %v49 = vpack.c.b16 %v43, %v41
  %v50 = vpack.c.b16 %v44, %v42
  %v51 = vpack.c.b16 %v47, %v45
  %v52 = vpack.c.b16 %v48, %v46
  %v73 = vunpack.c.l.b16 %v19
  %v74 = vunpack.c.h.b16 %v19
  %v75 = vunpack.c.l.b16 %v20
  %v76 = vunpack.c.h.b16 %v20
  %v77 = vunpack.c.l.b16 %v21
  %v78 = vunpack.c.h.b16 %v21
  %v79 = vunpack.c.l.b16 %v22
  %v80 = vunpack.c.h.b16 %v22
  %v81 = vunpack.c.l.b16 %v23
  %v82 = vunpack.c.h.b16 %v23
  %v83 = vunpack.c.l.b16 %v24
  %v84 = vunpack.c.h.b16 %v24
  %v85 = vunpack.c.l.b16 %v25
  %v86 = vunpack.c.h.b16 %v25
  %v87 = vunpack.c.l.b16 %v26
  %v88 = vunpack.c.h.b16 %v26
  %v89 = vunpack.c.l.b16 %v27
  %v90 = vunpack.c.h.b16 %v27
  %v91 = vunpack.c.l.b16 %v28
  %v92 = vunpack.c.h.b16 %v28
  %v93 = vunpack.c.l.b16 %v29
  %v94 = vunpack.c.h.b16 %v29
  %v95 = vunpack.c.l.b16 %v30
  %v96 = vunpack.c.h.b16 %v30
  %v97 = vunpack.c.l.b16 %v31
  %v98 = vunpack.c.h.b16 %v31
  %v99 = vunpack.c.l.b16 %v32
  %v100 = vunpack.c.h.b16 %v32
  %v101 = vunpack.c.l.b16 %v33
  %v102 = vunpack.c.h.b16 %v33
  %v103 = vunpack.c.l.b16 %v34
  %v104 = vunpack.c.h.b16 %v34
  %v105 = vunpack.c.l.b16 %v35
  %v106 = vunpack.c.h.b16 %v35
  %v107 = vunpack.c.l.b16 %v36
  %v108 = vunpack.c.h.b16 %v36
  %v109 = vpack.c.b16 %v75, %v73
  %v110 = vpack.c.b16 %v76, %v74
  %v111 = vpack.c.b16 %v79, %v77
  %v112 = vpack.c.b16 %v80, %v78
  %v113 = vpack.c.b16 %v83, %v81
  %v114 = vpack.c.b16 %v84, %v82
  %v115 = vpack.c.b16 %v87, %v85
  %v116 = vpack.c.b16 %v88, %v86
  %v117 = vpack.c.b16 %v91, %v89
  %v118 = vpack.c.b16 %v92, %v90
  %v119 = vpack.c.b16 %v95, %v93
  %v120 = vpack.c.b16 %v96, %v94
  %v121 = vpack.c.b16 %v99, %v97
  %v122 = vpack.c.b16 %v100, %v98
  %v123 = vpack.c.b16 %v103, %v101
  %v124 = vpack.c.b16 %v104, %v102
  %v125 = vpack.c.b16 %v107, %v105
  %v126 = vpack.c.b16 %v108, %v106
  %vm145 = vcmask 130048
  %v147 = vsel %vm145, %v50, 0
  %v150 = vsel %vm145, %v52, 0
  %152 = vmatpush.bf16.msra.mxu0 %v123
  %153 = vmatpush.bf16.msra.mxu0 %v121
  %154 = vmatpush.bf16.msra.mxu0 %v119
  %155 = vmatpush.bf16.msra.mxu0 %v117
  %156 = vmatpush.bf16.msra.mxu0 %v115
  %157 = vmatpush.bf16.msra.mxu0 %v113
  %158 = vmatpush.bf16.msra.mxu0 %v111
  %159 = vmatpush.bf16.msra.mxu0 %v109
  %160 = vmatmul.bf16.gmra.mxu0 %v49
  %v161 = vpop.f32.mrf.mxu0
  %v162 = vadd.f32 0.0, %v161
  %v163 = vpop.f32.mrf.mxu0
  %v164 = vadd.f32 0.0, %v163
  %165 = vmatmul.bf16.gmra.mxu0 %v51
  %v166 = vpop.f32.mrf.mxu0
  %v167 = vadd.f32 0.0, %v166
  %v168 = vpop.f32.mrf.mxu0
  %v169 = vadd.f32 0.0, %v168
  %170 = vdwg.mxu0
  %171 = vmatpush.bf16.msra.mxu0 0
  %172 = vmatpush.bf16.msra.mxu0 0
  %173 = vmatpush.bf16.msra.mxu0 0
  %174 = vmatpush.bf16.msra.mxu0 0
  %175 = vmatpush.bf16.msra.mxu0 0
  %176 = vmatpush.bf16.msra.mxu0 0
  %177 = vmatpush.bf16.msra.mxu0 0
  %178 = vmatpush.bf16.msra.mxu0 %v125
  %179 = vmatmul.bf16.gmra.mxu0 %v147
  %v180 = vpop.f32.mrf.mxu0
  %v181 = vadd.f32 %v162, %v180
  %v182 = vpop.f32.mrf.mxu0
  %v183 = vadd.f32 %v164, %v182
  %184 = vmatmul.bf16.gmra.mxu0 %v150
  %v185 = vpop.f32.mrf.mxu0
  %v186 = vadd.f32 %v167, %v185
  %v187 = vpop.f32.mrf.mxu0
  %v188 = vadd.f32 %v169, %v187
  %189 = vdwg.mxu0
  %190 = vmatpush.bf16.msra.mxu0 %v124
  %191 = vmatpush.bf16.msra.mxu0 %v122
  %192 = vmatpush.bf16.msra.mxu0 %v120
  %193 = vmatpush.bf16.msra.mxu0 %v118
  %194 = vmatpush.bf16.msra.mxu0 %v116
  %195 = vmatpush.bf16.msra.mxu0 %v114
  %196 = vmatpush.bf16.msra.mxu0 %v112
  %197 = vmatpush.bf16.msra.mxu0 %v110
  %198 = vmatmul.bf16.gmra.mxu0 %v49
  %v199 = vpop.f32.mrf.mxu0
  %v200 = vadd.f32 0.0, %v199
  %v201 = vpop.f32.mrf.mxu0
  %v202 = vadd.f32 0.0, %v201
  %203 = vmatmul.bf16.gmra.mxu0 %v51
  %v204 = vpop.f32.mrf.mxu0
  %v205 = vadd.f32 0.0, %v204
  %v206 = vpop.f32.mrf.mxu0
  %v207 = vadd.f32 0.0, %v206
  %208 = vdwg.mxu0
  %209 = vmatpush.bf16.msra.mxu0 0
  %210 = vmatpush.bf16.msra.mxu0 0
  %211 = vmatpush.bf16.msra.mxu0 0
  %212 = vmatpush.bf16.msra.mxu0 0
  %213 = vmatpush.bf16.msra.mxu0 0
  %214 = vmatpush.bf16.msra.mxu0 0
  %215 = vmatpush.bf16.msra.mxu0 0
  %216 = vmatpush.bf16.msra.mxu0 %v126
  %217 = vmatmul.bf16.gmra.mxu0 %v147
  %v218 = vpop.f32.mrf.mxu0
  %v219 = vadd.f32 %v200, %v218
  %v220 = vpop.f32.mrf.mxu0
  %v221 = vadd.f32 %v202, %v220
  %222 = vmatmul.bf16.gmra.mxu0 %v150
  %v223 = vpop.f32.mrf.mxu0
  %v224 = vadd.f32 %v205, %v223
  %v225 = vpop.f32.mrf.mxu0
  %v226 = vadd.f32 %v207, %v225
  %227 = vdwg.mxu0
  %s228 = scalar_lea.vmem %s0, 144
  %v229 = vld [vmem:[%s228] sm:$0xff]
  %v230 = vld [vmem:[%s228 + $0x8] sm:$0xff]
  %v231 = vld [vmem:[%s228 + $0x10] sm:$0xff]
  %v232 = vld [vmem:[%s228 + $0x18] sm:$0xff]
  %v233 = vld [vmem:[%s228 + $0x20] sm:$0xff]
  %v234 = vld [vmem:[%s228 + $0x28] sm:$0xff]
  %v235 = vld [vmem:[%s228 + $0x30] sm:$0xff]
  %v236 = vld [vmem:[%s228 + $0x38] sm:$0xff]
  %v237 = vld [vmem:[%s228 + $0x40] sm:$0xff]
  %v238 = vld [vmem:[%s228 + $0x48] sm:$0xff]
  %v239 = vld [vmem:[%s228 + $0x50] sm:$0xff]
  %v240 = vld [vmem:[%s228 + $0x58] sm:$0xff]
  %v241 = vld [vmem:[%s228 + $0x60] sm:$0xff]
  %v242 = vld [vmem:[%s228 + $0x68] sm:$0xff]
  %v243 = vld [vmem:[%s228 + $0x70] sm:$0xff]
  %v244 = vld [vmem:[%s228 + $0x78] sm:$0xff]
  %v245 = vld [vmem:[%s228 + $0x80] sm:$0xff]
  %v246 = vld [vmem:[%s228 + $0x88] sm:$0xff]
  %v265 = vunpack.c.l.b16 %v229
  %v266 = vunpack.c.h.b16 %v229
  %v267 = vunpack.c.l.b16 %v230
  %v268 = vunpack.c.h.b16 %v230
  %v269 = vunpack.c.l.b16 %v231
  %v270 = vunpack.c.h.b16 %v231
  %v271 = vunpack.c.l.b16 %v232
  %v272 = vunpack.c.h.b16 %v232
  %v273 = vunpack.c.l.b16 %v233
  %v274 = vunpack.c.h.b16 %v233
  %v275 = vunpack.c.l.b16 %v234
  %v276 = vunpack.c.h.b16 %v234
  %v277 = vunpack.c.l.b16 %v235
  %v278 = vunpack.c.h.b16 %v235
  %v279 = vunpack.c.l.b16 %v236
  %v280 = vunpack.c.h.b16 %v236
  %v281 = vunpack.c.l.b16 %v237
  %v282 = vunpack.c.h.b16 %v237
  %v283 = vunpack.c.l.b16 %v238
  %v284 = vunpack.c.h.b16 %v238
  %v285 = vunpack.c.l.b16 %v239
  %v286 = vunpack.c.h.b16 %v239
  %v287 = vunpack.c.l.b16 %v240
  %v288 = vunpack.c.h.b16 %v240
  %v289 = vunpack.c.l.b16 %v241
  %v290 = vunpack.c.h.b16 %v241
  %v291 = vunpack.c.l.b16 %v242
  %v292 = vunpack.c.h.b16 %v242
  %v293 = vunpack.c.l.b16 %v243
  %v294 = vunpack.c.h.b16 %v243
  %v295 = vunpack.c.l.b16 %v244
  %v296 = vunpack.c.h.b16 %v244
  %v297 = vunpack.c.l.b16 %v245
  %v298 = vunpack.c.h.b16 %v245
  %v299 = vunpack.c.l.b16 %v246
  %v300 = vunpack.c.h.b16 %v246
  %v301 = vpack.c.b16 %v267, %v265
  %v302 = vpack.c.b16 %v268, %v266
  %v303 = vpack.c.b16 %v271, %v269
  %v304 = vpack.c.b16 %v272, %v270
  %v305 = vpack.c.b16 %v275, %v273
  %v306 = vpack.c.b16 %v276, %v274
  %v307 = vpack.c.b16 %v279, %v277
  %v308 = vpack.c.b16 %v280, %v278
  %v309 = vpack.c.b16 %v283, %v281
  %v310 = vpack.c.b16 %v284, %v282
  %v311 = vpack.c.b16 %v287, %v285
  %v312 = vpack.c.b16 %v288, %v286
  %v313 = vpack.c.b16 %v291, %v289
  %v314 = vpack.c.b16 %v292, %v290
  %v315 = vpack.c.b16 %v295, %v293
  %v316 = vpack.c.b16 %v296, %v294
  %v317 = vpack.c.b16 %v299, %v297
  %v318 = vpack.c.b16 %v300, %v298
  %337 = vmatpush.bf16.msra.mxu0 %v315
  %338 = vmatpush.bf16.msra.mxu0 %v313
  %339 = vmatpush.bf16.msra.mxu0 %v311
  %340 = vmatpush.bf16.msra.mxu0 %v309
  %341 = vmatpush.bf16.msra.mxu0 %v307
  %342 = vmatpush.bf16.msra.mxu0 %v305
  %343 = vmatpush.bf16.msra.mxu0 %v303
  %344 = vmatpush.bf16.msra.mxu0 %v301
  %345 = vmatmul.bf16.gmra.mxu0 %v49
  %v346 = vpop.f32.mrf.mxu0
  %v347 = vadd.f32 0.0, %v346
  %v348 = vpop.f32.mrf.mxu0
  %v349 = vadd.f32 0.0, %v348
  %350 = vmatmul.bf16.gmra.mxu0 %v51
  %v351 = vpop.f32.mrf.mxu0
  %v352 = vadd.f32 0.0, %v351
  %v353 = vpop.f32.mrf.mxu0
  %v354 = vadd.f32 0.0, %v353
  %355 = vdwg.mxu0
  %356 = vmatpush.bf16.msra.mxu0 0
  %357 = vmatpush.bf16.msra.mxu0 0
  %358 = vmatpush.bf16.msra.mxu0 0
  %359 = vmatpush.bf16.msra.mxu0 0
  %360 = vmatpush.bf16.msra.mxu0 0
  %361 = vmatpush.bf16.msra.mxu0 0
  %362 = vmatpush.bf16.msra.mxu0 0
  %363 = vmatpush.bf16.msra.mxu0 %v317
  %364 = vmatmul.bf16.gmra.mxu0 %v147
  %v365 = vpop.f32.mrf.mxu0
  %v366 = vadd.f32 %v347, %v365
  %v367 = vpop.f32.mrf.mxu0
  %v368 = vadd.f32 %v349, %v367
  %369 = vmatmul.bf16.gmra.mxu0 %v150
  %v370 = vpop.f32.mrf.mxu0
  %v371 = vadd.f32 %v352, %v370
  %v372 = vpop.f32.mrf.mxu0
  %v373 = vadd.f32 %v354, %v372
  %374 = vdwg.mxu0
  %375 = vmatpush.bf16.msra.mxu0 %v316
  %376 = vmatpush.bf16.msra.mxu0 %v314
  %377 = vmatpush.bf16.msra.mxu0 %v312
  %378 = vmatpush.bf16.msra.mxu0 %v310
  %379 = vmatpush.bf16.msra.mxu0 %v308
  %380 = vmatpush.bf16.msra.mxu0 %v306
  %381 = vmatpush.bf16.msra.mxu0 %v304
  %382 = vmatpush.bf16.msra.mxu0 %v302
  %383 = vmatmul.bf16.gmra.mxu0 %v49
  %v384 = vpop.f32.mrf.mxu0
  %v385 = vadd.f32 0.0, %v384
  %v386 = vpop.f32.mrf.mxu0
  %v387 = vadd.f32 0.0, %v386
  %388 = vmatmul.bf16.gmra.mxu0 %v51
  %v389 = vpop.f32.mrf.mxu0
  %v390 = vadd.f32 0.0, %v389
  %v391 = vpop.f32.mrf.mxu0
  %v392 = vadd.f32 0.0, %v391
  %393 = vdwg.mxu0
  %394 = vmatpush.bf16.msra.mxu0 0
  %395 = vmatpush.bf16.msra.mxu0 0
  %396 = vmatpush.bf16.msra.mxu0 0
  %397 = vmatpush.bf16.msra.mxu0 0
  %398 = vmatpush.bf16.msra.mxu0 0
  %399 = vmatpush.bf16.msra.mxu0 0
  %400 = vmatpush.bf16.msra.mxu0 0
  %401 = vmatpush.bf16.msra.mxu0 %v318
  %402 = vmatmul.bf16.gmra.mxu0 %v147
  %v403 = vpop.f32.mrf.mxu0
  %v404 = vadd.f32 %v385, %v403
  %v405 = vpop.f32.mrf.mxu0
  %v406 = vadd.f32 %v387, %v405
  %407 = vmatmul.bf16.gmra.mxu0 %v150
  %v408 = vpop.f32.mrf.mxu0
  %v409 = vadd.f32 %v390, %v408
  %v410 = vpop.f32.mrf.mxu0
  %v411 = vadd.f32 %v392, %v410
  %412 = vdwg.mxu0
  %v413 = vmax.f32 %v181, %v366
  %v414 = vmax.f32 %v219, %v404
  %v415 = vmax.f32 %v183, %v368
  %v416 = vmax.f32 %v221, %v406
  %v417 = vmax.f32 %v186, %v371
  %v418 = vmax.f32 %v224, %v409
  %v419 = vmax.f32 %v188, %v373
  %v420 = vmax.f32 %v226, %v411
  %s421 = scalar_lea.vmem %s0, 288
  %v422 = vld [vmem:[%s421] sm:$0xff]
  %v423 = vld [vmem:[%s421 + $0x8] sm:$0xff]
  %v424 = vld [vmem:[%s421 + $0x10] sm:$0xff]
  %v425 = vld [vmem:[%s421 + $0x18] sm:$0xff]
  %v426 = vld [vmem:[%s421 + $0x20] sm:$0xff]
  %v427 = vld [vmem:[%s421 + $0x28] sm:$0xff]
  %v428 = vld [vmem:[%s421 + $0x30] sm:$0xff]
  %v429 = vld [vmem:[%s421 + $0x38] sm:$0xff]
  %v430 = vld [vmem:[%s421 + $0x40] sm:$0xff]
  %v431 = vld [vmem:[%s421 + $0x48] sm:$0xff]
  %v432 = vld [vmem:[%s421 + $0x50] sm:$0xff]
  %v433 = vld [vmem:[%s421 + $0x58] sm:$0xff]
  %v434 = vld [vmem:[%s421 + $0x60] sm:$0xff]
  %v435 = vld [vmem:[%s421 + $0x68] sm:$0xff]
  %v436 = vld [vmem:[%s421 + $0x70] sm:$0xff]
  %v437 = vld [vmem:[%s421 + $0x78] sm:$0xff]
  %v438 = vld [vmem:[%s421 + $0x80] sm:$0xff]
  %v439 = vld [vmem:[%s421 + $0x88] sm:$0xff]
  %v458 = vunpack.c.l.b16 %v422
  %v459 = vunpack.c.h.b16 %v422
  %v460 = vunpack.c.l.b16 %v423
  %v461 = vunpack.c.h.b16 %v423
  %v462 = vunpack.c.l.b16 %v424
  %v463 = vunpack.c.h.b16 %v424
  %v464 = vunpack.c.l.b16 %v425
  %v465 = vunpack.c.h.b16 %v425
  %v466 = vunpack.c.l.b16 %v426
  %v467 = vunpack.c.h.b16 %v426
  %v468 = vunpack.c.l.b16 %v427
  %v469 = vunpack.c.h.b16 %v427
  %v470 = vunpack.c.l.b16 %v428
  %v471 = vunpack.c.h.b16 %v428
  %v472 = vunpack.c.l.b16 %v429
  %v473 = vunpack.c.h.b16 %v429
  %v474 = vunpack.c.l.b16 %v430
  %v475 = vunpack.c.h.b16 %v430
  %v476 = vunpack.c.l.b16 %v431
  %v477 = vunpack.c.h.b16 %v431
  %v478 = vunpack.c.l.b16 %v432
  %v479 = vunpack.c.h.b16 %v432
  %v480 = vunpack.c.l.b16 %v433
  %v481 = vunpack.c.h.b16 %v433
  %v482 = vunpack.c.l.b16 %v434
  %v483 = vunpack.c.h.b16 %v434
  %v484 = vunpack.c.l.b16 %v435
  %v485 = vunpack.c.h.b16 %v435
  %v486 = vunpack.c.l.b16 %v436
  %v487 = vunpack.c.h.b16 %v436
  %v488 = vunpack.c.l.b16 %v437
  %v489 = vunpack.c.h.b16 %v437
  %v490 = vunpack.c.l.b16 %v438
  %v491 = vunpack.c.h.b16 %v438
  %v492 = vunpack.c.l.b16 %v439
  %v493 = vunpack.c.h.b16 %v439
  %v494 = vpack.c.b16 %v460, %v458
  %v495 = vpack.c.b16 %v461, %v459
  %v496 = vpack.c.b16 %v464, %v462
  %v497 = vpack.c.b16 %v465, %v463
  %v498 = vpack.c.b16 %v468, %v466
  %v499 = vpack.c.b16 %v469, %v467
  %v500 = vpack.c.b16 %v472, %v470
  %v501 = vpack.c.b16 %v473, %v471
  %v502 = vpack.c.b16 %v476, %v474
  %v503 = vpack.c.b16 %v477, %v475
  %v504 = vpack.c.b16 %v480, %v478
  %v505 = vpack.c.b16 %v481, %v479
  %v506 = vpack.c.b16 %v484, %v482
  %v507 = vpack.c.b16 %v485, %v483
  %v508 = vpack.c.b16 %v488, %v486
  %v509 = vpack.c.b16 %v489, %v487
  %v510 = vpack.c.b16 %v492, %v490
  %v511 = vpack.c.b16 %v493, %v491
  %530 = vmatpush.bf16.msra.mxu0 %v508
  %531 = vmatpush.bf16.msra.mxu0 %v506
  %532 = vmatpush.bf16.msra.mxu0 %v504
  %533 = vmatpush.bf16.msra.mxu0 %v502
  %534 = vmatpush.bf16.msra.mxu0 %v500
  %535 = vmatpush.bf16.msra.mxu0 %v498
  %536 = vmatpush.bf16.msra.mxu0 %v496
  %537 = vmatpush.bf16.msra.mxu0 %v494
  %538 = vmatmul.bf16.gmra.mxu0 %v49
  %v539 = vpop.f32.mrf.mxu0
  %v540 = vadd.f32 0.0, %v539
  %v541 = vpop.f32.mrf.mxu0
  %v542 = vadd.f32 0.0, %v541
  %543 = vmatmul.bf16.gmra.mxu0 %v51
  %v544 = vpop.f32.mrf.mxu0
  %v545 = vadd.f32 0.0, %v544
  %v546 = vpop.f32.mrf.mxu0
  %v547 = vadd.f32 0.0, %v546
  %548 = vdwg.mxu0
  %549 = vmatpush.bf16.msra.mxu0 0
  %550 = vmatpush.bf16.msra.mxu0 0
  %551 = vmatpush.bf16.msra.mxu0 0
  %552 = vmatpush.bf16.msra.mxu0 0
  %553 = vmatpush.bf16.msra.mxu0 0
  %554 = vmatpush.bf16.msra.mxu0 0
  %555 = vmatpush.bf16.msra.mxu0 0
  %556 = vmatpush.bf16.msra.mxu0 %v510
  %557 = vmatmul.bf16.gmra.mxu0 %v147
  %v558 = vpop.f32.mrf.mxu0
  %v559 = vadd.f32 %v540, %v558
  %v560 = vpop.f32.mrf.mxu0
  %v561 = vadd.f32 %v542, %v560
  %562 = vmatmul.bf16.gmra.mxu0 %v150
  %v563 = vpop.f32.mrf.mxu0
  %v564 = vadd.f32 %v545, %v563
  %v565 = vpop.f32.mrf.mxu0
  %v566 = vadd.f32 %v547, %v565
  %567 = vdwg.mxu0
  %568 = vmatpush.bf16.msra.mxu0 %v509
  %569 = vmatpush.bf16.msra.mxu0 %v507
  %570 = vmatpush.bf16.msra.mxu0 %v505
  %571 = vmatpush.bf16.msra.mxu0 %v503
  %572 = vmatpush.bf16.msra.mxu0 %v501
  %573 = vmatpush.bf16.msra.mxu0 %v499
  %574 = vmatpush.bf16.msra.mxu0 %v497
  %575 = vmatpush.bf16.msra.mxu0 %v495
  %576 = vmatmul.bf16.gmra.mxu0 %v49
  %v577 = vpop.f32.mrf.mxu0
  %v578 = vadd.f32 0.0, %v577
  %v579 = vpop.f32.mrf.mxu0
  %v580 = vadd.f32 0.0, %v579
  %581 = vmatmul.bf16.gmra.mxu0 %v51
  %v582 = vpop.f32.mrf.mxu0
  %v583 = vadd.f32 0.0, %v582
  %v584 = vpop.f32.mrf.mxu0
  %v585 = vadd.f32 0.0, %v584
  %586 = vdwg.mxu0
  %587 = vmatpush.bf16.msra.mxu0 0
  %588 = vmatpush.bf16.msra.mxu0 0
  %589 = vmatpush.bf16.msra.mxu0 0
  %590 = vmatpush.bf16.msra.mxu0 0
  %591 = vmatpush.bf16.msra.mxu0 0
  %592 = vmatpush.bf16.msra.mxu0 0
  %593 = vmatpush.bf16.msra.mxu0 0
  %594 = vmatpush.bf16.msra.mxu0 %v511
  %595 = vmatmul.bf16.gmra.mxu0 %v147
  %v596 = vpop.f32.mrf.mxu0
  %v597 = vadd.f32 %v578, %v596
  %v598 = vpop.f32.mrf.mxu0
  %v599 = vadd.f32 %v580, %v598
  %600 = vmatmul.bf16.gmra.mxu0 %v150
  %v601 = vpop.f32.mrf.mxu0
  %v602 = vadd.f32 %v583, %v601
  %v603 = vpop.f32.mrf.mxu0
  %v604 = vadd.f32 %v585, %v603
  %605 = vdwg.mxu0
  %v606 = vmax.f32 %v413, %v559
  %v607 = vmax.f32 %v414, %v597
  %v608 = vmax.f32 %v415, %v561
  %v609 = vmax.f32 %v416, %v599
  %v610 = vmax.f32 %v417, %v564
  %v611 = vmax.f32 %v418, %v602
  %v612 = vmax.f32 %v419, %v566
  %v613 = vmax.f32 %v420, %v604
  %s614 = scalar_lea.vmem %s0, 432
  %v615 = vld [vmem:[%s614] sm:$0xff]
  %v616 = vld [vmem:[%s614 + $0x8] sm:$0xff]
  %v617 = vld [vmem:[%s614 + $0x10] sm:$0xff]
  %v618 = vld [vmem:[%s614 + $0x18] sm:$0xff]
  %v619 = vld [vmem:[%s614 + $0x20] sm:$0xff]
  %v620 = vld [vmem:[%s614 + $0x28] sm:$0xff]
  %v621 = vld [vmem:[%s614 + $0x30] sm:$0xff]
  %v622 = vld [vmem:[%s614 + $0x38] sm:$0xff]
  %v623 = vld [vmem:[%s614 + $0x40] sm:$0xff]
  %v624 = vld [vmem:[%s614 + $0x48] sm:$0xff]
  %v625 = vld [vmem:[%s614 + $0x50] sm:$0xff]
  %v626 = vld [vmem:[%s614 + $0x58] sm:$0xff]
  %v627 = vld [vmem:[%s614 + $0x60] sm:$0xff]
  %v628 = vld [vmem:[%s614 + $0x68] sm:$0xff]
  %v629 = vld [vmem:[%s614 + $0x70] sm:$0xff]
  %v630 = vld [vmem:[%s614 + $0x78] sm:$0xff]
  %v631 = vld [vmem:[%s614 + $0x80] sm:$0xff]
  %v632 = vld [vmem:[%s614 + $0x88] sm:$0xff]
  %v651 = vunpack.c.l.b16 %v615
  %v652 = vunpack.c.h.b16 %v615
  %v653 = vunpack.c.l.b16 %v616
  %v654 = vunpack.c.h.b16 %v616
  %v655 = vunpack.c.l.b16 %v617
  %v656 = vunpack.c.h.b16 %v617
  %v657 = vunpack.c.l.b16 %v618
  %v658 = vunpack.c.h.b16 %v618
  %v659 = vunpack.c.l.b16 %v619
  %v660 = vunpack.c.h.b16 %v619
  %v661 = vunpack.c.l.b16 %v620
  %v662 = vunpack.c.h.b16 %v620
  %v663 = vunpack.c.l.b16 %v621
  %v664 = vunpack.c.h.b16 %v621
  %v665 = vunpack.c.l.b16 %v622
  %v666 = vunpack.c.h.b16 %v622
  %v667 = vunpack.c.l.b16 %v623
  %v668 = vunpack.c.h.b16 %v623
  %v669 = vunpack.c.l.b16 %v624
  %v670 = vunpack.c.h.b16 %v624
  %v671 = vunpack.c.l.b16 %v625
  %v672 = vunpack.c.h.b16 %v625
  %v673 = vunpack.c.l.b16 %v626
  %v674 = vunpack.c.h.b16 %v626
  %v675 = vunpack.c.l.b16 %v627
  %v676 = vunpack.c.h.b16 %v627
  %v677 = vunpack.c.l.b16 %v628
  %v678 = vunpack.c.h.b16 %v628
  %v679 = vunpack.c.l.b16 %v629
  %v680 = vunpack.c.h.b16 %v629
  %v681 = vunpack.c.l.b16 %v630
  %v682 = vunpack.c.h.b16 %v630
  %v683 = vunpack.c.l.b16 %v631
  %v684 = vunpack.c.h.b16 %v631
  %v685 = vunpack.c.l.b16 %v632
  %v686 = vunpack.c.h.b16 %v632
  %v687 = vpack.c.b16 %v653, %v651
  %v688 = vpack.c.b16 %v654, %v652
  %v689 = vpack.c.b16 %v657, %v655
  %v690 = vpack.c.b16 %v658, %v656
  %v691 = vpack.c.b16 %v661, %v659
  %v692 = vpack.c.b16 %v662, %v660
  %v693 = vpack.c.b16 %v665, %v663
  %v694 = vpack.c.b16 %v666, %v664
  %v695 = vpack.c.b16 %v669, %v667
  %v696 = vpack.c.b16 %v670, %v668
  %v697 = vpack.c.b16 %v673, %v671
  %v698 = vpack.c.b16 %v674, %v672
  %v699 = vpack.c.b16 %v677, %v675
  %v700 = vpack.c.b16 %v678, %v676
  %v701 = vpack.c.b16 %v681, %v679
  %v702 = vpack.c.b16 %v682, %v680
  %v703 = vpack.c.b16 %v685, %v683
  %v704 = vpack.c.b16 %v686, %v684
  %723 = vmatpush.bf16.msra.mxu0 %v701
  %724 = vmatpush.bf16.msra.mxu0 %v699
  %725 = vmatpush.bf16.msra.mxu0 %v697
  %726 = vmatpush.bf16.msra.mxu0 %v695
  %727 = vmatpush.bf16.msra.mxu0 %v693
  %728 = vmatpush.bf16.msra.mxu0 %v691
  %729 = vmatpush.bf16.msra.mxu0 %v689
  %730 = vmatpush.bf16.msra.mxu0 %v687
  %731 = vmatmul.bf16.gmra.mxu0 %v49
  %v732 = vpop.f32.mrf.mxu0
  %v733 = vadd.f32 0.0, %v732
  %v734 = vpop.f32.mrf.mxu0
  %v735 = vadd.f32 0.0, %v734
  %736 = vmatmul.bf16.gmra.mxu0 %v51
  %v737 = vpop.f32.mrf.mxu0
  %v738 = vadd.f32 0.0, %v737
  %v739 = vpop.f32.mrf.mxu0
  %v740 = vadd.f32 0.0, %v739
  %741 = vdwg.mxu0
  %742 = vmatpush.bf16.msra.mxu0 0
  %743 = vmatpush.bf16.msra.mxu0 0
  %744 = vmatpush.bf16.msra.mxu0 0
  %745 = vmatpush.bf16.msra.mxu0 0
  %746 = vmatpush.bf16.msra.mxu0 0
  %747 = vmatpush.bf16.msra.mxu0 0
  %748 = vmatpush.bf16.msra.mxu0 0
  %749 = vmatpush.bf16.msra.mxu0 %v703
  %750 = vmatmul.bf16.gmra.mxu0 %v147
  %v751 = vpop.f32.mrf.mxu0
  %v752 = vadd.f32 %v733, %v751
  %v753 = vpop.f32.mrf.mxu0
  %v754 = vadd.f32 %v735, %v753
  %755 = vmatmul.bf16.gmra.mxu0 %v150
  %v756 = vpop.f32.mrf.mxu0
  %v757 = vadd.f32 %v738, %v756
  %v758 = vpop.f32.mrf.mxu0
  %v759 = vadd.f32 %v740, %v758
  %760 = vdwg.mxu0
  %761 = vmatpush.bf16.msra.mxu0 %v702
  %762 = vmatpush.bf16.msra.mxu0 %v700
  %763 = vmatpush.bf16.msra.mxu0 %v698
  %764 = vmatpush.bf16.msra.mxu0 %v696
  %765 = vmatpush.bf16.msra.mxu0 %v694
  %766 = vmatpush.bf16.msra.mxu0 %v692
  %767 = vmatpush.bf16.msra.mxu0 %v690
  %768 = vmatpush.bf16.msra.mxu0 %v688
  %769 = vmatmul.bf16.gmra.mxu0 %v49
  %v770 = vpop.f32.mrf.mxu0
  %v771 = vadd.f32 0.0, %v770
  %v772 = vpop.f32.mrf.mxu0
  %v773 = vadd.f32 0.0, %v772
  %774 = vmatmul.bf16.gmra.mxu0 %v51
  %v775 = vpop.f32.mrf.mxu0
  %v776 = vadd.f32 0.0, %v775
  %v777 = vpop.f32.mrf.mxu0
  %v778 = vadd.f32 0.0, %v777
  %779 = vdwg.mxu0
  %780 = vmatpush.bf16.msra.mxu0 0
  %781 = vmatpush.bf16.msra.mxu0 0
  %782 = vmatpush.bf16.msra.mxu0 0
  %783 = vmatpush.bf16.msra.mxu0 0
  %784 = vmatpush.bf16.msra.mxu0 0
  %785 = vmatpush.bf16.msra.mxu0 0
  %786 = vmatpush.bf16.msra.mxu0 0
  %787 = vmatpush.bf16.msra.mxu0 %v704
  %788 = vmatmul.bf16.gmra.mxu0 %v147
  %v789 = vpop.f32.mrf.mxu0
  %v790 = vadd.f32 %v771, %v789
  %v791 = vpop.f32.mrf.mxu0
  %v792 = vadd.f32 %v773, %v791
  %793 = vmatmul.bf16.gmra.mxu0 %v150
  %v794 = vpop.f32.mrf.mxu0
  %v795 = vadd.f32 %v776, %v794
  %v796 = vpop.f32.mrf.mxu0
  %v797 = vadd.f32 %v778, %v796
  %798 = vdwg.mxu0
  %v799 = vmax.f32 %v606, %v752
  %v800 = vmax.f32 %v607, %v790
  %v801 = vmax.f32 %v608, %v754
  %v802 = vmax.f32 %v609, %v792
  %v803 = vmax.f32 %v610, %v757
  %v804 = vmax.f32 %v611, %v795
  %v805 = vmax.f32 %v612, %v759
  %v806 = vmax.f32 %v613, %v797
  %v807 = vld [vmem:[%s2] sm:$0xff]
  %v808 = vld [vmem:[%s2 + $0x8] sm:$0xff]
  %v809 = vld [vmem:[%s2 + $0x10] sm:$0xff]
  %v810 = vld [vmem:[%s2 + $0x18] sm:$0xff]
  %812 = vset.pattern.permute.xlu0 0
  %813 = vperm.xlu0 %812, %v807
  %v814 = vpop.permute.xlu0 %813
  %817 = vset.pattern.permute.xlu0 0
  %818 = vperm.xlu0 %817, %v808
  %v819 = vpop.permute.xlu0 %818
  %822 = vset.pattern.permute.xlu0 0
  %823 = vperm.xlu0 %822, %v809
  %v824 = vpop.permute.xlu0 %823
  %827 = vset.pattern.permute.xlu0 0
  %828 = vperm.xlu0 %827, %v810
  %v829 = vpop.permute.xlu0 %828
  %v831 = vadd.f32 %v799, %v814
  %v832 = vadd.f32 %v800, %v814
  %v833 = vadd.f32 %v801, %v819
  %v834 = vadd.f32 %v802, %v819
  %v835 = vadd.f32 %v803, %v824
  %v836 = vadd.f32 %v804, %v824
  %v837 = vadd.f32 %v805, %v829
  %v838 = vadd.f32 %v806, %v829
  %v839 = vmax.f32 %v831, 0.0
  %v840 = vmax.f32 %v832, 0.0
  %v841 = vmax.f32 %v833, 0.0
  %v842 = vmax.f32 %v834, 0.0
  %v843 = vmax.f32 %v835, 0.0
  %v844 = vmax.f32 %v836, 0.0
  %v845 = vmax.f32 %v837, 0.0
  %v846 = vmax.f32 %v838, 0.0
  %847 = vst [vmem:[%s3] sm:$0xff] %v839
  %848 = vst [vmem:[%s3 + $0x8] sm:$0xff] %v840
  %849 = vst [vmem:[%s3 + $0x10] sm:$0xff] %v841
  %850 = vst [vmem:[%s3 + $0x18] sm:$0xff] %v842
  %851 = vst [vmem:[%s3 + $0x20] sm:$0xff] %v843
  %852 = vst [vmem:[%s3 + $0x28] sm:$0xff] %v844
  %853 = vst [vmem:[%s3 + $0x30] sm:$0xff] %v845
  %854 = vst [vmem:[%s3 + $0x38] sm:$0xff] %v846
  // Predicated region
  $region14: #{cnn90_forward.6} parent=0 // pred_check
    _
  $region15: #{cnn90_forward.6} parent=0 // pred_check_branch
    %856 = sbr.rel (0) target = $region17
  $region16: #{cnn90_forward.6} parent=0 // pred_region
    _
  $region17: #{cnn90_forward.6} parent=0 // pred_fallthru
    _
  // Predicated region
  $region18: #{cnn90_forward.6} parent=0 // pred_check
    _
  $region19: #{cnn90_forward.6} parent=0 // pred_check_branch
    %858 = sbr.rel (0) target = $region21
  $region20: #{cnn90_forward.6} parent=0 // pred_region
    _
  $region21: #{cnn90_forward.6} parent=0 // pred_fallthru
    _

// kernel: cnn90_forward.7
$region0: #{cnn90_forward.7}
  #allocation0 [shape = 'u32[]', space=smem, size = 0x4, offset = 0x4, fixed_abs, tag = 'smem constant byte address 0x4 - core index']
  #allocation1 [shape = 'u32[72,128]{1,0:T(1,128)}', space=vmem, size = 0x9000, scoped, tag = 'internal scratch']
  %s0 = inlined_call_operand.vmem [shape: bf16[2,3872], index: 0, kind: input, shape index: {}]
  %s1 = inlined_call_operand.vmem [shape: bf16[3872,64], index: 1, kind: input, shape index: {}]
  %s2 = inlined_call_operand.vmem [shape: f32[1,64], index: 2, kind: input, shape index: {}]
  %s3 = inlined_call_operand.vmem [shape: bf16[64,64], index: 3, kind: input, shape index: {}]
  %s4 = inlined_call_operand.vmem [shape: f32[1,64], index: 4, kind: input, shape index: {}]
  %s5 = inlined_call_operand.vmem [shape: bf16[64,64], index: 5, kind: input, shape index: {}]
  %s6 = inlined_call_operand.vmem [shape: f32[1,64], index: 6, kind: input, shape index: {}]
  %s7 = inlined_call_operand.vmem [shape: bf16[64,64], index: 7, kind: input, shape index: {}]
  %s8 = inlined_call_operand.vmem [shape: f32[1,64], index: 8, kind: input, shape index: {}]
  %s9 = inlined_call_operand.vmem [shape: bf16[64,64], index: 9, kind: input, shape index: {}]
  %s10 = inlined_call_operand.vmem [shape: f32[1,64], index: 10, kind: input, shape index: {}]
  %s11 = inlined_call_operand.vmem [shape: bf16[64,10], index: 11, kind: input, shape index: {}]
  %s12 = inlined_call_operand.vmem [shape: f32[1,10], index: 12, kind: input, shape index: {}]
  %s13 = inlined_call_operand.hbm [shape: f32[2,10], index: 13, kind: output, shape index: {}]
  %s14 = sld [smem:[#allocation0]]
  $region62: #{cnn90_forward.7} parent=0
    _
  %s16 = ssub.s32 1, %s14
  %s17 = scalar_select 0, %s16, %s14
  $region1: #{cnn90_forward.7} parent=0
    #allocation2 [shape = 'u8[1024]{0}', space=vmem, size = 0x400, scoped, tag = 'output window, operand 0, single buffered']
    #allocation3 [shape = 's32[1]{0}', space=sflag, size = 0x4, scoped, tag = 'scoped memory for cnn90_forward.7']
    %18 = vsyncpa [#allocation3], 0
    // Predicated region
    $region2: #{cnn90_forward.7} parent=1 // pred_check
      _
    $region3: #{cnn90_forward.7} parent=1 // pred_check_branch
      %20 = sbr.rel (0) target = $region5
    $region4: #{cnn90_forward.7} parent=1 // pred_region
      _
    $region5: #{cnn90_forward.7} parent=1 // pred_fallthru
      _
    // Predicated region
    $region6: #{cnn90_forward.7} parent=1 // pred_check
      _
    $region7: #{cnn90_forward.7} parent=1 // pred_check_branch
      %22 = sbr.rel (0) target = $region9
    $region8: #{cnn90_forward.7} parent=1 // pred_region
      _
    $region9: #{cnn90_forward.7} parent=1 // pred_fallthru
      _
    // Predicated region
    $region10: #{cnn90_forward.7} parent=1 // pred_check
      _
    $region11: #{cnn90_forward.7} parent=1 // pred_check_branch
      %24 = sbr.rel (0) target = $region13
    $region12: #{cnn90_forward.7} parent=1 // pred_region
      _
    $region13: #{cnn90_forward.7} parent=1 // pred_fallthru
      _
    // Predicated region
    $region14: #{cnn90_forward.7} parent=1 // pred_check
      _
    $region15: #{cnn90_forward.7} parent=1 // pred_check_branch
      %26 = sbr.rel (0) target = $region17
    $region16: #{cnn90_forward.7} parent=1 // pred_region
      _
    $region17: #{cnn90_forward.7} parent=1 // pred_fallthru
      _
    // Predicated region
    $region18: #{cnn90_forward.7} parent=1 // pred_check
      _
    $region19: #{cnn90_forward.7} parent=1 // pred_check_branch
      %28 = sbr.rel (0) target = $region21
    $region20: #{cnn90_forward.7} parent=1 // pred_region
      _
    $region21: #{cnn90_forward.7} parent=1 // pred_fallthru
      _
    // Predicated region
    $region22: #{cnn90_forward.7} parent=1 // pred_check
      _
    $region23: #{cnn90_forward.7} parent=1 // pred_check_branch
      %30 = sbr.rel (0) target = $region25
    $region24: #{cnn90_forward.7} parent=1 // pred_region
      _
    $region25: #{cnn90_forward.7} parent=1 // pred_fallthru
      _
    // Predicated region
    $region26: #{cnn90_forward.7} parent=1 // pred_check
      _
    $region27: #{cnn90_forward.7} parent=1 // pred_check_branch
      %32 = sbr.rel (0) target = $region29
    $region28: #{cnn90_forward.7} parent=1 // pred_region
      _
    $region29: #{cnn90_forward.7} parent=1 // pred_fallthru
      _
    // Predicated region
    $region30: #{cnn90_forward.7} parent=1 // pred_check
      _
    $region31: #{cnn90_forward.7} parent=1 // pred_check_branch
      %34 = sbr.rel (0) target = $region33
    $region32: #{cnn90_forward.7} parent=1 // pred_region
      _
    $region33: #{cnn90_forward.7} parent=1 // pred_fallthru
      _
    // Predicated region
    $region34: #{cnn90_forward.7} parent=1 // pred_check
      _
    $region35: #{cnn90_forward.7} parent=1 // pred_check_branch
      %36 = sbr.rel (0) target = $region37
    $region36: #{cnn90_forward.7} parent=1 // pred_region
      _
    $region37: #{cnn90_forward.7} parent=1 // pred_fallthru
      _
    // Predicated region
    $region38: #{cnn90_forward.7} parent=1 // pred_check
      _
    $region39: #{cnn90_forward.7} parent=1 // pred_check_branch
      %38 = sbr.rel (0) target = $region41
    $region40: #{cnn90_forward.7} parent=1 // pred_region
      _
    $region41: #{cnn90_forward.7} parent=1 // pred_fallthru
      _
    // Predicated region
    $region42: #{cnn90_forward.7} parent=1 // pred_check
      _
    $region43: #{cnn90_forward.7} parent=1 // pred_check_branch
      %40 = sbr.rel (0) target = $region45
    $region44: #{cnn90_forward.7} parent=1 // pred_region
      _
    $region45: #{cnn90_forward.7} parent=1 // pred_fallthru
      _
    // Predicated region
    $region46: #{cnn90_forward.7} parent=1 // pred_check
      _
    $region47: #{cnn90_forward.7} parent=1 // pred_check_branch
      %42 = sbr.rel (0) target = $region49
    $region48: #{cnn90_forward.7} parent=1 // pred_region
      _
    $region49: #{cnn90_forward.7} parent=1 // pred_fallthru
      _
    // Predicated region
    $region50: #{cnn90_forward.7} parent=1 // pred_check
      _
    $region51: #{cnn90_forward.7} parent=1 // pred_check_branch
      %44 = sbr.rel (0) target = $region53
    $region52: #{cnn90_forward.7} parent=1 // pred_region
      _
    $region53: #{cnn90_forward.7} parent=1 // pred_fallthru
      _
    %v46 = vld [vmem:[%s0] sm:$0xff]
    %v47 = vld [vmem:[%s0 + $0x8] sm:$0xff]
    %v48 = vld [vmem:[%s0 + $0x10] sm:$0xff]
    %v49 = vld [vmem:[%s0 + $0x18] sm:$0x7f]
    %v50 = vld [vmem:[%s1] sm:$0xf]
    %v51 = vld [vmem:[%s1 + $0x4] sm:$0xf]
    %v52 = vld [vmem:[%s1 + $0x8] sm:$0xf]
    %v53 = vld [vmem:[%s1 + $0xc] sm:$0xf]
    %v54 = vld [vmem:[%s1 + $0x10] sm:$0xf]
    %v55 = vld [vmem:[%s1 + $0x14] sm:$0xf]
    %v56 = vld [vmem:[%s1 + $0x18] sm:$0xf]
    %v57 = vld [vmem:[%s1 + $0x1c] sm:$0xf]
    %v58 = vld [vmem:[%s1 + $0x20] sm:$0xf]
    %v59 = vld [vmem:[%s1 + $0x24] sm:$0xf]
    %v60 = vld [vmem:[%s1 + $0x28] sm:$0xf]
    %v61 = vld [vmem:[%s1 + $0x2c] sm:$0xf]
    %v62 = vld [vmem:[%s1 + $0x30] sm:$0xf]
    %v63 = vld [vmem:[%s1 + $0x34] sm:$0xf]
    %v64 = vld [vmem:[%s1 + $0x38] sm:$0xf]
    %v65 = vld [vmem:[%s1 + $0x3c] sm:$0xf]
    %v66 = vld [vmem:[%s1 + $0x40] sm:$0xf]
    %v67 = vld [vmem:[%s1 + $0x44] sm:$0xf]
    %v68 = vld [vmem:[%s1 + $0x48] sm:$0xf]
    %v69 = vld [vmem:[%s1 + $0x4c] sm:$0xf]
    %v70 = vld [vmem:[%s1 + $0x50] sm:$0xf]
    %v71 = vld [vmem:[%s1 + $0x54] sm:$0xf]
    %v72 = vld [vmem:[%s1 + $0x58] sm:$0xf]
    %v73 = vld [vmem:[%s1 + $0x5c] sm:$0xf]
    %v74 = vld [vmem:[%s1 + $0x60] sm:$0xf]
    %v75 = vld [vmem:[%s1 + $0x64] sm:$0xf]
    %v76 = vld [vmem:[%s1 + $0x68] sm:$0xf]
    %v77 = vld [vmem:[%s1 + $0x6c] sm:$0xf]
    %v78 = vld [vmem:[%s1 + $0x70] sm:$0xf]
    %v79 = vld [vmem:[%s1 + $0x74] sm:$0xf]
    %v80 = vld [vmem:[%s1 + $0x78] sm:$0xf]
    %v81 = vld [vmem:[%s1 + $0x7c] sm:$0xf]
    %v82 = vld [vmem:[%s1 + $0x80] sm:$0xf]
    %v83 = vld [vmem:[%s1 + $0x84] sm:$0xf]
    %v84 = vld [vmem:[%s1 + $0x88] sm:$0xf]
    %v85 = vld [vmem:[%s1 + $0x8c] sm:$0xf]
    %v86 = vld [vmem:[%s1 + $0x90] sm:$0xf]
    %v87 = vld [vmem:[%s1 + $0x94] sm:$0xf]
    %v88 = vld [vmem:[%s1 + $0x98] sm:$0xf]
    %v89 = vld [vmem:[%s1 + $0x9c] sm:$0xf]
    %v90 = vld [vmem:[%s1 + $0xa0] sm:$0xf]
    %v91 = vld [vmem:[%s1 + $0xa4] sm:$0xf]
    %v92 = vld [vmem:[%s1 + $0xa8] sm:$0xf]
    %v93 = vld [vmem:[%s1 + $0xac] sm:$0xf]
    %v94 = vld [vmem:[%s1 + $0xb0] sm:$0xf]
    %v95 = vld [vmem:[%s1 + $0xb4] sm:$0xf]
    %v96 = vld [vmem:[%s1 + $0xb8] sm:$0xf]
    %v97 = vld [vmem:[%s1 + $0xbc] sm:$0xf]
    %v98 = vld [vmem:[%s1 + $0xc0] sm:$0xf]
    %v99 = vld [vmem:[%s1 + $0xc4] sm:$0xf]
    %v100 = vld [vmem:[%s1 + $0xc8] sm:$0xf]
    %v101 = vld [vmem:[%s1 + $0xcc] sm:$0xf]
    %v102 = vld [vmem:[%s1 + $0xd0] sm:$0xf]
    %v103 = vld [vmem:[%s1 + $0xd4] sm:$0xf]
    %v104 = vld [vmem:[%s1 + $0xd8] sm:$0xf]
    %v105 = vld [vmem:[%s1 + $0xdc] sm:$0xf]
    %v106 = vld [vmem:[%s1 + $0xe0] sm:$0xf]
    %v107 = vld [vmem:[%s1 + $0xe4] sm:$0xf]
    %v108 = vld [vmem:[%s1 + $0xe8] sm:$0xf]
    %v109 = vld [vmem:[%s1 + $0xec] sm:$0xf]
    %v110 = vld [vmem:[%s1 + $0xf0] sm:$0xf]
    %v111 = vld [vmem:[%s1 + $0xf4] sm:$0xf]
    %v112 = vld [vmem:[%s1 + $0xf8] sm:$0xf]
    %v113 = vld [vmem:[%s1 + $0xfc] sm:$0xf]
    %v114 = vld [vmem:[%s1 + $0x100] sm:$0xf]
    %v115 = vld [vmem:[%s1 + $0x104] sm:$0xf]
    %v116 = vld [vmem:[%s1 + $0x108] sm:$0xf]
    %v117 = vld [vmem:[%s1 + $0x10c] sm:$0xf]
    %v118 = vld [vmem:[%s1 + $0x110] sm:$0xf]
    %v119 = vld [vmem:[%s1 + $0x114] sm:$0xf]
    %v120 = vld [vmem:[%s1 + $0x118] sm:$0xf]
    %v121 = vld [vmem:[%s1 + $0x11c] sm:$0xf]
    %v122 = vld [vmem:[%s1 + $0x120] sm:$0xf]
    %v123 = vld [vmem:[%s1 + $0x124] sm:$0xf]
    %v124 = vld [vmem:[%s1 + $0x128] sm:$0xf]
    %v125 = vld [vmem:[%s1 + $0x12c] sm:$0xf]
    %v126 = vld [vmem:[%s1 + $0x130] sm:$0xf]
    %v127 = vld [vmem:[%s1 + $0x134] sm:$0xf]
    %v128 = vld [vmem:[%s1 + $0x138] sm:$0xf]
    %v129 = vld [vmem:[%s1 + $0x13c] sm:$0xf]
    %v130 = vld [vmem:[%s1 + $0x140] sm:$0xf]
    %v131 = vld [vmem:[%s1 + $0x144] sm:$0xf]
    %v132 = vld [vmem:[%s1 + $0x148] sm:$0xf]
    %v133 = vld [vmem:[%s1 + $0x14c] sm:$0xf]
    %v134 = vld [vmem:[%s1 + $0x150] sm:$0xf]
    %v135 = vld [vmem:[%s1 + $0x154] sm:$0xf]
    %v136 = vld [vmem:[%s1 + $0x158] sm:$0xf]
    %v137 = vld [vmem:[%s1 + $0x15c] sm:$0xf]
    %v138 = vld [vmem:[%s1 + $0x160] sm:$0xf]
    %v139 = vld [vmem:[%s1 + $0x164] sm:$0xf]
    %v140 = vld [vmem:[%s1 + $0x168] sm:$0xf]
    %v141 = vld [vmem:[%s1 + $0x16c] sm:$0xf]
    %v142 = vld [vmem:[%s1 + $0x170] sm:$0xf]
    %v143 = vld [vmem:[%s1 + $0x174] sm:$0xf]
    %v144 = vld [vmem:[%s1 + $0x178] sm:$0xf]
    %v145 = vld [vmem:[%s1 + $0x17c] sm:$0xf]
    %v146 = vld [vmem:[%s1 + $0x180] sm:$0xf]
    %v147 = vld [vmem:[%s1 + $0x184] sm:$0xf]
    %v148 = vld [vmem:[%s1 + $0x188] sm:$0xf]
    %v149 = vld [vmem:[%s1 + $0x18c] sm:$0xf]
    %v150 = vld [vmem:[%s1 + $0x190] sm:$0xf]
    %v151 = vld [vmem:[%s1 + $0x194] sm:$0xf]
    %v152 = vld [vmem:[%s1 + $0x198] sm:$0xf]
    %v153 = vld [vmem:[%s1 + $0x19c] sm:$0xf]
    %v154 = vld [vmem:[%s1 + $0x1a0] sm:$0xf]
    %v155 = vld [vmem:[%s1 + $0x1a4] sm:$0xf]
    %v156 = vld [vmem:[%s1 + $0x1a8] sm:$0xf]
    %v157 = vld [vmem:[%s1 + $0x1ac] sm:$0xf]
    %v158 = vld [vmem:[%s1 + $0x1b0] sm:$0xf]
    %v159 = vld [vmem:[%s1 + $0x1b4] sm:$0xf]
    %v160 = vld [vmem:[%s1 + $0x1b8] sm:$0xf]
    %v161 = vld [vmem:[%s1 + $0x1bc] sm:$0xf]
    %v162 = vld [vmem:[%s1 + $0x1c0] sm:$0xf]
    %v163 = vld [vmem:[%s1 + $0x1c4] sm:$0xf]
    %v164 = vld [vmem:[%s1 + $0x1c8] sm:$0xf]
    %v165 = vld [vmem:[%s1 + $0x1cc] sm:$0xf]
    %v166 = vld [vmem:[%s1 + $0x1d0] sm:$0xf]
    %v167 = vld [vmem:[%s1 + $0x1d4] sm:$0xf]
    %v168 = vld [vmem:[%s1 + $0x1d8] sm:$0xf]
    %v169 = vld [vmem:[%s1 + $0x1dc] sm:$0xf]
    %v170 = vld [vmem:[%s1 + $0x1e0] sm:$0xf]
    %v171 = vld [vmem:[%s1 + $0x1e4] sm:$0xf]
    %v172 = vld [vmem:[%s1 + $0x1e8] sm:$0xf]
    %v173 = vld [vmem:[%s1 + $0x1ec] sm:$0xf]
    %v174 = vld [vmem:[%s1 + $0x1f0] sm:$0xf]
    %v175 = vld [vmem:[%s1 + $0x1f4] sm:$0xf]
    %v176 = vld [vmem:[%s1 + $0x1f8] sm:$0xf]
    %v177 = vld [vmem:[%s1 + $0x1fc] sm:$0xf]
    %v178 = vld [vmem:[%s1 + $0x200] sm:$0xf]
    %v179 = vld [vmem:[%s1 + $0x204] sm:$0xf]
    %v180 = vld [vmem:[%s1 + $0x208] sm:$0xf]
    %v181 = vld [vmem:[%s1 + $0x20c] sm:$0xf]
    %v182 = vld [vmem:[%s1 + $0x210] sm:$0xf]
    %v183 = vld [vmem:[%s1 + $0x214] sm:$0xf]
    %v184 = vld [vmem:[%s1 + $0x218] sm:$0xf]
    %v185 = vld [vmem:[%s1 + $0x21c] sm:$0xf]
    %v186 = vld [vmem:[%s1 + $0x220] sm:$0xf]
    %v187 = vld [vmem:[%s1 + $0x224] sm:$0xf]
    %v188 = vld [vmem:[%s1 + $0x228] sm:$0xf]
    %v189 = vld [vmem:[%s1 + $0x22c] sm:$0xf]
    %v190 = vld [vmem:[%s1 + $0x230] sm:$0xf]
    %v191 = vld [vmem:[%s1 + $0x234] sm:$0xf]
    %v192 = vld [vmem:[%s1 + $0x238] sm:$0xf]
    %v193 = vld [vmem:[%s1 + $0x23c] sm:$0xf]
    %v194 = vld [vmem:[%s1 + $0x240] sm:$0xf]
    %v195 = vld [vmem:[%s1 + $0x244] sm:$0xf]
    %v196 = vld [vmem:[%s1 + $0x248] sm:$0xf]
    %v197 = vld [vmem:[%s1 + $0x24c] sm:$0xf]
    %v198 = vld [vmem:[%s1 + $0x250] sm:$0xf]
    %v199 = vld [vmem:[%s1 + $0x254] sm:$0xf]
    %v200 = vld [vmem:[%s1 + $0x258] sm:$0xf]
    %v201 = vld [vmem:[%s1 + $0x25c] sm:$0xf]
    %v202 = vld [vmem:[%s1 + $0x260] sm:$0xf]
    %v203 = vld [vmem:[%s1 + $0x264] sm:$0xf]
    %v204 = vld [vmem:[%s1 + $0x268] sm:$0xf]
    %v205 = vld [vmem:[%s1 + $0x26c] sm:$0xf]
    %v206 = vld [vmem:[%s1 + $0x270] sm:$0xf]
    %v207 = vld [vmem:[%s1 + $0x274] sm:$0xf]
    %v208 = vld [vmem:[%s1 + $0x278] sm:$0xf]
    %v209 = vld [vmem:[%s1 + $0x27c] sm:$0xf]
    %v210 = vld [vmem:[%s1 + $0x280] sm:$0xf]
    %v211 = vld [vmem:[%s1 + $0x284] sm:$0xf]
    %v212 = vld [vmem:[%s1 + $0x288] sm:$0xf]
    %v213 = vld [vmem:[%s1 + $0x28c] sm:$0xf]
    %v214 = vld [vmem:[%s1 + $0x290] sm:$0xf]
    %v215 = vld [vmem:[%s1 + $0x294] sm:$0xf]
    %v216 = vld [vmem:[%s1 + $0x298] sm:$0xf]
    %v217 = vld [vmem:[%s1 + $0x29c] sm:$0xf]
    %v218 = vld [vmem:[%s1 + $0x2a0] sm:$0xf]
    %v219 = vld [vmem:[%s1 + $0x2a4] sm:$0xf]
    %v220 = vld [vmem:[%s1 + $0x2a8] sm:$0xf]
    %v221 = vld [vmem:[%s1 + $0x2ac] sm:$0xf]
    %v222 = vld [vmem:[%s1 + $0x2b0] sm:$0xf]
    %v223 = vld [vmem:[%s1 + $0x2b4] sm:$0xf]
    %v224 = vld [vmem:[%s1 + $0x2b8] sm:$0xf]
    %v225 = vld [vmem:[%s1 + $0x2bc] sm:$0xf]
    %v226 = vld [vmem:[%s1 + $0x2c0] sm:$0xf]
    %v227 = vld [vmem:[%s1 + $0x2c4] sm:$0xf]
    %v228 = vld [vmem:[%s1 + $0x2c8] sm:$0xf]
    %v229 = vld [vmem:[%s1 + $0x2cc] sm:$0xf]
    %v230 = vld [vmem:[%s1 + $0x2d0] sm:$0xf]
    %v231 = vld [vmem:[%s1 + $0x2d4] sm:$0xf]
    %v232 = vld [vmem:[%s1 + $0x2d8] sm:$0xf]
    %v233 = vld [vmem:[%s1 + $0x2dc] sm:$0xf]
    %v234 = vld [vmem:[%s1 + $0x2e0] sm:$0xf]
    %v235 = vld [vmem:[%s1 + $0x2e4] sm:$0xf]
    %v236 = vld [vmem:[%s1 + $0x2e8] sm:$0xf]
    %v237 = vld [vmem:[%s1 + $0x2ec] sm:$0xf]
    %v238 = vld [vmem:[%s1 + $0x2f0] sm:$0xf]
    %v239 = vld [vmem:[%s1 + $0x2f4] sm:$0xf]
    %v240 = vld [vmem:[%s1 + $0x2f8] sm:$0xf]
    %v241 = vld [vmem:[%s1 + $0x2fc] sm:$0xf]
    %v242 = vld [vmem:[%s1 + $0x300] sm:$0xf]
    %v243 = vld [vmem:[%s1 + $0x304] sm:$0xf]
    %v244 = vld [vmem:[%s1 + $0x308] sm:$0xf]
    %v245 = vld [vmem:[%s1 + $0x30c] sm:$0xf]
    %v246 = vld [vmem:[%s1 + $0x310] sm:$0xf]
    %v247 = vld [vmem:[%s1 + $0x314] sm:$0xf]
    %v248 = vld [vmem:[%s1 + $0x318] sm:$0xf]
    %v249 = vld [vmem:[%s1 + $0x31c] sm:$0xf]
    %v250 = vld [vmem:[%s1 + $0x320] sm:$0xf]
    %v251 = vld [vmem:[%s1 + $0x324] sm:$0xf]
    %v252 = vld [vmem:[%s1 + $0x328] sm:$0xf]
    %v253 = vld [vmem:[%s1 + $0x32c] sm:$0xf]
    %v254 = vld [vmem:[%s1 + $0x330] sm:$0xf]
    %v255 = vld [vmem:[%s1 + $0x334] sm:$0xf]
    %v256 = vld [vmem:[%s1 + $0x338] sm:$0xf]
    %v257 = vld [vmem:[%s1 + $0x33c] sm:$0xf]
    %v258 = vld [vmem:[%s1 + $0x340] sm:$0xf]
    %v259 = vld [vmem:[%s1 + $0x344] sm:$0xf]
    %v260 = vld [vmem:[%s1 + $0x348] sm:$0xf]
    %v261 = vld [vmem:[%s1 + $0x34c] sm:$0xf]
    %v262 = vld [vmem:[%s1 + $0x350] sm:$0xf]
    %v263 = vld [vmem:[%s1 + $0x354] sm:$0xf]
    %v264 = vld [vmem:[%s1 + $0x358] sm:$0xf]
    %v265 = vld [vmem:[%s1 + $0x35c] sm:$0xf]
    %v266 = vld [vmem:[%s1 + $0x360] sm:$0xf]
    %v267 = vld [vmem:[%s1 + $0x364] sm:$0xf]
    %v268 = vld [vmem:[%s1 + $0x368] sm:$0xf]
    %v269 = vld [vmem:[%s1 + $0x36c] sm:$0xf]
    %v270 = vld [vmem:[%s1 + $0x370] sm:$0xf]
    %v271 = vld [vmem:[%s1 + $0x374] sm:$0xf]
    %v272 = vld [vmem:[%s1 + $0x378] sm:$0xf]
    %v273 = vld [vmem:[%s1 + $0x37c] sm:$0xf]
    %v274 = vld [vmem:[%s1 + $0x380] sm:$0xf]
    %v275 = vld [vmem:[%s1 + $0x384] sm:$0xf]
    %v276 = vld [vmem:[%s1 + $0x388] sm:$0xf]
    %v277 = vld [vmem:[%s1 + $0x38c] sm:$0xf]
    %v278 = vld [vmem:[%s1 + $0x390] sm:$0xf]
    %v279 = vld [vmem:[%s1 + $0x394] sm:$0xf]
    %v280 = vld [vmem:[%s1 + $0x398] sm:$0xf]
    %v281 = vld [vmem:[%s1 + $0x39c] sm:$0xf]
    %v282 = vld [vmem:[%s1 + $0x3a0] sm:$0xf]
    %v283 = vld [vmem:[%s1 + $0x3a4] sm:$0xf]
    %v284 = vld [vmem:[%s1 + $0x3a8] sm:$0xf]
    %v285 = vld [vmem:[%s1 + $0x3ac] sm:$0xf]
    %v286 = vld [vmem:[%s1 + $0x3b0] sm:$0xf]
    %v287 = vld [vmem:[%s1 + $0x3b4] sm:$0xf]
    %v288 = vld [vmem:[%s1 + $0x3b8] sm:$0xf]
    %v289 = vld [vmem:[%s1 + $0x3bc] sm:$0xf]
    %v290 = vld [vmem:[%s1 + $0x3c0] sm:$0xf]
    %v291 = vld [vmem:[%s1 + $0x3c4] sm:$0xf]
    %v292 = vld [vmem:[%s1 + $0x3c8] sm:$0xf]
    %v293 = vld [vmem:[%s1 + $0x3cc] sm:$0xf]
    %v294 = vld [vmem:[%s1 + $0x3d0] sm:$0xf]
    %v295 = vld [vmem:[%s1 + $0x3d4] sm:$0xf]
    %v296 = vld [vmem:[%s1 + $0x3d8] sm:$0xf]
    %v297 = vld [vmem:[%s1 + $0x3dc] sm:$0xf]
    %v298 = vld [vmem:[%s1 + $0x3e0] sm:$0xf]
    %v299 = vld [vmem:[%s1 + $0x3e4] sm:$0xf]
    %v300 = vld [vmem:[%s1 + $0x3e8] sm:$0xf]
    %v301 = vld [vmem:[%s1 + $0x3ec] sm:$0xf]
    %v302 = vld [vmem:[%s1 + $0x3f0] sm:$0xf]
    %v303 = vld [vmem:[%s1 + $0x3f4] sm:$0xf]
    %v304 = vld [vmem:[%s1 + $0x3f8] sm:$0xf]
    %v305 = vld [vmem:[%s1 + $0x3fc] sm:$0xf]
    %v306 = vld [vmem:[%s1 + $0x400] sm:$0xf]
    %v307 = vld [vmem:[%s1 + $0x404] sm:$0xf]
    %v308 = vld [vmem:[%s1 + $0x408] sm:$0xf]
    %v309 = vld [vmem:[%s1 + $0x40c] sm:$0xf]
    %v310 = vld [vmem:[%s1 + $0x410] sm:$0xf]
    %v311 = vld [vmem:[%s1 + $0x414] sm:$0xf]
    %v312 = vld [vmem:[%s1 + $0x418] sm:$0xf]
    %v313 = vld [vmem:[%s1 + $0x41c] sm:$0xf]
    %v314 = vld [vmem:[%s1 + $0x420] sm:$0xf]
    %v315 = vld [vmem:[%s1 + $0x424] sm:$0xf]
    %v316 = vld [vmem:[%s1 + $0x428] sm:$0xf]
    %v317 = vld [vmem:[%s1 + $0x42c] sm:$0xf]
    %v318 = vld [vmem:[%s1 + $0x430] sm:$0xf]
    %v319 = vld [vmem:[%s1 + $0x434] sm:$0xf]
    %v320 = vld [vmem:[%s1 + $0x438] sm:$0xf]
    %v321 = vld [vmem:[%s1 + $0x43c] sm:$0xf]
    %v322 = vld [vmem:[%s1 + $0x440] sm:$0xf]
    %v323 = vld [vmem:[%s1 + $0x444] sm:$0xf]
    %v324 = vld [vmem:[%s1 + $0x448] sm:$0xf]
    %v325 = vld [vmem:[%s1 + $0x44c] sm:$0xf]
    %v326 = vld [vmem:[%s1 + $0x450] sm:$0xf]
    %v327 = vld [vmem:[%s1 + $0x454] sm:$0xf]
    %v328 = vld [vmem:[%s1 + $0x458] sm:$0xf]
    %v329 = vld [vmem:[%s1 + $0x45c] sm:$0xf]
    %v330 = vld [vmem:[%s1 + $0x460] sm:$0xf]
    %v331 = vld [vmem:[%s1 + $0x464] sm:$0xf]
    %v332 = vld [vmem:[%s1 + $0x468] sm:$0xf]
    %v333 = vld [vmem:[%s1 + $0x46c] sm:$0xf]
    %v334 = vld [vmem:[%s1 + $0x470] sm:$0xf]
    %v335 = vld [vmem:[%s1 + $0x474] sm:$0xf]
    %v336 = vld [vmem:[%s1 + $0x478] sm:$0xf]
    %v337 = vld [vmem:[%s1 + $0x47c] sm:$0xf]
    %v338 = vld [vmem:[%s1 + $0x480] sm:$0xf]
    %v339 = vld [vmem:[%s1 + $0x484] sm:$0xf]
    %v340 = vld [vmem:[%s1 + $0x488] sm:$0xf]
    %v341 = vld [vmem:[%s1 + $0x48c] sm:$0xf]
    %v342 = vld [vmem:[%s1 + $0x490] sm:$0xf]
    %v343 = vld [vmem:[%s1 + $0x494] sm:$0xf]
    %v344 = vld [vmem:[%s1 + $0x498] sm:$0xf]
    %v345 = vld [vmem:[%s1 + $0x49c] sm:$0xf]
    %v346 = vld [vmem:[%s1 + $0x4a0] sm:$0xf]
    %v347 = vld [vmem:[%s1 + $0x4a4] sm:$0xf]
    %v348 = vld [vmem:[%s1 + $0x4a8] sm:$0xf]
    %v349 = vld [vmem:[%s1 + $0x4ac] sm:$0xf]
    %v350 = vld [vmem:[%s1 + $0x4b0] sm:$0xf]
    %v351 = vld [vmem:[%s1 + $0x4b4] sm:$0xf]
    %v352 = vld [vmem:[%s1 + $0x4b8] sm:$0xf]
    %v353 = vld [vmem:[%s1 + $0x4bc] sm:$0xf]
    %v354 = vld [vmem:[%s1 + $0x4c0] sm:$0xf]
    %v355 = vld [vmem:[%s1 + $0x4c4] sm:$0xf]
    %v356 = vld [vmem:[%s1 + $0x4c8] sm:$0xf]
    %v357 = vld [vmem:[%s1 + $0x4cc] sm:$0xf]
    %v358 = vld [vmem:[%s1 + $0x4d0] sm:$0xf]
    %v359 = vld [vmem:[%s1 + $0x4d4] sm:$0xf]
    %v360 = vld [vmem:[%s1 + $0x4d8] sm:$0xf]
    %v361 = vld [vmem:[%s1 + $0x4dc] sm:$0xf]
    %v362 = vld [vmem:[%s1 + $0x4e0] sm:$0xf]
    %v363 = vld [vmem:[%s1 + $0x4e4] sm:$0xf]
    %v364 = vld [vmem:[%s1 + $0x4e8] sm:$0xf]
    %v365 = vld [vmem:[%s1 + $0x4ec] sm:$0xf]
    %v366 = vld [vmem:[%s1 + $0x4f0] sm:$0xf]
    %v367 = vld [vmem:[%s1 + $0x4f4] sm:$0xf]
    %v368 = vld [vmem:[%s1 + $0x4f8] sm:$0xf]
    %v369 = vld [vmem:[%s1 + $0x4fc] sm:$0xf]
    %v370 = vld [vmem:[%s1 + $0x500] sm:$0xf]
    %v371 = vld [vmem:[%s1 + $0x504] sm:$0xf]
    %v372 = vld [vmem:[%s1 + $0x508] sm:$0xf]
    %v373 = vld [vmem:[%s1 + $0x50c] sm:$0xf]
    %v374 = vld [vmem:[%s1 + $0x510] sm:$0xf]
    %v375 = vld [vmem:[%s1 + $0x514] sm:$0xf]
    %v376 = vld [vmem:[%s1 + $0x518] sm:$0xf]
    %v377 = vld [vmem:[%s1 + $0x51c] sm:$0xf]
    %v378 = vld [vmem:[%s1 + $0x520] sm:$0xf]
    %v379 = vld [vmem:[%s1 + $0x524] sm:$0xf]
    %v380 = vld [vmem:[%s1 + $0x528] sm:$0xf]
    %v381 = vld [vmem:[%s1 + $0x52c] sm:$0xf]
    %v382 = vld [vmem:[%s1 + $0x530] sm:$0xf]
    %v383 = vld [vmem:[%s1 + $0x534] sm:$0xf]
    %v384 = vld [vmem:[%s1 + $0x538] sm:$0xf]
    %v385 = vld [vmem:[%s1 + $0x53c] sm:$0xf]
    %v386 = vld [vmem:[%s1 + $0x540] sm:$0xf]
    %v387 = vld [vmem:[%s1 + $0x544] sm:$0xf]
    %v388 = vld [vmem:[%s1 + $0x548] sm:$0xf]
    %v389 = vld [vmem:[%s1 + $0x54c] sm:$0xf]
    %v390 = vld [vmem:[%s1 + $0x550] sm:$0xf]
    %v391 = vld [vmem:[%s1 + $0x554] sm:$0xf]
    %v392 = vld [vmem:[%s1 + $0x558] sm:$0xf]
    %v393 = vld [vmem:[%s1 + $0x55c] sm:$0xf]
    %v394 = vld [vmem:[%s1 + $0x560] sm:$0xf]
    %v395 = vld [vmem:[%s1 + $0x564] sm:$0xf]
    %v396 = vld [vmem:[%s1 + $0x568] sm:$0xf]
    %v397 = vld [vmem:[%s1 + $0x56c] sm:$0xf]
    %v398 = vld [vmem:[%s1 + $0x570] sm:$0xf]
    %v399 = vld [vmem:[%s1 + $0x574] sm:$0xf]
    %v400 = vld [vmem:[%s1 + $0x578] sm:$0xf]
    %v401 = vld [vmem:[%s1 + $0x57c] sm:$0xf]
    %v402 = vld [vmem:[%s1 + $0x580] sm:$0xf]
    %v403 = vld [vmem:[%s1 + $0x584] sm:$0xf]
    %v404 = vld [vmem:[%s1 + $0x588] sm:$0xf]
    %v405 = vld [vmem:[%s1 + $0x58c] sm:$0xf]
    %v406 = vld [vmem:[%s1 + $0x590] sm:$0xf]
    %v407 = vld [vmem:[%s1 + $0x594] sm:$0xf]
    %v408 = vld [vmem:[%s1 + $0x598] sm:$0xf]
    %v409 = vld [vmem:[%s1 + $0x59c] sm:$0xf]
    %v410 = vld [vmem:[%s1 + $0x5a0] sm:$0xf]
    %v411 = vld [vmem:[%s1 + $0x5a4] sm:$0xf]
    %v412 = vld [vmem:[%s1 + $0x5a8] sm:$0xf]
    %v413 = vld [vmem:[%s1 + $0x5ac] sm:$0xf]
    %v414 = vld [vmem:[%s1 + $0x5b0] sm:$0xf]
    %v415 = vld [vmem:[%s1 + $0x5b4] sm:$0xf]
    %v416 = vld [vmem:[%s1 + $0x5b8] sm:$0xf]
    %v417 = vld [vmem:[%s1 + $0x5bc] sm:$0xf]
    %v418 = vld [vmem:[%s1 + $0x5c0] sm:$0xf]
    %v419 = vld [vmem:[%s1 + $0x5c4] sm:$0xf]
    %v420 = vld [vmem:[%s1 + $0x5c8] sm:$0xf]
    %v421 = vld [vmem:[%s1 + $0x5cc] sm:$0xf]
    %v422 = vld [vmem:[%s1 + $0x5d0] sm:$0xf]
    %v423 = vld [vmem:[%s1 + $0x5d4] sm:$0xf]
    %v424 = vld [vmem:[%s1 + $0x5d8] sm:$0xf]
    %v425 = vld [vmem:[%s1 + $0x5dc] sm:$0xf]
    %v426 = vld [vmem:[%s1 + $0x5e0] sm:$0xf]
    %v427 = vld [vmem:[%s1 + $0x5e4] sm:$0xf]
    %v428 = vld [vmem:[%s1 + $0x5e8] sm:$0xf]
    %v429 = vld [vmem:[%s1 + $0x5ec] sm:$0xf]
    %v430 = vld [vmem:[%s1 + $0x5f0] sm:$0xf]
    %v431 = vld [vmem:[%s1 + $0x5f4] sm:$0xf]
    %v432 = vld [vmem:[%s1 + $0x5f8] sm:$0xf]
    %v433 = vld [vmem:[%s1 + $0x5fc] sm:$0xf]
    %v434 = vld [vmem:[%s1 + $0x600] sm:$0xf]
    %v435 = vld [vmem:[%s1 + $0x604] sm:$0xf]
    %v436 = vld [vmem:[%s1 + $0x608] sm:$0xf]
    %v437 = vld [vmem:[%s1 + $0x60c] sm:$0xf]
    %v438 = vld [vmem:[%s1 + $0x610] sm:$0xf]
    %v439 = vld [vmem:[%s1 + $0x614] sm:$0xf]
    %v440 = vld [vmem:[%s1 + $0x618] sm:$0xf]
    %v441 = vld [vmem:[%s1 + $0x61c] sm:$0xf]
    %v442 = vld [vmem:[%s1 + $0x620] sm:$0xf]
    %v443 = vld [vmem:[%s1 + $0x624] sm:$0xf]
    %v444 = vld [vmem:[%s1 + $0x628] sm:$0xf]
    %v445 = vld [vmem:[%s1 + $0x62c] sm:$0xf]
    %v446 = vld [vmem:[%s1 + $0x630] sm:$0xf]
    %v447 = vld [vmem:[%s1 + $0x634] sm:$0xf]
    %v448 = vld [vmem:[%s1 + $0x638] sm:$0xf]
    %v449 = vld [vmem:[%s1 + $0x63c] sm:$0xf]
    %v450 = vld [vmem:[%s1 + $0x640] sm:$0xf]
    %v451 = vld [vmem:[%s1 + $0x644] sm:$0xf]
    %v452 = vld [vmem:[%s1 + $0x648] sm:$0xf]
    %v453 = vld [vmem:[%s1 + $0x64c] sm:$0xf]
    %v454 = vld [vmem:[%s1 + $0x650] sm:$0xf]
    %v455 = vld [vmem:[%s1 + $0x654] sm:$0xf]
    %v456 = vld [vmem:[%s1 + $0x658] sm:$0xf]
    %v457 = vld [vmem:[%s1 + $0x65c] sm:$0xf]
    %v458 = vld [vmem:[%s1 + $0x660] sm:$0xf]
    %v459 = vld [vmem:[%s1 + $0x664] sm:$0xf]
    %v460 = vld [vmem:[%s1 + $0x668] sm:$0xf]
    %v461 = vld [vmem:[%s1 + $0x66c] sm:$0xf]
    %v462 = vld [vmem:[%s1 + $0x670] sm:$0xf]
    %v463 = vld [vmem:[%s1 + $0x674] sm:$0xf]
    %v464 = vld [vmem:[%s1 + $0x678] sm:$0xf]
    %v465 = vld [vmem:[%s1 + $0x67c] sm:$0xf]
    %v466 = vld [vmem:[%s1 + $0x680] sm:$0xf]
    %v467 = vld [vmem:[%s1 + $0x684] sm:$0xf]
    %v468 = vld [vmem:[%s1 + $0x688] sm:$0xf]
    %v469 = vld [vmem:[%s1 + $0x68c] sm:$0xf]
    %v470 = vld [vmem:[%s1 + $0x690] sm:$0xf]
    %v471 = vld [vmem:[%s1 + $0x694] sm:$0xf]
    %v472 = vld [vmem:[%s1 + $0x698] sm:$0xf]
    %v473 = vld [vmem:[%s1 + $0x69c] sm:$0xf]
    %v474 = vld [vmem:[%s1 + $0x6a0] sm:$0xf]
    %v475 = vld [vmem:[%s1 + $0x6a4] sm:$0xf]
    %v476 = vld [vmem:[%s1 + $0x6a8] sm:$0xf]
    %v477 = vld [vmem:[%s1 + $0x6ac] sm:$0xf]
    %v478 = vld [vmem:[%s1 + $0x6b0] sm:$0xf]
    %v479 = vld [vmem:[%s1 + $0x6b4] sm:$0xf]
    %v480 = vld [vmem:[%s1 + $0x6b8] sm:$0xf]
    %v481 = vld [vmem:[%s1 + $0x6bc] sm:$0xf]
    %v482 = vld [vmem:[%s1 + $0x6c0] sm:$0xf]
    %v483 = vld [vmem:[%s1 + $0x6c4] sm:$0xf]
    %v484 = vld [vmem:[%s1 + $0x6c8] sm:$0xf]
    %v485 = vld [vmem:[%s1 + $0x6cc] sm:$0xf]
    %v486 = vld [vmem:[%s1 + $0x6d0] sm:$0xf]
    %v487 = vld [vmem:[%s1 + $0x6d4] sm:$0xf]
    %v488 = vld [vmem:[%s1 + $0x6d8] sm:$0xf]
    %v489 = vld [vmem:[%s1 + $0x6dc] sm:$0xf]
    %v490 = vld [vmem:[%s1 + $0x6e0] sm:$0xf]
    %v491 = vld [vmem:[%s1 + $0x6e4] sm:$0xf]
    %v492 = vld [vmem:[%s1 + $0x6e8] sm:$0xf]
    %v493 = vld [vmem:[%s1 + $0x6ec] sm:$0xf]
    %v494 = vld [vmem:[%s1 + $0x6f0] sm:$0xf]
    %v495 = vld [vmem:[%s1 + $0x6f4] sm:$0xf]
    %v496 = vld [vmem:[%s1 + $0x6f8] sm:$0xf]
    %v497 = vld [vmem:[%s1 + $0x6fc] sm:$0xf]
    %v498 = vld [vmem:[%s1 + $0x700] sm:$0xf]
    %v499 = vld [vmem:[%s1 + $0x704] sm:$0xf]
    %v500 = vld [vmem:[%s1 + $0x708] sm:$0xf]
    %v501 = vld [vmem:[%s1 + $0x70c] sm:$0xf]
    %v502 = vld [vmem:[%s1 + $0x710] sm:$0xf]
    %v503 = vld [vmem:[%s1 + $0x714] sm:$0xf]
    %v504 = vld [vmem:[%s1 + $0x718] sm:$0xf]
    %v505 = vld [vmem:[%s1 + $0x71c] sm:$0xf]
    %v506 = vld [vmem:[%s1 + $0x720] sm:$0xf]
    %v507 = vld [vmem:[%s1 + $0x724] sm:$0xf]
    %v508 = vld [vmem:[%s1 + $0x728] sm:$0xf]
    %v509 = vld [vmem:[%s1 + $0x72c] sm:$0xf]
    %v510 = vld [vmem:[%s1 + $0x730] sm:$0xf]
    %v511 = vld [vmem:[%s1 + $0x734] sm:$0xf]
    %v512 = vld [vmem:[%s1 + $0x738] sm:$0xf]
    %v513 = vld [vmem:[%s1 + $0x73c] sm:$0xf]
    %v514 = vld [vmem:[%s1 + $0x740] sm:$0xf]
    %v515 = vld [vmem:[%s1 + $0x744] sm:$0xf]
    %v516 = vld [vmem:[%s1 + $0x748] sm:$0xf]
    %v517 = vld [vmem:[%s1 + $0x74c] sm:$0xf]
    %v518 = vld [vmem:[%s1 + $0x750] sm:$0xf]
    %v519 = vld [vmem:[%s1 + $0x754] sm:$0xf]
    %v520 = vld [vmem:[%s1 + $0x758] sm:$0xf]
    %v521 = vld [vmem:[%s1 + $0x75c] sm:$0xf]
    %v522 = vld [vmem:[%s1 + $0x760] sm:$0xf]
    %v523 = vld [vmem:[%s1 + $0x764] sm:$0xf]
    %v524 = vld [vmem:[%s1 + $0x768] sm:$0xf]
    %v525 = vld [vmem:[%s1 + $0x76c] sm:$0xf]
    %v526 = vld [vmem:[%s1 + $0x770] sm:$0xf]
    %v527 = vld [vmem:[%s1 + $0x774] sm:$0xf]
    %v528 = vld [vmem:[%s1 + $0x778] sm:$0xf]
    %v529 = vld [vmem:[%s1 + $0x77c] sm:$0xf]
    %v530 = vld [vmem:[%s1 + $0x780] sm:$0xf]
    %v531 = vld [vmem:[%s1 + $0x784] sm:$0xf]
    %v532 = vld [vmem:[%s1 + $0x788] sm:$0xf]
    %v533 = vld [vmem:[%s1 + $0x78c] sm:$0xf]
    %v534 = vld [vmem:[%s2] sm:$0x1]
    %v536 = vperm.slane %v534, 0
    %539 = vst [vmem:[#allocation1] ss:$9 sm:$0xff] %v46
    %v540 = vld [vmem:[#allocation1] sm:$0xff]
    %v541 = vld [vmem:[#allocation1 + $0x9] sm:$0xff]
    %v542 = vld [vmem:[#allocation1 + $0x12] sm:$0xff]
    %v543 = vld [vmem:[#allocation1 + $0x1b] sm:$0xff]
    %v544 = vld [vmem:[#allocation1 + $0x24] sm:$0xff]
    %v545 = vld [vmem:[#allocation1 + $0x2d] sm:$0xff]
    %v546 = vld [vmem:[#allocation1 + $0x36] sm:$0xff]
    %v547 = vld [vmem:[#allocation1 + $0x3f] sm:$0xff]
    %549 = vst [vmem:[#allocation1] ss:$9 sm:$0xff] %v47
    %v550 = vld [vmem:[#allocation1] sm:$0xff]
    %v551 = vld [vmem:[#allocation1 + $0x9] sm:$0xff]
    %v552 = vld [vmem:[#allocation1 + $0x12] sm:$0xff]
    %v553 = vld [vmem:[#allocation1 + $0x1b] sm:$0xff]
    %v554 = vld [vmem:[#allocation1 + $0x24] sm:$0xff]
    %v555 = vld [vmem:[#allocation1 + $0x2d] sm:$0xff]
    %v556 = vld [vmem:[#allocation1 + $0x36] sm:$0xff]
    %v557 = vld [vmem:[#allocation1 + $0x3f] sm:$0xff]
    %559 = vst [vmem:[#allocation1] ss:$9 sm:$0xff] %v48
    %v560 = vld [vmem:[#allocation1] sm:$0xff]
    %v561 = vld [vmem:[#allocation1 + $0x9] sm:$0xff]
    %v562 = vld [vmem:[#allocation1 + $0x12] sm:$0xff]
    %v563 = vld [vmem:[#allocation1 + $0x1b] sm:$0xff]
    %v564 = vld [vmem:[#allocation1 + $0x24] sm:$0xff]
    %v565 = vld [vmem:[#allocation1 + $0x2d] sm:$0xff]
    %v566 = vld [vmem:[#allocation1 + $0x36] sm:$0xff]
    %v567 = vld [vmem:[#allocation1 + $0x3f] sm:$0xff]
    %569 = vst [vmem:[#allocation1] ss:$9 sm:$0xff] %v49
    %v570 = vld [vmem:[#allocation1] sm:$0xff]
    %v571 = vld [vmem:[#allocation1 + $0x9] sm:$0xff]
    %v572 = vld [vmem:[#allocation1 + $0x12] sm:$0xff]
    %v573 = vld [vmem:[#allocation1 + $0x1b] sm:$0xff]
    %v574 = vld [vmem:[#allocation1 + $0x24] sm:$0xff]
    %v575 = vld [vmem:[#allocation1 + $0x2d] sm:$0xff]
    %v576 = vld [vmem:[#allocation1 + $0x36] sm:$0xff]
    %v1091 = vunpack.c.l.b16 %v50
    %v1092 = vunpack.c.l.b16 %v51
    %v1093 = vunpack.c.l.b16 %v52
    %v1094 = vunpack.c.l.b16 %v53
    %v1095 = vunpack.c.l.b16 %v54
    %v1096 = vunpack.c.l.b16 %v55
    %v1097 = vunpack.c.l.b16 %v56
    %v1098 = vunpack.c.l.b16 %v57
    %v1099 = vunpack.c.l.b16 %v58
    %v1100 = vunpack.c.l.b16 %v59
    %v1101 = vunpack.c.l.b16 %v60
    %v1102 = vunpack.c.l.b16 %v61
    %v1103 = vunpack.c.l.b16 %v62
    %v1104 = vunpack.c.l.b16 %v63
    %v1105 = vunpack.c.l.b16 %v64
    %v1106 = vunpack.c.l.b16 %v65
    %v1107 = vunpack.c.l.b16 %v66
    %v1108 = vunpack.c.l.b16 %v67
    %v1109 = vunpack.c.l.b16 %v68
    %v1110 = vunpack.c.l.b16 %v69
    %v1111 = vunpack.c.l.b16 %v70
    %v1112 = vunpack.c.l.b16 %v71
    %v1113 = vunpack.c.l.b16 %v72
    %v1114 = vunpack.c.l.b16 %v73
    %v1115 = vunpack.c.l.b16 %v74
    %v1116 = vunpack.c.l.b16 %v75
    %v1117 = vunpack.c.l.b16 %v76
    %v1118 = vunpack.c.l.b16 %v77
    %v1119 = vunpack.c.l.b16 %v78
    %v1120 = vunpack.c.l.b16 %v79
    %v1121 = vunpack.c.l.b16 %v80
    %v1122 = vunpack.c.l.b16 %v81
    %v1123 = vunpack.c.l.b16 %v82
    %v1124 = vunpack.c.l.b16 %v83
    %v1125 = vunpack.c.l.b16 %v84
    %v1126 = vunpack.c.l.b16 %v85
    %v1127 = vunpack.c.l.b16 %v86
    %v1128 = vunpack.c.l.b16 %v87
    %v1129 = vunpack.c.l.b16 %v88
    %v1130 = vunpack.c.l.b16 %v89
    %v1131 = vunpack.c.l.b16 %v90
    %v1132 = vunpack.c.l.b16 %v91
    %v1133 = vunpack.c.l.b16 %v92
    %v1134 = vunpack.c.l.b16 %v93
    %v1135 = vunpack.c.l.b16 %v94
    %v1136 = vunpack.c.l.b16 %v95
    %v1137 = vunpack.c.l.b16 %v96
    %v1138 = vunpack.c.l.b16 %v97
    %v1139 = vunpack.c.l.b16 %v98
    %v1140 = vunpack.c.l.b16 %v99
    %v1141 = vunpack.c.l.b16 %v100
    %v1142 = vunpack.c.l.b16 %v101
    %v1143 = vunpack.c.l.b16 %v102
    %v1144 = vunpack.c.l.b16 %v103
    %v1145 = vunpack.c.l.b16 %v104
    %v1146 = vunpack.c.l.b16 %v105
    %v1147 = vunpack.c.l.b16 %v106
    %v1148 = vunpack.c.l.b16 %v107
    %v1149 = vunpack.c.l.b16 %v108
    %v1150 = vunpack.c.l.b16 %v109
    %v1151 = vunpack.c.l.b16 %v110
    %v1152 = vunpack.c.l.b16 %v111
    %v1153 = vunpack.c.l.b16 %v112
    %v1154 = vunpack.c.l.b16 %v113
    %v1155 = vunpack.c.l.b16 %v114
    %v1156 = vunpack.c.l.b16 %v115
    %v1157 = vunpack.c.l.b16 %v116
    %v1158 = vunpack.c.l.b16 %v117
    %v1159 = vunpack.c.l.b16 %v118
    %v1160 = vunpack.c.l.b16 %v119
    %v1161 = vunpack.c.l.b16 %v120
    %v1162 = vunpack.c.l.b16 %v121
    %v1163 = vunpack.c.l.b16 %v122
    %v1164 = vunpack.c.l.b16 %v123
    %v1165 = vunpack.c.l.b16 %v124
    %v1166 = vunpack.c.l.b16 %v125
    %v1167 = vunpack.c.l.b16 %v126
    %v1168 = vunpack.c.l.b16 %v127
    %v1169 = vunpack.c.l.b16 %v128
    %v1170 = vunpack.c.l.b16 %v129
    %v1171 = vunpack.c.l.b16 %v130
    %v1172 = vunpack.c.l.b16 %v131
    %v1173 = vunpack.c.l.b16 %v132
    %v1174 = vunpack.c.l.b16 %v133
    %v1175 = vunpack.c.l.b16 %v134
    %v1176 = vunpack.c.l.b16 %v135
    %v1177 = vunpack.c.l.b16 %v136
    %v1178 = vunpack.c.l.b16 %v137
    %v1179 = vunpack.c.l.b16 %v138
    %v1180 = vunpack.c.l.b16 %v139
    %v1181 = vunpack.c.l.b16 %v140
    %v1182 = vunpack.c.l.b16 %v141
    %v1183 = vunpack.c.l.b16 %v142
    %v1184 = vunpack.c.l.b16 %v143
    %v1185 = vunpack.c.l.b16 %v144
    %v1186 = vunpack.c.l.b16 %v145
    %v1187 = vunpack.c.l.b16 %v146
    %v1188 = vunpack.c.l.b16 %v147
    %v1189 = vunpack.c.l.b16 %v148
    %v1190 = vunpack.c.l.b16 %v149
    %v1191 = vunpack.c.l.b16 %v150
    %v1192 = vunpack.c.l.b16 %v151
    %v1193 = vunpack.c.l.b16 %v152
    %v1194 = vunpack.c.l.b16 %v153
    %v1195 = vunpack.c.l.b16 %v154
    %v1196 = vunpack.c.l.b16 %v155
    %v1197 = vunpack.c.l.b16 %v156
    %v1198 = vunpack.c.l.b16 %v157
    %v1199 = vunpack.c.l.b16 %v158
    %v1200 = vunpack.c.l.b16 %v159
    %v1201 = vunpack.c.l.b16 %v160
    %v1202 = vunpack.c.l.b16 %v161
    %v1203 = vunpack.c.l.b16 %v162
    %v1204 = vunpack.c.l.b16 %v163
    %v1205 = vunpack.c.l.b16 %v164
    %v1206 = vunpack.c.l.b16 %v165
    %v1207 = vunpack.c.l.b16 %v166
    %v1208 = vunpack.c.l.b16 %v167
    %v1209 = vunpack.c.l.b16 %v168
    %v1210 = vunpack.c.l.b16 %v169
    %v1211 = vunpack.c.l.b16 %v170
    %v1212 = vunpack.c.l.b16 %v171
    %v1213 = vunpack.c.l.b16 %v172
    %v1214 = vunpack.c.l.b16 %v173
    %v1215 = vunpack.c.l.b16 %v174
    %v1216 = vunpack.c.l.b16 %v175
    %v1217 = vunpack.c.l.b16 %v176
    %v1218 = vunpack.c.l.b16 %v177
    %v1219 = vunpack.c.l.b16 %v178
    %v1220 = vunpack.c.l.b16 %v179
    %v1221 = vunpack.c.l.b16 %v180
    %v1222 = vunpack.c.l.b16 %v181
    %v1223 = vunpack.c.l.b16 %v182
    %v1224 = vunpack.c.l.b16 %v183
    %v1225 = vunpack.c.l.b16 %v184
    %v1226 = vunpack.c.l.b16 %v185
    %v1227 = vunpack.c.l.b16 %v186
    %v1228 = vunpack.c.l.b16 %v187
    %v1229 = vunpack.c.l.b16 %v188
    %v1230 = vunpack.c.l.b16 %v189
    %v1231 = vunpack.c.l.b16 %v190
    %v1232 = vunpack.c.l.b16 %v191
    %v1233 = vunpack.c.l.b16 %v192
    %v1234 = vunpack.c.l.b16 %v193
    %v1235 = vunpack.c.l.b16 %v194
    %v1236 = vunpack.c.l.b16 %v195
    %v1237 = vunpack.c.l.b16 %v196
    %v1238 = vunpack.c.l.b16 %v197
    %v1239 = vunpack.c.l.b16 %v198
    %v1240 = vunpack.c.l.b16 %v199
    %v1241 = vunpack.c.l.b16 %v200
    %v1242 = vunpack.c.l.b16 %v201
    %v1243 = vunpack.c.l.b16 %v202
    %v1244 = vunpack.c.l.b16 %v203
    %v1245 = vunpack.c.l.b16 %v204
    %v1246 = vunpack.c.l.b16 %v205
    %v1247 = vunpack.c.l.b16 %v206
    %v1248 = vunpack.c.l.b16 %v207
    %v1249 = vunpack.c.l.b16 %v208
    %v1250 = vunpack.c.l.b16 %v209
    %v1251 = vunpack.c.l.b16 %v210
    %v1252 = vunpack.c.l.b16 %v211
    %v1253 = vunpack.c.l.b16 %v212
    %v1254 = vunpack.c.l.b16 %v213
    %v1255 = vunpack.c.l.b16 %v214
    %v1256 = vunpack.c.l.b16 %v215
    %v1257 = vunpack.c.l.b16 %v216
    %v1258 = vunpack.c.l.b16 %v217
    %v1259 = vunpack.c.l.b16 %v218
    %v1260 = vunpack.c.l.b16 %v219
    %v1261 = vunpack.c.l.b16 %v220
    %v1262 = vunpack.c.l.b16 %v221
    %v1263 = vunpack.c.l.b16 %v222
    %v1264 = vunpack.c.l.b16 %v223
    %v1265 = vunpack.c.l.b16 %v224
    %v1266 = vunpack.c.l.b16 %v225
    %v1267 = vunpack.c.l.b16 %v226
    %v1268 = vunpack.c.l.b16 %v227
    %v1269 = vunpack.c.l.b16 %v228
    %v1270 = vunpack.c.l.b16 %v229
    %v1271 = vunpack.c.l.b16 %v230
    %v1272 = vunpack.c.l.b16 %v231
    %v1273 = vunpack.c.l.b16 %v232
    %v1274 = vunpack.c.l.b16 %v233
    %v1275 = vunpack.c.l.b16 %v234
    %v1276 = vunpack.c.l.b16 %v235
    %v1277 = vunpack.c.l.b16 %v236
    %v1278 = vunpack.c.l.b16 %v237
    %v1279 = vunpack.c.l.b16 %v238
    %v1280 = vunpack.c.l.b16 %v239
    %v1281 = vunpack.c.l.b16 %v240
    %v1282 = vunpack.c.l.b16 %v241
    %v1283 = vunpack.c.l.b16 %v242
    %v1284 = vunpack.c.l.b16 %v243
    %v1285 = vunpack.c.l.b16 %v244
    %v1286 = vunpack.c.l.b16 %v245
    %v1287 = vunpack.c.l.b16 %v246
    %v1288 = vunpack.c.l.b16 %v247
    %v1289 = vunpack.c.l.b16 %v248
    %v1290 = vunpack.c.l.b16 %v249
    %v1291 = vunpack.c.l.b16 %v250
    %v1292 = vunpack.c.l.b16 %v251
    %v1293 = vunpack.c.l.b16 %v252
    %v1294 = vunpack.c.l.b16 %v253
    %v1295 = vunpack.c.l.b16 %v254
    %v1296 = vunpack.c.l.b16 %v255
    %v1297 = vunpack.c.l.b16 %v256
    %v1298 = vunpack.c.l.b16 %v257
    %v1299 = vunpack.c.l.b16 %v258
    %v1300 = vunpack.c.l.b16 %v259
    %v1301 = vunpack.c.l.b16 %v260
    %v1302 = vunpack.c.l.b16 %v261
    %v1303 = vunpack.c.l.b16 %v262
    %v1304 = vunpack.c.l.b16 %v263
    %v1305 = vunpack.c.l.b16 %v264
    %v1306 = vunpack.c.l.b16 %v265
    %v1307 = vunpack.c.l.b16 %v266
    %v1308 = vunpack.c.l.b16 %v267
    %v1309 = vunpack.c.l.b16 %v268
    %v1310 = vunpack.c.l.b16 %v269
    %v1311 = vunpack.c.l.b16 %v270
    %v1312 = vunpack.c.l.b16 %v271
    %v1313 = vunpack.c.l.b16 %v272
    %v1314 = vunpack.c.l.b16 %v273
    %v1315 = vunpack.c.l.b16 %v274
    %v1316 = vunpack.c.l.b16 %v275
    %v1317 = vunpack.c.l.b16 %v276
    %v1318 = vunpack.c.l.b16 %v277
    %v1319 = vunpack.c.l.b16 %v278
    %v1320 = vunpack.c.l.b16 %v279
    %v1321 = vunpack.c.l.b16 %v280
    %v1322 = vunpack.c.l.b16 %v281
    %v1323 = vunpack.c.l.b16 %v282
    %v1324 = vunpack.c.l.b16 %v283
    %v1325 = vunpack.c.l.b16 %v284
    %v1326 = vunpack.c.l.b16 %v285
    %v1327 = vunpack.c.l.b16 %v286
    %v1328 = vunpack.c.l.b16 %v287
    %v1329 = vunpack.c.l.b16 %v288
    %v1330 = vunpack.c.l.b16 %v289
    %v1331 = vunpack.c.l.b16 %v290
    %v1332 = vunpack.c.l.b16 %v291
    %v1333 = vunpack.c.l.b16 %v292
    %v1334 = vunpack.c.l.b16 %v293
    %v1335 = vunpack.c.l.b16 %v294
    %v1336 = vunpack.c.l.b16 %v295
    %v1337 = vunpack.c.l.b16 %v296
    %v1338 = vunpack.c.l.b16 %v297
    %v1339 = vunpack.c.l.b16 %v298
    %v1340 = vunpack.c.l.b16 %v299
    %v1341 = vunpack.c.l.b16 %v300
    %v1342 = vunpack.c.l.b16 %v301
    %v1343 = vunpack.c.l.b16 %v302
    %v1344 = vunpack.c.l.b16 %v303
    %v1345 = vunpack.c.l.b16 %v304
    %v1346 = vunpack.c.l.b16 %v305
    %v1347 = vunpack.c.l.b16 %v306
    %v1348 = vunpack.c.l.b16 %v307
    %v1349 = vunpack.c.l.b16 %v308
    %v1350 = vunpack.c.l.b16 %v309
    %v1351 = vunpack.c.l.b16 %v310
    %v1352 = vunpack.c.l.b16 %v311
    %v1353 = vunpack.c.l.b16 %v312
    %v1354 = vunpack.c.l.b16 %v313
    %v1355 = vunpack.c.l.b16 %v314
    %v1356 = vunpack.c.l.b16 %v315
    %v1357 = vunpack.c.l.b16 %v316
    %v1358 = vunpack.c.l.b16 %v317
    %v1359 = vunpack.c.l.b16 %v318
    %v1360 = vunpack.c.l.b16 %v319
    %v1361 = vunpack.c.l.b16 %v320
    %v1362 = vunpack.c.l.b16 %v321
    %v1363 = vunpack.c.l.b16 %v322
    %v1364 = vunpack.c.l.b16 %v323
    %v1365 = vunpack.c.l.b16 %v324
    %v1366 = vunpack.c.l.b16 %v325
    %v1367 = vunpack.c.l.b16 %v326
    %v1368 = vunpack.c.l.b16 %v327
    %v1369 = vunpack.c.l.b16 %v328
    %v1370 = vunpack.c.l.b16 %v329
    %v1371 = vunpack.c.l.b16 %v330
    %v1372 = vunpack.c.l.b16 %v331
    %v1373 = vunpack.c.l.b16 %v332
    %v1374 = vunpack.c.l.b16 %v333
    %v1375 = vunpack.c.l.b16 %v334
    %v1376 = vunpack.c.l.b16 %v335
    %v1377 = vunpack.c.l.b16 %v336
    %v1378 = vunpack.c.l.b16 %v337
    %v1379 = vunpack.c.l.b16 %v338
    %v1380 = vunpack.c.l.b16 %v339
    %v1381 = vunpack.c.l.b16 %v340
    %v1382 = vunpack.c.l.b16 %v341
    %v1383 = vunpack.c.l.b16 %v342
    %v1384 = vunpack.c.l.b16 %v343
    %v1385 = vunpack.c.l.b16 %v344
    %v1386 = vunpack.c.l.b16 %v345
    %v1387 = vunpack.c.l.b16 %v346
    %v1388 = vunpack.c.l.b16 %v347
    %v1389 = vunpack.c.l.b16 %v348
    %v1390 = vunpack.c.l.b16 %v349
    %v1391 = vunpack.c.l.b16 %v350
    %v1392 = vunpack.c.l.b16 %v351
    %v1393 = vunpack.c.l.b16 %v352
    %v1394 = vunpack.c.l.b16 %v353
    %v1395 = vunpack.c.l.b16 %v354
    %v1396 = vunpack.c.l.b16 %v355
    %v1397 = vunpack.c.l.b16 %v356
    %v1398 = vunpack.c.l.b16 %v357
    %v1399 = vunpack.c.l.b16 %v358
    %v1400 = vunpack.c.l.b16 %v359
    %v1401 = vunpack.c.l.b16 %v360
    %v1402 = vunpack.c.l.b16 %v361
    %v1403 = vunpack.c.l.b16 %v362
    %v1404 = vunpack.c.l.b16 %v363
    %v1405 = vunpack.c.l.b16 %v364
    %v1406 = vunpack.c.l.b16 %v365
    %v1407 = vunpack.c.l.b16 %v366
    %v1408 = vunpack.c.l.b16 %v367
    %v1409 = vunpack.c.l.b16 %v368
    %v1410 = vunpack.c.l.b16 %v369
    %v1411 = vunpack.c.l.b16 %v370
    %v1412 = vunpack.c.l.b16 %v371
    %v1413 = vunpack.c.l.b16 %v372
    %v1414 = vunpack.c.l.b16 %v373
    %v1415 = vunpack.c.l.b16 %v374
    %v1416 = vunpack.c.l.b16 %v375
    %v1417 = vunpack.c.l.b16 %v376
    %v1418 = vunpack.c.l.b16 %v377
    %v1419 = vunpack.c.l.b16 %v378
    %v1420 = vunpack.c.l.b16 %v379
    %v1421 = vunpack.c.l.b16 %v380
    %v1422 = vunpack.c.l.b16 %v381
    %v1423 = vunpack.c.l.b16 %v382
    %v1424 = vunpack.c.l.b16 %v383
    %v1425 = vunpack.c.l.b16 %v384
    %v1426 = vunpack.c.l.b16 %v385
    %v1427 = vunpack.c.l.b16 %v386
    %v1428 = vunpack.c.l.b16 %v387
    %v1429 = vunpack.c.l.b16 %v388
    %v1430 = vunpack.c.l.b16 %v389
    %v1431 = vunpack.c.l.b16 %v390
    %v1432 = vunpack.c.l.b16 %v391
    %v1433 = vunpack.c.l.b16 %v392
    %v1434 = vunpack.c.l.b16 %v393
    %v1435 = vunpack.c.l.b16 %v394
    %v1436 = vunpack.c.l.b16 %v395
    %v1437 = vunpack.c.l.b16 %v396
    %v1438 = vunpack.c.l.b16 %v397
    %v1439 = vunpack.c.l.b16 %v398
    %v1440 = vunpack.c.l.b16 %v399
    %v1441 = vunpack.c.l.b16 %v400
    %v1442 = vunpack.c.l.b16 %v401
    %v1443 = vunpack.c.l.b16 %v402
    %v1444 = vunpack.c.l.b16 %v403
    %v1445 = vunpack.c.l.b16 %v404
    %v1446 = vunpack.c.l.b16 %v405
    %v1447 = vunpack.c.l.b16 %v406
    %v1448 = vunpack.c.l.b16 %v407
    %v1449 = vunpack.c.l.b16 %v408
    %v1450 = vunpack.c.l.b16 %v409
    %v1451 = vunpack.c.l.b16 %v410
    %v1452 = vunpack.c.l.b16 %v411
    %v1453 = vunpack.c.l.b16 %v412
    %v1454 = vunpack.c.l.b16 %v413
    %v1455 = vunpack.c.l.b16 %v414
    %v1456 = vunpack.c.l.b16 %v415
    %v1457 = vunpack.c.l.b16 %v416
    %v1458 = vunpack.c.l.b16 %v417
    %v1459 = vunpack.c.l.b16 %v418
    %v1460 = vunpack.c.l.b16 %v419
    %v1461 = vunpack.c.l.b16 %v420
    %v1462 = vunpack.c.l.b16 %v421
    %v1463 = vunpack.c.l.b16 %v422
    %v1464 = vunpack.c.l.b16 %v423
    %v1465 = vunpack.c.l.b16 %v424
    %v1466 = vunpack.c.l.b16 %v425
    %v1467 = vunpack.c.l.b16 %v426
    %v1468 = vunpack.c.l.b16 %v427
    %v1469 = vunpack.c.l.b16 %v428
    %v1470 = vunpack.c.l.b16 %v429
    %v1471 = vunpack.c.l.b16 %v430
    %v1472 = vunpack.c.l.b16 %v431
    %v1473 = vunpack.c.l.b16 %v432
    %v1474 = vunpack.c.l.b16 %v433
    %v1475 = vunpack.c.l.b16 %v434
    %v1476 = vunpack.c.l.b16 %v435
    %v1477 = vunpack.c.l.b16 %v436
    %v1478 = vunpack.c.l.b16 %v437
    %v1479 = vunpack.c.l.b16 %v438
    %v1480 = vunpack.c.l.b16 %v439
    %v1481 = vunpack.c.l.b16 %v440
    %v1482 = vunpack.c.l.b16 %v441
    %v1483 = vunpack.c.l.b16 %v442
    %v1484 = vunpack.c.l.b16 %v443
    %v1485 = vunpack.c.l.b16 %v444
    %v1486 = vunpack.c.l.b16 %v445
    %v1487 = vunpack.c.l.b16 %v446
    %v1488 = vunpack.c.l.b16 %v447
    %v1489 = vunpack.c.l.b16 %v448
    %v1490 = vunpack.c.l.b16 %v449
    %v1491 = vunpack.c.l.b16 %v450
    %v1492 = vunpack.c.l.b16 %v451
    %v1493 = vunpack.c.l.b16 %v452
    %v1494 = vunpack.c.l.b16 %v453
    %v1495 = vunpack.c.l.b16 %v454
    %v1496 = vunpack.c.l.b16 %v455
    %v1497 = vunpack.c.l.b16 %v456
    %v1498 = vunpack.c.l.b16 %v457
    %v1499 = vunpack.c.l.b16 %v458
    %v1500 = vunpack.c.l.b16 %v459
    %v1501 = vunpack.c.l.b16 %v460
    %v1502 = vunpack.c.l.b16 %v461
    %v1503 = vunpack.c.l.b16 %v462
    %v1504 = vunpack.c.l.b16 %v463
    %v1505 = vunpack.c.l.b16 %v464
    %v1506 = vunpack.c.l.b16 %v465
    %v1507 = vunpack.c.l.b16 %v466
    %v1508 = vunpack.c.l.b16 %v467
    %v1509 = vunpack.c.l.b16 %v468
    %v1510 = vunpack.c.l.b16 %v469
    %v1511 = vunpack.c.l.b16 %v470
    %v1512 = vunpack.c.l.b16 %v471
    %v1513 = vunpack.c.l.b16 %v472
    %v1514 = vunpack.c.l.b16 %v473
    %v1515 = vunpack.c.l.b16 %v474
    %v1516 = vunpack.c.l.b16 %v475
    %v1517 = vunpack.c.l.b16 %v476
    %v1518 = vunpack.c.l.b16 %v477
    %v1519 = vunpack.c.l.b16 %v478
    %v1520 = vunpack.c.l.b16 %v479
    %v1521 = vunpack.c.l.b16 %v480
    %v1522 = vunpack.c.l.b16 %v481
    %v1523 = vunpack.c.l.b16 %v482
    %v1524 = vunpack.c.l.b16 %v483
    %v1525 = vunpack.c.l.b16 %v484
    %v1526 = vunpack.c.l.b16 %v485
    %v1527 = vunpack.c.l.b16 %v486
    %v1528 = vunpack.c.l.b16 %v487
    %v1529 = vunpack.c.l.b16 %v488
    %v1530 = vunpack.c.l.b16 %v489
    %v1531 = vunpack.c.l.b16 %v490
    %v1532 = vunpack.c.l.b16 %v491
    %v1533 = vunpack.c.l.b16 %v492
    %v1534 = vunpack.c.l.b16 %v493
    %v1535 = vunpack.c.l.b16 %v494
    %v1536 = vunpack.c.l.b16 %v495
    %v1537 = vunpack.c.l.b16 %v496
    %v1538 = vunpack.c.l.b16 %v497
    %v1539 = vunpack.c.l.b16 %v498
    %v1540 = vunpack.c.l.b16 %v499
    %v1541 = vunpack.c.l.b16 %v500
    %v1542 = vunpack.c.l.b16 %v501
    %v1543 = vunpack.c.l.b16 %v502
    %v1544 = vunpack.c.l.b16 %v503
    %v1545 = vunpack.c.l.b16 %v504
    %v1546 = vunpack.c.l.b16 %v505
    %v1547 = vunpack.c.l.b16 %v506
    %v1548 = vunpack.c.l.b16 %v507
    %v1549 = vunpack.c.l.b16 %v508
    %v1550 = vunpack.c.l.b16 %v509
    %v1551 = vunpack.c.l.b16 %v510
    %v1552 = vunpack.c.l.b16 %v511
    %v1553 = vunpack.c.l.b16 %v512
    %v1554 = vunpack.c.l.b16 %v513
    %v1555 = vunpack.c.l.b16 %v514
    %v1556 = vunpack.c.l.b16 %v515
    %v1557 = vunpack.c.l.b16 %v516
    %v1558 = vunpack.c.l.b16 %v517
    %v1559 = vunpack.c.l.b16 %v518
    %v1560 = vunpack.c.l.b16 %v519
    %v1561 = vunpack.c.l.b16 %v520
    %v1562 = vunpack.c.l.b16 %v521
    %v1563 = vunpack.c.l.b16 %v522
    %v1564 = vunpack.c.l.b16 %v523
    %v1565 = vunpack.c.l.b16 %v524
    %v1566 = vunpack.c.l.b16 %v525
    %v1567 = vunpack.c.l.b16 %v526
    %v1568 = vunpack.c.l.b16 %v527
    %v1569 = vunpack.c.l.b16 %v528
    %v1570 = vunpack.c.l.b16 %v529
    %v1571 = vunpack.c.l.b16 %v530
    %v1572 = vunpack.c.l.b16 %v531
    %v1573 = vunpack.c.l.b16 %v532
    %v1574 = vunpack.c.l.b16 %v533
    %v1575 = vpack.c.b16 %v1092, %v1091
    %v1576 = vpack.c.b16 %v1094, %v1093
    %v1577 = vpack.c.b16 %v1096, %v1095
    %v1578 = vpack.c.b16 %v1098, %v1097
    %v1579 = vpack.c.b16 %v1100, %v1099
    %v1580 = vpack.c.b16 %v1102, %v1101
    %v1581 = vpack.c.b16 %v1104, %v1103
    %v1582 = vpack.c.b16 %v1106, %v1105
    %v1583 = vpack.c.b16 %v1108, %v1107
    %v1584 = vpack.c.b16 %v1110, %v1109
    %v1585 = vpack.c.b16 %v1112, %v1111
    %v1586 = vpack.c.b16 %v1114, %v1113
    %v1587 = vpack.c.b16 %v1116, %v1115
    %v1588 = vpack.c.b16 %v1118, %v1117
    %v1589 = vpack.c.b16 %v1120, %v1119
    %v1590 = vpack.c.b16 %v1122, %v1121
    %v1591 = vpack.c.b16 %v1124, %v1123
    %v1592 = vpack.c.b16 %v1126, %v1125
    %v1593 = vpack.c.b16 %v1128, %v1127
    %v1594 = vpack.c.b16 %v1130, %v1129
    %v1595 = vpack.c.b16 %v1132, %v1131
    %v1596 = vpack.c.b16 %v1134, %v1133
    %v1597 = vpack.c.b16 %v1136, %v1135
    %v1598 = vpack.c.b16 %v1138, %v1137
    %v1599 = vpack.c.b16 %v1140, %v1139
    %v1600 = vpack.c.b16 %v1142, %v1141
    %v1601 = vpack.c.b16 %v1144, %v1143
    %v1602 = vpack.c.b16 %v1146, %v1145
    %v1603 = vpack.c.b16 %v1148, %v1147
    %v1604 = vpack.c.b16 %v1150, %v1149
    %v1605 = vpack.c.b16 %v1152, %v1151
    %v1606 = vpack.c.b16 %v1154, %v1153
    %v1607 = vpack.c.b16 %v1156, %v1155
    %v1608 = vpack.c.b16 %v1158, %v1157
    %v1609 = vpack.c.b16 %v1160, %v1159
    %v1610 = vpack.c.b16 %v1162, %v1161
    %v1611 = vpack.c.b16 %v1164, %v1163
    %v1612 = vpack.c.b16 %v1166, %v1165
    %v1613 = vpack.c.b16 %v1168, %v1167
    %v1614 = vpack.c.b16 %v1170, %v1169
    %v1615 = vpack.c.b16 %v1172, %v1171
    %v1616 = vpack.c.b16 %v1174, %v1173
    %v1617 = vpack.c.b16 %v1176, %v1175
    %v1618 = vpack.c.b16 %v1178, %v1177
    %v1619 = vpack.c.b16 %v1180, %v1179
    %v1620 = vpack.c.b16 %v1182, %v1181
    %v1621 = vpack.c.b16 %v1184, %v1183
    %v1622 = vpack.c.b16 %v1186, %v1185
    %v1623 = vpack.c.b16 %v1188, %v1187
    %v1624 = vpack.c.b16 %v1190, %v1189
    %v1625 = vpack.c.b16 %v1192, %v1191
    %v1626 = vpack.c.b16 %v1194, %v1193
    %v1627 = vpack.c.b16 %v1196, %v1195
    %v1628 = vpack.c.b16 %v1198, %v1197
    %v1629 = vpack.c.b16 %v1200, %v1199
    %v1630 = vpack.c.b16 %v1202, %v1201
    %v1631 = vpack.c.b16 %v1204, %v1203
    %v1632 = vpack.c.b16 %v1206, %v1205
    %v1633 = vpack.c.b16 %v1208, %v1207
    %v1634 = vpack.c.b16 %v1210, %v1209
    %v1635 = vpack.c.b16 %v1212, %v1211
    %v1636 = vpack.c.b16 %v1214, %v1213
    %v1637 = vpack.c.b16 %v1216, %v1215
    %v1638 = vpack.c.b16 %v1218, %v1217
    %v1639 = vpack.c.b16 %v1220, %v1219
    %v1640 = vpack.c.b16 %v1222, %v1221
    %v1641 = vpack.c.b16 %v1224, %v1223
    %v1642 = vpack.c.b16 %v1226, %v1225
    %v1643 = vpack.c.b16 %v1228, %v1227
    %v1644 = vpack.c.b16 %v1230, %v1229
    %v1645 = vpack.c.b16 %v1232, %v1231
    %v1646 = vpack.c.b16 %v1234, %v1233
    %v1647 = vpack.c.b16 %v1236, %v1235
    %v1648 = vpack.c.b16 %v1238, %v1237
    %v1649 = vpack.c.b16 %v1240, %v1239
    %v1650 = vpack.c.b16 %v1242, %v1241
    %v1651 = vpack.c.b16 %v1244, %v1243
    %v1652 = vpack.c.b16 %v1246, %v1245
    %v1653 = vpack.c.b16 %v1248, %v1247
    %v1654 = vpack.c.b16 %v1250, %v1249
    %v1655 = vpack.c.b16 %v1252, %v1251
    %v1656 = vpack.c.b16 %v1254, %v1253
    %v1657 = vpack.c.b16 %v1256, %v1255
    %v1658 = vpack.c.b16 %v1258, %v1257
    %v1659 = vpack.c.b16 %v1260, %v1259
    %v1660 = vpack.c.b16 %v1262, %v1261
    %v1661 = vpack.c.b16 %v1264, %v1263
    %v1662 = vpack.c.b16 %v1266, %v1265
    %v1663 = vpack.c.b16 %v1268, %v1267
    %v1664 = vpack.c.b16 %v1270, %v1269
    %v1665 = vpack.c.b16 %v1272, %v1271
    %v1666 = vpack.c.b16 %v1274, %v1273
    %v1667 = vpack.c.b16 %v1276, %v1275
    %v1668 = vpack.c.b16 %v1278, %v1277
    %v1669 = vpack.c.b16 %v1280, %v1279
    %v1670 = vpack.c.b16 %v1282, %v1281
    %v1671 = vpack.c.b16 %v1284, %v1283
    %v1672 = vpack.c.b16 %v1286, %v1285
    %v1673 = vpack.c.b16 %v1288, %v1287
    %v1674 = vpack.c.b16 %v1290, %v1289
    %v1675 = vpack.c.b16 %v1292, %v1291
    %v1676 = vpack.c.b16 %v1294, %v1293
    %v1677 = vpack.c.b16 %v1296, %v1295
    %v1678 = vpack.c.b16 %v1298, %v1297
    %v1679 = vpack.c.b16 %v1300, %v1299
    %v1680 = vpack.c.b16 %v1302, %v1301
    %v1681 = vpack.c.b16 %v1304, %v1303
    %v1682 = vpack.c.b16 %v1306, %v1305
    %v1683 = vpack.c.b16 %v1308, %v1307
    %v1684 = vpack.c.b16 %v1310, %v1309
    %v1685 = vpack.c.b16 %v1312, %v1311
    %v1686 = vpack.c.b16 %v1314, %v1313
    %v1687 = vpack.c.b16 %v1316, %v1315
    %v1688 = vpack.c.b16 %v1318, %v1317
    %v1689 = vpack.c.b16 %v1320, %v1319
    %v1690 = vpack.c.b16 %v1322, %v1321
    %v1691 = vpack.c.b16 %v1324, %v1323
    %v1692 = vpack.c.b16 %v1326, %v1325
    %v1693 = vpack.c.b16 %v1328, %v1327
    %v1694 = vpack.c.b16 %v1330, %v1329
    %v1695 = vpack.c.b16 %v1332, %v1331
    %v1696 = vpack.c.b16 %v1334, %v1333
    %v1697 = vpack.c.b16 %v1336, %v1335
    %v1698 = vpack.c.b16 %v1338, %v1337
    %v1699 = vpack.c.b16 %v1340, %v1339
    %v1700 = vpack.c.b16 %v1342, %v1341
    %v1701 = vpack.c.b16 %v1344, %v1343
    %v1702 = vpack.c.b16 %v1346, %v1345
    %v1703 = vpack.c.b16 %v1348, %v1347
    %v1704 = vpack.c.b16 %v1350, %v1349
    %v1705 = vpack.c.b16 %v1352, %v1351
    %v1706 = vpack.c.b16 %v1354, %v1353
    %v1707 = vpack.c.b16 %v1356, %v1355
    %v1708 = vpack.c.b16 %v1358, %v1357
    %v1709 = vpack.c.b16 %v1360, %v1359
    %v1710 = vpack.c.b16 %v1362, %v1361
    %v1711 = vpack.c.b16 %v1364, %v1363
    %v1712 = vpack.c.b16 %v1366, %v1365
    %v1713 = vpack.c.b16 %v1368, %v1367
    %v1714 = vpack.c.b16 %v1370, %v1369
    %v1715 = vpack.c.b16 %v1372, %v1371
    %v1716 = vpack.c.b16 %v1374, %v1373
    %v1717 = vpack.c.b16 %v1376, %v1375
    %v1718 = vpack.c.b16 %v1378, %v1377
    %v1719 = vpack.c.b16 %v1380, %v1379
    %v1720 = vpack.c.b16 %v1382, %v1381
    %v1721 = vpack.c.b16 %v1384, %v1383
    %v1722 = vpack.c.b16 %v1386, %v1385
    %v1723 = vpack.c.b16 %v1388, %v1387
    %v1724 = vpack.c.b16 %v1390, %v1389
    %v1725 = vpack.c.b16 %v1392, %v1391
    %v1726 = vpack.c.b16 %v1394, %v1393
    %v1727 = vpack.c.b16 %v1396, %v1395
    %v1728 = vpack.c.b16 %v1398, %v1397
    %v1729 = vpack.c.b16 %v1400, %v1399
    %v1730 = vpack.c.b16 %v1402, %v1401
    %v1731 = vpack.c.b16 %v1404, %v1403
    %v1732 = vpack.c.b16 %v1406, %v1405
    %v1733 = vpack.c.b16 %v1408, %v1407
    %v1734 = vpack.c.b16 %v1410, %v1409
    %v1735 = vpack.c.b16 %v1412, %v1411
    %v1736 = vpack.c.b16 %v1414, %v1413
    %v1737 = vpack.c.b16 %v1416, %v1415
    %v1738 = vpack.c.b16 %v1418, %v1417
    %v1739 = vpack.c.b16 %v1420, %v1419
    %v1740 = vpack.c.b16 %v1422, %v1421
    %v1741 = vpack.c.b16 %v1424, %v1423
    %v1742 = vpack.c.b16 %v1426, %v1425
    %v1743 = vpack.c.b16 %v1428, %v1427
    %v1744 = vpack.c.b16 %v1430, %v1429
    %v1745 = vpack.c.b16 %v1432, %v1431
    %v1746 = vpack.c.b16 %v1434, %v1433
    %v1747 = vpack.c.b16 %v1436, %v1435
    %v1748 = vpack.c.b16 %v1438, %v1437
    %v1749 = vpack.c.b16 %v1440, %v1439
    %v1750 = vpack.c.b16 %v1442, %v1441
    %v1751 = vpack.c.b16 %v1444, %v1443
    %v1752 = vpack.c.b16 %v1446, %v1445
    %v1753 = vpack.c.b16 %v1448, %v1447
    %v1754 = vpack.c.b16 %v1450, %v1449
    %v1755 = vpack.c.b16 %v1452, %v1451
    %v1756 = vpack.c.b16 %v1454, %v1453
    %v1757 = vpack.c.b16 %v1456, %v1455
    %v1758 = vpack.c.b16 %v1458, %v1457
    %v1759 = vpack.c.b16 %v1460, %v1459
    %v1760 = vpack.c.b16 %v1462, %v1461
    %v1761 = vpack.c.b16 %v1464, %v1463
    %v1762 = vpack.c.b16 %v1466, %v1465
    %v1763 = vpack.c.b16 %v1468, %v1467
    %v1764 = vpack.c.b16 %v1470, %v1469
    %v1765 = vpack.c.b16 %v1472, %v1471
    %v1766 = vpack.c.b16 %v1474, %v1473
    %v1767 = vpack.c.b16 %v1476, %v1475
    %v1768 = vpack.c.b16 %v1478, %v1477
    %v1769 = vpack.c.b16 %v1480, %v1479
    %v1770 = vpack.c.b16 %v1482, %v1481
    %v1771 = vpack.c.b16 %v1484, %v1483
    %v1772 = vpack.c.b16 %v1486, %v1485
    %v1773 = vpack.c.b16 %v1488, %v1487
    %v1774 = vpack.c.b16 %v1490, %v1489
    %v1775 = vpack.c.b16 %v1492, %v1491
    %v1776 = vpack.c.b16 %v1494, %v1493
    %v1777 = vpack.c.b16 %v1496, %v1495
    %v1778 = vpack.c.b16 %v1498, %v1497
    %v1779 = vpack.c.b16 %v1500, %v1499
    %v1780 = vpack.c.b16 %v1502, %v1501
    %v1781 = vpack.c.b16 %v1504, %v1503
    %v1782 = vpack.c.b16 %v1506, %v1505
    %v1783 = vpack.c.b16 %v1508, %v1507
    %v1784 = vpack.c.b16 %v1510, %v1509
    %v1785 = vpack.c.b16 %v1512, %v1511
    %v1786 = vpack.c.b16 %v1514, %v1513
    %v1787 = vpack.c.b16 %v1516, %v1515
    %v1788 = vpack.c.b16 %v1518, %v1517
    %v1789 = vpack.c.b16 %v1520, %v1519
    %v1790 = vpack.c.b16 %v1522, %v1521
    %v1791 = vpack.c.b16 %v1524, %v1523
    %v1792 = vpack.c.b16 %v1526, %v1525
    %v1793 = vpack.c.b16 %v1528, %v1527
    %v1794 = vpack.c.b16 %v1530, %v1529
    %v1795 = vpack.c.b16 %v1532, %v1531
    %v1796 = vpack.c.b16 %v1534, %v1533
    %v1797 = vpack.c.b16 %v1536, %v1535
    %v1798 = vpack.c.b16 %v1538, %v1537
    %v1799 = vpack.c.b16 %v1540, %v1539
    %v1800 = vpack.c.b16 %v1542, %v1541
    %v1801 = vpack.c.b16 %v1544, %v1543
    %v1802 = vpack.c.b16 %v1546, %v1545
    %v1803 = vpack.c.b16 %v1548, %v1547
    %v1804 = vpack.c.b16 %v1550, %v1549
    %v1805 = vpack.c.b16 %v1552, %v1551
    %v1806 = vpack.c.b16 %v1554, %v1553
    %v1807 = vpack.c.b16 %v1556, %v1555
    %v1808 = vpack.c.b16 %v1558, %v1557
    %v1809 = vpack.c.b16 %v1560, %v1559
    %v1810 = vpack.c.b16 %v1562, %v1561
    %v1811 = vpack.c.b16 %v1564, %v1563
    %v1812 = vpack.c.b16 %v1566, %v1565
    %v1813 = vpack.c.b16 %v1568, %v1567
    %v1814 = vpack.c.b16 %v1570, %v1569
    %v1815 = vpack.c.b16 %v1572, %v1571
    %v1816 = vpack.c.b16 %v1574, %v1573
    %vm2059 = vcmask 261120
    %v2060 = vsel %vm2059, %v576, 0
    %2062 = vmatpush.bf16.msra.mxu0 %v1582
    %2063 = vmatpush.bf16.msra.mxu0 %v1581
    %2064 = vmatpush.bf16.msra.mxu0 %v1580
    %2065 = vmatpush.bf16.msra.mxu0 %v1579
    %2066 = vmatpush.bf16.msra.mxu0 %v1578
    %2067 = vmatpush.bf16.msra.mxu0 %v1577
    %2068 = vmatpush.bf16.msra.mxu0 %v1576
    %2069 = vmatpush.bf16.msra.mxu0 %v1575
    %2070 = vmatmul.bf16.gmra.mxu0 %v540
    %v2071 = vpop.f32.mrf.mxu0
    %v2072 = vadd.f32 %v536, %v2071
    %v2073 = vpop.f32.mrf.mxu0
    %2074 = vdwg.mxu0
    %2075 = vmatpush.bf16.msra.mxu0 %v1590
    %2076 = vmatpush.bf16.msra.mxu0 %v1589
    %2077 = vmatpush.bf16.msra.mxu0 %v1588
    %2078 = vmatpush.bf16.msra.mxu0 %v1587
    %2079 = vmatpush.bf16.msra.mxu0 %v1586
    %2080 = vmatpush.bf16.msra.mxu0 %v1585
    %2081 = vmatpush.bf16.msra.mxu0 %v1584
    %2082 = vmatpush.bf16.msra.mxu0 %v1583
    %2083 = vmatmul.bf16.gmra.mxu0 %v541
    %v2084 = vpop.f32.mrf.mxu0
    %v2085 = vadd.f32 %v2072, %v2084
    %v2086 = vpop.f32.mrf.mxu0
    %2087 = vdwg.mxu0
    %2088 = vmatpush.bf16.msra.mxu0 %v1598
    %2089 = vmatpush.bf16.msra.mxu0 %v1597
    %2090 = vmatpush.bf16.msra.mxu0 %v1596
    %2091 = vmatpush.bf16.msra.mxu0 %v1595
    %2092 = vmatpush.bf16.msra.mxu0 %v1594
    %2093 = vmatpush.bf16.msra.mxu0 %v1593
    %2094 = vmatpush.bf16.msra.mxu0 %v1592
    %2095 = vmatpush.bf16.msra.mxu0 %v1591
    %2096 = vmatmul.bf16.gmra.mxu0 %v542
    %v2097 = vpop.f32.mrf.mxu0
    %v2098 = vadd.f32 %v2085, %v2097
    %v2099 = vpop.f32.mrf.mxu0
    %2100 = vdwg.mxu0
    %2101 = vmatpush.bf16.msra.mxu0 %v1606
    %2102 = vmatpush.bf16.msra.mxu0 %v1605
    %2103 = vmatpush.bf16.msra.mxu0 %v1604
    %2104 = vmatpush.bf16.msra.mxu0 %v1603
    %2105 = vmatpush.bf16.msra.mxu0 %v1602
    %2106 = vmatpush.bf16.msra.mxu0 %v1601
    %2107 = vmatpush.bf16.msra.mxu0 %v1600
    %2108 = vmatpush.bf16.msra.mxu0 %v1599
    %2109 = vmatmul.bf16.gmra.mxu0 %v543
    %v2110 = vpop.f32.mrf.mxu0
    %v2111 = vadd.f32 %v2098, %v2110
    %v2112 = vpop.f32.mrf.mxu0
    %2113 = vdwg.mxu0
    %2114 = vmatpush.bf16.msra.mxu0 %v1614
    %2115 = vmatpush.bf16.msra.mxu0 %v1613
    %2116 = vmatpush.bf16.msra.mxu0 %v1612
    %2117 = vmatpush.bf16.msra.mxu0 %v1611
    %2118 = vmatpush.bf16.msra.mxu0 %v1610
    %2119 = vmatpush.bf16.msra.mxu0 %v1609
    %2120 = vmatpush.bf16.msra.mxu0 %v1608
    %2121 = vmatpush.bf16.msra.mxu0 %v1607
    %2122 = vmatmul.bf16.gmra.mxu0 %v544
    %v2123 = vpop.f32.mrf.mxu0
    %v2124 = vadd.f32 %v2111, %v2123
    %v2125 = vpop.f32.mrf.mxu0
    %2126 = vdwg.mxu0
    %2127 = vmatpush.bf16.msra.mxu0 %v1622
    %2128 = vmatpush.bf16.msra.mxu0 %v1621
    %2129 = vmatpush.bf16.msra.mxu0 %v1620
    %2130 = vmatpush.bf16.msra.mxu0 %v1619
    %2131 = vmatpush.bf16.msra.mxu0 %v1618
    %2132 = vmatpush.bf16.msra.mxu0 %v1617
    %2133 = vmatpush.bf16.msra.mxu0 %v1616
    %2134 = vmatpush.bf16.msra.mxu0 %v1615
    %2135 = vmatmul.bf16.gmra.mxu0 %v545
    %v2136 = vpop.f32.mrf.mxu0
    %v2137 = vadd.f32 %v2124, %v2136
    %v2138 = vpop.f32.mrf.mxu0
    %2139 = vdwg.mxu0
    %2140 = vmatpush.bf16.msra.mxu0 %v1630
    %2141 = vmatpush.bf16.msra.mxu0 %v1629
    %2142 = vmatpush.bf16.msra.mxu0 %v1628
    %2143 = vmatpush.bf16.msra.mxu0 %v1627
    %2144 = vmatpush.bf16.msra.mxu0 %v1626
    %2145 = vmatpush.bf16.msra.mxu0 %v1625
    %2146 = vmatpush.bf16.msra.mxu0 %v1624
    %2147 = vmatpush.bf16.msra.mxu0 %v1623
    %2148 = vmatmul.bf16.gmra.mxu0 %v546
    %v2149 = vpop.f32.mrf.mxu0
    %v2150 = vadd.f32 %v2137, %v2149
    %v2151 = vpop.f32.mrf.mxu0
    %2152 = vdwg.mxu0
    %2153 = vmatpush.bf16.msra.mxu0 %v1638
    %2154 = vmatpush.bf16.msra.mxu0 %v1637
    %2155 = vmatpush.bf16.msra.mxu0 %v1636
    %2156 = vmatpush.bf16.msra.mxu0 %v1635
    %2157 = vmatpush.bf16.msra.mxu0 %v1634
    %2158 = vmatpush.bf16.msra.mxu0 %v1633
    %2159 = vmatpush.bf16.msra.mxu0 %v1632
    %2160 = vmatpush.bf16.msra.mxu0 %v1631
    %2161 = vmatmul.bf16.gmra.mxu0 %v547
    %v2162 = vpop.f32.mrf.mxu0
    %v2163 = vadd.f32 %v2150, %v2162
    %v2164 = vpop.f32.mrf.mxu0
    %2165 = vdwg.mxu0
    %2166 = vmatpush.bf16.msra.mxu0 %v1646
    %2167 = vmatpush.bf16.msra.mxu0 %v1645
    %2168 = vmatpush.bf16.msra.mxu0 %v1644
    %2169 = vmatpush.bf16.msra.mxu0 %v1643
    %2170 = vmatpush.bf16.msra.mxu0 %v1642
    %2171 = vmatpush.bf16.msra.mxu0 %v1641
    %2172 = vmatpush.bf16.msra.mxu0 %v1640
    %2173 = vmatpush.bf16.msra.mxu0 %v1639
    %2174 = vmatmul.bf16.gmra.mxu0 %v550
    %v2175 = vpop.f32.mrf.mxu0
    %v2176 = vadd.f32 %v2163, %v2175
    %v2177 = vpop.f32.mrf.mxu0
    %2178 = vdwg.mxu0
    %2179 = vmatpush.bf16.msra.mxu0 %v1654
    %2180 = vmatpush.bf16.msra.mxu0 %v1653
    %2181 = vmatpush.bf16.msra.mxu0 %v1652
    %2182 = vmatpush.bf16.msra.mxu0 %v1651
    %2183 = vmatpush.bf16.msra.mxu0 %v1650
    %2184 = vmatpush.bf16.msra.mxu0 %v1649
    %2185 = vmatpush.bf16.msra.mxu0 %v1648
    %2186 = vmatpush.bf16.msra.mxu0 %v1647
    %2187 = vmatmul.bf16.gmra.mxu0 %v551
    %v2188 = vpop.f32.mrf.mxu0
    %v2189 = vadd.f32 %v2176, %v2188
    %v2190 = vpop.f32.mrf.mxu0
    %2191 = vdwg.mxu0
    %2192 = vmatpush.bf16.msra.mxu0 %v1662
    %2193 = vmatpush.bf16.msra.mxu0 %v1661
    %2194 = vmatpush.bf16.msra.mxu0 %v1660
    %2195 = vmatpush.bf16.msra.mxu0 %v1659
    %2196 = vmatpush.bf16.msra.mxu0 %v1658
    %2197 = vmatpush.bf16.msra.mxu0 %v1657
    %2198 = vmatpush.bf16.msra.mxu0 %v1656
    %2199 = vmatpush.bf16.msra.mxu0 %v1655
    %2200 = vmatmul.bf16.gmra.mxu0 %v552
    %v2201 = vpop.f32.mrf.mxu0
    %v2202 = vadd.f32 %v2189, %v2201
    %v2203 = vpop.f32.mrf.mxu0
    %2204 = vdwg.mxu0
    %2205 = vmatpush.bf16.msra.mxu0 %v1670
    %2206 = vmatpush.bf16.msra.mxu0 %v1669
    %2207 = vmatpush.bf16.msra.mxu0 %v1668
    %2208 = vmatpush.bf16.msra.mxu0 %v1667
    %2209 = vmatpush.bf16.msra.mxu0 %v1666
    %2210 = vmatpush.bf16.msra.mxu0 %v1665
    %2211 = vmatpush.bf16.msra.mxu0 %v1664
    %2212 = vmatpush.bf16.msra.mxu0 %v1663
    %2213 = vmatmul.bf16.gmra.mxu0 %v553
    %v2214 = vpop.f32.mrf.mxu0
    %v2215 = vadd.f32 %v2202, %v2214
    %v2216 = vpop.f32.mrf.mxu0
    %2217 = vdwg.mxu0
    %2218 = vmatpush.bf16.msra.mxu0 %v1678
    %2219 = vmatpush.bf16.msra.mxu0 %v1677
    %2220 = vmatpush.bf16.msra.mxu0 %v1676
    %2221 = vmatpush.bf16.msra.mxu0 %v1675
    %2222 = vmatpush.bf16.msra.mxu0 %v1674
    %2223 = vmatpush.bf16.msra.mxu0 %v1673
    %2224 = vmatpush.bf16.msra.mxu0 %v1672
    %2225 = vmatpush.bf16.msra.mxu0 %v1671
    %2226 = vmatmul.bf16.gmra.mxu0 %v554
    %v2227 = vpop.f32.mrf.mxu0
    %v2228 = vadd.f32 %v2215, %v2227
    %v2229 = vpop.f32.mrf.mxu0
    %2230 = vdwg.mxu0
    %2231 = vmatpush.bf16.msra.mxu0 %v1686
    %2232 = vmatpush.bf16.msra.mxu0 %v1685
    %2233 = vmatpush.bf16.msra.mxu0 %v1684
    %2234 = vmatpush.bf16.msra.mxu0 %v1683
    %2235 = vmatpush.bf16.msra.mxu0 %v1682
    %2236 = vmatpush.bf16.msra.mxu0 %v1681
    %2237 = vmatpush.bf16.msra.mxu0 %v1680
    %2238 = vmatpush.bf16.msra.mxu0 %v1679
    %2239 = vmatmul.bf16.gmra.mxu0 %v555
    %v2240 = vpop.f32.mrf.mxu0
    %v2241 = vadd.f32 %v2228, %v2240
    %v2242 = vpop.f32.mrf.mxu0
    %2243 = vdwg.mxu0
    %2244 = vmatpush.bf16.msra.mxu0 %v1694
    %2245 = vmatpush.bf16.msra.mxu0 %v1693
    %2246 = vmatpush.bf16.msra.mxu0 %v1692
    %2247 = vmatpush.bf16.msra.mxu0 %v1691
    %2248 = vmatpush.bf16.msra.mxu0 %v1690
    %2249 = vmatpush.bf16.msra.mxu0 %v1689
    %2250 = vmatpush.bf16.msra.mxu0 %v1688
    %2251 = vmatpush.bf16.msra.mxu0 %v1687
    %2252 = vmatmul.bf16.gmra.mxu0 %v556
    %v2253 = vpop.f32.mrf.mxu0
    %v2254 = vadd.f32 %v2241, %v2253
    %v2255 = vpop.f32.mrf.mxu0
    %2256 = vdwg.mxu0
    %2257 = vmatpush.bf16.msra.mxu0 %v1702
    %2258 = vmatpush.bf16.msra.mxu0 %v1701
    %2259 = vmatpush.bf16.msra.mxu0 %v1700
    %2260 = vmatpush.bf16.msra.mxu0 %v1699
    %2261 = vmatpush.bf16.msra.mxu0 %v1698
    %2262 = vmatpush.bf16.msra.mxu0 %v1697
    %2263 = vmatpush.bf16.msra.mxu0 %v1696
    %2264 = vmatpush.bf16.msra.mxu0 %v1695
    %2265 = vmatmul.bf16.gmra.mxu0 %v557
    %v2266 = vpop.f32.mrf.mxu0
    %v2267 = vadd.f32 %v2254, %v2266
    %v2268 = vpop.f32.mrf.mxu0
    %2269 = vdwg.mxu0
    %2270 = vmatpush.bf16.msra.mxu0 %v1710
    %2271 = vmatpush.bf16.msra.mxu0 %v1709
    %2272 = vmatpush.bf16.msra.mxu0 %v1708
    %2273 = vmatpush.bf16.msra.mxu0 %v1707
    %2274 = vmatpush.bf16.msra.mxu0 %v1706
    %2275 = vmatpush.bf16.msra.mxu0 %v1705
    %2276 = vmatpush.bf16.msra.mxu0 %v1704
    %2277 = vmatpush.bf16.msra.mxu0 %v1703
    %2278 = vmatmul.bf16.gmra.mxu0 %v560
    %v2279 = vpop.f32.mrf.mxu0
    %v2280 = vadd.f32 %v2267, %v2279
    %v2281 = vpop.f32.mrf.mxu0
    %2282 = vdwg.mxu0
    %2283 = vmatpush.bf16.msra.mxu0 %v1718
    %2284 = vmatpush.bf16.msra.mxu0 %v1717
    %2285 = vmatpush.bf16.msra.mxu0 %v1716
    %2286 = vmatpush.bf16.msra.mxu0 %v1715
    %2287 = vmatpush.bf16.msra.mxu0 %v1714
    %2288 = vmatpush.bf16.msra.mxu0 %v1713
    %2289 = vmatpush.bf16.msra.mxu0 %v1712
    %2290 = vmatpush.bf16.msra.mxu0 %v1711
    %2291 = vmatmul.bf16.gmra.mxu0 %v561
    %v2292 = vpop.f32.mrf.mxu0
    %v2293 = vadd.f32 %v2280, %v2292
    %v2294 = vpop.f32.mrf.mxu0
    %2295 = vdwg.mxu0
    %2296 = vmatpush.bf16.msra.mxu0 %v1726
    %2297 = vmatpush.bf16.msra.mxu0 %v1725
    %2298 = vmatpush.bf16.msra.mxu0 %v1724
    %2299 = vmatpush.bf16.msra.mxu0 %v1723
    %2300 = vmatpush.bf16.msra.mxu0 %v1722
    %2301 = vmatpush.bf16.msra.mxu0 %v1721
    %2302 = vmatpush.bf16.msra.mxu0 %v1720
    %2303 = vmatpush.bf16.msra.mxu0 %v1719
    %2304 = vmatmul.bf16.gmra.mxu0 %v562
    %v2305 = vpop.f32.mrf.mxu0
    %v2306 = vadd.f32 %v2293, %v2305
    %v2307 = vpop.f32.mrf.mxu0
    %2308 = vdwg.mxu0
    %2309 = vmatpush.bf16.msra.mxu0 %v1734
    %2310 = vmatpush.bf16.msra.mxu0 %v1733
    %2311 = vmatpush.bf16.msra.mxu0 %v1732
    %2312 = vmatpush.bf16.msra.mxu0 %v1731
    %2313 = vmatpush.bf16.msra.mxu0 %v1730
    %2314 = vmatpush.bf16.msra.mxu0 %v1729
    %2315 = vmatpush.bf16.msra.mxu0 %v1728
    %2316 = vmatpush.bf16.msra.mxu0 %v1727
    %2317 = vmatmul.bf16.gmra.mxu0 %v563
    %v2318 = vpop.f32.mrf.mxu0
    %v2319 = vadd.f32 %v2306, %v2318
    %v2320 = vpop.f32.mrf.mxu0
    %2321 = vdwg.mxu0
    %2322 = vmatpush.bf16.msra.mxu0 %v1742
    %2323 = vmatpush.bf16.msra.mxu0 %v1741
    %2324 = vmatpush.bf16.msra.mxu0 %v1740
    %2325 = vmatpush.bf16.msra.mxu0 %v1739
    %2326 = vmatpush.bf16.msra.mxu0 %v1738
    %2327 = vmatpush.bf16.msra.mxu0 %v1737
    %2328 = vmatpush.bf16.msra.mxu0 %v1736
    %2329 = vmatpush.bf16.msra.mxu0 %v1735
    %2330 = vmatmul.bf16.gmra.mxu0 %v564
    %v2331 = vpop.f32.mrf.mxu0
    %v2332 = vadd.f32 %v2319, %v2331
    %v2333 = vpop.f32.mrf.mxu0
    %2334 = vdwg.mxu0
    %2335 = vmatpush.bf16.msra.mxu0 %v1750
    %2336 = vmatpush.bf16.msra.mxu0 %v1749
    %2337 = vmatpush.bf16.msra.mxu0 %v1748
    %2338 = vmatpush.bf16.msra.mxu0 %v1747
    %2339 = vmatpush.bf16.msra.mxu0 %v1746
    %2340 = vmatpush.bf16.msra.mxu0 %v1745
    %2341 = vmatpush.bf16.msra.mxu0 %v1744
    %2342 = vmatpush.bf16.msra.mxu0 %v1743
    %2343 = vmatmul.bf16.gmra.mxu0 %v565
    %v2344 = vpop.f32.mrf.mxu0
    %v2345 = vadd.f32 %v2332, %v2344
    %v2346 = vpop.f32.mrf.mxu0
    %2347 = vdwg.mxu0
    %2348 = vmatpush.bf16.msra.mxu0 %v1758
    %2349 = vmatpush.bf16.msra.mxu0 %v1757
    %2350 = vmatpush.bf16.msra.mxu0 %v1756
    %2351 = vmatpush.bf16.msra.mxu0 %v1755
    %2352 = vmatpush.bf16.msra.mxu0 %v1754
    %2353 = vmatpush.bf16.msra.mxu0 %v1753
    %2354 = vmatpush.bf16.msra.mxu0 %v1752
    %2355 = vmatpush.bf16.msra.mxu0 %v1751
    %2356 = vmatmul.bf16.gmra.mxu0 %v566
    %v2357 = vpop.f32.mrf.mxu0
    %v2358 = vadd.f32 %v2345, %v2357
    %v2359 = vpop.f32.mrf.mxu0
    %2360 = vdwg.mxu0
    %2361 = vmatpush.bf16.msra.mxu0 %v1766
    %2362 = vmatpush.bf16.msra.mxu0 %v1765
    %2363 = vmatpush.bf16.msra.mxu0 %v1764
    %2364 = vmatpush.bf16.msra.mxu0 %v1763
    %2365 = vmatpush.bf16.msra.mxu0 %v1762
    %2366 = vmatpush.bf16.msra.mxu0 %v1761
    %2367 = vmatpush.bf16.msra.mxu0 %v1760
    %2368 = vmatpush.bf16.msra.mxu0 %v1759
    %2369 = vmatmul.bf16.gmra.mxu0 %v567
    %v2370 = vpop.f32.mrf.mxu0
    %v2371 = vadd.f32 %v2358, %v2370
    %v2372 = vpop.f32.mrf.mxu0
    %2373 = vdwg.mxu0
    %2374 = vmatpush.bf16.msra.mxu0 %v1774
    %2375 = vmatpush.bf16.msra.mxu0 %v1773
    %2376 = vmatpush.bf16.msra.mxu0 %v1772
    %2377 = vmatpush.bf16.msra.mxu0 %v1771
    %2378 = vmatpush.bf16.msra.mxu0 %v1770
    %2379 = vmatpush.bf16.msra.mxu0 %v1769
    %2380 = vmatpush.bf16.msra.mxu0 %v1768
    %2381 = vmatpush.bf16.msra.mxu0 %v1767
    %2382 = vmatmul.bf16.gmra.mxu0 %v570
    %v2383 = vpop.f32.mrf.mxu0
    %v2384 = vadd.f32 %v2371, %v2383
    %v2385 = vpop.f32.mrf.mxu0
    %2386 = vdwg.mxu0
    %2387 = vmatpush.bf16.msra.mxu0 %v1782
    %2388 = vmatpush.bf16.msra.mxu0 %v1781
    %2389 = vmatpush.bf16.msra.mxu0 %v1780
    %2390 = vmatpush.bf16.msra.mxu0 %v1779
    %2391 = vmatpush.bf16.msra.mxu0 %v1778
    %2392 = vmatpush.bf16.msra.mxu0 %v1777
    %2393 = vmatpush.bf16.msra.mxu0 %v1776
    %2394 = vmatpush.bf16.msra.mxu0 %v1775
    %2395 = vmatmul.bf16.gmra.mxu0 %v571
    %v2396 = vpop.f32.mrf.mxu0
    %v2397 = vadd.f32 %v2384, %v2396
    %v2398 = vpop.f32.mrf.mxu0
    %2399 = vdwg.mxu0
    %2400 = vmatpush.bf16.msra.mxu0 %v1790
    %2401 = vmatpush.bf16.msra.mxu0 %v1789
    %2402 = vmatpush.bf16.msra.mxu0 %v1788
    %2403 = vmatpush.bf16.msra.mxu0 %v1787
    %2404 = vmatpush.bf16.msra.mxu0 %v1786
    %2405 = vmatpush.bf16.msra.mxu0 %v1785
    %2406 = vmatpush.bf16.msra.mxu0 %v1784
    %2407 = vmatpush.bf16.msra.mxu0 %v1783
    %2408 = vmatmul.bf16.gmra.mxu0 %v572
    %v2409 = vpop.f32.mrf.mxu0
    %v2410 = vadd.f32 %v2397, %v2409
    %v2411 = vpop.f32.mrf.mxu0
    %2412 = vdwg.mxu0
    %2413 = vmatpush.bf16.msra.mxu0 %v1798
    %2414 = vmatpush.bf16.msra.mxu0 %v1797
    %2415 = vmatpush.bf16.msra.mxu0 %v1796
    %2416 = vmatpush.bf16.msra.mxu0 %v1795
    %2417 = vmatpush.bf16.msra.mxu0 %v1794
    %2418 = vmatpush.bf16.msra.mxu0 %v1793
    %2419 = vmatpush.bf16.msra.mxu0 %v1792
    %2420 = vmatpush.bf16.msra.mxu0 %v1791
    %2421 = vmatmul.bf16.gmra.mxu0 %v573
    %v2422 = vpop.f32.mrf.mxu0
    %v2423 = vadd.f32 %v2410, %v2422
    %v2424 = vpop.f32.mrf.mxu0
    %2425 = vdwg.mxu0
    %2426 = vmatpush.bf16.msra.mxu0 %v1806
    %2427 = vmatpush.bf16.msra.mxu0 %v1805
    %2428 = vmatpush.bf16.msra.mxu0 %v1804
    %2429 = vmatpush.bf16.msra.mxu0 %v1803
    %2430 = vmatpush.bf16.msra.mxu0 %v1802
    %2431 = vmatpush.bf16.msra.mxu0 %v1801
    %2432 = vmatpush.bf16.msra.mxu0 %v1800
    %2433 = vmatpush.bf16.msra.mxu0 %v1799
    %2434 = vmatmul.bf16.gmra.mxu0 %v574
    %v2435 = vpop.f32.mrf.mxu0
    %v2436 = vadd.f32 %v2423, %v2435
    %v2437 = vpop.f32.mrf.mxu0
    %2438 = vdwg.mxu0
    %2439 = vmatpush.bf16.msra.mxu0 %v1814
    %2440 = vmatpush.bf16.msra.mxu0 %v1813
    %2441 = vmatpush.bf16.msra.mxu0 %v1812
    %2442 = vmatpush.bf16.msra.mxu0 %v1811
    %2443 = vmatpush.bf16.msra.mxu0 %v1810
    %2444 = vmatpush.bf16.msra.mxu0 %v1809
    %2445 = vmatpush.bf16.msra.mxu0 %v1808
    %2446 = vmatpush.bf16.msra.mxu0 %v1807
    %2447 = vmatmul.bf16.gmra.mxu0 %v575
    %v2448 = vpop.f32.mrf.mxu0
    %v2449 = vadd.f32 %v2436, %v2448
    %v2450 = vpop.f32.mrf.mxu0
    %2451 = vdwg.mxu0
    %2452 = vmatpush.bf16.msra.mxu0 0
    %2453 = vmatpush.bf16.msra.mxu0 0
    %2454 = vmatpush.bf16.msra.mxu0 0
    %2455 = vmatpush.bf16.msra.mxu0 0
    %2456 = vmatpush.bf16.msra.mxu0 0
    %2457 = vmatpush.bf16.msra.mxu0 0
    %2458 = vmatpush.bf16.msra.mxu0 %v1816
    %2459 = vmatpush.bf16.msra.mxu0 %v1815
    %2460 = vmatmul.bf16.gmra.mxu0 %v2060
    %v2461 = vpop.f32.mrf.mxu0
    %v2462 = vadd.f32 %v2449, %v2461
    %v2463 = vpop.f32.mrf.mxu0
    %2464 = vdwg.mxu0
    %v2465 = vmax.f32 %v2462, 0.0
    %v2466 = vpack.c.bf16 %v2465, %v2465
    %v2467 = vld [vmem:[%s3] sm:$0xf]
    %v2468 = vld [vmem:[%s3 + $0x4] sm:$0xf]
    %v2469 = vld [vmem:[%s3 + $0x8] sm:$0xf]
    %v2470 = vld [vmem:[%s3 + $0xc] sm:$0xf]
    %v2471 = vld [vmem:[%s3 + $0x10] sm:$0xf]
    %v2472 = vld [vmem:[%s3 + $0x14] sm:$0xf]
    %v2473 = vld [vmem:[%s3 + $0x18] sm:$0xf]
    %v2474 = vld [vmem:[%s3 + $0x1c] sm:$0xf]
    %v2475 = vld [vmem:[%s4] sm:$0x1]
    %v2477 = vperm.slane %v2475, 0
    %v2487 = vunpack.c.l.b16 %v2467
    %v2488 = vunpack.c.l.b16 %v2468
    %v2489 = vunpack.c.l.b16 %v2469
    %v2490 = vunpack.c.l.b16 %v2470
    %v2491 = vunpack.c.l.b16 %v2471
    %v2492 = vunpack.c.l.b16 %v2472
    %v2493 = vunpack.c.l.b16 %v2473
    %v2494 = vunpack.c.l.b16 %v2474
    %v2495 = vpack.c.b16 %v2488, %v2487
    %v2496 = vpack.c.b16 %v2490, %v2489
    %v2497 = vpack.c.b16 %v2492, %v2491
    %v2498 = vpack.c.b16 %v2494, %v2493
    %vm2503 = vcmask 523264
    %v2505 = vsel %vm2503, %v2466, 0
    %2507 = vmatpush.bf16.msra.mxu0 0
    %2508 = vmatpush.bf16.msra.mxu0 0
    %2509 = vmatpush.bf16.msra.mxu0 0
    %2510 = vmatpush.bf16.msra.mxu0 0
    %2511 = vmatpush.bf16.msra.mxu0 %v2498
    %2512 = vmatpush.bf16.msra.mxu0 %v2497
    %2513 = vmatpush.bf16.msra.mxu0 %v2496
    %2514 = vmatpush.bf16.msra.mxu0 %v2495
    %2515 = vmatmul.bf16.gmra.mxu0 %v2505
    %v2516 = vpop.f32.mrf.mxu0
    %v2517 = vadd.f32 %v2477, %v2516
    %v2518 = vpop.f32.mrf.mxu0
    %2519 = vdwg.mxu0
    %v2520 = vmax.f32 %v2517, 0.0
    %v2521 = vpack.c.bf16 %v2520, %v2520
    %v2522 = vld [vmem:[%s5] sm:$0xf]
    %v2523 = vld [vmem:[%s5 + $0x4] sm:$0xf]
    %v2524 = vld [vmem:[%s5 + $0x8] sm:$0xf]
    %v2525 = vld [vmem:[%s5 + $0xc] sm:$0xf]
    %v2526 = vld [vmem:[%s5 + $0x10] sm:$0xf]
    %v2527 = vld [vmem:[%s5 + $0x14] sm:$0xf]
    %v2528 = vld [vmem:[%s5 + $0x18] sm:$0xf]
    %v2529 = vld [vmem:[%s5 + $0x1c] sm:$0xf]
    %v2530 = vld [vmem:[%s6] sm:$0x1]
    %v2532 = vperm.slane %v2530, 0
    %v2542 = vunpack.c.l.b16 %v2522
    %v2543 = vunpack.c.l.b16 %v2523
    %v2544 = vunpack.c.l.b16 %v2524
    %v2545 = vunpack.c.l.b16 %v2525
    %v2546 = vunpack.c.l.b16 %v2526
    %v2547 = vunpack.c.l.b16 %v2527
    %v2548 = vunpack.c.l.b16 %v2528
    %v2549 = vunpack.c.l.b16 %v2529
    %v2550 = vpack.c.b16 %v2543, %v2542
    %v2551 = vpack.c.b16 %v2545, %v2544
    %v2552 = vpack.c.b16 %v2547, %v2546
    %v2553 = vpack.c.b16 %v2549, %v2548
    %v2559 = vsel %vm2503, %v2521, 0
    %2561 = vmatpush.bf16.msra.mxu0 0
    %2562 = vmatpush.bf16.msra.mxu0 0
    %2563 = vmatpush.bf16.msra.mxu0 0
    %2564 = vmatpush.bf16.msra.mxu0 0
    %2565 = vmatpush.bf16.msra.mxu0 %v2553
    %2566 = vmatpush.bf16.msra.mxu0 %v2552
    %2567 = vmatpush.bf16.msra.mxu0 %v2551
    %2568 = vmatpush.bf16.msra.mxu0 %v2550
    %2569 = vmatmul.bf16.gmra.mxu0 %v2559
    %v2570 = vpop.f32.mrf.mxu0
    %v2571 = vadd.f32 %v2532, %v2570
    %v2572 = vpop.f32.mrf.mxu0
    %2573 = vdwg.mxu0
    %v2574 = vmax.f32 %v2571, 0.0
    %v2575 = vpack.c.bf16 %v2574, %v2574
    %v2576 = vld [vmem:[%s7] sm:$0xf]
    %v2577 = vld [vmem:[%s7 + $0x4] sm:$0xf]
    %v2578 = vld [vmem:[%s7 + $0x8] sm:$0xf]
    %v2579 = vld [vmem:[%s7 + $0xc] sm:$0xf]
    %v2580 = vld [vmem:[%s7 + $0x10] sm:$0xf]
    %v2581 = vld [vmem:[%s7 + $0x14] sm:$0xf]
    %v2582 = vld [vmem:[%s7 + $0x18] sm:$0xf]
    %v2583 = vld [vmem:[%s7 + $0x1c] sm:$0xf]
    %v2584 = vld [vmem:[%s8] sm:$0x1]
    %v2586 = vperm.slane %v2584, 0
    %v2596 = vunpack.c.l.b16 %v2576
    %v2597 = vunpack.c.l.b16 %v2577
    %v2598 = vunpack.c.l.b16 %v2578
    %v2599 = vunpack.c.l.b16 %v2579
    %v2600 = vunpack.c.l.b16 %v2580
    %v2601 = vunpack.c.l.b16 %v2581
    %v2602 = vunpack.c.l.b16 %v2582
    %v2603 = vunpack.c.l.b16 %v2583
    %v2604 = vpack.c.b16 %v2597, %v2596
    %v2605 = vpack.c.b16 %v2599, %v2598
    %v2606 = vpack.c.b16 %v2601, %v2600
    %v2607 = vpack.c.b16 %v2603, %v2602
    %v2613 = vsel %vm2503, %v2575, 0
    %2615 = vmatpush.bf16.msra.mxu0 0
    %2616 = vmatpush.bf16.msra.mxu0 0
    %2617 = vmatpush.bf16.msra.mxu0 0
    %2618 = vmatpush.bf16.msra.mxu0 0
    %2619 = vmatpush.bf16.msra.mxu0 %v2607
    %2620 = vmatpush.bf16.msra.mxu0 %v2606
    %2621 = vmatpush.bf16.msra.mxu0 %v2605
    %2622 = vmatpush.bf16.msra.mxu0 %v2604
    %2623 = vmatmul.bf16.gmra.mxu0 %v2613
    %v2624 = vpop.f32.mrf.mxu0
    %v2625 = vadd.f32 %v2586, %v2624
    %v2626 = vpop.f32.mrf.mxu0
    %2627 = vdwg.mxu0
    %v2628 = vmax.f32 %v2625, 0.0
    %v2629 = vpack.c.bf16 %v2628, %v2628
    %v2630 = vld [vmem:[%s9] sm:$0xf]
    %v2631 = vld [vmem:[%s9 + $0x4] sm:$0xf]
    %v2632 = vld [vmem:[%s9 + $0x8] sm:$0xf]
    %v2633 = vld [vmem:[%s9 + $0xc] sm:$0xf]
    %v2634 = vld [vmem:[%s9 + $0x10] sm:$0xf]
    %v2635 = vld [vmem:[%s9 + $0x14] sm:$0xf]
    %v2636 = vld [vmem:[%s9 + $0x18] sm:$0xf]
    %v2637 = vld [vmem:[%s9 + $0x1c] sm:$0xf]
    %v2638 = vld [vmem:[%s10] sm:$0x1]
    %v2640 = vperm.slane %v2638, 0
    %v2650 = vunpack.c.l.b16 %v2630
    %v2651 = vunpack.c.l.b16 %v2631
    %v2652 = vunpack.c.l.b16 %v2632
    %v2653 = vunpack.c.l.b16 %v2633
    %v2654 = vunpack.c.l.b16 %v2634
    %v2655 = vunpack.c.l.b16 %v2635
    %v2656 = vunpack.c.l.b16 %v2636
    %v2657 = vunpack.c.l.b16 %v2637
    %v2658 = vpack.c.b16 %v2651, %v2650
    %v2659 = vpack.c.b16 %v2653, %v2652
    %v2660 = vpack.c.b16 %v2655, %v2654
    %v2661 = vpack.c.b16 %v2657, %v2656
    %v2667 = vsel %vm2503, %v2629, 0
    %2669 = vmatpush.bf16.msra.mxu0 0
    %2670 = vmatpush.bf16.msra.mxu0 0
    %2671 = vmatpush.bf16.msra.mxu0 0
    %2672 = vmatpush.bf16.msra.mxu0 0
    %2673 = vmatpush.bf16.msra.mxu0 %v2661
    %2674 = vmatpush.bf16.msra.mxu0 %v2660
    %2675 = vmatpush.bf16.msra.mxu0 %v2659
    %2676 = vmatpush.bf16.msra.mxu0 %v2658
    %2677 = vmatmul.bf16.gmra.mxu0 %v2667
    %v2678 = vpop.f32.mrf.mxu0
    %v2679 = vadd.f32 %v2640, %v2678
    %v2680 = vpop.f32.mrf.mxu0
    %2681 = vdwg.mxu0
    %v2682 = vmax.f32 %v2679, 0.0
    %v2683 = vpack.c.bf16 %v2682, %v2682
    %v2684 = vld [vmem:[%s11] sm:$0xf]
    %v2685 = vld [vmem:[%s11 + $0x4] sm:$0xf]
    %v2686 = vld [vmem:[%s11 + $0x8] sm:$0xf]
    %v2687 = vld [vmem:[%s11 + $0xc] sm:$0xf]
    %v2688 = vld [vmem:[%s11 + $0x10] sm:$0xf]
    %v2689 = vld [vmem:[%s11 + $0x14] sm:$0xf]
    %v2690 = vld [vmem:[%s11 + $0x18] sm:$0xf]
    %v2691 = vld [vmem:[%s11 + $0x1c] sm:$0xf]
    %v2692 = vld [vmem:[%s12] sm:$0x1]
    %v2694 = vperm.slane %v2692, 0
    %v2704 = vunpack.c.l.b16 %v2684
    %v2705 = vunpack.c.l.b16 %v2685
    %v2706 = vunpack.c.l.b16 %v2686
    %v2707 = vunpack.c.l.b16 %v2687
    %v2708 = vunpack.c.l.b16 %v2688
    %v2709 = vunpack.c.l.b16 %v2689
    %v2710 = vunpack.c.l.b16 %v2690
    %v2711 = vunpack.c.l.b16 %v2691
    %v2712 = vpack.c.b16 %v2705, %v2704
    %v2713 = vpack.c.b16 %v2707, %v2706
    %v2714 = vpack.c.b16 %v2709, %v2708
    %v2715 = vpack.c.b16 %v2711, %v2710
    %v2721 = vsel %vm2503, %v2683, 0
    %2723 = vmatpush.bf16.msra.mxu0 0
    %2724 = vmatpush.bf16.msra.mxu0 0
    %2725 = vmatpush.bf16.msra.mxu0 0
    %2726 = vmatpush.bf16.msra.mxu0 0
    %2727 = vmatpush.bf16.msra.mxu0 %v2715
    %2728 = vmatpush.bf16.msra.mxu0 %v2714
    %2729 = vmatpush.bf16.msra.mxu0 %v2713
    %2730 = vmatpush.bf16.msra.mxu0 %v2712
    %2731 = vmatmul.bf16.gmra.mxu0 %v2721
    %v2732 = vpop.f32.mrf.mxu0
    %v2733 = vadd.f32 %v2694, %v2732
    %v2734 = vpop.f32.mrf.mxu0
    %2735 = vdwg.mxu0
    %vm2736 = vcmask 74752
    %2737 = vst.msk [vmem:[#allocation2] sm:$0x3] %vm2736, %v2733
    // Predicated region
    $region54: #{cnn90_forward.7} parent=1 // pred_check
      _
    $region55: #{cnn90_forward.7} parent=1 // pred_check_branch
      %2739 = sbr.rel (0) target = $region57
    $region56: #{cnn90_forward.7} parent=1 // pred_region
      %2741 = vsyncadd [#allocation3], 0
      %s2743 = sshll.u32 [#allocation2], 4
      %s2744 = int_to_ptr.vmem [resolvable:$true] %s2743
      %s2745 = sshll.u32 %s13, 4
      %s2746 = int_to_ptr.hbm [resolvable:$true] %s2745
      %2748 = dma.vmem_to_hbm [thread:$0]  %s2744, 32, %s2746, [#allocation3]
    $region57: #{cnn90_forward.7} parent=1 // pred_fallthru
      _
    // Predicated region
    $region58: #{cnn90_forward.7} parent=1 // pred_check
      _
    $region59: #{cnn90_forward.7} parent=1 // pred_check_branch
      %2750 = sbr.rel (0) target = $region61
    $region60: #{cnn90_forward.7} parent=1 // pred_region
      %2752 = dma.done [#allocation3], 32
    $region61: #{cnn90_forward.7} parent=1 // pred_fallthru
      _
    %2753 = vsyncpa [#allocation3], 1

</llo_original>
